<compile_context>
chip_gen: v6e
topology: v6e:2x2x1
jax: 0.10.0
libtpu: 0.0.40
codegen_flags: <defaults>
</compile_context>

<pallas_src>
import jax
import jax.numpy as jnp
import numpy as np
from jax.experimental import pallas as pl
from jax.experimental.pallas import tpu as pltpu

EMBEDDING_DIM = 768          # Config.EMBEDDING_DIM
HID1, HID2 = 512, 256        # classifier hidden sizes
LANE = 128                   # lane width for the lane-dense output block


def _round_up(x, m):
    return ((x + m - 1) // m) * m


def _const_spec(shape):
    """BlockSpec for a grid-invariant input; single-buffered when supported."""
    index_map = lambda i, k: (0,) * len(shape)
    try:
        return pl.BlockSpec(shape, index_map, pipeline_mode=pl.Buffered(1))
    except Exception:
        return pl.BlockSpec(shape, index_map)


def _pick_k_tile(K, tk_max):
    """Choose (TK, Kp). Prefer a TK that divides round_up(K,128) exactly so the
    wrapper never has to copy/pad the (large) image arrays along K."""
    kp0 = _round_up(K, 128)
    if kp0 <= tk_max:
        return kp0, kp0
    divisors = [tk for tk in range(128, tk_max + 1, 128) if kp0 % tk == 0]
    tk = max(divisors)
    if tk >= tk_max // 4:
        return tk, kp0
    return tk_max, _round_up(K, tk_max)


def _siamese_kernel(img1_ref, img2_ref, wb_ref, bb_ref, w1_ref, b1_ref,
                    w2_ref, b2_ref, w3r_ref, b3_ref,
                    out_ref, acc1_ref, acc2_ref):
    k = pl.program_id(1)

    @pl.when(k == 0)
    def _():
        acc1_ref[...] = jnp.zeros_like(acc1_ref)
        acc2_ref[...] = jnp.zeros_like(acc2_ref)

    # Shared backbone: the same (TK, 768) bf16 weight tile feeds BOTH images.
    # Image tiles arrive as f32 and are cast to bf16 on the VPU right before
    # the MXU dot (cast hides under the matmul; HBM reads stay f32-once).
    wb = wb_ref[...]
    acc1_ref[...] += jnp.dot(img1_ref[...].astype(jnp.bfloat16), wb,
                             preferred_element_type=jnp.float32)
    acc2_ref[...] += jnp.dot(img2_ref[...].astype(jnp.bfloat16), wb,
                             preferred_element_type=jnp.float32)

    @pl.when(k == pl.num_programs(1) - 1)
    def _():
        f1 = acc1_ref[...] + bb_ref[...]            # (TM, 768) f32
        f2 = acc2_ref[...] + bb_ref[...]
        diff = jnp.abs(f1 - f2)

        # Linear(3*768, 512) as three accumulated dots against static row
        # slices of w1 (identical FLOPs, no (TM, 2304) concat temp).
        dt = w1_ref.dtype
        h1 = jnp.dot(f1.astype(dt), w1_ref[0:EMBEDDING_DIM, :],
                     preferred_element_type=jnp.float32)
        h1 += jnp.dot(f2.astype(dt), w1_ref[EMBEDDING_DIM:2 * EMBEDDING_DIM, :],
                      preferred_element_type=jnp.float32)
        h1 += jnp.dot(diff.astype(dt), w1_ref[2 * EMBEDDING_DIM:3 * EMBEDDING_DIM, :],
                      preferred_element_type=jnp.float32)
        h1 = jnp.maximum(h1 + b1_ref[...], 0.0)     # ReLU (Dropout = identity, eval)

        h2 = jnp.dot(h1.astype(w2_ref.dtype), w2_ref[...],
                     preferred_element_type=jnp.float32) + b2_ref[...]
        h2 = jnp.maximum(h2, 0.0)                   # ReLU (Dropout = identity, eval)

        # Linear(256, 1): N=1 -> VPU multiply + lane reduce (keep it off the MXU)
        logit = jnp.sum(h2 * w3r_ref[...], axis=-1, keepdims=True) + b3_ref[...]
        prob = 0.5 * (jnp.tanh(0.5 * logit) + 1.0)  # sigmoid, robust & EUP-friendly

        # Lane-dense store: broadcast the (TM,1) result across 128 lanes.
        out_ref[...] = jnp.broadcast_to(prob, out_ref.shape)


def siamese_change_detector(img1, img2, params):
    """img1, img2: (B, C, H, W) float32. Returns (B,) change probabilities."""
    B = img1.shape[0]
    flat1 = img1.reshape(B, -1).astype(jnp.float32)
    flat2 = img2.reshape(B, -1).astype(jnp.float32)
    K = flat1.shape[1]

    # ---- generation-aware tile / VMEM budget selection ----
    try:
        vmem_cap = int(pltpu.get_tpu_info().vmem_capacity_bytes)
    except Exception:
        vmem_cap = 64 * 1024 * 1024                  # conservative (v7x-like)
    if vmem_cap >= 96 * 1024 * 1024:                 # v5e / v6e: 128 MiB physical
        tk_max, vmem_limit = 8192, 80 * 1024 * 1024
    else:                                            # v7x: 64 MiB per TensorCore
        tk_max, vmem_limit = 4096, 48 * 1024 * 1024

    # Batch tile: >= 2 tiles when B allows (keeps both v7x TCs busy via the
    # "parallel" axis), capped at 256 rows (amortizes the wb weight stream).
    if B <= 8:
        TM = _round_up(max(B, 1), 8)
    else:
        TM = min(256, _round_up((B + 1) // 2, 8))
    Bp = _round_up(B, TM)
    nbt = Bp // TM

    TK, Kp = _pick_k_tile(K, tk_max)
    nk = Kp // TK

    # Zero-pad only when necessary (zero-padded rows / K columns are exact).
    def _prep(x):
        if Bp != B or Kp != K:
            x = jnp.pad(x, ((0, Bp - B), (0, Kp - K)))
        return x

    f1p = _prep(flat1)                               # stays f32; cast in-kernel
    f2p = _prep(flat2)

    wb = params["wb"].astype(jnp.bfloat16)
    if Kp != K:
        wb = jnp.pad(wb, ((0, Kp - K), (0, 0)))
    w1 = params["w1"].astype(jnp.bfloat16)
    w2 = params["w2"].astype(jnp.bfloat16)
    bb, b1, b2 = params["bb"], params["b1"], params["b2"]
    w3r = params["w3"].T                             # (1, 256) f32, stays on VPU
    b3 = params["b3"]                                # (1, 1) f32

    out = pl.pallas_call(
        _siamese_kernel,
        grid=(nbt, nk),
        in_specs=[
            pl.BlockSpec((TM, TK), lambda i, k: (i, k)),               # img1 (f32)
            pl.BlockSpec((TM, TK), lambda i, k: (i, k)),               # img2 (f32)
            pl.BlockSpec((TK, EMBEDDING_DIM), lambda i, k: (k, 0)),    # wb (bf16)
            _const_spec((1, EMBEDDING_DIM)),                           # bb
            _const_spec((3 * EMBEDDING_DIM, HID1)),                    # w1
            _const_spec((1, HID1)),                                    # b1
            _const_spec((HID1, HID2)),                                 # w2
            _const_spec((1, HID2)),                                    # b2
            _const_spec((1, HID2)),                                    # w3 row
            _const_spec((1, 1)),                                       # b3
        ],
        out_specs=pl.BlockSpec((TM, LANE), lambda i, k: (i, 0)),
        out_shape=jax.ShapeDtypeStruct((Bp, LANE), jnp.float32),
        scratch_shapes=[pltpu.VMEM((TM, EMBEDDING_DIM), jnp.float32),
                        pltpu.VMEM((TM, EMBEDDING_DIM), jnp.float32)],
        compiler_params=pltpu.CompilerParams(
            dimension_semantics=("parallel", "arbitrary"),
            vmem_limit_bytes=vmem_limit,
        ),
    )(f1p, f2p, wb, bb, w1, b1, w2, b2, w3r, b3)

    # output.squeeze() in the PyTorch module; lane 0 carries the result.
    return out[:B, 0]


def init_params(key, flat_dim):
    """Deterministic PyTorch-Linear-like init (uniform +/- 1/sqrt(fan_in))."""
    ks = jax.random.split(key, 4)

    def lin(k, fan_in, fan_out):
        bound = 1.0 / np.sqrt(fan_in)
        kw, kb = jax.random.split(k)
        w = jax.random.uniform(kw, (fan_in, fan_out), jnp.float32, -bound, bound)
        b = jax.random.uniform(kb, (1, fan_out), jnp.float32, -bound, bound)
        return w, b

    # TODO(synk): the real dinov2_vitb14 backbone has no in-script Pallas
    # equivalent; a shared linear projection flat_img -> 768 stands in for it.
    wb, bb = lin(ks[0], flat_dim, EMBEDDING_DIM)    # synthetic shared backbone
    w1, b1 = lin(ks[1], EMBEDDING_DIM * 3, HID1)    # Linear(2304, 512)
    w2, b2 = lin(ks[2], HID1, HID2)                 # Linear(512, 256)
    w3, b3 = lin(ks[3], HID2, 1)                    # Linear(256, 1)
    return {"wb": wb, "bb": bb, "w1": w1, "b1": b1,
            "w2": w2, "b2": b2, "w3": w3, "b3": b3}


def _reference(img1, img2, p):
    """Pure-JAX reference with the same bf16-weight / f32-accum numerics."""
    B = img1.shape[0]
    x1 = img1.reshape(B, -1).astype(jnp.bfloat16)
    x2 = img2.reshape(B, -1).astype(jnp.bfloat16)
    wb = p["wb"].astype(jnp.bfloat16)
    f1 = jnp.dot(x1, wb, preferred_element_type=jnp.float32) + p["bb"]
    f2 = jnp.dot(x2, wb, preferred_element_type=jnp.float32) + p["bb"]
    d = jnp.abs(f1 - f2)
    comb = jnp.concatenate([f1, f2, d], axis=1).astype(jnp.bfloat16)
    h1 = jnp.maximum(jnp.dot(comb, p["w1"].astype(jnp.bfloat16),
                             preferred_element_type=jnp.float32) + p["b1"], 0.0)
    h2 = jnp.maximum(jnp.dot(h1.astype(jnp.bfloat16), p["w2"].astype(jnp.bfloat16),
                             preferred_element_type=jnp.float32) + p["b2"], 0.0)
    logit = h2 @ p["w3"] + p["b3"]
    return jax.nn.sigmoid(logit).squeeze()


if __name__ == "__main__":
    key = jax.random.PRNGKey(0)
    k_img1, k_img2, k_par = jax.random.split(key, 3)

    B, C, H, W = 2, 4, 16, 16                       # small NCHW inputs
    img1 = jax.random.normal(k_img1, (B, C, H, W), jnp.float32)
    img2 = jax.random.normal(k_img2, (B, C, H, W), jnp.float32)

    params = init_params(k_par, C * H * W)

    out = jax.block_until_ready(siamese_change_detector(img1, img2, params))
    ref = jax.block_until_ready(_reference(img1, img2, params))

    assert out.shape == (B,), out.shape
    assert np.allclose(np.asarray(out), np.asarray(ref), rtol=2e-3, atol=2e-3), (out, ref)

    print("KERNEL_OK")
</pallas_src>

<mosaic_0001>
module attributes {stable_mosaic.version = 11 : i64} {
  func.func @_siamese_kernel(%arg0: i32, %arg1: i32, %arg2: memref<8x1024xf32, #tpu.memory_space<vmem>>, %arg3: memref<8x1024xf32, #tpu.memory_space<vmem>>, %arg4: memref<1024x768xbf16, #tpu.memory_space<vmem>>, %arg5: memref<1x768xf32, #tpu.memory_space<vmem>>, %arg6: memref<2304x512xbf16, #tpu.memory_space<vmem>>, %arg7: memref<1x512xf32, #tpu.memory_space<vmem>>, %arg8: memref<512x256xbf16, #tpu.memory_space<vmem>>, %arg9: memref<1x256xf32, #tpu.memory_space<vmem>>, %arg10: memref<1x256xf32, #tpu.memory_space<vmem>>, %arg11: memref<1x1xf32, #tpu.memory_space<vmem>>, %arg12: memref<8x128xf32, #tpu.memory_space<vmem>>, %arg13: memref<8x768xf32, #tpu.memory_space<vmem>>, %arg14: memref<8x768xf32, #tpu.memory_space<vmem>>) attributes {dimension_semantics = [#tpu.dimension_semantics<parallel>, #tpu.dimension_semantics<arbitrary>], iteration_bounds = array<i64: 1, 1>, scalar_prefetch = 0 : i64, scratch_operands = 2 : i64, tpu.core_type = #tpu.core_type<tc>, window_params = [{transform_indices = @transform_0, window_bounds = array<i64: 8, 1024>}, {transform_indices = @transform_1, window_bounds = array<i64: 8, 1024>}, {transform_indices = @transform_2, window_bounds = array<i64: 1024, 768>}, {pipeline_mode = #tpu.pipeline_mode<synchronous>, transform_indices = @transform_3, window_bounds = array<i64: 1, 768>}, {pipeline_mode = #tpu.pipeline_mode<synchronous>, transform_indices = @transform_4, window_bounds = array<i64: 2304, 512>}, {pipeline_mode = #tpu.pipeline_mode<synchronous>, transform_indices = @transform_5, window_bounds = array<i64: 1, 512>}, {pipeline_mode = #tpu.pipeline_mode<synchronous>, transform_indices = @transform_6, window_bounds = array<i64: 512, 256>}, {pipeline_mode = #tpu.pipeline_mode<synchronous>, transform_indices = @transform_7, window_bounds = array<i64: 1, 256>}, {pipeline_mode = #tpu.pipeline_mode<synchronous>, transform_indices = @transform_8, window_bounds = array<i64: 1, 256>}, {pipeline_mode = #tpu.pipeline_mode<synchronous>, transform_indices = @transform_9, window_bounds = array<i64: 1, 1>}, {transform_indices = @transform_10, window_bounds = array<i64: 8, 128>}]} {
    %c0_i32 = arith.constant 0 : i32
    %0 = arith.cmpi eq, %arg1, %c0_i32 : i32
    %1 = arith.extui %0 : i1 to i32
    %c0_i32_0 = arith.constant 0 : i32
    %2 = arith.cmpi ne, %1, %c0_i32_0 : i32
    scf.if %2 {
      %cst_17 = arith.constant 0.000000e+00 : f32
      %19 = vector.broadcast %cst_17 : f32 to vector<8x768xf32>
      %c0_18 = arith.constant 0 : index
      %c0_19 = arith.constant 0 : index
      %20 = vector.load %arg13[%c0_18, %c0_19] : memref<8x768xf32, #tpu.memory_space<vmem>>, vector<8x768xf32>
      tpu.vector_store %arg13[%c0_18, %c0_19], %19 {strides = array<i32>} : memref<8x768xf32, #tpu.memory_space<vmem>>, vector<8x768xf32>,
      %cst_20 = arith.constant 0.000000e+00 : f32
      %21 = vector.broadcast %cst_20 : f32 to vector<8x768xf32>
      %c0_21 = arith.constant 0 : index
      %c0_22 = arith.constant 0 : index
      %22 = vector.load %arg14[%c0_21, %c0_22] : memref<8x768xf32, #tpu.memory_space<vmem>>, vector<8x768xf32>
      tpu.vector_store %arg14[%c0_21, %c0_22], %21 {strides = array<i32>} : memref<8x768xf32, #tpu.memory_space<vmem>>, vector<8x768xf32>,
    } else {
    }
    %c0 = arith.constant 0 : index
    %c0_1 = arith.constant 0 : index
    %3 = vector.load %arg4[%c0, %c0_1] : memref<1024x768xbf16, #tpu.memory_space<vmem>>, vector<1024x768xbf16>
    %c0_2 = arith.constant 0 : index
    %c0_3 = arith.constant 0 : index
    %4 = vector.load %arg13[%c0_2, %c0_3] : memref<8x768xf32, #tpu.memory_space<vmem>>, vector<8x768xf32>
    %c0_4 = arith.constant 0 : index
    %c0_5 = arith.constant 0 : index
    %5 = vector.load %arg2[%c0_4, %c0_5] : memref<8x1024xf32, #tpu.memory_space<vmem>>, vector<8x1024xf32>
    %6 = arith.truncf %5 : vector<8x1024xf32> to vector<8x1024xbf16>
    %cst = arith.constant dense<0.000000e+00> : vector<8x768xf32>
    %7 = tpu.matmul %6, %3, %cst {dimension_numbers = #tpu.dot_dimension_numbers<[1], [0], [0], [1], [0, 0, 1, 1], [], []>} : vector<8x1024xbf16>, vector<1024x768xbf16>, vector<8x768xf32> -> vector<8x768xf32>
    %8 = arith.addf %4, %7 : vector<8x768xf32>
    %c0_6 = arith.constant 0 : index
    %c0_7 = arith.constant 0 : index
    %9 = vector.load %arg13[%c0_6, %c0_7] : memref<8x768xf32, #tpu.memory_space<vmem>>, vector<8x768xf32>
    tpu.vector_store %arg13[%c0_6, %c0_7], %8 {strides = array<i32>} : memref<8x768xf32, #tpu.memory_space<vmem>>, vector<8x768xf32>,
    %c0_8 = arith.constant 0 : index
    %c0_9 = arith.constant 0 : index
    %10 = vector.load %arg14[%c0_8, %c0_9] : memref<8x768xf32, #tpu.memory_space<vmem>>, vector<8x768xf32>
    %c0_10 = arith.constant 0 : index
    %c0_11 = arith.constant 0 : index
    %11 = vector.load %arg3[%c0_10, %c0_11] : memref<8x1024xf32, #tpu.memory_space<vmem>>, vector<8x1024xf32>
    %12 = arith.truncf %11 : vector<8x1024xf32> to vector<8x1024xbf16>
    %cst_12 = arith.constant dense<0.000000e+00> : vector<8x768xf32>
    %13 = tpu.matmul %12, %3, %cst_12 {dimension_numbers = #tpu.dot_dimension_numbers<[1], [0], [0], [1], [0, 0, 1, 1], [], []>} : vector<8x1024xbf16>, vector<1024x768xbf16>, vector<8x768xf32> -> vector<8x768xf32>
    %14 = arith.addf %10, %13 : vector<8x768xf32>
    %c0_13 = arith.constant 0 : index
    %c0_14 = arith.constant 0 : index
    %15 = vector.load %arg14[%c0_13, %c0_14] : memref<8x768xf32, #tpu.memory_space<vmem>>, vector<8x768xf32>
    tpu.vector_store %arg14[%c0_13, %c0_14], %14 {strides = array<i32>} : memref<8x768xf32, #tpu.memory_space<vmem>>, vector<8x768xf32>,
    %c0_i32_15 = arith.constant 0 : i32
    %16 = arith.cmpi eq, %arg1, %c0_i32_15 : i32
    %17 = arith.extui %16 : i1 to i32
    %c0_i32_16 = arith.constant 0 : i32
    %18 = arith.cmpi ne, %17, %c0_i32_16 : i32
    scf.if %18 {
      %c0_17 = arith.constant 0 : index
      %c0_18 = arith.constant 0 : index
      %19 = vector.load %arg13[%c0_17, %c0_18] : memref<8x768xf32, #tpu.memory_space<vmem>>, vector<8x768xf32>
      %c0_19 = arith.constant 0 : index
      %c0_20 = arith.constant 0 : index
      %20 = vector.load %arg5[%c0_19, %c0_20] : memref<1x768xf32, #tpu.memory_space<vmem>>, vector<1x768xf32>
      %21 = vector.broadcast %20 : vector<1x768xf32> to vector<8x768xf32>
      %22 = arith.addf %19, %21 : vector<8x768xf32>
      %c0_21 = arith.constant 0 : index
      %c0_22 = arith.constant 0 : index
      %23 = vector.load %arg14[%c0_21, %c0_22] : memref<8x768xf32, #tpu.memory_space<vmem>>, vector<8x768xf32>
      %c0_23 = arith.constant 0 : index
      %c0_24 = arith.constant 0 : index
      %24 = vector.load %arg5[%c0_23, %c0_24] : memref<1x768xf32, #tpu.memory_space<vmem>>, vector<1x768xf32>
      %25 = vector.broadcast %24 : vector<1x768xf32> to vector<8x768xf32>
      %26 = arith.addf %23, %25 : vector<8x768xf32>
      %27 = arith.subf %22, %26 : vector<8x768xf32>
      %28 = math.absf %27 : vector<8x768xf32>
      %29 = arith.truncf %22 : vector<8x768xf32> to vector<8x768xbf16>
      %c0_25 = arith.constant 0 : index
      %c0_26 = arith.constant 0 : index
      %30 = vector.load %arg6[%c0_25, %c0_26] : memref<2304x512xbf16, #tpu.memory_space<vmem>>, vector<768x512xbf16>
      %cst_27 = arith.constant dense<0.000000e+00> : vector<8x512xf32>
      %31 = tpu.matmul %29, %30, %cst_27 {dimension_numbers = #tpu.dot_dimension_numbers<[1], [0], [0], [1], [0, 0, 1, 1], [], []>} : vector<8x768xbf16>, vector<768x512xbf16>, vector<8x512xf32> -> vector<8x512xf32>
      %32 = arith.truncf %26 : vector<8x768xf32> to vector<8x768xbf16>
      %c768 = arith.constant 768 : index
      %c0_28 = arith.constant 0 : index
      %33 = vector.load %arg6[%c768, %c0_28] : memref<2304x512xbf16, #tpu.memory_space<vmem>>, vector<768x512xbf16>
      %cst_29 = arith.constant dense<0.000000e+00> : vector<8x512xf32>
      %34 = tpu.matmul %32, %33, %cst_29 {dimension_numbers = #tpu.dot_dimension_numbers<[1], [0], [0], [1], [0, 0, 1, 1], [], []>} : vector<8x768xbf16>, vector<768x512xbf16>, vector<8x512xf32> -> vector<8x512xf32>
      %35 = arith.addf %31, %34 : vector<8x512xf32>
      %36 = arith.truncf %28 : vector<8x768xf32> to vector<8x768xbf16>
      %c1536 = arith.constant 1536 : index
      %c0_30 = arith.constant 0 : index
      %37 = vector.load %arg6[%c1536, %c0_30] : memref<2304x512xbf16, #tpu.memory_space<vmem>>, vector<768x512xbf16>
      %cst_31 = arith.constant dense<0.000000e+00> : vector<8x512xf32>
      %38 = tpu.matmul %36, %37, %cst_31 {dimension_numbers = #tpu.dot_dimension_numbers<[1], [0], [0], [1], [0, 0, 1, 1], [], []>} : vector<8x768xbf16>, vector<768x512xbf16>, vector<8x512xf32> -> vector<8x512xf32>
      %39 = arith.addf %35, %38 : vector<8x512xf32>
      %c0_32 = arith.constant 0 : index
      %c0_33 = arith.constant 0 : index
      %40 = vector.load %arg7[%c0_32, %c0_33] : memref<1x512xf32, #tpu.memory_space<vmem>>, vector<1x512xf32>
      %41 = vector.broadcast %40 : vector<1x512xf32> to vector<8x512xf32>
      %42 = arith.addf %39, %41 : vector<8x512xf32>
      %cst_34 = arith.constant 0.000000e+00 : f32
      %43 = vector.broadcast %cst_34 : f32 to vector<8x512xf32>
      %44 = arith.maximumf %42, %43 : vector<8x512xf32>
      %45 = arith.truncf %44 : vector<8x512xf32> to vector<8x512xbf16>
      %c0_35 = arith.constant 0 : index
      %c0_36 = arith.constant 0 : index
      %46 = vector.load %arg8[%c0_35, %c0_36] : memref<512x256xbf16, #tpu.memory_space<vmem>>, vector<512x256xbf16>
      %cst_37 = arith.constant dense<0.000000e+00> : vector<8x256xf32>
      %47 = tpu.matmul %45, %46, %cst_37 {dimension_numbers = #tpu.dot_dimension_numbers<[1], [0], [0], [1], [0, 0, 1, 1], [], []>} : vector<8x512xbf16>, vector<512x256xbf16>, vector<8x256xf32> -> vector<8x256xf32>
      %c0_38 = arith.constant 0 : index
      %c0_39 = arith.constant 0 : index
      %48 = vector.load %arg9[%c0_38, %c0_39] : memref<1x256xf32, #tpu.memory_space<vmem>>, vector<1x256xf32>
      %49 = vector.broadcast %48 : vector<1x256xf32> to vector<8x256xf32>
      %50 = arith.addf %47, %49 : vector<8x256xf32>
      %cst_40 = arith.constant 0.000000e+00 : f32
      %51 = vector.broadcast %cst_40 : f32 to vector<8x256xf32>
      %52 = arith.maximumf %50, %51 : vector<8x256xf32>
      %c0_41 = arith.constant 0 : index
      %c0_42 = arith.constant 0 : index
      %53 = vector.load %arg10[%c0_41, %c0_42] : memref<1x256xf32, #tpu.memory_space<vmem>>, vector<1x256xf32>
      %54 = vector.broadcast %53 : vector<1x256xf32> to vector<8x256xf32>
      %55 = arith.mulf %52, %54 : vector<8x256xf32>
      %cst_43 = arith.constant dense<0.000000e+00> : vector<8xf32>
      %56 = vector.multi_reduction <add>, %55, %cst_43 [1] : vector<8x256xf32> to vector<8xf32>
      %57 = vector.shape_cast %56 : vector<8xf32> to vector<8x1xf32>
      %c0_44 = arith.constant 0 : index
      %c0_45 = arith.constant 0 : index
      %58 = vector.load %arg11[%c0_44, %c0_45] : memref<1x1xf32, #tpu.memory_space<vmem>>, vector<1x1xf32>
      %59 = vector.broadcast %58 : vector<1x1xf32> to vector<8x1xf32>
      %60 = arith.addf %57, %59 : vector<8x1xf32>
      %cst_46 = arith.constant 5.000000e-01 : f32
      %61 = vector.broadcast %cst_46 : f32 to vector<8x1xf32>
      %62 = arith.mulf %61, %60 : vector<8x1xf32>
      %63 = math.tanh %62 : vector<8x1xf32>
      %cst_47 = arith.constant 1.000000e+00 : f32
      %64 = vector.broadcast %cst_47 : f32 to vector<8x1xf32>
      %65 = arith.addf %63, %64 : vector<8x1xf32>
      %cst_48 = arith.constant 5.000000e-01 : f32
      %66 = vector.broadcast %cst_48 : f32 to vector<8x1xf32>
      %67 = arith.mulf %66, %65 : vector<8x1xf32>
      %68 = vector.shape_cast %67 : vector<8x1xf32> to vector<8x1xf32>
      %69 = vector.broadcast %68 : vector<8x1xf32> to vector<8x128xf32>
      %c0_49 = arith.constant 0 : index
      %c0_50 = arith.constant 0 : index
      %70 = vector.load %arg12[%c0_49, %c0_50] : memref<8x128xf32, #tpu.memory_space<vmem>>, vector<8x128xf32>
      tpu.vector_store %arg12[%c0_49, %c0_50], %69 {strides = array<i32>} : memref<8x128xf32, #tpu.memory_space<vmem>>, vector<8x128xf32>,
    } else {
    }
    return
  }
  func.func @transform_0(%arg0: i32, %arg1: i32) -> (i32, i32) {
    %c0_i32 = arith.constant 0 : i32
    return %arg0, %arg1 : i32, i32
  }
  func.func @transform_1(%arg0: i32, %arg1: i32) -> (i32, i32) {
    %c0_i32 = arith.constant 0 : i32
    return %arg0, %arg1 : i32, i32
  }
  func.func @transform_2(%arg0: i32, %arg1: i32) -> (i32, i32) {
    %c0_i32 = arith.constant 0 : i32
    %c0_i32_0 = arith.constant 0 : i32
    return %arg1, %c0_i32 : i32, i32
  }
  func.func @transform_3(%arg0: i32, %arg1: i32) -> (i32, i32) {
    %c0_i32 = arith.constant 0 : i32
    %c0_i32_0 = arith.constant 0 : i32
    %c0_i32_1 = arith.constant 0 : i32
    return %c0_i32, %c0_i32_0 : i32, i32
  }
  func.func @transform_4(%arg0: i32, %arg1: i32) -> (i32, i32) {
    %c0_i32 = arith.constant 0 : i32
    %c0_i32_0 = arith.constant 0 : i32
    %c0_i32_1 = arith.constant 0 : i32
    return %c0_i32, %c0_i32_0 : i32, i32
  }
  func.func @transform_5(%arg0: i32, %arg1: i32) -> (i32, i32) {
    %c0_i32 = arith.constant 0 : i32
    %c0_i32_0 = arith.constant 0 : i32
    %c0_i32_1 = arith.constant 0 : i32
    return %c0_i32, %c0_i32_0 : i32, i32
  }
  func.func @transform_6(%arg0: i32, %arg1: i32) -> (i32, i32) {
    %c0_i32 = arith.constant 0 : i32
    %c0_i32_0 = arith.constant 0 : i32
    %c0_i32_1 = arith.constant 0 : i32
    return %c0_i32, %c0_i32_0 : i32, i32
  }
  func.func @transform_7(%arg0: i32, %arg1: i32) -> (i32, i32) {
    %c0_i32 = arith.constant 0 : i32
    %c0_i32_0 = arith.constant 0 : i32
    %c0_i32_1 = arith.constant 0 : i32
    return %c0_i32, %c0_i32_0 : i32, i32
  }
  func.func @transform_8(%arg0: i32, %arg1: i32) -> (i32, i32) {
    %c0_i32 = arith.constant 0 : i32
    %c0_i32_0 = arith.constant 0 : i32
    %c0_i32_1 = arith.constant 0 : i32
    return %c0_i32, %c0_i32_0 : i32, i32
  }
  func.func @transform_9(%arg0: i32, %arg1: i32) -> (i32, i32) {
    %c0_i32 = arith.constant 0 : i32
    %c0_i32_0 = arith.constant 0 : i32
    %c0_i32_1 = arith.constant 0 : i32
    return %c0_i32, %c0_i32_0 : i32, i32
  }
  func.func @transform_10(%arg0: i32, %arg1: i32) -> (i32, i32) {
    %c0_i32 = arith.constant 0 : i32
    %c0_i32_0 = arith.constant 0 : i32
    return %arg0, %c0_i32 : i32, i32
  }
}

</mosaic_0001>

<llo_original>
// kernel: tpu_custom_call.1
$region0: #{tpu_custom_call.1}
  #allocation0 [shape = 'u32[]', space=smem, size = 0x4, offset = 0x4, fixed_abs, tag = 'smem constant byte address 0x4 - core index']
  #allocation1 [shape = 'u32[144,128]{1,0:T(1,128)}', space=vmem, size = 0x12000, scoped, tag = 'internal scratch']
  #allocation2 [shape = 'f32[8,768]{1,0:T(8,128)}', space=vmem, size = 0x6000, scoped, tag = 'scratch operand']
  #allocation3 [shape = 'f32[8,768]{1,0:T(8,128)}', space=vmem, size = 0x6000, scoped, tag = 'scratch operand']
  #allocation4 [shape = 'f32[1,1]{1,0:T(1,128)S(1)}', space=vmem, size = 0x200, scoped, tag = 'scoped memory for tpu_custom_call.1']
  %s0 = inlined_call_operand.hbm [shape: f32[8,1024], index: 0, kind: input, shape index: {}]
  %s1 = inlined_call_operand.hbm [shape: f32[8,1024], index: 1, kind: input, shape index: {}]
  %s2 = inlined_call_operand.hbm [shape: bf16[1024,768], index: 2, kind: input, shape index: {}]
  %s3 = inlined_call_operand.hbm [shape: f32[1,768], index: 3, kind: input, shape index: {}]
  %s4 = inlined_call_operand.hbm [shape: bf16[2304,512], index: 4, kind: input, shape index: {}]
  %s5 = inlined_call_operand.hbm [shape: f32[1,512], index: 5, kind: input, shape index: {}]
  %s6 = inlined_call_operand.hbm [shape: bf16[512,256], index: 6, kind: input, shape index: {}]
  %s7 = inlined_call_operand.hbm [shape: f32[1,256], index: 7, kind: input, shape index: {}]
  %s8 = inlined_call_operand.hbm [shape: f32[1,256], index: 8, kind: input, shape index: {}]
  %s9 = inlined_call_operand.<no memory space> [shape: f32[1,1], index: 9, kind: input, shape index: {}]
  %s10 = inlined_call_operand.hbm [shape: f32[8,128], index: 10, kind: output, shape index: {}]
  %s11 = sld [smem:[#allocation0]]
  $region94: #{tpu_custom_call.1} parent=0
    _
  %s13 = ssub.s32 1, %s11
  %s14 = scalar_select 0, %s13, %s11
  %v15 = vstv %s9
  %16 = vst [vmem:[#allocation4] sm:$0x1] %v15
  $region1: #{tpu_custom_call.1} parent=0
    #allocation5 [shape = 'u8[32768]{0}', space=vmem, size = 0x8000, scoped, tag = 'input window, operand 0, single buffered']
    #allocation6 [shape = 's32[1]{0}', space=sflag, size = 0x4, scoped, tag = 'scoped memory for tpu_custom_call.1']
    #allocation7 [shape = 's32[1]{0}', space=sflag, size = 0x4, scoped, tag = 'scoped memory for tpu_custom_call.1']
    #allocation8 [shape = 'u8[32768]{0}', space=vmem, size = 0x8000, scoped, tag = 'input window, operand 1, single buffered']
    #allocation9 [shape = 's32[1]{0}', space=sflag, size = 0x4, scoped, tag = 'scoped memory for tpu_custom_call.1']
    #allocation10 [shape = 'u8[1572864]{0}', space=vmem, size = 0x180000, scoped, tag = 'input window, operand 2, single buffered']
    #allocation11 [shape = 'u8[3072]{0}', space=vmem, size = 0xc00, scoped, tag = 'input window, operand 3, single buffered']
    #allocation12 [shape = 's32[1]{0}', space=sflag, size = 0x4, scoped, tag = 'scoped memory for tpu_custom_call.1']
    #allocation13 [shape = 'u8[2359296]{0}', space=vmem, size = 0x240000, scoped, tag = 'input window, operand 4, single buffered']
    #allocation14 [shape = 'u8[2048]{0}', space=vmem, size = 0x800, scoped, tag = 'input window, operand 5, single buffered']
    #allocation15 [shape = 's32[1]{0}', space=sflag, size = 0x4, scoped, tag = 'scoped memory for tpu_custom_call.1']
    #allocation16 [shape = 'u8[262144]{0}', space=vmem, size = 0x40000, scoped, tag = 'input window, operand 6, single buffered']
    #allocation17 [shape = 'u8[1024]{0}', space=vmem, size = 0x400, scoped, tag = 'input window, operand 7, single buffered']
    #allocation18 [shape = 's32[1]{0}', space=sflag, size = 0x4, scoped, tag = 'scoped memory for tpu_custom_call.1']
    #allocation19 [shape = 'u8[1024]{0}', space=vmem, size = 0x400, scoped, tag = 'input window, operand 8, single buffered']
    #allocation20 [shape = 'u8[4096]{0}', space=vmem, size = 0x1000, scoped, tag = 'output window, operand 0, single buffered']
    %17 = vsyncpa [#allocation6], 0
    %18 = vsyncpa [#allocation9], 0
    %19 = vsyncpa [#allocation12], 0
    %20 = vsyncpa [#allocation15], 0
    %21 = vsyncpa [#allocation18], 0
    %22 = vsyncpa [#allocation7], 0
    // Predicated region
    $region2: #{tpu_custom_call.1} parent=1 // pred_check
      _
    $region3: #{tpu_custom_call.1} parent=1 // pred_check_branch
      %24 = sbr.rel (0) target = $region5
    $region4: #{tpu_custom_call.1} parent=1 // pred_region
      %s26 = ssub.s32 1024, 1024
      %27 = vsyncadd [#allocation6], %s26
      %s29 = sshll.u32 [#allocation5], 4
      %s30 = int_to_ptr.vmem [resolvable:$true] %s29
      %32 = dma.hbm_to_vmem [thread:$0]  %s0, 1024, %s30, [#allocation6]
    $region5: #{tpu_custom_call.1} parent=1 // pred_fallthru
      _
    // Predicated region
    $region6: #{tpu_custom_call.1} parent=1 // pred_check
      _
    $region7: #{tpu_custom_call.1} parent=1 // pred_check_branch
      %34 = sbr.rel (0) target = $region9
    $region8: #{tpu_custom_call.1} parent=1 // pred_region
      %s36 = ssub.s32 1024, 1024
      %37 = vsyncadd [#allocation9], %s36
      %s39 = sshll.u32 [#allocation8], 4
      %s40 = int_to_ptr.vmem [resolvable:$true] %s39
      %42 = dma.hbm_to_vmem [thread:$0]  %s1, 1024, %s40, [#allocation9]
    $region9: #{tpu_custom_call.1} parent=1 // pred_fallthru
      _
    // Predicated region
    $region10: #{tpu_custom_call.1} parent=1 // pred_check
      _
    $region11: #{tpu_custom_call.1} parent=1 // pred_check_branch
      %44 = sbr.rel (0) target = $region13
    $region12: #{tpu_custom_call.1} parent=1 // pred_region
      %s46 = ssub.s32 49152, 49152
      %47 = vsyncadd [#allocation9], %s46
      %s48 = sshll.u32 [#allocation10], 4
      %s49 = int_to_ptr.vmem [resolvable:$true] %s48
      %54 = dma.hbm_to_vmem [thread:$0]  %s2, 49152, %s49, [#allocation9], 384, 384, 24
    $region13: #{tpu_custom_call.1} parent=1 // pred_fallthru
      _
    // Predicated region
    $region14: #{tpu_custom_call.1} parent=1 // pred_check
      _
    $region15: #{tpu_custom_call.1} parent=1 // pred_check_branch
      %56 = sbr.rel (0) target = $region17
    $region16: #{tpu_custom_call.1} parent=1 // pred_region
      %s58 = ssub.s32 96, 96
      %59 = vsyncadd [#allocation12], %s58
      %s61 = sshll.u32 [#allocation11], 4
      %s62 = int_to_ptr.vmem [resolvable:$true] %s61
      %64 = dma.hbm_to_vmem [thread:$0]  %s3, 96, %s62, [#allocation12]
    $region17: #{tpu_custom_call.1} parent=1 // pred_fallthru
      _
    // Predicated region
    $region18: #{tpu_custom_call.1} parent=1 // pred_check
      _
    $region19: #{tpu_custom_call.1} parent=1 // pred_check_branch
      %66 = sbr.rel (0) target = $region21
    $region20: #{tpu_custom_call.1} parent=1 // pred_region
      %s68 = ssub.s32 73728, 73728
      %69 = vsyncadd [#allocation12], %s68
      %s70 = sshll.u32 [#allocation13], 4
      %s71 = int_to_ptr.vmem [resolvable:$true] %s70
      %76 = dma.hbm_to_vmem [thread:$0]  %s4, 73728, %s71, [#allocation12], 256, 256, 16
    $region21: #{tpu_custom_call.1} parent=1 // pred_fallthru
      _
    // Predicated region
    $region22: #{tpu_custom_call.1} parent=1 // pred_check
      _
    $region23: #{tpu_custom_call.1} parent=1 // pred_check_branch
      %78 = sbr.rel (0) target = $region25
    $region24: #{tpu_custom_call.1} parent=1 // pred_region
      %s80 = ssub.s32 64, 64
      %81 = vsyncadd [#allocation15], %s80
      %s83 = sshll.u32 [#allocation14], 4
      %s84 = int_to_ptr.vmem [resolvable:$true] %s83
      %86 = dma.hbm_to_vmem [thread:$0]  %s5, 64, %s84, [#allocation15]
    $region25: #{tpu_custom_call.1} parent=1 // pred_fallthru
      _
    // Predicated region
    $region26: #{tpu_custom_call.1} parent=1 // pred_check
      _
    $region27: #{tpu_custom_call.1} parent=1 // pred_check_branch
      %88 = sbr.rel (0) target = $region29
    $region28: #{tpu_custom_call.1} parent=1 // pred_region
      %s90 = ssub.s32 8192, 8192
      %91 = vsyncadd [#allocation15], %s90
      %s92 = sshll.u32 [#allocation16], 4
      %s93 = int_to_ptr.vmem [resolvable:$true] %s92
      %98 = dma.hbm_to_vmem [thread:$0]  %s6, 8192, %s93, [#allocation15], 128, 128, 8
    $region29: #{tpu_custom_call.1} parent=1 // pred_fallthru
      _
    // Predicated region
    $region30: #{tpu_custom_call.1} parent=1 // pred_check
      _
    $region31: #{tpu_custom_call.1} parent=1 // pred_check_branch
      %100 = sbr.rel (0) target = $region33
    $region32: #{tpu_custom_call.1} parent=1 // pred_region
      %s102 = ssub.s32 32, 32
      %103 = vsyncadd [#allocation18], %s102
      %s105 = sshll.u32 [#allocation17], 4
      %s106 = int_to_ptr.vmem [resolvable:$true] %s105
      %108 = dma.hbm_to_vmem [thread:$0]  %s7, 32, %s106, [#allocation18]
    $region33: #{tpu_custom_call.1} parent=1 // pred_fallthru
      _
    // Predicated region
    $region34: #{tpu_custom_call.1} parent=1 // pred_check
      _
    $region35: #{tpu_custom_call.1} parent=1 // pred_check_branch
      %110 = sbr.rel (0) target = $region37
    $region36: #{tpu_custom_call.1} parent=1 // pred_region
      %s112 = ssub.s32 32, 32
      %113 = vsyncadd [#allocation18], %s112
      %s115 = sshll.u32 [#allocation19], 4
      %s116 = int_to_ptr.vmem [resolvable:$true] %s115
      %118 = dma.hbm_to_vmem [thread:$0]  %s8, 32, %s116, [#allocation18]
    $region37: #{tpu_custom_call.1} parent=1 // pred_fallthru
      _
    // Predicated region
    $region38: #{tpu_custom_call.1} parent=1 // pred_check
      _
    $region39: #{tpu_custom_call.1} parent=1 // pred_check_branch
      %120 = sbr.rel (0) target = $region41
    $region40: #{tpu_custom_call.1} parent=1 // pred_region
      _
    $region41: #{tpu_custom_call.1} parent=1 // pred_fallthru
      _
    // Predicated region
    $region42: #{tpu_custom_call.1} parent=1 // pred_check
      _
    $region43: #{tpu_custom_call.1} parent=1 // pred_check_branch
      %122 = sbr.rel (0) target = $region45
    $region44: #{tpu_custom_call.1} parent=1 // pred_region
      %123 = dma.done [#allocation6], 1024
    $region45: #{tpu_custom_call.1} parent=1 // pred_fallthru
      _
    // Predicated region
    $region46: #{tpu_custom_call.1} parent=1 // pred_check
      _
    $region47: #{tpu_custom_call.1} parent=1 // pred_check_branch
      %125 = sbr.rel (0) target = $region49
    $region48: #{tpu_custom_call.1} parent=1 // pred_region
      %126 = dma.done [#allocation9], 1024
    $region49: #{tpu_custom_call.1} parent=1 // pred_fallthru
      _
    // Predicated region
    $region50: #{tpu_custom_call.1} parent=1 // pred_check
      _
    $region51: #{tpu_custom_call.1} parent=1 // pred_check_branch
      %128 = sbr.rel (0) target = $region53
    $region52: #{tpu_custom_call.1} parent=1 // pred_region
      %129 = dma.done [#allocation9], 49152
    $region53: #{tpu_custom_call.1} parent=1 // pred_fallthru
      _
    // Predicated region
    $region54: #{tpu_custom_call.1} parent=1 // pred_check
      _
    $region55: #{tpu_custom_call.1} parent=1 // pred_check_branch
      %131 = sbr.rel (0) target = $region57
    $region56: #{tpu_custom_call.1} parent=1 // pred_region
      %132 = dma.done [#allocation12], 96
    $region57: #{tpu_custom_call.1} parent=1 // pred_fallthru
      _
    // Predicated region
    $region58: #{tpu_custom_call.1} parent=1 // pred_check
      _
    $region59: #{tpu_custom_call.1} parent=1 // pred_check_branch
      %134 = sbr.rel (0) target = $region61
    $region60: #{tpu_custom_call.1} parent=1 // pred_region
      %135 = dma.done [#allocation12], 73728
    $region61: #{tpu_custom_call.1} parent=1 // pred_fallthru
      _
    // Predicated region
    $region62: #{tpu_custom_call.1} parent=1 // pred_check
      _
    $region63: #{tpu_custom_call.1} parent=1 // pred_check_branch
      %137 = sbr.rel (0) target = $region65
    $region64: #{tpu_custom_call.1} parent=1 // pred_region
      %138 = dma.done [#allocation15], 64
    $region65: #{tpu_custom_call.1} parent=1 // pred_fallthru
      _
    // Predicated region
    $region66: #{tpu_custom_call.1} parent=1 // pred_check
      _
    $region67: #{tpu_custom_call.1} parent=1 // pred_check_branch
      %140 = sbr.rel (0) target = $region69
    $region68: #{tpu_custom_call.1} parent=1 // pred_region
      %141 = dma.done [#allocation15], 8192
    $region69: #{tpu_custom_call.1} parent=1 // pred_fallthru
      _
    // Predicated region
    $region70: #{tpu_custom_call.1} parent=1 // pred_check
      _
    $region71: #{tpu_custom_call.1} parent=1 // pred_check_branch
      %143 = sbr.rel (0) target = $region73
    $region72: #{tpu_custom_call.1} parent=1 // pred_region
      %144 = dma.done [#allocation18], 32
    $region73: #{tpu_custom_call.1} parent=1 // pred_fallthru
      _
    // Predicated region
    $region74: #{tpu_custom_call.1} parent=1 // pred_check
      _
    $region75: #{tpu_custom_call.1} parent=1 // pred_check_branch
      %146 = sbr.rel (0) target = $region77
    $region76: #{tpu_custom_call.1} parent=1 // pred_region
      %147 = dma.done [#allocation18], 32
    $region77: #{tpu_custom_call.1} parent=1 // pred_fallthru
      _
    %p148 = scmp.eq.s32.totalorder 0, 0
    // Predicated region
    $region78: #{tpu_custom_call.1} parent=1 // pred_check
      %p149 = pneg %p148
    $region79: #{tpu_custom_call.1} parent=1 // pred_check_branch
      %151 = sbr.rel (%p149) target = $region81
    $region80: #{tpu_custom_call.1} parent=1 // pred_region
      %152 = vst [vmem:[#allocation2] sm:$0xff] 0.0
      %153 = vst [vmem:[#allocation2 + $0x8] sm:$0xff] 0.0
      %154 = vst [vmem:[#allocation2 + $0x10] sm:$0xff] 0.0
      %155 = vst [vmem:[#allocation2 + $0x18] sm:$0xff] 0.0
      %156 = vst [vmem:[#allocation2 + $0x20] sm:$0xff] 0.0
      %157 = vst [vmem:[#allocation2 + $0x28] sm:$0xff] 0.0
      %158 = vst [vmem:[#allocation3] sm:$0xff] 0.0
      %159 = vst [vmem:[#allocation3 + $0x8] sm:$0xff] 0.0
      %160 = vst [vmem:[#allocation3 + $0x10] sm:$0xff] 0.0
      %161 = vst [vmem:[#allocation3 + $0x18] sm:$0xff] 0.0
      %162 = vst [vmem:[#allocation3 + $0x20] sm:$0xff] 0.0
      %163 = vst [vmem:[#allocation3 + $0x28] sm:$0xff] 0.0
    $region81: #{tpu_custom_call.1} parent=1 // pred_fallthru
      _
    %v164 = vld [vmem:[#allocation10] sm:$0xff]
    %v165 = vld [vmem:[#allocation10 + $0x8] sm:$0xff]
    %v166 = vld [vmem:[#allocation10 + $0x10] sm:$0xff]
    %v167 = vld [vmem:[#allocation10 + $0x18] sm:$0xff]
    %v168 = vld [vmem:[#allocation10 + $0x20] sm:$0xff]
    %v169 = vld [vmem:[#allocation10 + $0x28] sm:$0xff]
    %v170 = vld [vmem:[#allocation10 + $0x30] sm:$0xff]
    %v171 = vld [vmem:[#allocation10 + $0x38] sm:$0xff]
    %v172 = vld [vmem:[#allocation10 + $0x40] sm:$0xff]
    %v173 = vld [vmem:[#allocation10 + $0x48] sm:$0xff]
    %v174 = vld [vmem:[#allocation10 + $0x50] sm:$0xff]
    %v175 = vld [vmem:[#allocation10 + $0x58] sm:$0xff]
    %v176 = vld [vmem:[#allocation10 + $0x60] sm:$0xff]
    %v177 = vld [vmem:[#allocation10 + $0x68] sm:$0xff]
    %v178 = vld [vmem:[#allocation10 + $0x70] sm:$0xff]
    %v179 = vld [vmem:[#allocation10 + $0x78] sm:$0xff]
    %v180 = vld [vmem:[#allocation10 + $0x80] sm:$0xff]
    %v181 = vld [vmem:[#allocation10 + $0x88] sm:$0xff]
    %v182 = vld [vmem:[#allocation10 + $0x90] sm:$0xff]
    %v183 = vld [vmem:[#allocation10 + $0x98] sm:$0xff]
    %v184 = vld [vmem:[#allocation10 + $0xa0] sm:$0xff]
    %v185 = vld [vmem:[#allocation10 + $0xa8] sm:$0xff]
    %v186 = vld [vmem:[#allocation10 + $0xb0] sm:$0xff]
    %v187 = vld [vmem:[#allocation10 + $0xb8] sm:$0xff]
    %v188 = vld [vmem:[#allocation10 + $0xc0] sm:$0xff]
    %v189 = vld [vmem:[#allocation10 + $0xc8] sm:$0xff]
    %v190 = vld [vmem:[#allocation10 + $0xd0] sm:$0xff]
    %v191 = vld [vmem:[#allocation10 + $0xd8] sm:$0xff]
    %v192 = vld [vmem:[#allocation10 + $0xe0] sm:$0xff]
    %v193 = vld [vmem:[#allocation10 + $0xe8] sm:$0xff]
    %v194 = vld [vmem:[#allocation10 + $0xf0] sm:$0xff]
    %v195 = vld [vmem:[#allocation10 + $0xf8] sm:$0xff]
    %v196 = vld [vmem:[#allocation10 + $0x100] sm:$0xff]
    %v197 = vld [vmem:[#allocation10 + $0x108] sm:$0xff]
    %v198 = vld [vmem:[#allocation10 + $0x110] sm:$0xff]
    %v199 = vld [vmem:[#allocation10 + $0x118] sm:$0xff]
    %v200 = vld [vmem:[#allocation10 + $0x120] sm:$0xff]
    %v201 = vld [vmem:[#allocation10 + $0x128] sm:$0xff]
    %v202 = vld [vmem:[#allocation10 + $0x130] sm:$0xff]
    %v203 = vld [vmem:[#allocation10 + $0x138] sm:$0xff]
    %v204 = vld [vmem:[#allocation10 + $0x140] sm:$0xff]
    %v205 = vld [vmem:[#allocation10 + $0x148] sm:$0xff]
    %v206 = vld [vmem:[#allocation10 + $0x150] sm:$0xff]
    %v207 = vld [vmem:[#allocation10 + $0x158] sm:$0xff]
    %v208 = vld [vmem:[#allocation10 + $0x160] sm:$0xff]
    %v209 = vld [vmem:[#allocation10 + $0x168] sm:$0xff]
    %v210 = vld [vmem:[#allocation10 + $0x170] sm:$0xff]
    %v211 = vld [vmem:[#allocation10 + $0x178] sm:$0xff]
    %v212 = vld [vmem:[#allocation10 + $0x180] sm:$0xff]
    %v213 = vld [vmem:[#allocation10 + $0x188] sm:$0xff]
    %v214 = vld [vmem:[#allocation10 + $0x190] sm:$0xff]
    %v215 = vld [vmem:[#allocation10 + $0x198] sm:$0xff]
    %v216 = vld [vmem:[#allocation10 + $0x1a0] sm:$0xff]
    %v217 = vld [vmem:[#allocation10 + $0x1a8] sm:$0xff]
    %v218 = vld [vmem:[#allocation10 + $0x1b0] sm:$0xff]
    %v219 = vld [vmem:[#allocation10 + $0x1b8] sm:$0xff]
    %v220 = vld [vmem:[#allocation10 + $0x1c0] sm:$0xff]
    %v221 = vld [vmem:[#allocation10 + $0x1c8] sm:$0xff]
    %v222 = vld [vmem:[#allocation10 + $0x1d0] sm:$0xff]
    %v223 = vld [vmem:[#allocation10 + $0x1d8] sm:$0xff]
    %v224 = vld [vmem:[#allocation10 + $0x1e0] sm:$0xff]
    %v225 = vld [vmem:[#allocation10 + $0x1e8] sm:$0xff]
    %v226 = vld [vmem:[#allocation10 + $0x1f0] sm:$0xff]
    %v227 = vld [vmem:[#allocation10 + $0x1f8] sm:$0xff]
    %v228 = vld [vmem:[#allocation10 + $0x200] sm:$0xff]
    %v229 = vld [vmem:[#allocation10 + $0x208] sm:$0xff]
    %v230 = vld [vmem:[#allocation10 + $0x210] sm:$0xff]
    %v231 = vld [vmem:[#allocation10 + $0x218] sm:$0xff]
    %v232 = vld [vmem:[#allocation10 + $0x220] sm:$0xff]
    %v233 = vld [vmem:[#allocation10 + $0x228] sm:$0xff]
    %v234 = vld [vmem:[#allocation10 + $0x230] sm:$0xff]
    %v235 = vld [vmem:[#allocation10 + $0x238] sm:$0xff]
    %v236 = vld [vmem:[#allocation10 + $0x240] sm:$0xff]
    %v237 = vld [vmem:[#allocation10 + $0x248] sm:$0xff]
    %v238 = vld [vmem:[#allocation10 + $0x250] sm:$0xff]
    %v239 = vld [vmem:[#allocation10 + $0x258] sm:$0xff]
    %v240 = vld [vmem:[#allocation10 + $0x260] sm:$0xff]
    %v241 = vld [vmem:[#allocation10 + $0x268] sm:$0xff]
    %v242 = vld [vmem:[#allocation10 + $0x270] sm:$0xff]
    %v243 = vld [vmem:[#allocation10 + $0x278] sm:$0xff]
    %v244 = vld [vmem:[#allocation10 + $0x280] sm:$0xff]
    %v245 = vld [vmem:[#allocation10 + $0x288] sm:$0xff]
    %v246 = vld [vmem:[#allocation10 + $0x290] sm:$0xff]
    %v247 = vld [vmem:[#allocation10 + $0x298] sm:$0xff]
    %v248 = vld [vmem:[#allocation10 + $0x2a0] sm:$0xff]
    %v249 = vld [vmem:[#allocation10 + $0x2a8] sm:$0xff]
    %v250 = vld [vmem:[#allocation10 + $0x2b0] sm:$0xff]
    %v251 = vld [vmem:[#allocation10 + $0x2b8] sm:$0xff]
    %v252 = vld [vmem:[#allocation10 + $0x2c0] sm:$0xff]
    %v253 = vld [vmem:[#allocation10 + $0x2c8] sm:$0xff]
    %v254 = vld [vmem:[#allocation10 + $0x2d0] sm:$0xff]
    %v255 = vld [vmem:[#allocation10 + $0x2d8] sm:$0xff]
    %v256 = vld [vmem:[#allocation10 + $0x2e0] sm:$0xff]
    %v257 = vld [vmem:[#allocation10 + $0x2e8] sm:$0xff]
    %v258 = vld [vmem:[#allocation10 + $0x2f0] sm:$0xff]
    %v259 = vld [vmem:[#allocation10 + $0x2f8] sm:$0xff]
    %v260 = vld [vmem:[#allocation10 + $0x300] sm:$0xff]
    %v261 = vld [vmem:[#allocation10 + $0x308] sm:$0xff]
    %v262 = vld [vmem:[#allocation10 + $0x310] sm:$0xff]
    %v263 = vld [vmem:[#allocation10 + $0x318] sm:$0xff]
    %v264 = vld [vmem:[#allocation10 + $0x320] sm:$0xff]
    %v265 = vld [vmem:[#allocation10 + $0x328] sm:$0xff]
    %v266 = vld [vmem:[#allocation10 + $0x330] sm:$0xff]
    %v267 = vld [vmem:[#allocation10 + $0x338] sm:$0xff]
    %v268 = vld [vmem:[#allocation10 + $0x340] sm:$0xff]
    %v269 = vld [vmem:[#allocation10 + $0x348] sm:$0xff]
    %v270 = vld [vmem:[#allocation10 + $0x350] sm:$0xff]
    %v271 = vld [vmem:[#allocation10 + $0x358] sm:$0xff]
    %v272 = vld [vmem:[#allocation10 + $0x360] sm:$0xff]
    %v273 = vld [vmem:[#allocation10 + $0x368] sm:$0xff]
    %v274 = vld [vmem:[#allocation10 + $0x370] sm:$0xff]
    %v275 = vld [vmem:[#allocation10 + $0x378] sm:$0xff]
    %v276 = vld [vmem:[#allocation10 + $0x380] sm:$0xff]
    %v277 = vld [vmem:[#allocation10 + $0x388] sm:$0xff]
    %v278 = vld [vmem:[#allocation10 + $0x390] sm:$0xff]
    %v279 = vld [vmem:[#allocation10 + $0x398] sm:$0xff]
    %v280 = vld [vmem:[#allocation10 + $0x3a0] sm:$0xff]
    %v281 = vld [vmem:[#allocation10 + $0x3a8] sm:$0xff]
    %v282 = vld [vmem:[#allocation10 + $0x3b0] sm:$0xff]
    %v283 = vld [vmem:[#allocation10 + $0x3b8] sm:$0xff]
    %v284 = vld [vmem:[#allocation10 + $0x3c0] sm:$0xff]
    %v285 = vld [vmem:[#allocation10 + $0x3c8] sm:$0xff]
    %v286 = vld [vmem:[#allocation10 + $0x3d0] sm:$0xff]
    %v287 = vld [vmem:[#allocation10 + $0x3d8] sm:$0xff]
    %v288 = vld [vmem:[#allocation10 + $0x3e0] sm:$0xff]
    %v289 = vld [vmem:[#allocation10 + $0x3e8] sm:$0xff]
    %v290 = vld [vmem:[#allocation10 + $0x3f0] sm:$0xff]
    %v291 = vld [vmem:[#allocation10 + $0x3f8] sm:$0xff]
    %v292 = vld [vmem:[#allocation10 + $0x400] sm:$0xff]
    %v293 = vld [vmem:[#allocation10 + $0x408] sm:$0xff]
    %v294 = vld [vmem:[#allocation10 + $0x410] sm:$0xff]
    %v295 = vld [vmem:[#allocation10 + $0x418] sm:$0xff]
    %v296 = vld [vmem:[#allocation10 + $0x420] sm:$0xff]
    %v297 = vld [vmem:[#allocation10 + $0x428] sm:$0xff]
    %v298 = vld [vmem:[#allocation10 + $0x430] sm:$0xff]
    %v299 = vld [vmem:[#allocation10 + $0x438] sm:$0xff]
    %v300 = vld [vmem:[#allocation10 + $0x440] sm:$0xff]
    %v301 = vld [vmem:[#allocation10 + $0x448] sm:$0xff]
    %v302 = vld [vmem:[#allocation10 + $0x450] sm:$0xff]
    %v303 = vld [vmem:[#allocation10 + $0x458] sm:$0xff]
    %v304 = vld [vmem:[#allocation10 + $0x460] sm:$0xff]
    %v305 = vld [vmem:[#allocation10 + $0x468] sm:$0xff]
    %v306 = vld [vmem:[#allocation10 + $0x470] sm:$0xff]
    %v307 = vld [vmem:[#allocation10 + $0x478] sm:$0xff]
    %v308 = vld [vmem:[#allocation10 + $0x480] sm:$0xff]
    %v309 = vld [vmem:[#allocation10 + $0x488] sm:$0xff]
    %v310 = vld [vmem:[#allocation10 + $0x490] sm:$0xff]
    %v311 = vld [vmem:[#allocation10 + $0x498] sm:$0xff]
    %v312 = vld [vmem:[#allocation10 + $0x4a0] sm:$0xff]
    %v313 = vld [vmem:[#allocation10 + $0x4a8] sm:$0xff]
    %v314 = vld [vmem:[#allocation10 + $0x4b0] sm:$0xff]
    %v315 = vld [vmem:[#allocation10 + $0x4b8] sm:$0xff]
    %v316 = vld [vmem:[#allocation10 + $0x4c0] sm:$0xff]
    %v317 = vld [vmem:[#allocation10 + $0x4c8] sm:$0xff]
    %v318 = vld [vmem:[#allocation10 + $0x4d0] sm:$0xff]
    %v319 = vld [vmem:[#allocation10 + $0x4d8] sm:$0xff]
    %v320 = vld [vmem:[#allocation10 + $0x4e0] sm:$0xff]
    %v321 = vld [vmem:[#allocation10 + $0x4e8] sm:$0xff]
    %v322 = vld [vmem:[#allocation10 + $0x4f0] sm:$0xff]
    %v323 = vld [vmem:[#allocation10 + $0x4f8] sm:$0xff]
    %v324 = vld [vmem:[#allocation10 + $0x500] sm:$0xff]
    %v325 = vld [vmem:[#allocation10 + $0x508] sm:$0xff]
    %v326 = vld [vmem:[#allocation10 + $0x510] sm:$0xff]
    %v327 = vld [vmem:[#allocation10 + $0x518] sm:$0xff]
    %v328 = vld [vmem:[#allocation10 + $0x520] sm:$0xff]
    %v329 = vld [vmem:[#allocation10 + $0x528] sm:$0xff]
    %v330 = vld [vmem:[#allocation10 + $0x530] sm:$0xff]
    %v331 = vld [vmem:[#allocation10 + $0x538] sm:$0xff]
    %v332 = vld [vmem:[#allocation10 + $0x540] sm:$0xff]
    %v333 = vld [vmem:[#allocation10 + $0x548] sm:$0xff]
    %v334 = vld [vmem:[#allocation10 + $0x550] sm:$0xff]
    %v335 = vld [vmem:[#allocation10 + $0x558] sm:$0xff]
    %v336 = vld [vmem:[#allocation10 + $0x560] sm:$0xff]
    %v337 = vld [vmem:[#allocation10 + $0x568] sm:$0xff]
    %v338 = vld [vmem:[#allocation10 + $0x570] sm:$0xff]
    %v339 = vld [vmem:[#allocation10 + $0x578] sm:$0xff]
    %v340 = vld [vmem:[#allocation10 + $0x580] sm:$0xff]
    %v341 = vld [vmem:[#allocation10 + $0x588] sm:$0xff]
    %v342 = vld [vmem:[#allocation10 + $0x590] sm:$0xff]
    %v343 = vld [vmem:[#allocation10 + $0x598] sm:$0xff]
    %v344 = vld [vmem:[#allocation10 + $0x5a0] sm:$0xff]
    %v345 = vld [vmem:[#allocation10 + $0x5a8] sm:$0xff]
    %v346 = vld [vmem:[#allocation10 + $0x5b0] sm:$0xff]
    %v347 = vld [vmem:[#allocation10 + $0x5b8] sm:$0xff]
    %v348 = vld [vmem:[#allocation10 + $0x5c0] sm:$0xff]
    %v349 = vld [vmem:[#allocation10 + $0x5c8] sm:$0xff]
    %v350 = vld [vmem:[#allocation10 + $0x5d0] sm:$0xff]
    %v351 = vld [vmem:[#allocation10 + $0x5d8] sm:$0xff]
    %v352 = vld [vmem:[#allocation10 + $0x5e0] sm:$0xff]
    %v353 = vld [vmem:[#allocation10 + $0x5e8] sm:$0xff]
    %v354 = vld [vmem:[#allocation10 + $0x5f0] sm:$0xff]
    %v355 = vld [vmem:[#allocation10 + $0x5f8] sm:$0xff]
    %v356 = vld [vmem:[#allocation10 + $0x600] sm:$0xff]
    %v357 = vld [vmem:[#allocation10 + $0x608] sm:$0xff]
    %v358 = vld [vmem:[#allocation10 + $0x610] sm:$0xff]
    %v359 = vld [vmem:[#allocation10 + $0x618] sm:$0xff]
    %v360 = vld [vmem:[#allocation10 + $0x620] sm:$0xff]
    %v361 = vld [vmem:[#allocation10 + $0x628] sm:$0xff]
    %v362 = vld [vmem:[#allocation10 + $0x630] sm:$0xff]
    %v363 = vld [vmem:[#allocation10 + $0x638] sm:$0xff]
    %v364 = vld [vmem:[#allocation10 + $0x640] sm:$0xff]
    %v365 = vld [vmem:[#allocation10 + $0x648] sm:$0xff]
    %v366 = vld [vmem:[#allocation10 + $0x650] sm:$0xff]
    %v367 = vld [vmem:[#allocation10 + $0x658] sm:$0xff]
    %v368 = vld [vmem:[#allocation10 + $0x660] sm:$0xff]
    %v369 = vld [vmem:[#allocation10 + $0x668] sm:$0xff]
    %v370 = vld [vmem:[#allocation10 + $0x670] sm:$0xff]
    %v371 = vld [vmem:[#allocation10 + $0x678] sm:$0xff]
    %v372 = vld [vmem:[#allocation10 + $0x680] sm:$0xff]
    %v373 = vld [vmem:[#allocation10 + $0x688] sm:$0xff]
    %v374 = vld [vmem:[#allocation10 + $0x690] sm:$0xff]
    %v375 = vld [vmem:[#allocation10 + $0x698] sm:$0xff]
    %v376 = vld [vmem:[#allocation10 + $0x6a0] sm:$0xff]
    %v377 = vld [vmem:[#allocation10 + $0x6a8] sm:$0xff]
    %v378 = vld [vmem:[#allocation10 + $0x6b0] sm:$0xff]
    %v379 = vld [vmem:[#allocation10 + $0x6b8] sm:$0xff]
    %v380 = vld [vmem:[#allocation10 + $0x6c0] sm:$0xff]
    %v381 = vld [vmem:[#allocation10 + $0x6c8] sm:$0xff]
    %v382 = vld [vmem:[#allocation10 + $0x6d0] sm:$0xff]
    %v383 = vld [vmem:[#allocation10 + $0x6d8] sm:$0xff]
    %v384 = vld [vmem:[#allocation10 + $0x6e0] sm:$0xff]
    %v385 = vld [vmem:[#allocation10 + $0x6e8] sm:$0xff]
    %v386 = vld [vmem:[#allocation10 + $0x6f0] sm:$0xff]
    %v387 = vld [vmem:[#allocation10 + $0x6f8] sm:$0xff]
    %v388 = vld [vmem:[#allocation10 + $0x700] sm:$0xff]
    %v389 = vld [vmem:[#allocation10 + $0x708] sm:$0xff]
    %v390 = vld [vmem:[#allocation10 + $0x710] sm:$0xff]
    %v391 = vld [vmem:[#allocation10 + $0x718] sm:$0xff]
    %v392 = vld [vmem:[#allocation10 + $0x720] sm:$0xff]
    %v393 = vld [vmem:[#allocation10 + $0x728] sm:$0xff]
    %v394 = vld [vmem:[#allocation10 + $0x730] sm:$0xff]
    %v395 = vld [vmem:[#allocation10 + $0x738] sm:$0xff]
    %v396 = vld [vmem:[#allocation10 + $0x740] sm:$0xff]
    %v397 = vld [vmem:[#allocation10 + $0x748] sm:$0xff]
    %v398 = vld [vmem:[#allocation10 + $0x750] sm:$0xff]
    %v399 = vld [vmem:[#allocation10 + $0x758] sm:$0xff]
    %v400 = vld [vmem:[#allocation10 + $0x760] sm:$0xff]
    %v401 = vld [vmem:[#allocation10 + $0x768] sm:$0xff]
    %v402 = vld [vmem:[#allocation10 + $0x770] sm:$0xff]
    %v403 = vld [vmem:[#allocation10 + $0x778] sm:$0xff]
    %v404 = vld [vmem:[#allocation10 + $0x780] sm:$0xff]
    %v405 = vld [vmem:[#allocation10 + $0x788] sm:$0xff]
    %v406 = vld [vmem:[#allocation10 + $0x790] sm:$0xff]
    %v407 = vld [vmem:[#allocation10 + $0x798] sm:$0xff]
    %v408 = vld [vmem:[#allocation10 + $0x7a0] sm:$0xff]
    %v409 = vld [vmem:[#allocation10 + $0x7a8] sm:$0xff]
    %v410 = vld [vmem:[#allocation10 + $0x7b0] sm:$0xff]
    %v411 = vld [vmem:[#allocation10 + $0x7b8] sm:$0xff]
    %v412 = vld [vmem:[#allocation10 + $0x7c0] sm:$0xff]
    %v413 = vld [vmem:[#allocation10 + $0x7c8] sm:$0xff]
    %v414 = vld [vmem:[#allocation10 + $0x7d0] sm:$0xff]
    %v415 = vld [vmem:[#allocation10 + $0x7d8] sm:$0xff]
    %v416 = vld [vmem:[#allocation10 + $0x7e0] sm:$0xff]
    %v417 = vld [vmem:[#allocation10 + $0x7e8] sm:$0xff]
    %v418 = vld [vmem:[#allocation10 + $0x7f0] sm:$0xff]
    %v419 = vld [vmem:[#allocation10 + $0x7f8] sm:$0xff]
    %v420 = vld [vmem:[#allocation10 + $0x800] sm:$0xff]
    %v421 = vld [vmem:[#allocation10 + $0x808] sm:$0xff]
    %v422 = vld [vmem:[#allocation10 + $0x810] sm:$0xff]
    %v423 = vld [vmem:[#allocation10 + $0x818] sm:$0xff]
    %v424 = vld [vmem:[#allocation10 + $0x820] sm:$0xff]
    %v425 = vld [vmem:[#allocation10 + $0x828] sm:$0xff]
    %v426 = vld [vmem:[#allocation10 + $0x830] sm:$0xff]
    %v427 = vld [vmem:[#allocation10 + $0x838] sm:$0xff]
    %v428 = vld [vmem:[#allocation10 + $0x840] sm:$0xff]
    %v429 = vld [vmem:[#allocation10 + $0x848] sm:$0xff]
    %v430 = vld [vmem:[#allocation10 + $0x850] sm:$0xff]
    %v431 = vld [vmem:[#allocation10 + $0x858] sm:$0xff]
    %v432 = vld [vmem:[#allocation10 + $0x860] sm:$0xff]
    %v433 = vld [vmem:[#allocation10 + $0x868] sm:$0xff]
    %v434 = vld [vmem:[#allocation10 + $0x870] sm:$0xff]
    %v435 = vld [vmem:[#allocation10 + $0x878] sm:$0xff]
    %v436 = vld [vmem:[#allocation10 + $0x880] sm:$0xff]
    %v437 = vld [vmem:[#allocation10 + $0x888] sm:$0xff]
    %v438 = vld [vmem:[#allocation10 + $0x890] sm:$0xff]
    %v439 = vld [vmem:[#allocation10 + $0x898] sm:$0xff]
    %v440 = vld [vmem:[#allocation10 + $0x8a0] sm:$0xff]
    %v441 = vld [vmem:[#allocation10 + $0x8a8] sm:$0xff]
    %v442 = vld [vmem:[#allocation10 + $0x8b0] sm:$0xff]
    %v443 = vld [vmem:[#allocation10 + $0x8b8] sm:$0xff]
    %v444 = vld [vmem:[#allocation10 + $0x8c0] sm:$0xff]
    %v445 = vld [vmem:[#allocation10 + $0x8c8] sm:$0xff]
    %v446 = vld [vmem:[#allocation10 + $0x8d0] sm:$0xff]
    %v447 = vld [vmem:[#allocation10 + $0x8d8] sm:$0xff]
    %v448 = vld [vmem:[#allocation10 + $0x8e0] sm:$0xff]
    %v449 = vld [vmem:[#allocation10 + $0x8e8] sm:$0xff]
    %v450 = vld [vmem:[#allocation10 + $0x8f0] sm:$0xff]
    %v451 = vld [vmem:[#allocation10 + $0x8f8] sm:$0xff]
    %v452 = vld [vmem:[#allocation10 + $0x900] sm:$0xff]
    %v453 = vld [vmem:[#allocation10 + $0x908] sm:$0xff]
    %v454 = vld [vmem:[#allocation10 + $0x910] sm:$0xff]
    %v455 = vld [vmem:[#allocation10 + $0x918] sm:$0xff]
    %v456 = vld [vmem:[#allocation10 + $0x920] sm:$0xff]
    %v457 = vld [vmem:[#allocation10 + $0x928] sm:$0xff]
    %v458 = vld [vmem:[#allocation10 + $0x930] sm:$0xff]
    %v459 = vld [vmem:[#allocation10 + $0x938] sm:$0xff]
    %v460 = vld [vmem:[#allocation10 + $0x940] sm:$0xff]
    %v461 = vld [vmem:[#allocation10 + $0x948] sm:$0xff]
    %v462 = vld [vmem:[#allocation10 + $0x950] sm:$0xff]
    %v463 = vld [vmem:[#allocation10 + $0x958] sm:$0xff]
    %v464 = vld [vmem:[#allocation10 + $0x960] sm:$0xff]
    %v465 = vld [vmem:[#allocation10 + $0x968] sm:$0xff]
    %v466 = vld [vmem:[#allocation10 + $0x970] sm:$0xff]
    %v467 = vld [vmem:[#allocation10 + $0x978] sm:$0xff]
    %v468 = vld [vmem:[#allocation10 + $0x980] sm:$0xff]
    %v469 = vld [vmem:[#allocation10 + $0x988] sm:$0xff]
    %v470 = vld [vmem:[#allocation10 + $0x990] sm:$0xff]
    %v471 = vld [vmem:[#allocation10 + $0x998] sm:$0xff]
    %v472 = vld [vmem:[#allocation10 + $0x9a0] sm:$0xff]
    %v473 = vld [vmem:[#allocation10 + $0x9a8] sm:$0xff]
    %v474 = vld [vmem:[#allocation10 + $0x9b0] sm:$0xff]
    %v475 = vld [vmem:[#allocation10 + $0x9b8] sm:$0xff]
    %v476 = vld [vmem:[#allocation10 + $0x9c0] sm:$0xff]
    %v477 = vld [vmem:[#allocation10 + $0x9c8] sm:$0xff]
    %v478 = vld [vmem:[#allocation10 + $0x9d0] sm:$0xff]
    %v479 = vld [vmem:[#allocation10 + $0x9d8] sm:$0xff]
    %v480 = vld [vmem:[#allocation10 + $0x9e0] sm:$0xff]
    %v481 = vld [vmem:[#allocation10 + $0x9e8] sm:$0xff]
    %v482 = vld [vmem:[#allocation10 + $0x9f0] sm:$0xff]
    %v483 = vld [vmem:[#allocation10 + $0x9f8] sm:$0xff]
    %v484 = vld [vmem:[#allocation10 + $0xa00] sm:$0xff]
    %v485 = vld [vmem:[#allocation10 + $0xa08] sm:$0xff]
    %v486 = vld [vmem:[#allocation10 + $0xa10] sm:$0xff]
    %v487 = vld [vmem:[#allocation10 + $0xa18] sm:$0xff]
    %v488 = vld [vmem:[#allocation10 + $0xa20] sm:$0xff]
    %v489 = vld [vmem:[#allocation10 + $0xa28] sm:$0xff]
    %v490 = vld [vmem:[#allocation10 + $0xa30] sm:$0xff]
    %v491 = vld [vmem:[#allocation10 + $0xa38] sm:$0xff]
    %v492 = vld [vmem:[#allocation10 + $0xa40] sm:$0xff]
    %v493 = vld [vmem:[#allocation10 + $0xa48] sm:$0xff]
    %v494 = vld [vmem:[#allocation10 + $0xa50] sm:$0xff]
    %v495 = vld [vmem:[#allocation10 + $0xa58] sm:$0xff]
    %v496 = vld [vmem:[#allocation10 + $0xa60] sm:$0xff]
    %v497 = vld [vmem:[#allocation10 + $0xa68] sm:$0xff]
    %v498 = vld [vmem:[#allocation10 + $0xa70] sm:$0xff]
    %v499 = vld [vmem:[#allocation10 + $0xa78] sm:$0xff]
    %v500 = vld [vmem:[#allocation10 + $0xa80] sm:$0xff]
    %v501 = vld [vmem:[#allocation10 + $0xa88] sm:$0xff]
    %v502 = vld [vmem:[#allocation10 + $0xa90] sm:$0xff]
    %v503 = vld [vmem:[#allocation10 + $0xa98] sm:$0xff]
    %v504 = vld [vmem:[#allocation10 + $0xaa0] sm:$0xff]
    %v505 = vld [vmem:[#allocation10 + $0xaa8] sm:$0xff]
    %v506 = vld [vmem:[#allocation10 + $0xab0] sm:$0xff]
    %v507 = vld [vmem:[#allocation10 + $0xab8] sm:$0xff]
    %v508 = vld [vmem:[#allocation10 + $0xac0] sm:$0xff]
    %v509 = vld [vmem:[#allocation10 + $0xac8] sm:$0xff]
    %v510 = vld [vmem:[#allocation10 + $0xad0] sm:$0xff]
    %v511 = vld [vmem:[#allocation10 + $0xad8] sm:$0xff]
    %v512 = vld [vmem:[#allocation10 + $0xae0] sm:$0xff]
    %v513 = vld [vmem:[#allocation10 + $0xae8] sm:$0xff]
    %v514 = vld [vmem:[#allocation10 + $0xaf0] sm:$0xff]
    %v515 = vld [vmem:[#allocation10 + $0xaf8] sm:$0xff]
    %v516 = vld [vmem:[#allocation10 + $0xb00] sm:$0xff]
    %v517 = vld [vmem:[#allocation10 + $0xb08] sm:$0xff]
    %v518 = vld [vmem:[#allocation10 + $0xb10] sm:$0xff]
    %v519 = vld [vmem:[#allocation10 + $0xb18] sm:$0xff]
    %v520 = vld [vmem:[#allocation10 + $0xb20] sm:$0xff]
    %v521 = vld [vmem:[#allocation10 + $0xb28] sm:$0xff]
    %v522 = vld [vmem:[#allocation10 + $0xb30] sm:$0xff]
    %v523 = vld [vmem:[#allocation10 + $0xb38] sm:$0xff]
    %v524 = vld [vmem:[#allocation10 + $0xb40] sm:$0xff]
    %v525 = vld [vmem:[#allocation10 + $0xb48] sm:$0xff]
    %v526 = vld [vmem:[#allocation10 + $0xb50] sm:$0xff]
    %v527 = vld [vmem:[#allocation10 + $0xb58] sm:$0xff]
    %v528 = vld [vmem:[#allocation10 + $0xb60] sm:$0xff]
    %v529 = vld [vmem:[#allocation10 + $0xb68] sm:$0xff]
    %v530 = vld [vmem:[#allocation10 + $0xb70] sm:$0xff]
    %v531 = vld [vmem:[#allocation10 + $0xb78] sm:$0xff]
    %v532 = vld [vmem:[#allocation10 + $0xb80] sm:$0xff]
    %v533 = vld [vmem:[#allocation10 + $0xb88] sm:$0xff]
    %v534 = vld [vmem:[#allocation10 + $0xb90] sm:$0xff]
    %v535 = vld [vmem:[#allocation10 + $0xb98] sm:$0xff]
    %v536 = vld [vmem:[#allocation10 + $0xba0] sm:$0xff]
    %v537 = vld [vmem:[#allocation10 + $0xba8] sm:$0xff]
    %v538 = vld [vmem:[#allocation10 + $0xbb0] sm:$0xff]
    %v539 = vld [vmem:[#allocation10 + $0xbb8] sm:$0xff]
    %v540 = vld [vmem:[#allocation10 + $0xbc0] sm:$0xff]
    %v541 = vld [vmem:[#allocation10 + $0xbc8] sm:$0xff]
    %v542 = vld [vmem:[#allocation10 + $0xbd0] sm:$0xff]
    %v543 = vld [vmem:[#allocation10 + $0xbd8] sm:$0xff]
    %v544 = vld [vmem:[#allocation10 + $0xbe0] sm:$0xff]
    %v545 = vld [vmem:[#allocation10 + $0xbe8] sm:$0xff]
    %v546 = vld [vmem:[#allocation10 + $0xbf0] sm:$0xff]
    %v547 = vld [vmem:[#allocation10 + $0xbf8] sm:$0xff]
    %v548 = vld [vmem:[#allocation2] sm:$0xff]
    %v549 = vld [vmem:[#allocation2 + $0x8] sm:$0xff]
    %v550 = vld [vmem:[#allocation2 + $0x10] sm:$0xff]
    %v551 = vld [vmem:[#allocation2 + $0x18] sm:$0xff]
    %v552 = vld [vmem:[#allocation2 + $0x20] sm:$0xff]
    %v553 = vld [vmem:[#allocation2 + $0x28] sm:$0xff]
    %v554 = vld [vmem:[#allocation5] sm:$0xff]
    %v555 = vld [vmem:[#allocation5 + $0x8] sm:$0xff]
    %v556 = vld [vmem:[#allocation5 + $0x10] sm:$0xff]
    %v557 = vld [vmem:[#allocation5 + $0x18] sm:$0xff]
    %v558 = vld [vmem:[#allocation5 + $0x20] sm:$0xff]
    %v559 = vld [vmem:[#allocation5 + $0x28] sm:$0xff]
    %v560 = vld [vmem:[#allocation5 + $0x30] sm:$0xff]
    %v561 = vld [vmem:[#allocation5 + $0x38] sm:$0xff]
    %v562 = vpack.c.bf16 %v554, %v554
    %v563 = vpack.c.bf16 %v555, %v555
    %v564 = vpack.c.bf16 %v556, %v556
    %v565 = vpack.c.bf16 %v557, %v557
    %v566 = vpack.c.bf16 %v558, %v558
    %v567 = vpack.c.bf16 %v559, %v559
    %v568 = vpack.c.bf16 %v560, %v560
    %v569 = vpack.c.bf16 %v561, %v561
    %v954 = vunpack.c.l.b16 %v164
    %v955 = vunpack.c.h.b16 %v164
    %v956 = vunpack.c.l.b16 %v165
    %v957 = vunpack.c.h.b16 %v165
    %v958 = vunpack.c.l.b16 %v166
    %v959 = vunpack.c.h.b16 %v166
    %v960 = vunpack.c.l.b16 %v167
    %v961 = vunpack.c.h.b16 %v167
    %v962 = vunpack.c.l.b16 %v168
    %v963 = vunpack.c.h.b16 %v168
    %v964 = vunpack.c.l.b16 %v169
    %v965 = vunpack.c.h.b16 %v169
    %v966 = vunpack.c.l.b16 %v170
    %v967 = vunpack.c.h.b16 %v170
    %v968 = vunpack.c.l.b16 %v171
    %v969 = vunpack.c.h.b16 %v171
    %v970 = vunpack.c.l.b16 %v172
    %v971 = vunpack.c.h.b16 %v172
    %v972 = vunpack.c.l.b16 %v173
    %v973 = vunpack.c.h.b16 %v173
    %v974 = vunpack.c.l.b16 %v174
    %v975 = vunpack.c.h.b16 %v174
    %v976 = vunpack.c.l.b16 %v175
    %v977 = vunpack.c.h.b16 %v175
    %v978 = vunpack.c.l.b16 %v176
    %v979 = vunpack.c.h.b16 %v176
    %v980 = vunpack.c.l.b16 %v177
    %v981 = vunpack.c.h.b16 %v177
    %v982 = vunpack.c.l.b16 %v178
    %v983 = vunpack.c.h.b16 %v178
    %v984 = vunpack.c.l.b16 %v179
    %v985 = vunpack.c.h.b16 %v179
    %v986 = vunpack.c.l.b16 %v180
    %v987 = vunpack.c.h.b16 %v180
    %v988 = vunpack.c.l.b16 %v181
    %v989 = vunpack.c.h.b16 %v181
    %v990 = vunpack.c.l.b16 %v182
    %v991 = vunpack.c.h.b16 %v182
    %v992 = vunpack.c.l.b16 %v183
    %v993 = vunpack.c.h.b16 %v183
    %v994 = vunpack.c.l.b16 %v184
    %v995 = vunpack.c.h.b16 %v184
    %v996 = vunpack.c.l.b16 %v185
    %v997 = vunpack.c.h.b16 %v185
    %v998 = vunpack.c.l.b16 %v186
    %v999 = vunpack.c.h.b16 %v186
    %v1000 = vunpack.c.l.b16 %v187
    %v1001 = vunpack.c.h.b16 %v187
    %v1002 = vunpack.c.l.b16 %v188
    %v1003 = vunpack.c.h.b16 %v188
    %v1004 = vunpack.c.l.b16 %v189
    %v1005 = vunpack.c.h.b16 %v189
    %v1006 = vunpack.c.l.b16 %v190
    %v1007 = vunpack.c.h.b16 %v190
    %v1008 = vunpack.c.l.b16 %v191
    %v1009 = vunpack.c.h.b16 %v191
    %v1010 = vunpack.c.l.b16 %v192
    %v1011 = vunpack.c.h.b16 %v192
    %v1012 = vunpack.c.l.b16 %v193
    %v1013 = vunpack.c.h.b16 %v193
    %v1014 = vunpack.c.l.b16 %v194
    %v1015 = vunpack.c.h.b16 %v194
    %v1016 = vunpack.c.l.b16 %v195
    %v1017 = vunpack.c.h.b16 %v195
    %v1018 = vunpack.c.l.b16 %v196
    %v1019 = vunpack.c.h.b16 %v196
    %v1020 = vunpack.c.l.b16 %v197
    %v1021 = vunpack.c.h.b16 %v197
    %v1022 = vunpack.c.l.b16 %v198
    %v1023 = vunpack.c.h.b16 %v198
    %v1024 = vunpack.c.l.b16 %v199
    %v1025 = vunpack.c.h.b16 %v199
    %v1026 = vunpack.c.l.b16 %v200
    %v1027 = vunpack.c.h.b16 %v200
    %v1028 = vunpack.c.l.b16 %v201
    %v1029 = vunpack.c.h.b16 %v201
    %v1030 = vunpack.c.l.b16 %v202
    %v1031 = vunpack.c.h.b16 %v202
    %v1032 = vunpack.c.l.b16 %v203
    %v1033 = vunpack.c.h.b16 %v203
    %v1034 = vunpack.c.l.b16 %v204
    %v1035 = vunpack.c.h.b16 %v204
    %v1036 = vunpack.c.l.b16 %v205
    %v1037 = vunpack.c.h.b16 %v205
    %v1038 = vunpack.c.l.b16 %v206
    %v1039 = vunpack.c.h.b16 %v206
    %v1040 = vunpack.c.l.b16 %v207
    %v1041 = vunpack.c.h.b16 %v207
    %v1042 = vunpack.c.l.b16 %v208
    %v1043 = vunpack.c.h.b16 %v208
    %v1044 = vunpack.c.l.b16 %v209
    %v1045 = vunpack.c.h.b16 %v209
    %v1046 = vunpack.c.l.b16 %v210
    %v1047 = vunpack.c.h.b16 %v210
    %v1048 = vunpack.c.l.b16 %v211
    %v1049 = vunpack.c.h.b16 %v211
    %v1050 = vunpack.c.l.b16 %v212
    %v1051 = vunpack.c.h.b16 %v212
    %v1052 = vunpack.c.l.b16 %v213
    %v1053 = vunpack.c.h.b16 %v213
    %v1054 = vunpack.c.l.b16 %v214
    %v1055 = vunpack.c.h.b16 %v214
    %v1056 = vunpack.c.l.b16 %v215
    %v1057 = vunpack.c.h.b16 %v215
    %v1058 = vunpack.c.l.b16 %v216
    %v1059 = vunpack.c.h.b16 %v216
    %v1060 = vunpack.c.l.b16 %v217
    %v1061 = vunpack.c.h.b16 %v217
    %v1062 = vunpack.c.l.b16 %v218
    %v1063 = vunpack.c.h.b16 %v218
    %v1064 = vunpack.c.l.b16 %v219
    %v1065 = vunpack.c.h.b16 %v219
    %v1066 = vunpack.c.l.b16 %v220
    %v1067 = vunpack.c.h.b16 %v220
    %v1068 = vunpack.c.l.b16 %v221
    %v1069 = vunpack.c.h.b16 %v221
    %v1070 = vunpack.c.l.b16 %v222
    %v1071 = vunpack.c.h.b16 %v222
    %v1072 = vunpack.c.l.b16 %v223
    %v1073 = vunpack.c.h.b16 %v223
    %v1074 = vunpack.c.l.b16 %v224
    %v1075 = vunpack.c.h.b16 %v224
    %v1076 = vunpack.c.l.b16 %v225
    %v1077 = vunpack.c.h.b16 %v225
    %v1078 = vunpack.c.l.b16 %v226
    %v1079 = vunpack.c.h.b16 %v226
    %v1080 = vunpack.c.l.b16 %v227
    %v1081 = vunpack.c.h.b16 %v227
    %v1082 = vunpack.c.l.b16 %v228
    %v1083 = vunpack.c.h.b16 %v228
    %v1084 = vunpack.c.l.b16 %v229
    %v1085 = vunpack.c.h.b16 %v229
    %v1086 = vunpack.c.l.b16 %v230
    %v1087 = vunpack.c.h.b16 %v230
    %v1088 = vunpack.c.l.b16 %v231
    %v1089 = vunpack.c.h.b16 %v231
    %v1090 = vunpack.c.l.b16 %v232
    %v1091 = vunpack.c.h.b16 %v232
    %v1092 = vunpack.c.l.b16 %v233
    %v1093 = vunpack.c.h.b16 %v233
    %v1094 = vunpack.c.l.b16 %v234
    %v1095 = vunpack.c.h.b16 %v234
    %v1096 = vunpack.c.l.b16 %v235
    %v1097 = vunpack.c.h.b16 %v235
    %v1098 = vunpack.c.l.b16 %v236
    %v1099 = vunpack.c.h.b16 %v236
    %v1100 = vunpack.c.l.b16 %v237
    %v1101 = vunpack.c.h.b16 %v237
    %v1102 = vunpack.c.l.b16 %v238
    %v1103 = vunpack.c.h.b16 %v238
    %v1104 = vunpack.c.l.b16 %v239
    %v1105 = vunpack.c.h.b16 %v239
    %v1106 = vunpack.c.l.b16 %v240
    %v1107 = vunpack.c.h.b16 %v240
    %v1108 = vunpack.c.l.b16 %v241
    %v1109 = vunpack.c.h.b16 %v241
    %v1110 = vunpack.c.l.b16 %v242
    %v1111 = vunpack.c.h.b16 %v242
    %v1112 = vunpack.c.l.b16 %v243
    %v1113 = vunpack.c.h.b16 %v243
    %v1114 = vunpack.c.l.b16 %v244
    %v1115 = vunpack.c.h.b16 %v244
    %v1116 = vunpack.c.l.b16 %v245
    %v1117 = vunpack.c.h.b16 %v245
    %v1118 = vunpack.c.l.b16 %v246
    %v1119 = vunpack.c.h.b16 %v246
    %v1120 = vunpack.c.l.b16 %v247
    %v1121 = vunpack.c.h.b16 %v247
    %v1122 = vunpack.c.l.b16 %v248
    %v1123 = vunpack.c.h.b16 %v248
    %v1124 = vunpack.c.l.b16 %v249
    %v1125 = vunpack.c.h.b16 %v249
    %v1126 = vunpack.c.l.b16 %v250
    %v1127 = vunpack.c.h.b16 %v250
    %v1128 = vunpack.c.l.b16 %v251
    %v1129 = vunpack.c.h.b16 %v251
    %v1130 = vunpack.c.l.b16 %v252
    %v1131 = vunpack.c.h.b16 %v252
    %v1132 = vunpack.c.l.b16 %v253
    %v1133 = vunpack.c.h.b16 %v253
    %v1134 = vunpack.c.l.b16 %v254
    %v1135 = vunpack.c.h.b16 %v254
    %v1136 = vunpack.c.l.b16 %v255
    %v1137 = vunpack.c.h.b16 %v255
    %v1138 = vunpack.c.l.b16 %v256
    %v1139 = vunpack.c.h.b16 %v256
    %v1140 = vunpack.c.l.b16 %v257
    %v1141 = vunpack.c.h.b16 %v257
    %v1142 = vunpack.c.l.b16 %v258
    %v1143 = vunpack.c.h.b16 %v258
    %v1144 = vunpack.c.l.b16 %v259
    %v1145 = vunpack.c.h.b16 %v259
    %v1146 = vunpack.c.l.b16 %v260
    %v1147 = vunpack.c.h.b16 %v260
    %v1148 = vunpack.c.l.b16 %v261
    %v1149 = vunpack.c.h.b16 %v261
    %v1150 = vunpack.c.l.b16 %v262
    %v1151 = vunpack.c.h.b16 %v262
    %v1152 = vunpack.c.l.b16 %v263
    %v1153 = vunpack.c.h.b16 %v263
    %v1154 = vunpack.c.l.b16 %v264
    %v1155 = vunpack.c.h.b16 %v264
    %v1156 = vunpack.c.l.b16 %v265
    %v1157 = vunpack.c.h.b16 %v265
    %v1158 = vunpack.c.l.b16 %v266
    %v1159 = vunpack.c.h.b16 %v266
    %v1160 = vunpack.c.l.b16 %v267
    %v1161 = vunpack.c.h.b16 %v267
    %v1162 = vunpack.c.l.b16 %v268
    %v1163 = vunpack.c.h.b16 %v268
    %v1164 = vunpack.c.l.b16 %v269
    %v1165 = vunpack.c.h.b16 %v269
    %v1166 = vunpack.c.l.b16 %v270
    %v1167 = vunpack.c.h.b16 %v270
    %v1168 = vunpack.c.l.b16 %v271
    %v1169 = vunpack.c.h.b16 %v271
    %v1170 = vunpack.c.l.b16 %v272
    %v1171 = vunpack.c.h.b16 %v272
    %v1172 = vunpack.c.l.b16 %v273
    %v1173 = vunpack.c.h.b16 %v273
    %v1174 = vunpack.c.l.b16 %v274
    %v1175 = vunpack.c.h.b16 %v274
    %v1176 = vunpack.c.l.b16 %v275
    %v1177 = vunpack.c.h.b16 %v275
    %v1178 = vunpack.c.l.b16 %v276
    %v1179 = vunpack.c.h.b16 %v276
    %v1180 = vunpack.c.l.b16 %v277
    %v1181 = vunpack.c.h.b16 %v277
    %v1182 = vunpack.c.l.b16 %v278
    %v1183 = vunpack.c.h.b16 %v278
    %v1184 = vunpack.c.l.b16 %v279
    %v1185 = vunpack.c.h.b16 %v279
    %v1186 = vunpack.c.l.b16 %v280
    %v1187 = vunpack.c.h.b16 %v280
    %v1188 = vunpack.c.l.b16 %v281
    %v1189 = vunpack.c.h.b16 %v281
    %v1190 = vunpack.c.l.b16 %v282
    %v1191 = vunpack.c.h.b16 %v282
    %v1192 = vunpack.c.l.b16 %v283
    %v1193 = vunpack.c.h.b16 %v283
    %v1194 = vunpack.c.l.b16 %v284
    %v1195 = vunpack.c.h.b16 %v284
    %v1196 = vunpack.c.l.b16 %v285
    %v1197 = vunpack.c.h.b16 %v285
    %v1198 = vunpack.c.l.b16 %v286
    %v1199 = vunpack.c.h.b16 %v286
    %v1200 = vunpack.c.l.b16 %v287
    %v1201 = vunpack.c.h.b16 %v287
    %v1202 = vunpack.c.l.b16 %v288
    %v1203 = vunpack.c.h.b16 %v288
    %v1204 = vunpack.c.l.b16 %v289
    %v1205 = vunpack.c.h.b16 %v289
    %v1206 = vunpack.c.l.b16 %v290
    %v1207 = vunpack.c.h.b16 %v290
    %v1208 = vunpack.c.l.b16 %v291
    %v1209 = vunpack.c.h.b16 %v291
    %v1210 = vunpack.c.l.b16 %v292
    %v1211 = vunpack.c.h.b16 %v292
    %v1212 = vunpack.c.l.b16 %v293
    %v1213 = vunpack.c.h.b16 %v293
    %v1214 = vunpack.c.l.b16 %v294
    %v1215 = vunpack.c.h.b16 %v294
    %v1216 = vunpack.c.l.b16 %v295
    %v1217 = vunpack.c.h.b16 %v295
    %v1218 = vunpack.c.l.b16 %v296
    %v1219 = vunpack.c.h.b16 %v296
    %v1220 = vunpack.c.l.b16 %v297
    %v1221 = vunpack.c.h.b16 %v297
    %v1222 = vunpack.c.l.b16 %v298
    %v1223 = vunpack.c.h.b16 %v298
    %v1224 = vunpack.c.l.b16 %v299
    %v1225 = vunpack.c.h.b16 %v299
    %v1226 = vunpack.c.l.b16 %v300
    %v1227 = vunpack.c.h.b16 %v300
    %v1228 = vunpack.c.l.b16 %v301
    %v1229 = vunpack.c.h.b16 %v301
    %v1230 = vunpack.c.l.b16 %v302
    %v1231 = vunpack.c.h.b16 %v302
    %v1232 = vunpack.c.l.b16 %v303
    %v1233 = vunpack.c.h.b16 %v303
    %v1234 = vunpack.c.l.b16 %v304
    %v1235 = vunpack.c.h.b16 %v304
    %v1236 = vunpack.c.l.b16 %v305
    %v1237 = vunpack.c.h.b16 %v305
    %v1238 = vunpack.c.l.b16 %v306
    %v1239 = vunpack.c.h.b16 %v306
    %v1240 = vunpack.c.l.b16 %v307
    %v1241 = vunpack.c.h.b16 %v307
    %v1242 = vunpack.c.l.b16 %v308
    %v1243 = vunpack.c.h.b16 %v308
    %v1244 = vunpack.c.l.b16 %v309
    %v1245 = vunpack.c.h.b16 %v309
    %v1246 = vunpack.c.l.b16 %v310
    %v1247 = vunpack.c.h.b16 %v310
    %v1248 = vunpack.c.l.b16 %v311
    %v1249 = vunpack.c.h.b16 %v311
    %v1250 = vunpack.c.l.b16 %v312
    %v1251 = vunpack.c.h.b16 %v312
    %v1252 = vunpack.c.l.b16 %v313
    %v1253 = vunpack.c.h.b16 %v313
    %v1254 = vunpack.c.l.b16 %v314
    %v1255 = vunpack.c.h.b16 %v314
    %v1256 = vunpack.c.l.b16 %v315
    %v1257 = vunpack.c.h.b16 %v315
    %v1258 = vunpack.c.l.b16 %v316
    %v1259 = vunpack.c.h.b16 %v316
    %v1260 = vunpack.c.l.b16 %v317
    %v1261 = vunpack.c.h.b16 %v317
    %v1262 = vunpack.c.l.b16 %v318
    %v1263 = vunpack.c.h.b16 %v318
    %v1264 = vunpack.c.l.b16 %v319
    %v1265 = vunpack.c.h.b16 %v319
    %v1266 = vunpack.c.l.b16 %v320
    %v1267 = vunpack.c.h.b16 %v320
    %v1268 = vunpack.c.l.b16 %v321
    %v1269 = vunpack.c.h.b16 %v321
    %v1270 = vunpack.c.l.b16 %v322
    %v1271 = vunpack.c.h.b16 %v322
    %v1272 = vunpack.c.l.b16 %v323
    %v1273 = vunpack.c.h.b16 %v323
    %v1274 = vunpack.c.l.b16 %v324
    %v1275 = vunpack.c.h.b16 %v324
    %v1276 = vunpack.c.l.b16 %v325
    %v1277 = vunpack.c.h.b16 %v325
    %v1278 = vunpack.c.l.b16 %v326
    %v1279 = vunpack.c.h.b16 %v326
    %v1280 = vunpack.c.l.b16 %v327
    %v1281 = vunpack.c.h.b16 %v327
    %v1282 = vunpack.c.l.b16 %v328
    %v1283 = vunpack.c.h.b16 %v328
    %v1284 = vunpack.c.l.b16 %v329
    %v1285 = vunpack.c.h.b16 %v329
    %v1286 = vunpack.c.l.b16 %v330
    %v1287 = vunpack.c.h.b16 %v330
    %v1288 = vunpack.c.l.b16 %v331
    %v1289 = vunpack.c.h.b16 %v331
    %v1290 = vunpack.c.l.b16 %v332
    %v1291 = vunpack.c.h.b16 %v332
    %v1292 = vunpack.c.l.b16 %v333
    %v1293 = vunpack.c.h.b16 %v333
    %v1294 = vunpack.c.l.b16 %v334
    %v1295 = vunpack.c.h.b16 %v334
    %v1296 = vunpack.c.l.b16 %v335
    %v1297 = vunpack.c.h.b16 %v335
    %v1298 = vunpack.c.l.b16 %v336
    %v1299 = vunpack.c.h.b16 %v336
    %v1300 = vunpack.c.l.b16 %v337
    %v1301 = vunpack.c.h.b16 %v337
    %v1302 = vunpack.c.l.b16 %v338
    %v1303 = vunpack.c.h.b16 %v338
    %v1304 = vunpack.c.l.b16 %v339
    %v1305 = vunpack.c.h.b16 %v339
    %v1306 = vunpack.c.l.b16 %v340
    %v1307 = vunpack.c.h.b16 %v340
    %v1308 = vunpack.c.l.b16 %v341
    %v1309 = vunpack.c.h.b16 %v341
    %v1310 = vunpack.c.l.b16 %v342
    %v1311 = vunpack.c.h.b16 %v342
    %v1312 = vunpack.c.l.b16 %v343
    %v1313 = vunpack.c.h.b16 %v343
    %v1314 = vunpack.c.l.b16 %v344
    %v1315 = vunpack.c.h.b16 %v344
    %v1316 = vunpack.c.l.b16 %v345
    %v1317 = vunpack.c.h.b16 %v345
    %v1318 = vunpack.c.l.b16 %v346
    %v1319 = vunpack.c.h.b16 %v346
    %v1320 = vunpack.c.l.b16 %v347
    %v1321 = vunpack.c.h.b16 %v347
    %v1322 = vunpack.c.l.b16 %v348
    %v1323 = vunpack.c.h.b16 %v348
    %v1324 = vunpack.c.l.b16 %v349
    %v1325 = vunpack.c.h.b16 %v349
    %v1326 = vunpack.c.l.b16 %v350
    %v1327 = vunpack.c.h.b16 %v350
    %v1328 = vunpack.c.l.b16 %v351
    %v1329 = vunpack.c.h.b16 %v351
    %v1330 = vunpack.c.l.b16 %v352
    %v1331 = vunpack.c.h.b16 %v352
    %v1332 = vunpack.c.l.b16 %v353
    %v1333 = vunpack.c.h.b16 %v353
    %v1334 = vunpack.c.l.b16 %v354
    %v1335 = vunpack.c.h.b16 %v354
    %v1336 = vunpack.c.l.b16 %v355
    %v1337 = vunpack.c.h.b16 %v355
    %v1338 = vunpack.c.l.b16 %v356
    %v1339 = vunpack.c.h.b16 %v356
    %v1340 = vunpack.c.l.b16 %v357
    %v1341 = vunpack.c.h.b16 %v357
    %v1342 = vunpack.c.l.b16 %v358
    %v1343 = vunpack.c.h.b16 %v358
    %v1344 = vunpack.c.l.b16 %v359
    %v1345 = vunpack.c.h.b16 %v359
    %v1346 = vunpack.c.l.b16 %v360
    %v1347 = vunpack.c.h.b16 %v360
    %v1348 = vunpack.c.l.b16 %v361
    %v1349 = vunpack.c.h.b16 %v361
    %v1350 = vunpack.c.l.b16 %v362
    %v1351 = vunpack.c.h.b16 %v362
    %v1352 = vunpack.c.l.b16 %v363
    %v1353 = vunpack.c.h.b16 %v363
    %v1354 = vunpack.c.l.b16 %v364
    %v1355 = vunpack.c.h.b16 %v364
    %v1356 = vunpack.c.l.b16 %v365
    %v1357 = vunpack.c.h.b16 %v365
    %v1358 = vunpack.c.l.b16 %v366
    %v1359 = vunpack.c.h.b16 %v366
    %v1360 = vunpack.c.l.b16 %v367
    %v1361 = vunpack.c.h.b16 %v367
    %v1362 = vunpack.c.l.b16 %v368
    %v1363 = vunpack.c.h.b16 %v368
    %v1364 = vunpack.c.l.b16 %v369
    %v1365 = vunpack.c.h.b16 %v369
    %v1366 = vunpack.c.l.b16 %v370
    %v1367 = vunpack.c.h.b16 %v370
    %v1368 = vunpack.c.l.b16 %v371
    %v1369 = vunpack.c.h.b16 %v371
    %v1370 = vunpack.c.l.b16 %v372
    %v1371 = vunpack.c.h.b16 %v372
    %v1372 = vunpack.c.l.b16 %v373
    %v1373 = vunpack.c.h.b16 %v373
    %v1374 = vunpack.c.l.b16 %v374
    %v1375 = vunpack.c.h.b16 %v374
    %v1376 = vunpack.c.l.b16 %v375
    %v1377 = vunpack.c.h.b16 %v375
    %v1378 = vunpack.c.l.b16 %v376
    %v1379 = vunpack.c.h.b16 %v376
    %v1380 = vunpack.c.l.b16 %v377
    %v1381 = vunpack.c.h.b16 %v377
    %v1382 = vunpack.c.l.b16 %v378
    %v1383 = vunpack.c.h.b16 %v378
    %v1384 = vunpack.c.l.b16 %v379
    %v1385 = vunpack.c.h.b16 %v379
    %v1386 = vunpack.c.l.b16 %v380
    %v1387 = vunpack.c.h.b16 %v380
    %v1388 = vunpack.c.l.b16 %v381
    %v1389 = vunpack.c.h.b16 %v381
    %v1390 = vunpack.c.l.b16 %v382
    %v1391 = vunpack.c.h.b16 %v382
    %v1392 = vunpack.c.l.b16 %v383
    %v1393 = vunpack.c.h.b16 %v383
    %v1394 = vunpack.c.l.b16 %v384
    %v1395 = vunpack.c.h.b16 %v384
    %v1396 = vunpack.c.l.b16 %v385
    %v1397 = vunpack.c.h.b16 %v385
    %v1398 = vunpack.c.l.b16 %v386
    %v1399 = vunpack.c.h.b16 %v386
    %v1400 = vunpack.c.l.b16 %v387
    %v1401 = vunpack.c.h.b16 %v387
    %v1402 = vunpack.c.l.b16 %v388
    %v1403 = vunpack.c.h.b16 %v388
    %v1404 = vunpack.c.l.b16 %v389
    %v1405 = vunpack.c.h.b16 %v389
    %v1406 = vunpack.c.l.b16 %v390
    %v1407 = vunpack.c.h.b16 %v390
    %v1408 = vunpack.c.l.b16 %v391
    %v1409 = vunpack.c.h.b16 %v391
    %v1410 = vunpack.c.l.b16 %v392
    %v1411 = vunpack.c.h.b16 %v392
    %v1412 = vunpack.c.l.b16 %v393
    %v1413 = vunpack.c.h.b16 %v393
    %v1414 = vunpack.c.l.b16 %v394
    %v1415 = vunpack.c.h.b16 %v394
    %v1416 = vunpack.c.l.b16 %v395
    %v1417 = vunpack.c.h.b16 %v395
    %v1418 = vunpack.c.l.b16 %v396
    %v1419 = vunpack.c.h.b16 %v396
    %v1420 = vunpack.c.l.b16 %v397
    %v1421 = vunpack.c.h.b16 %v397
    %v1422 = vunpack.c.l.b16 %v398
    %v1423 = vunpack.c.h.b16 %v398
    %v1424 = vunpack.c.l.b16 %v399
    %v1425 = vunpack.c.h.b16 %v399
    %v1426 = vunpack.c.l.b16 %v400
    %v1427 = vunpack.c.h.b16 %v400
    %v1428 = vunpack.c.l.b16 %v401
    %v1429 = vunpack.c.h.b16 %v401
    %v1430 = vunpack.c.l.b16 %v402
    %v1431 = vunpack.c.h.b16 %v402
    %v1432 = vunpack.c.l.b16 %v403
    %v1433 = vunpack.c.h.b16 %v403
    %v1434 = vunpack.c.l.b16 %v404
    %v1435 = vunpack.c.h.b16 %v404
    %v1436 = vunpack.c.l.b16 %v405
    %v1437 = vunpack.c.h.b16 %v405
    %v1438 = vunpack.c.l.b16 %v406
    %v1439 = vunpack.c.h.b16 %v406
    %v1440 = vunpack.c.l.b16 %v407
    %v1441 = vunpack.c.h.b16 %v407
    %v1442 = vunpack.c.l.b16 %v408
    %v1443 = vunpack.c.h.b16 %v408
    %v1444 = vunpack.c.l.b16 %v409
    %v1445 = vunpack.c.h.b16 %v409
    %v1446 = vunpack.c.l.b16 %v410
    %v1447 = vunpack.c.h.b16 %v410
    %v1448 = vunpack.c.l.b16 %v411
    %v1449 = vunpack.c.h.b16 %v411
    %v1450 = vunpack.c.l.b16 %v412
    %v1451 = vunpack.c.h.b16 %v412
    %v1452 = vunpack.c.l.b16 %v413
    %v1453 = vunpack.c.h.b16 %v413
    %v1454 = vunpack.c.l.b16 %v414
    %v1455 = vunpack.c.h.b16 %v414
    %v1456 = vunpack.c.l.b16 %v415
    %v1457 = vunpack.c.h.b16 %v415
    %v1458 = vunpack.c.l.b16 %v416
    %v1459 = vunpack.c.h.b16 %v416
    %v1460 = vunpack.c.l.b16 %v417
    %v1461 = vunpack.c.h.b16 %v417
    %v1462 = vunpack.c.l.b16 %v418
    %v1463 = vunpack.c.h.b16 %v418
    %v1464 = vunpack.c.l.b16 %v419
    %v1465 = vunpack.c.h.b16 %v419
    %v1466 = vunpack.c.l.b16 %v420
    %v1467 = vunpack.c.h.b16 %v420
    %v1468 = vunpack.c.l.b16 %v421
    %v1469 = vunpack.c.h.b16 %v421
    %v1470 = vunpack.c.l.b16 %v422
    %v1471 = vunpack.c.h.b16 %v422
    %v1472 = vunpack.c.l.b16 %v423
    %v1473 = vunpack.c.h.b16 %v423
    %v1474 = vunpack.c.l.b16 %v424
    %v1475 = vunpack.c.h.b16 %v424
    %v1476 = vunpack.c.l.b16 %v425
    %v1477 = vunpack.c.h.b16 %v425
    %v1478 = vunpack.c.l.b16 %v426
    %v1479 = vunpack.c.h.b16 %v426
    %v1480 = vunpack.c.l.b16 %v427
    %v1481 = vunpack.c.h.b16 %v427
    %v1482 = vunpack.c.l.b16 %v428
    %v1483 = vunpack.c.h.b16 %v428
    %v1484 = vunpack.c.l.b16 %v429
    %v1485 = vunpack.c.h.b16 %v429
    %v1486 = vunpack.c.l.b16 %v430
    %v1487 = vunpack.c.h.b16 %v430
    %v1488 = vunpack.c.l.b16 %v431
    %v1489 = vunpack.c.h.b16 %v431
    %v1490 = vunpack.c.l.b16 %v432
    %v1491 = vunpack.c.h.b16 %v432
    %v1492 = vunpack.c.l.b16 %v433
    %v1493 = vunpack.c.h.b16 %v433
    %v1494 = vunpack.c.l.b16 %v434
    %v1495 = vunpack.c.h.b16 %v434
    %v1496 = vunpack.c.l.b16 %v435
    %v1497 = vunpack.c.h.b16 %v435
    %v1498 = vunpack.c.l.b16 %v436
    %v1499 = vunpack.c.h.b16 %v436
    %v1500 = vunpack.c.l.b16 %v437
    %v1501 = vunpack.c.h.b16 %v437
    %v1502 = vunpack.c.l.b16 %v438
    %v1503 = vunpack.c.h.b16 %v438
    %v1504 = vunpack.c.l.b16 %v439
    %v1505 = vunpack.c.h.b16 %v439
    %v1506 = vunpack.c.l.b16 %v440
    %v1507 = vunpack.c.h.b16 %v440
    %v1508 = vunpack.c.l.b16 %v441
    %v1509 = vunpack.c.h.b16 %v441
    %v1510 = vunpack.c.l.b16 %v442
    %v1511 = vunpack.c.h.b16 %v442
    %v1512 = vunpack.c.l.b16 %v443
    %v1513 = vunpack.c.h.b16 %v443
    %v1514 = vunpack.c.l.b16 %v444
    %v1515 = vunpack.c.h.b16 %v444
    %v1516 = vunpack.c.l.b16 %v445
    %v1517 = vunpack.c.h.b16 %v445
    %v1518 = vunpack.c.l.b16 %v446
    %v1519 = vunpack.c.h.b16 %v446
    %v1520 = vunpack.c.l.b16 %v447
    %v1521 = vunpack.c.h.b16 %v447
    %v1522 = vunpack.c.l.b16 %v448
    %v1523 = vunpack.c.h.b16 %v448
    %v1524 = vunpack.c.l.b16 %v449
    %v1525 = vunpack.c.h.b16 %v449
    %v1526 = vunpack.c.l.b16 %v450
    %v1527 = vunpack.c.h.b16 %v450
    %v1528 = vunpack.c.l.b16 %v451
    %v1529 = vunpack.c.h.b16 %v451
    %v1530 = vunpack.c.l.b16 %v452
    %v1531 = vunpack.c.h.b16 %v452
    %v1532 = vunpack.c.l.b16 %v453
    %v1533 = vunpack.c.h.b16 %v453
    %v1534 = vunpack.c.l.b16 %v454
    %v1535 = vunpack.c.h.b16 %v454
    %v1536 = vunpack.c.l.b16 %v455
    %v1537 = vunpack.c.h.b16 %v455
    %v1538 = vunpack.c.l.b16 %v456
    %v1539 = vunpack.c.h.b16 %v456
    %v1540 = vunpack.c.l.b16 %v457
    %v1541 = vunpack.c.h.b16 %v457
    %v1542 = vunpack.c.l.b16 %v458
    %v1543 = vunpack.c.h.b16 %v458
    %v1544 = vunpack.c.l.b16 %v459
    %v1545 = vunpack.c.h.b16 %v459
    %v1546 = vunpack.c.l.b16 %v460
    %v1547 = vunpack.c.h.b16 %v460
    %v1548 = vunpack.c.l.b16 %v461
    %v1549 = vunpack.c.h.b16 %v461
    %v1550 = vunpack.c.l.b16 %v462
    %v1551 = vunpack.c.h.b16 %v462
    %v1552 = vunpack.c.l.b16 %v463
    %v1553 = vunpack.c.h.b16 %v463
    %v1554 = vunpack.c.l.b16 %v464
    %v1555 = vunpack.c.h.b16 %v464
    %v1556 = vunpack.c.l.b16 %v465
    %v1557 = vunpack.c.h.b16 %v465
    %v1558 = vunpack.c.l.b16 %v466
    %v1559 = vunpack.c.h.b16 %v466
    %v1560 = vunpack.c.l.b16 %v467
    %v1561 = vunpack.c.h.b16 %v467
    %v1562 = vunpack.c.l.b16 %v468
    %v1563 = vunpack.c.h.b16 %v468
    %v1564 = vunpack.c.l.b16 %v469
    %v1565 = vunpack.c.h.b16 %v469
    %v1566 = vunpack.c.l.b16 %v470
    %v1567 = vunpack.c.h.b16 %v470
    %v1568 = vunpack.c.l.b16 %v471
    %v1569 = vunpack.c.h.b16 %v471
    %v1570 = vunpack.c.l.b16 %v472
    %v1571 = vunpack.c.h.b16 %v472
    %v1572 = vunpack.c.l.b16 %v473
    %v1573 = vunpack.c.h.b16 %v473
    %v1574 = vunpack.c.l.b16 %v474
    %v1575 = vunpack.c.h.b16 %v474
    %v1576 = vunpack.c.l.b16 %v475
    %v1577 = vunpack.c.h.b16 %v475
    %v1578 = vunpack.c.l.b16 %v476
    %v1579 = vunpack.c.h.b16 %v476
    %v1580 = vunpack.c.l.b16 %v477
    %v1581 = vunpack.c.h.b16 %v477
    %v1582 = vunpack.c.l.b16 %v478
    %v1583 = vunpack.c.h.b16 %v478
    %v1584 = vunpack.c.l.b16 %v479
    %v1585 = vunpack.c.h.b16 %v479
    %v1586 = vunpack.c.l.b16 %v480
    %v1587 = vunpack.c.h.b16 %v480
    %v1588 = vunpack.c.l.b16 %v481
    %v1589 = vunpack.c.h.b16 %v481
    %v1590 = vunpack.c.l.b16 %v482
    %v1591 = vunpack.c.h.b16 %v482
    %v1592 = vunpack.c.l.b16 %v483
    %v1593 = vunpack.c.h.b16 %v483
    %v1594 = vunpack.c.l.b16 %v484
    %v1595 = vunpack.c.h.b16 %v484
    %v1596 = vunpack.c.l.b16 %v485
    %v1597 = vunpack.c.h.b16 %v485
    %v1598 = vunpack.c.l.b16 %v486
    %v1599 = vunpack.c.h.b16 %v486
    %v1600 = vunpack.c.l.b16 %v487
    %v1601 = vunpack.c.h.b16 %v487
    %v1602 = vunpack.c.l.b16 %v488
    %v1603 = vunpack.c.h.b16 %v488
    %v1604 = vunpack.c.l.b16 %v489
    %v1605 = vunpack.c.h.b16 %v489
    %v1606 = vunpack.c.l.b16 %v490
    %v1607 = vunpack.c.h.b16 %v490
    %v1608 = vunpack.c.l.b16 %v491
    %v1609 = vunpack.c.h.b16 %v491
    %v1610 = vunpack.c.l.b16 %v492
    %v1611 = vunpack.c.h.b16 %v492
    %v1612 = vunpack.c.l.b16 %v493
    %v1613 = vunpack.c.h.b16 %v493
    %v1614 = vunpack.c.l.b16 %v494
    %v1615 = vunpack.c.h.b16 %v494
    %v1616 = vunpack.c.l.b16 %v495
    %v1617 = vunpack.c.h.b16 %v495
    %v1618 = vunpack.c.l.b16 %v496
    %v1619 = vunpack.c.h.b16 %v496
    %v1620 = vunpack.c.l.b16 %v497
    %v1621 = vunpack.c.h.b16 %v497
    %v1622 = vunpack.c.l.b16 %v498
    %v1623 = vunpack.c.h.b16 %v498
    %v1624 = vunpack.c.l.b16 %v499
    %v1625 = vunpack.c.h.b16 %v499
    %v1626 = vunpack.c.l.b16 %v500
    %v1627 = vunpack.c.h.b16 %v500
    %v1628 = vunpack.c.l.b16 %v501
    %v1629 = vunpack.c.h.b16 %v501
    %v1630 = vunpack.c.l.b16 %v502
    %v1631 = vunpack.c.h.b16 %v502
    %v1632 = vunpack.c.l.b16 %v503
    %v1633 = vunpack.c.h.b16 %v503
    %v1634 = vunpack.c.l.b16 %v504
    %v1635 = vunpack.c.h.b16 %v504
    %v1636 = vunpack.c.l.b16 %v505
    %v1637 = vunpack.c.h.b16 %v505
    %v1638 = vunpack.c.l.b16 %v506
    %v1639 = vunpack.c.h.b16 %v506
    %v1640 = vunpack.c.l.b16 %v507
    %v1641 = vunpack.c.h.b16 %v507
    %v1642 = vunpack.c.l.b16 %v508
    %v1643 = vunpack.c.h.b16 %v508
    %v1644 = vunpack.c.l.b16 %v509
    %v1645 = vunpack.c.h.b16 %v509
    %v1646 = vunpack.c.l.b16 %v510
    %v1647 = vunpack.c.h.b16 %v510
    %v1648 = vunpack.c.l.b16 %v511
    %v1649 = vunpack.c.h.b16 %v511
    %v1650 = vunpack.c.l.b16 %v512
    %v1651 = vunpack.c.h.b16 %v512
    %v1652 = vunpack.c.l.b16 %v513
    %v1653 = vunpack.c.h.b16 %v513
    %v1654 = vunpack.c.l.b16 %v514
    %v1655 = vunpack.c.h.b16 %v514
    %v1656 = vunpack.c.l.b16 %v515
    %v1657 = vunpack.c.h.b16 %v515
    %v1658 = vunpack.c.l.b16 %v516
    %v1659 = vunpack.c.h.b16 %v516
    %v1660 = vunpack.c.l.b16 %v517
    %v1661 = vunpack.c.h.b16 %v517
    %v1662 = vunpack.c.l.b16 %v518
    %v1663 = vunpack.c.h.b16 %v518
    %v1664 = vunpack.c.l.b16 %v519
    %v1665 = vunpack.c.h.b16 %v519
    %v1666 = vunpack.c.l.b16 %v520
    %v1667 = vunpack.c.h.b16 %v520
    %v1668 = vunpack.c.l.b16 %v521
    %v1669 = vunpack.c.h.b16 %v521
    %v1670 = vunpack.c.l.b16 %v522
    %v1671 = vunpack.c.h.b16 %v522
    %v1672 = vunpack.c.l.b16 %v523
    %v1673 = vunpack.c.h.b16 %v523
    %v1674 = vunpack.c.l.b16 %v524
    %v1675 = vunpack.c.h.b16 %v524
    %v1676 = vunpack.c.l.b16 %v525
    %v1677 = vunpack.c.h.b16 %v525
    %v1678 = vunpack.c.l.b16 %v526
    %v1679 = vunpack.c.h.b16 %v526
    %v1680 = vunpack.c.l.b16 %v527
    %v1681 = vunpack.c.h.b16 %v527
    %v1682 = vunpack.c.l.b16 %v528
    %v1683 = vunpack.c.h.b16 %v528
    %v1684 = vunpack.c.l.b16 %v529
    %v1685 = vunpack.c.h.b16 %v529
    %v1686 = vunpack.c.l.b16 %v530
    %v1687 = vunpack.c.h.b16 %v530
    %v1688 = vunpack.c.l.b16 %v531
    %v1689 = vunpack.c.h.b16 %v531
    %v1690 = vunpack.c.l.b16 %v532
    %v1691 = vunpack.c.h.b16 %v532
    %v1692 = vunpack.c.l.b16 %v533
    %v1693 = vunpack.c.h.b16 %v533
    %v1694 = vunpack.c.l.b16 %v534
    %v1695 = vunpack.c.h.b16 %v534
    %v1696 = vunpack.c.l.b16 %v535
    %v1697 = vunpack.c.h.b16 %v535
    %v1698 = vunpack.c.l.b16 %v536
    %v1699 = vunpack.c.h.b16 %v536
    %v1700 = vunpack.c.l.b16 %v537
    %v1701 = vunpack.c.h.b16 %v537
    %v1702 = vunpack.c.l.b16 %v538
    %v1703 = vunpack.c.h.b16 %v538
    %v1704 = vunpack.c.l.b16 %v539
    %v1705 = vunpack.c.h.b16 %v539
    %v1706 = vunpack.c.l.b16 %v540
    %v1707 = vunpack.c.h.b16 %v540
    %v1708 = vunpack.c.l.b16 %v541
    %v1709 = vunpack.c.h.b16 %v541
    %v1710 = vunpack.c.l.b16 %v542
    %v1711 = vunpack.c.h.b16 %v542
    %v1712 = vunpack.c.l.b16 %v543
    %v1713 = vunpack.c.h.b16 %v543
    %v1714 = vunpack.c.l.b16 %v544
    %v1715 = vunpack.c.h.b16 %v544
    %v1716 = vunpack.c.l.b16 %v545
    %v1717 = vunpack.c.h.b16 %v545
    %v1718 = vunpack.c.l.b16 %v546
    %v1719 = vunpack.c.h.b16 %v546
    %v1720 = vunpack.c.l.b16 %v547
    %v1721 = vunpack.c.h.b16 %v547
    %v1722 = vpack.c.b16 %v960, %v954
    %v1723 = vpack.c.b16 %v961, %v955
    %v1724 = vpack.c.b16 %v962, %v956
    %v1725 = vpack.c.b16 %v963, %v957
    %v1726 = vpack.c.b16 %v964, %v958
    %v1727 = vpack.c.b16 %v965, %v959
    %v1728 = vpack.c.b16 %v972, %v966
    %v1729 = vpack.c.b16 %v973, %v967
    %v1730 = vpack.c.b16 %v974, %v968
    %v1731 = vpack.c.b16 %v975, %v969
    %v1732 = vpack.c.b16 %v976, %v970
    %v1733 = vpack.c.b16 %v977, %v971
    %v1734 = vpack.c.b16 %v984, %v978
    %v1735 = vpack.c.b16 %v985, %v979
    %v1736 = vpack.c.b16 %v986, %v980
    %v1737 = vpack.c.b16 %v987, %v981
    %v1738 = vpack.c.b16 %v988, %v982
    %v1739 = vpack.c.b16 %v989, %v983
    %v1740 = vpack.c.b16 %v996, %v990
    %v1741 = vpack.c.b16 %v997, %v991
    %v1742 = vpack.c.b16 %v998, %v992
    %v1743 = vpack.c.b16 %v999, %v993
    %v1744 = vpack.c.b16 %v1000, %v994
    %v1745 = vpack.c.b16 %v1001, %v995
    %v1746 = vpack.c.b16 %v1008, %v1002
    %v1747 = vpack.c.b16 %v1009, %v1003
    %v1748 = vpack.c.b16 %v1010, %v1004
    %v1749 = vpack.c.b16 %v1011, %v1005
    %v1750 = vpack.c.b16 %v1012, %v1006
    %v1751 = vpack.c.b16 %v1013, %v1007
    %v1752 = vpack.c.b16 %v1020, %v1014
    %v1753 = vpack.c.b16 %v1021, %v1015
    %v1754 = vpack.c.b16 %v1022, %v1016
    %v1755 = vpack.c.b16 %v1023, %v1017
    %v1756 = vpack.c.b16 %v1024, %v1018
    %v1757 = vpack.c.b16 %v1025, %v1019
    %v1758 = vpack.c.b16 %v1032, %v1026
    %v1759 = vpack.c.b16 %v1033, %v1027
    %v1760 = vpack.c.b16 %v1034, %v1028
    %v1761 = vpack.c.b16 %v1035, %v1029
    %v1762 = vpack.c.b16 %v1036, %v1030
    %v1763 = vpack.c.b16 %v1037, %v1031
    %v1764 = vpack.c.b16 %v1044, %v1038
    %v1765 = vpack.c.b16 %v1045, %v1039
    %v1766 = vpack.c.b16 %v1046, %v1040
    %v1767 = vpack.c.b16 %v1047, %v1041
    %v1768 = vpack.c.b16 %v1048, %v1042
    %v1769 = vpack.c.b16 %v1049, %v1043
    %v1770 = vpack.c.b16 %v1056, %v1050
    %v1771 = vpack.c.b16 %v1057, %v1051
    %v1772 = vpack.c.b16 %v1058, %v1052
    %v1773 = vpack.c.b16 %v1059, %v1053
    %v1774 = vpack.c.b16 %v1060, %v1054
    %v1775 = vpack.c.b16 %v1061, %v1055
    %v1776 = vpack.c.b16 %v1068, %v1062
    %v1777 = vpack.c.b16 %v1069, %v1063
    %v1778 = vpack.c.b16 %v1070, %v1064
    %v1779 = vpack.c.b16 %v1071, %v1065
    %v1780 = vpack.c.b16 %v1072, %v1066
    %v1781 = vpack.c.b16 %v1073, %v1067
    %v1782 = vpack.c.b16 %v1080, %v1074
    %v1783 = vpack.c.b16 %v1081, %v1075
    %v1784 = vpack.c.b16 %v1082, %v1076
    %v1785 = vpack.c.b16 %v1083, %v1077
    %v1786 = vpack.c.b16 %v1084, %v1078
    %v1787 = vpack.c.b16 %v1085, %v1079
    %v1788 = vpack.c.b16 %v1092, %v1086
    %v1789 = vpack.c.b16 %v1093, %v1087
    %v1790 = vpack.c.b16 %v1094, %v1088
    %v1791 = vpack.c.b16 %v1095, %v1089
    %v1792 = vpack.c.b16 %v1096, %v1090
    %v1793 = vpack.c.b16 %v1097, %v1091
    %v1794 = vpack.c.b16 %v1104, %v1098
    %v1795 = vpack.c.b16 %v1105, %v1099
    %v1796 = vpack.c.b16 %v1106, %v1100
    %v1797 = vpack.c.b16 %v1107, %v1101
    %v1798 = vpack.c.b16 %v1108, %v1102
    %v1799 = vpack.c.b16 %v1109, %v1103
    %v1800 = vpack.c.b16 %v1116, %v1110
    %v1801 = vpack.c.b16 %v1117, %v1111
    %v1802 = vpack.c.b16 %v1118, %v1112
    %v1803 = vpack.c.b16 %v1119, %v1113
    %v1804 = vpack.c.b16 %v1120, %v1114
    %v1805 = vpack.c.b16 %v1121, %v1115
    %v1806 = vpack.c.b16 %v1128, %v1122
    %v1807 = vpack.c.b16 %v1129, %v1123
    %v1808 = vpack.c.b16 %v1130, %v1124
    %v1809 = vpack.c.b16 %v1131, %v1125
    %v1810 = vpack.c.b16 %v1132, %v1126
    %v1811 = vpack.c.b16 %v1133, %v1127
    %v1812 = vpack.c.b16 %v1140, %v1134
    %v1813 = vpack.c.b16 %v1141, %v1135
    %v1814 = vpack.c.b16 %v1142, %v1136
    %v1815 = vpack.c.b16 %v1143, %v1137
    %v1816 = vpack.c.b16 %v1144, %v1138
    %v1817 = vpack.c.b16 %v1145, %v1139
    %v1818 = vpack.c.b16 %v1152, %v1146
    %v1819 = vpack.c.b16 %v1153, %v1147
    %v1820 = vpack.c.b16 %v1154, %v1148
    %v1821 = vpack.c.b16 %v1155, %v1149
    %v1822 = vpack.c.b16 %v1156, %v1150
    %v1823 = vpack.c.b16 %v1157, %v1151
    %v1824 = vpack.c.b16 %v1164, %v1158
    %v1825 = vpack.c.b16 %v1165, %v1159
    %v1826 = vpack.c.b16 %v1166, %v1160
    %v1827 = vpack.c.b16 %v1167, %v1161
    %v1828 = vpack.c.b16 %v1168, %v1162
    %v1829 = vpack.c.b16 %v1169, %v1163
    %v1830 = vpack.c.b16 %v1176, %v1170
    %v1831 = vpack.c.b16 %v1177, %v1171
    %v1832 = vpack.c.b16 %v1178, %v1172
    %v1833 = vpack.c.b16 %v1179, %v1173
    %v1834 = vpack.c.b16 %v1180, %v1174
    %v1835 = vpack.c.b16 %v1181, %v1175
    %v1836 = vpack.c.b16 %v1188, %v1182
    %v1837 = vpack.c.b16 %v1189, %v1183
    %v1838 = vpack.c.b16 %v1190, %v1184
    %v1839 = vpack.c.b16 %v1191, %v1185
    %v1840 = vpack.c.b16 %v1192, %v1186
    %v1841 = vpack.c.b16 %v1193, %v1187
    %v1842 = vpack.c.b16 %v1200, %v1194
    %v1843 = vpack.c.b16 %v1201, %v1195
    %v1844 = vpack.c.b16 %v1202, %v1196
    %v1845 = vpack.c.b16 %v1203, %v1197
    %v1846 = vpack.c.b16 %v1204, %v1198
    %v1847 = vpack.c.b16 %v1205, %v1199
    %v1848 = vpack.c.b16 %v1212, %v1206
    %v1849 = vpack.c.b16 %v1213, %v1207
    %v1850 = vpack.c.b16 %v1214, %v1208
    %v1851 = vpack.c.b16 %v1215, %v1209
    %v1852 = vpack.c.b16 %v1216, %v1210
    %v1853 = vpack.c.b16 %v1217, %v1211
    %v1854 = vpack.c.b16 %v1224, %v1218
    %v1855 = vpack.c.b16 %v1225, %v1219
    %v1856 = vpack.c.b16 %v1226, %v1220
    %v1857 = vpack.c.b16 %v1227, %v1221
    %v1858 = vpack.c.b16 %v1228, %v1222
    %v1859 = vpack.c.b16 %v1229, %v1223
    %v1860 = vpack.c.b16 %v1236, %v1230
    %v1861 = vpack.c.b16 %v1237, %v1231
    %v1862 = vpack.c.b16 %v1238, %v1232
    %v1863 = vpack.c.b16 %v1239, %v1233
    %v1864 = vpack.c.b16 %v1240, %v1234
    %v1865 = vpack.c.b16 %v1241, %v1235
    %v1866 = vpack.c.b16 %v1248, %v1242
    %v1867 = vpack.c.b16 %v1249, %v1243
    %v1868 = vpack.c.b16 %v1250, %v1244
    %v1869 = vpack.c.b16 %v1251, %v1245
    %v1870 = vpack.c.b16 %v1252, %v1246
    %v1871 = vpack.c.b16 %v1253, %v1247
    %v1872 = vpack.c.b16 %v1260, %v1254
    %v1873 = vpack.c.b16 %v1261, %v1255
    %v1874 = vpack.c.b16 %v1262, %v1256
    %v1875 = vpack.c.b16 %v1263, %v1257
    %v1876 = vpack.c.b16 %v1264, %v1258
    %v1877 = vpack.c.b16 %v1265, %v1259
    %v1878 = vpack.c.b16 %v1272, %v1266
    %v1879 = vpack.c.b16 %v1273, %v1267
    %v1880 = vpack.c.b16 %v1274, %v1268
    %v1881 = vpack.c.b16 %v1275, %v1269
    %v1882 = vpack.c.b16 %v1276, %v1270
    %v1883 = vpack.c.b16 %v1277, %v1271
    %v1884 = vpack.c.b16 %v1284, %v1278
    %v1885 = vpack.c.b16 %v1285, %v1279
    %v1886 = vpack.c.b16 %v1286, %v1280
    %v1887 = vpack.c.b16 %v1287, %v1281
    %v1888 = vpack.c.b16 %v1288, %v1282
    %v1889 = vpack.c.b16 %v1289, %v1283
    %v1890 = vpack.c.b16 %v1296, %v1290
    %v1891 = vpack.c.b16 %v1297, %v1291
    %v1892 = vpack.c.b16 %v1298, %v1292
    %v1893 = vpack.c.b16 %v1299, %v1293
    %v1894 = vpack.c.b16 %v1300, %v1294
    %v1895 = vpack.c.b16 %v1301, %v1295
    %v1896 = vpack.c.b16 %v1308, %v1302
    %v1897 = vpack.c.b16 %v1309, %v1303
    %v1898 = vpack.c.b16 %v1310, %v1304
    %v1899 = vpack.c.b16 %v1311, %v1305
    %v1900 = vpack.c.b16 %v1312, %v1306
    %v1901 = vpack.c.b16 %v1313, %v1307
    %v1902 = vpack.c.b16 %v1320, %v1314
    %v1903 = vpack.c.b16 %v1321, %v1315
    %v1904 = vpack.c.b16 %v1322, %v1316
    %v1905 = vpack.c.b16 %v1323, %v1317
    %v1906 = vpack.c.b16 %v1324, %v1318
    %v1907 = vpack.c.b16 %v1325, %v1319
    %v1908 = vpack.c.b16 %v1332, %v1326
    %v1909 = vpack.c.b16 %v1333, %v1327
    %v1910 = vpack.c.b16 %v1334, %v1328
    %v1911 = vpack.c.b16 %v1335, %v1329
    %v1912 = vpack.c.b16 %v1336, %v1330
    %v1913 = vpack.c.b16 %v1337, %v1331
    %v1914 = vpack.c.b16 %v1344, %v1338
    %v1915 = vpack.c.b16 %v1345, %v1339
    %v1916 = vpack.c.b16 %v1346, %v1340
    %v1917 = vpack.c.b16 %v1347, %v1341
    %v1918 = vpack.c.b16 %v1348, %v1342
    %v1919 = vpack.c.b16 %v1349, %v1343
    %v1920 = vpack.c.b16 %v1356, %v1350
    %v1921 = vpack.c.b16 %v1357, %v1351
    %v1922 = vpack.c.b16 %v1358, %v1352
    %v1923 = vpack.c.b16 %v1359, %v1353
    %v1924 = vpack.c.b16 %v1360, %v1354
    %v1925 = vpack.c.b16 %v1361, %v1355
    %v1926 = vpack.c.b16 %v1368, %v1362
    %v1927 = vpack.c.b16 %v1369, %v1363
    %v1928 = vpack.c.b16 %v1370, %v1364
    %v1929 = vpack.c.b16 %v1371, %v1365
    %v1930 = vpack.c.b16 %v1372, %v1366
    %v1931 = vpack.c.b16 %v1373, %v1367
    %v1932 = vpack.c.b16 %v1380, %v1374
    %v1933 = vpack.c.b16 %v1381, %v1375
    %v1934 = vpack.c.b16 %v1382, %v1376
    %v1935 = vpack.c.b16 %v1383, %v1377
    %v1936 = vpack.c.b16 %v1384, %v1378
    %v1937 = vpack.c.b16 %v1385, %v1379
    %v1938 = vpack.c.b16 %v1392, %v1386
    %v1939 = vpack.c.b16 %v1393, %v1387
    %v1940 = vpack.c.b16 %v1394, %v1388
    %v1941 = vpack.c.b16 %v1395, %v1389
    %v1942 = vpack.c.b16 %v1396, %v1390
    %v1943 = vpack.c.b16 %v1397, %v1391
    %v1944 = vpack.c.b16 %v1404, %v1398
    %v1945 = vpack.c.b16 %v1405, %v1399
    %v1946 = vpack.c.b16 %v1406, %v1400
    %v1947 = vpack.c.b16 %v1407, %v1401
    %v1948 = vpack.c.b16 %v1408, %v1402
    %v1949 = vpack.c.b16 %v1409, %v1403
    %v1950 = vpack.c.b16 %v1416, %v1410
    %v1951 = vpack.c.b16 %v1417, %v1411
    %v1952 = vpack.c.b16 %v1418, %v1412
    %v1953 = vpack.c.b16 %v1419, %v1413
    %v1954 = vpack.c.b16 %v1420, %v1414
    %v1955 = vpack.c.b16 %v1421, %v1415
    %v1956 = vpack.c.b16 %v1428, %v1422
    %v1957 = vpack.c.b16 %v1429, %v1423
    %v1958 = vpack.c.b16 %v1430, %v1424
    %v1959 = vpack.c.b16 %v1431, %v1425
    %v1960 = vpack.c.b16 %v1432, %v1426
    %v1961 = vpack.c.b16 %v1433, %v1427
    %v1962 = vpack.c.b16 %v1440, %v1434
    %v1963 = vpack.c.b16 %v1441, %v1435
    %v1964 = vpack.c.b16 %v1442, %v1436
    %v1965 = vpack.c.b16 %v1443, %v1437
    %v1966 = vpack.c.b16 %v1444, %v1438
    %v1967 = vpack.c.b16 %v1445, %v1439
    %v1968 = vpack.c.b16 %v1452, %v1446
    %v1969 = vpack.c.b16 %v1453, %v1447
    %v1970 = vpack.c.b16 %v1454, %v1448
    %v1971 = vpack.c.b16 %v1455, %v1449
    %v1972 = vpack.c.b16 %v1456, %v1450
    %v1973 = vpack.c.b16 %v1457, %v1451
    %v1974 = vpack.c.b16 %v1464, %v1458
    %v1975 = vpack.c.b16 %v1465, %v1459
    %v1976 = vpack.c.b16 %v1466, %v1460
    %v1977 = vpack.c.b16 %v1467, %v1461
    %v1978 = vpack.c.b16 %v1468, %v1462
    %v1979 = vpack.c.b16 %v1469, %v1463
    %v1980 = vpack.c.b16 %v1476, %v1470
    %v1981 = vpack.c.b16 %v1477, %v1471
    %v1982 = vpack.c.b16 %v1478, %v1472
    %v1983 = vpack.c.b16 %v1479, %v1473
    %v1984 = vpack.c.b16 %v1480, %v1474
    %v1985 = vpack.c.b16 %v1481, %v1475
    %v1986 = vpack.c.b16 %v1488, %v1482
    %v1987 = vpack.c.b16 %v1489, %v1483
    %v1988 = vpack.c.b16 %v1490, %v1484
    %v1989 = vpack.c.b16 %v1491, %v1485
    %v1990 = vpack.c.b16 %v1492, %v1486
    %v1991 = vpack.c.b16 %v1493, %v1487
    %v1992 = vpack.c.b16 %v1500, %v1494
    %v1993 = vpack.c.b16 %v1501, %v1495
    %v1994 = vpack.c.b16 %v1502, %v1496
    %v1995 = vpack.c.b16 %v1503, %v1497
    %v1996 = vpack.c.b16 %v1504, %v1498
    %v1997 = vpack.c.b16 %v1505, %v1499
    %v1998 = vpack.c.b16 %v1512, %v1506
    %v1999 = vpack.c.b16 %v1513, %v1507
    %v2000 = vpack.c.b16 %v1514, %v1508
    %v2001 = vpack.c.b16 %v1515, %v1509
    %v2002 = vpack.c.b16 %v1516, %v1510
    %v2003 = vpack.c.b16 %v1517, %v1511
    %v2004 = vpack.c.b16 %v1524, %v1518
    %v2005 = vpack.c.b16 %v1525, %v1519
    %v2006 = vpack.c.b16 %v1526, %v1520
    %v2007 = vpack.c.b16 %v1527, %v1521
    %v2008 = vpack.c.b16 %v1528, %v1522
    %v2009 = vpack.c.b16 %v1529, %v1523
    %v2010 = vpack.c.b16 %v1536, %v1530
    %v2011 = vpack.c.b16 %v1537, %v1531
    %v2012 = vpack.c.b16 %v1538, %v1532
    %v2013 = vpack.c.b16 %v1539, %v1533
    %v2014 = vpack.c.b16 %v1540, %v1534
    %v2015 = vpack.c.b16 %v1541, %v1535
    %v2016 = vpack.c.b16 %v1548, %v1542
    %v2017 = vpack.c.b16 %v1549, %v1543
    %v2018 = vpack.c.b16 %v1550, %v1544
    %v2019 = vpack.c.b16 %v1551, %v1545
    %v2020 = vpack.c.b16 %v1552, %v1546
    %v2021 = vpack.c.b16 %v1553, %v1547
    %v2022 = vpack.c.b16 %v1560, %v1554
    %v2023 = vpack.c.b16 %v1561, %v1555
    %v2024 = vpack.c.b16 %v1562, %v1556
    %v2025 = vpack.c.b16 %v1563, %v1557
    %v2026 = vpack.c.b16 %v1564, %v1558
    %v2027 = vpack.c.b16 %v1565, %v1559
    %v2028 = vpack.c.b16 %v1572, %v1566
    %v2029 = vpack.c.b16 %v1573, %v1567
    %v2030 = vpack.c.b16 %v1574, %v1568
    %v2031 = vpack.c.b16 %v1575, %v1569
    %v2032 = vpack.c.b16 %v1576, %v1570
    %v2033 = vpack.c.b16 %v1577, %v1571
    %v2034 = vpack.c.b16 %v1584, %v1578
    %v2035 = vpack.c.b16 %v1585, %v1579
    %v2036 = vpack.c.b16 %v1586, %v1580
    %v2037 = vpack.c.b16 %v1587, %v1581
    %v2038 = vpack.c.b16 %v1588, %v1582
    %v2039 = vpack.c.b16 %v1589, %v1583
    %v2040 = vpack.c.b16 %v1596, %v1590
    %v2041 = vpack.c.b16 %v1597, %v1591
    %v2042 = vpack.c.b16 %v1598, %v1592
    %v2043 = vpack.c.b16 %v1599, %v1593
    %v2044 = vpack.c.b16 %v1600, %v1594
    %v2045 = vpack.c.b16 %v1601, %v1595
    %v2046 = vpack.c.b16 %v1608, %v1602
    %v2047 = vpack.c.b16 %v1609, %v1603
    %v2048 = vpack.c.b16 %v1610, %v1604
    %v2049 = vpack.c.b16 %v1611, %v1605
    %v2050 = vpack.c.b16 %v1612, %v1606
    %v2051 = vpack.c.b16 %v1613, %v1607
    %v2052 = vpack.c.b16 %v1620, %v1614
    %v2053 = vpack.c.b16 %v1621, %v1615
    %v2054 = vpack.c.b16 %v1622, %v1616
    %v2055 = vpack.c.b16 %v1623, %v1617
    %v2056 = vpack.c.b16 %v1624, %v1618
    %v2057 = vpack.c.b16 %v1625, %v1619
    %v2058 = vpack.c.b16 %v1632, %v1626
    %v2059 = vpack.c.b16 %v1633, %v1627
    %v2060 = vpack.c.b16 %v1634, %v1628
    %v2061 = vpack.c.b16 %v1635, %v1629
    %v2062 = vpack.c.b16 %v1636, %v1630
    %v2063 = vpack.c.b16 %v1637, %v1631
    %v2064 = vpack.c.b16 %v1644, %v1638
    %v2065 = vpack.c.b16 %v1645, %v1639
    %v2066 = vpack.c.b16 %v1646, %v1640
    %v2067 = vpack.c.b16 %v1647, %v1641
    %v2068 = vpack.c.b16 %v1648, %v1642
    %v2069 = vpack.c.b16 %v1649, %v1643
    %v2070 = vpack.c.b16 %v1656, %v1650
    %v2071 = vpack.c.b16 %v1657, %v1651
    %v2072 = vpack.c.b16 %v1658, %v1652
    %v2073 = vpack.c.b16 %v1659, %v1653
    %v2074 = vpack.c.b16 %v1660, %v1654
    %v2075 = vpack.c.b16 %v1661, %v1655
    %v2076 = vpack.c.b16 %v1668, %v1662
    %v2077 = vpack.c.b16 %v1669, %v1663
    %v2078 = vpack.c.b16 %v1670, %v1664
    %v2079 = vpack.c.b16 %v1671, %v1665
    %v2080 = vpack.c.b16 %v1672, %v1666
    %v2081 = vpack.c.b16 %v1673, %v1667
    %v2082 = vpack.c.b16 %v1680, %v1674
    %v2083 = vpack.c.b16 %v1681, %v1675
    %v2084 = vpack.c.b16 %v1682, %v1676
    %v2085 = vpack.c.b16 %v1683, %v1677
    %v2086 = vpack.c.b16 %v1684, %v1678
    %v2087 = vpack.c.b16 %v1685, %v1679
    %v2088 = vpack.c.b16 %v1692, %v1686
    %v2089 = vpack.c.b16 %v1693, %v1687
    %v2090 = vpack.c.b16 %v1694, %v1688
    %v2091 = vpack.c.b16 %v1695, %v1689
    %v2092 = vpack.c.b16 %v1696, %v1690
    %v2093 = vpack.c.b16 %v1697, %v1691
    %v2094 = vpack.c.b16 %v1704, %v1698
    %v2095 = vpack.c.b16 %v1705, %v1699
    %v2096 = vpack.c.b16 %v1706, %v1700
    %v2097 = vpack.c.b16 %v1707, %v1701
    %v2098 = vpack.c.b16 %v1708, %v1702
    %v2099 = vpack.c.b16 %v1709, %v1703
    %v2100 = vpack.c.b16 %v1716, %v1710
    %v2101 = vpack.c.b16 %v1717, %v1711
    %v2102 = vpack.c.b16 %v1718, %v1712
    %v2103 = vpack.c.b16 %v1719, %v1713
    %v2104 = vpack.c.b16 %v1720, %v1714
    %v2105 = vpack.c.b16 %v1721, %v1715
    %2490 = vmatprep.subr.bf16.mxu0 %v1765
    %2491 = vmatpush1.bf16.msra.mxu0 %v1764
    %2492 = vmatprep.subr.bf16.mxu0 %v1759
    %2493 = vmatpush1.bf16.msra.mxu0 %v1758
    %2494 = vmatprep.subr.bf16.mxu0 %v1753
    %2495 = vmatpush1.bf16.msra.mxu0 %v1752
    %2496 = vmatprep.subr.bf16.mxu0 %v1747
    %2497 = vmatpush1.bf16.msra.mxu0 %v1746
    %2498 = vmatprep.subr.bf16.mxu0 %v1741
    %2499 = vmatpush1.bf16.msra.mxu0 %v1740
    %2500 = vmatprep.subr.bf16.mxu0 %v1735
    %2501 = vmatpush1.bf16.msra.mxu0 %v1734
    %2502 = vmatprep.subr.bf16.mxu0 %v1729
    %2503 = vmatpush1.bf16.msra.mxu0 %v1728
    %2504 = vmatprep.subr.bf16.mxu0 %v1723
    %2505 = vmatpush1.bf16.msra.mxu0 %v1722
    %2506 = vmatprep.subr.bf16.mxu0 %v1813
    %2507 = vmatpush2.bf16.msra.mxu0 %v1812
    %2508 = vmatprep.subr.bf16.mxu0 %v1807
    %2509 = vmatpush2.bf16.msra.mxu0 %v1806
    %2510 = vmatprep.subr.bf16.mxu0 %v1801
    %2511 = vmatpush2.bf16.msra.mxu0 %v1800
    %2512 = vmatprep.subr.bf16.mxu0 %v1795
    %2513 = vmatpush2.bf16.msra.mxu0 %v1794
    %2514 = vmatprep.subr.bf16.mxu0 %v1789
    %2515 = vmatpush2.bf16.msra.mxu0 %v1788
    %2516 = vmatprep.subr.bf16.mxu0 %v1783
    %2517 = vmatpush2.bf16.msra.mxu0 %v1782
    %2518 = vmatprep.subr.bf16.mxu0 %v1777
    %2519 = vmatpush2.bf16.msra.mxu0 %v1776
    %2520 = vmatprep.subr.bf16.mxu0 %v1771
    %2521 = vmatpush2.bf16.msra.mxu0 %v1770
    %2522 = vmatprep.mubr.bf16.mxu0 %v563
    %2523 = vmatmul.mubr.bf16.gmra.mxu0 %v562
    %v2524 = vpop.f32.mrf.mxu0
    %v2525 = vadd.f32 0.0, %v2524
    %v2526 = vpop.f32.mrf.mxu0
    %v2527 = vadd.f32 0.0, %v2526
    %v2528 = vpop.f32.mrf.mxu0
    %v2529 = vpop.f32.mrf.mxu0
    %2530 = vdwg.mxu0
    %2531 = vmatprep.subr.bf16.mxu0 %v1861
    %2532 = vmatpush1.bf16.msra.mxu0 %v1860
    %2533 = vmatprep.subr.bf16.mxu0 %v1855
    %2534 = vmatpush1.bf16.msra.mxu0 %v1854
    %2535 = vmatprep.subr.bf16.mxu0 %v1849
    %2536 = vmatpush1.bf16.msra.mxu0 %v1848
    %2537 = vmatprep.subr.bf16.mxu0 %v1843
    %2538 = vmatpush1.bf16.msra.mxu0 %v1842
    %2539 = vmatprep.subr.bf16.mxu0 %v1837
    %2540 = vmatpush1.bf16.msra.mxu0 %v1836
    %2541 = vmatprep.subr.bf16.mxu0 %v1831
    %2542 = vmatpush1.bf16.msra.mxu0 %v1830
    %2543 = vmatprep.subr.bf16.mxu0 %v1825
    %2544 = vmatpush1.bf16.msra.mxu0 %v1824
    %2545 = vmatprep.subr.bf16.mxu0 %v1819
    %2546 = vmatpush1.bf16.msra.mxu0 %v1818
    %2547 = vmatprep.subr.bf16.mxu0 %v1909
    %2548 = vmatpush2.bf16.msra.mxu0 %v1908
    %2549 = vmatprep.subr.bf16.mxu0 %v1903
    %2550 = vmatpush2.bf16.msra.mxu0 %v1902
    %2551 = vmatprep.subr.bf16.mxu0 %v1897
    %2552 = vmatpush2.bf16.msra.mxu0 %v1896
    %2553 = vmatprep.subr.bf16.mxu0 %v1891
    %2554 = vmatpush2.bf16.msra.mxu0 %v1890
    %2555 = vmatprep.subr.bf16.mxu0 %v1885
    %2556 = vmatpush2.bf16.msra.mxu0 %v1884
    %2557 = vmatprep.subr.bf16.mxu0 %v1879
    %2558 = vmatpush2.bf16.msra.mxu0 %v1878
    %2559 = vmatprep.subr.bf16.mxu0 %v1873
    %2560 = vmatpush2.bf16.msra.mxu0 %v1872
    %2561 = vmatprep.subr.bf16.mxu0 %v1867
    %2562 = vmatpush2.bf16.msra.mxu0 %v1866
    %2563 = vmatprep.mubr.bf16.mxu0 %v565
    %2564 = vmatmul.mubr.bf16.gmra.mxu0 %v564
    %v2565 = vpop.f32.mrf.mxu0
    %v2566 = vadd.f32 %v2525, %v2565
    %v2567 = vpop.f32.mrf.mxu0
    %v2568 = vadd.f32 %v2527, %v2567
    %v2569 = vpop.f32.mrf.mxu0
    %v2570 = vpop.f32.mrf.mxu0
    %2571 = vdwg.mxu0
    %2572 = vmatprep.subr.bf16.mxu0 %v1957
    %2573 = vmatpush1.bf16.msra.mxu0 %v1956
    %2574 = vmatprep.subr.bf16.mxu0 %v1951
    %2575 = vmatpush1.bf16.msra.mxu0 %v1950
    %2576 = vmatprep.subr.bf16.mxu0 %v1945
    %2577 = vmatpush1.bf16.msra.mxu0 %v1944
    %2578 = vmatprep.subr.bf16.mxu0 %v1939
    %2579 = vmatpush1.bf16.msra.mxu0 %v1938
    %2580 = vmatprep.subr.bf16.mxu0 %v1933
    %2581 = vmatpush1.bf16.msra.mxu0 %v1932
    %2582 = vmatprep.subr.bf16.mxu0 %v1927
    %2583 = vmatpush1.bf16.msra.mxu0 %v1926
    %2584 = vmatprep.subr.bf16.mxu0 %v1921
    %2585 = vmatpush1.bf16.msra.mxu0 %v1920
    %2586 = vmatprep.subr.bf16.mxu0 %v1915
    %2587 = vmatpush1.bf16.msra.mxu0 %v1914
    %2588 = vmatprep.subr.bf16.mxu0 %v2005
    %2589 = vmatpush2.bf16.msra.mxu0 %v2004
    %2590 = vmatprep.subr.bf16.mxu0 %v1999
    %2591 = vmatpush2.bf16.msra.mxu0 %v1998
    %2592 = vmatprep.subr.bf16.mxu0 %v1993
    %2593 = vmatpush2.bf16.msra.mxu0 %v1992
    %2594 = vmatprep.subr.bf16.mxu0 %v1987
    %2595 = vmatpush2.bf16.msra.mxu0 %v1986
    %2596 = vmatprep.subr.bf16.mxu0 %v1981
    %2597 = vmatpush2.bf16.msra.mxu0 %v1980
    %2598 = vmatprep.subr.bf16.mxu0 %v1975
    %2599 = vmatpush2.bf16.msra.mxu0 %v1974
    %2600 = vmatprep.subr.bf16.mxu0 %v1969
    %2601 = vmatpush2.bf16.msra.mxu0 %v1968
    %2602 = vmatprep.subr.bf16.mxu0 %v1963
    %2603 = vmatpush2.bf16.msra.mxu0 %v1962
    %2604 = vmatprep.mubr.bf16.mxu0 %v567
    %2605 = vmatmul.mubr.bf16.gmra.mxu0 %v566
    %v2606 = vpop.f32.mrf.mxu0
    %v2607 = vadd.f32 %v2566, %v2606
    %v2608 = vpop.f32.mrf.mxu0
    %v2609 = vadd.f32 %v2568, %v2608
    %v2610 = vpop.f32.mrf.mxu0
    %v2611 = vpop.f32.mrf.mxu0
    %2612 = vdwg.mxu0
    %2613 = vmatprep.subr.bf16.mxu0 %v2053
    %2614 = vmatpush1.bf16.msra.mxu0 %v2052
    %2615 = vmatprep.subr.bf16.mxu0 %v2047
    %2616 = vmatpush1.bf16.msra.mxu0 %v2046
    %2617 = vmatprep.subr.bf16.mxu0 %v2041
    %2618 = vmatpush1.bf16.msra.mxu0 %v2040
    %2619 = vmatprep.subr.bf16.mxu0 %v2035
    %2620 = vmatpush1.bf16.msra.mxu0 %v2034
    %2621 = vmatprep.subr.bf16.mxu0 %v2029
    %2622 = vmatpush1.bf16.msra.mxu0 %v2028
    %2623 = vmatprep.subr.bf16.mxu0 %v2023
    %2624 = vmatpush1.bf16.msra.mxu0 %v2022
    %2625 = vmatprep.subr.bf16.mxu0 %v2017
    %2626 = vmatpush1.bf16.msra.mxu0 %v2016
    %2627 = vmatprep.subr.bf16.mxu0 %v2011
    %2628 = vmatpush1.bf16.msra.mxu0 %v2010
    %2629 = vmatprep.subr.bf16.mxu0 %v2101
    %2630 = vmatpush2.bf16.msra.mxu0 %v2100
    %2631 = vmatprep.subr.bf16.mxu0 %v2095
    %2632 = vmatpush2.bf16.msra.mxu0 %v2094
    %2633 = vmatprep.subr.bf16.mxu0 %v2089
    %2634 = vmatpush2.bf16.msra.mxu0 %v2088
    %2635 = vmatprep.subr.bf16.mxu0 %v2083
    %2636 = vmatpush2.bf16.msra.mxu0 %v2082
    %2637 = vmatprep.subr.bf16.mxu0 %v2077
    %2638 = vmatpush2.bf16.msra.mxu0 %v2076
    %2639 = vmatprep.subr.bf16.mxu0 %v2071
    %2640 = vmatpush2.bf16.msra.mxu0 %v2070
    %2641 = vmatprep.subr.bf16.mxu0 %v2065
    %2642 = vmatpush2.bf16.msra.mxu0 %v2064
    %2643 = vmatprep.subr.bf16.mxu0 %v2059
    %2644 = vmatpush2.bf16.msra.mxu0 %v2058
    %2645 = vmatprep.mubr.bf16.mxu0 %v569
    %2646 = vmatmul.mubr.bf16.gmra.mxu0 %v568
    %v2647 = vpop.f32.mrf.mxu0
    %v2648 = vadd.f32 %v2607, %v2647
    %v2649 = vpop.f32.mrf.mxu0
    %v2650 = vadd.f32 %v2609, %v2649
    %v2651 = vpop.f32.mrf.mxu0
    %v2652 = vpop.f32.mrf.mxu0
    %2653 = vdwg.mxu0
    %2654 = vmatprep.subr.bf16.mxu0 %v1767
    %2655 = vmatpush1.bf16.msra.mxu0 %v1766
    %2656 = vmatprep.subr.bf16.mxu0 %v1761
    %2657 = vmatpush1.bf16.msra.mxu0 %v1760
    %2658 = vmatprep.subr.bf16.mxu0 %v1755
    %2659 = vmatpush1.bf16.msra.mxu0 %v1754
    %2660 = vmatprep.subr.bf16.mxu0 %v1749
    %2661 = vmatpush1.bf16.msra.mxu0 %v1748
    %2662 = vmatprep.subr.bf16.mxu0 %v1743
    %2663 = vmatpush1.bf16.msra.mxu0 %v1742
    %2664 = vmatprep.subr.bf16.mxu0 %v1737
    %2665 = vmatpush1.bf16.msra.mxu0 %v1736
    %2666 = vmatprep.subr.bf16.mxu0 %v1731
    %2667 = vmatpush1.bf16.msra.mxu0 %v1730
    %2668 = vmatprep.subr.bf16.mxu0 %v1725
    %2669 = vmatpush1.bf16.msra.mxu0 %v1724
    %2670 = vmatprep.subr.bf16.mxu0 %v1815
    %2671 = vmatpush2.bf16.msra.mxu0 %v1814
    %2672 = vmatprep.subr.bf16.mxu0 %v1809
    %2673 = vmatpush2.bf16.msra.mxu0 %v1808
    %2674 = vmatprep.subr.bf16.mxu0 %v1803
    %2675 = vmatpush2.bf16.msra.mxu0 %v1802
    %2676 = vmatprep.subr.bf16.mxu0 %v1797
    %2677 = vmatpush2.bf16.msra.mxu0 %v1796
    %2678 = vmatprep.subr.bf16.mxu0 %v1791
    %2679 = vmatpush2.bf16.msra.mxu0 %v1790
    %2680 = vmatprep.subr.bf16.mxu0 %v1785
    %2681 = vmatpush2.bf16.msra.mxu0 %v1784
    %2682 = vmatprep.subr.bf16.mxu0 %v1779
    %2683 = vmatpush2.bf16.msra.mxu0 %v1778
    %2684 = vmatprep.subr.bf16.mxu0 %v1773
    %2685 = vmatpush2.bf16.msra.mxu0 %v1772
    %2686 = vmatprep.mubr.bf16.mxu0 %v563
    %2687 = vmatmul.mubr.bf16.gmra.mxu0 %v562
    %v2688 = vpop.f32.mrf.mxu0
    %v2689 = vadd.f32 0.0, %v2688
    %v2690 = vpop.f32.mrf.mxu0
    %v2691 = vadd.f32 0.0, %v2690
    %v2692 = vpop.f32.mrf.mxu0
    %v2693 = vpop.f32.mrf.mxu0
    %2694 = vdwg.mxu0
    %2695 = vmatprep.subr.bf16.mxu0 %v1863
    %2696 = vmatpush1.bf16.msra.mxu0 %v1862
    %2697 = vmatprep.subr.bf16.mxu0 %v1857
    %2698 = vmatpush1.bf16.msra.mxu0 %v1856
    %2699 = vmatprep.subr.bf16.mxu0 %v1851
    %2700 = vmatpush1.bf16.msra.mxu0 %v1850
    %2701 = vmatprep.subr.bf16.mxu0 %v1845
    %2702 = vmatpush1.bf16.msra.mxu0 %v1844
    %2703 = vmatprep.subr.bf16.mxu0 %v1839
    %2704 = vmatpush1.bf16.msra.mxu0 %v1838
    %2705 = vmatprep.subr.bf16.mxu0 %v1833
    %2706 = vmatpush1.bf16.msra.mxu0 %v1832
    %2707 = vmatprep.subr.bf16.mxu0 %v1827
    %2708 = vmatpush1.bf16.msra.mxu0 %v1826
    %2709 = vmatprep.subr.bf16.mxu0 %v1821
    %2710 = vmatpush1.bf16.msra.mxu0 %v1820
    %2711 = vmatprep.subr.bf16.mxu0 %v1911
    %2712 = vmatpush2.bf16.msra.mxu0 %v1910
    %2713 = vmatprep.subr.bf16.mxu0 %v1905
    %2714 = vmatpush2.bf16.msra.mxu0 %v1904
    %2715 = vmatprep.subr.bf16.mxu0 %v1899
    %2716 = vmatpush2.bf16.msra.mxu0 %v1898
    %2717 = vmatprep.subr.bf16.mxu0 %v1893
    %2718 = vmatpush2.bf16.msra.mxu0 %v1892
    %2719 = vmatprep.subr.bf16.mxu0 %v1887
    %2720 = vmatpush2.bf16.msra.mxu0 %v1886
    %2721 = vmatprep.subr.bf16.mxu0 %v1881
    %2722 = vmatpush2.bf16.msra.mxu0 %v1880
    %2723 = vmatprep.subr.bf16.mxu0 %v1875
    %2724 = vmatpush2.bf16.msra.mxu0 %v1874
    %2725 = vmatprep.subr.bf16.mxu0 %v1869
    %2726 = vmatpush2.bf16.msra.mxu0 %v1868
    %2727 = vmatprep.mubr.bf16.mxu0 %v565
    %2728 = vmatmul.mubr.bf16.gmra.mxu0 %v564
    %v2729 = vpop.f32.mrf.mxu0
    %v2730 = vadd.f32 %v2689, %v2729
    %v2731 = vpop.f32.mrf.mxu0
    %v2732 = vadd.f32 %v2691, %v2731
    %v2733 = vpop.f32.mrf.mxu0
    %v2734 = vpop.f32.mrf.mxu0
    %2735 = vdwg.mxu0
    %2736 = vmatprep.subr.bf16.mxu0 %v1959
    %2737 = vmatpush1.bf16.msra.mxu0 %v1958
    %2738 = vmatprep.subr.bf16.mxu0 %v1953
    %2739 = vmatpush1.bf16.msra.mxu0 %v1952
    %2740 = vmatprep.subr.bf16.mxu0 %v1947
    %2741 = vmatpush1.bf16.msra.mxu0 %v1946
    %2742 = vmatprep.subr.bf16.mxu0 %v1941
    %2743 = vmatpush1.bf16.msra.mxu0 %v1940
    %2744 = vmatprep.subr.bf16.mxu0 %v1935
    %2745 = vmatpush1.bf16.msra.mxu0 %v1934
    %2746 = vmatprep.subr.bf16.mxu0 %v1929
    %2747 = vmatpush1.bf16.msra.mxu0 %v1928
    %2748 = vmatprep.subr.bf16.mxu0 %v1923
    %2749 = vmatpush1.bf16.msra.mxu0 %v1922
    %2750 = vmatprep.subr.bf16.mxu0 %v1917
    %2751 = vmatpush1.bf16.msra.mxu0 %v1916
    %2752 = vmatprep.subr.bf16.mxu0 %v2007
    %2753 = vmatpush2.bf16.msra.mxu0 %v2006
    %2754 = vmatprep.subr.bf16.mxu0 %v2001
    %2755 = vmatpush2.bf16.msra.mxu0 %v2000
    %2756 = vmatprep.subr.bf16.mxu0 %v1995
    %2757 = vmatpush2.bf16.msra.mxu0 %v1994
    %2758 = vmatprep.subr.bf16.mxu0 %v1989
    %2759 = vmatpush2.bf16.msra.mxu0 %v1988
    %2760 = vmatprep.subr.bf16.mxu0 %v1983
    %2761 = vmatpush2.bf16.msra.mxu0 %v1982
    %2762 = vmatprep.subr.bf16.mxu0 %v1977
    %2763 = vmatpush2.bf16.msra.mxu0 %v1976
    %2764 = vmatprep.subr.bf16.mxu0 %v1971
    %2765 = vmatpush2.bf16.msra.mxu0 %v1970
    %2766 = vmatprep.subr.bf16.mxu0 %v1965
    %2767 = vmatpush2.bf16.msra.mxu0 %v1964
    %2768 = vmatprep.mubr.bf16.mxu0 %v567
    %2769 = vmatmul.mubr.bf16.gmra.mxu0 %v566
    %v2770 = vpop.f32.mrf.mxu0
    %v2771 = vadd.f32 %v2730, %v2770
    %v2772 = vpop.f32.mrf.mxu0
    %v2773 = vadd.f32 %v2732, %v2772
    %v2774 = vpop.f32.mrf.mxu0
    %v2775 = vpop.f32.mrf.mxu0
    %2776 = vdwg.mxu0
    %2777 = vmatprep.subr.bf16.mxu0 %v2055
    %2778 = vmatpush1.bf16.msra.mxu0 %v2054
    %2779 = vmatprep.subr.bf16.mxu0 %v2049
    %2780 = vmatpush1.bf16.msra.mxu0 %v2048
    %2781 = vmatprep.subr.bf16.mxu0 %v2043
    %2782 = vmatpush1.bf16.msra.mxu0 %v2042
    %2783 = vmatprep.subr.bf16.mxu0 %v2037
    %2784 = vmatpush1.bf16.msra.mxu0 %v2036
    %2785 = vmatprep.subr.bf16.mxu0 %v2031
    %2786 = vmatpush1.bf16.msra.mxu0 %v2030
    %2787 = vmatprep.subr.bf16.mxu0 %v2025
    %2788 = vmatpush1.bf16.msra.mxu0 %v2024
    %2789 = vmatprep.subr.bf16.mxu0 %v2019
    %2790 = vmatpush1.bf16.msra.mxu0 %v2018
    %2791 = vmatprep.subr.bf16.mxu0 %v2013
    %2792 = vmatpush1.bf16.msra.mxu0 %v2012
    %2793 = vmatprep.subr.bf16.mxu0 %v2103
    %2794 = vmatpush2.bf16.msra.mxu0 %v2102
    %2795 = vmatprep.subr.bf16.mxu0 %v2097
    %2796 = vmatpush2.bf16.msra.mxu0 %v2096
    %2797 = vmatprep.subr.bf16.mxu0 %v2091
    %2798 = vmatpush2.bf16.msra.mxu0 %v2090
    %2799 = vmatprep.subr.bf16.mxu0 %v2085
    %2800 = vmatpush2.bf16.msra.mxu0 %v2084
    %2801 = vmatprep.subr.bf16.mxu0 %v2079
    %2802 = vmatpush2.bf16.msra.mxu0 %v2078
    %2803 = vmatprep.subr.bf16.mxu0 %v2073
    %2804 = vmatpush2.bf16.msra.mxu0 %v2072
    %2805 = vmatprep.subr.bf16.mxu0 %v2067
    %2806 = vmatpush2.bf16.msra.mxu0 %v2066
    %2807 = vmatprep.subr.bf16.mxu0 %v2061
    %2808 = vmatpush2.bf16.msra.mxu0 %v2060
    %2809 = vmatprep.mubr.bf16.mxu0 %v569
    %2810 = vmatmul.mubr.bf16.gmra.mxu0 %v568
    %v2811 = vpop.f32.mrf.mxu0
    %v2812 = vadd.f32 %v2771, %v2811
    %v2813 = vpop.f32.mrf.mxu0
    %v2814 = vadd.f32 %v2773, %v2813
    %v2815 = vpop.f32.mrf.mxu0
    %v2816 = vpop.f32.mrf.mxu0
    %2817 = vdwg.mxu0
    %2818 = vmatprep.subr.bf16.mxu0 %v1769
    %2819 = vmatpush1.bf16.msra.mxu0 %v1768
    %2820 = vmatprep.subr.bf16.mxu0 %v1763
    %2821 = vmatpush1.bf16.msra.mxu0 %v1762
    %2822 = vmatprep.subr.bf16.mxu0 %v1757
    %2823 = vmatpush1.bf16.msra.mxu0 %v1756
    %2824 = vmatprep.subr.bf16.mxu0 %v1751
    %2825 = vmatpush1.bf16.msra.mxu0 %v1750
    %2826 = vmatprep.subr.bf16.mxu0 %v1745
    %2827 = vmatpush1.bf16.msra.mxu0 %v1744
    %2828 = vmatprep.subr.bf16.mxu0 %v1739
    %2829 = vmatpush1.bf16.msra.mxu0 %v1738
    %2830 = vmatprep.subr.bf16.mxu0 %v1733
    %2831 = vmatpush1.bf16.msra.mxu0 %v1732
    %2832 = vmatprep.subr.bf16.mxu0 %v1727
    %2833 = vmatpush1.bf16.msra.mxu0 %v1726
    %2834 = vmatprep.subr.bf16.mxu0 %v1817
    %2835 = vmatpush2.bf16.msra.mxu0 %v1816
    %2836 = vmatprep.subr.bf16.mxu0 %v1811
    %2837 = vmatpush2.bf16.msra.mxu0 %v1810
    %2838 = vmatprep.subr.bf16.mxu0 %v1805
    %2839 = vmatpush2.bf16.msra.mxu0 %v1804
    %2840 = vmatprep.subr.bf16.mxu0 %v1799
    %2841 = vmatpush2.bf16.msra.mxu0 %v1798
    %2842 = vmatprep.subr.bf16.mxu0 %v1793
    %2843 = vmatpush2.bf16.msra.mxu0 %v1792
    %2844 = vmatprep.subr.bf16.mxu0 %v1787
    %2845 = vmatpush2.bf16.msra.mxu0 %v1786
    %2846 = vmatprep.subr.bf16.mxu0 %v1781
    %2847 = vmatpush2.bf16.msra.mxu0 %v1780
    %2848 = vmatprep.subr.bf16.mxu0 %v1775
    %2849 = vmatpush2.bf16.msra.mxu0 %v1774
    %2850 = vmatprep.mubr.bf16.mxu0 %v563
    %2851 = vmatmul.mubr.bf16.gmra.mxu0 %v562
    %v2852 = vpop.f32.mrf.mxu0
    %v2853 = vadd.f32 0.0, %v2852
    %v2854 = vpop.f32.mrf.mxu0
    %v2855 = vadd.f32 0.0, %v2854
    %v2856 = vpop.f32.mrf.mxu0
    %v2857 = vpop.f32.mrf.mxu0
    %2858 = vdwg.mxu0
    %2859 = vmatprep.subr.bf16.mxu0 %v1865
    %2860 = vmatpush1.bf16.msra.mxu0 %v1864
    %2861 = vmatprep.subr.bf16.mxu0 %v1859
    %2862 = vmatpush1.bf16.msra.mxu0 %v1858
    %2863 = vmatprep.subr.bf16.mxu0 %v1853
    %2864 = vmatpush1.bf16.msra.mxu0 %v1852
    %2865 = vmatprep.subr.bf16.mxu0 %v1847
    %2866 = vmatpush1.bf16.msra.mxu0 %v1846
    %2867 = vmatprep.subr.bf16.mxu0 %v1841
    %2868 = vmatpush1.bf16.msra.mxu0 %v1840
    %2869 = vmatprep.subr.bf16.mxu0 %v1835
    %2870 = vmatpush1.bf16.msra.mxu0 %v1834
    %2871 = vmatprep.subr.bf16.mxu0 %v1829
    %2872 = vmatpush1.bf16.msra.mxu0 %v1828
    %2873 = vmatprep.subr.bf16.mxu0 %v1823
    %2874 = vmatpush1.bf16.msra.mxu0 %v1822
    %2875 = vmatprep.subr.bf16.mxu0 %v1913
    %2876 = vmatpush2.bf16.msra.mxu0 %v1912
    %2877 = vmatprep.subr.bf16.mxu0 %v1907
    %2878 = vmatpush2.bf16.msra.mxu0 %v1906
    %2879 = vmatprep.subr.bf16.mxu0 %v1901
    %2880 = vmatpush2.bf16.msra.mxu0 %v1900
    %2881 = vmatprep.subr.bf16.mxu0 %v1895
    %2882 = vmatpush2.bf16.msra.mxu0 %v1894
    %2883 = vmatprep.subr.bf16.mxu0 %v1889
    %2884 = vmatpush2.bf16.msra.mxu0 %v1888
    %2885 = vmatprep.subr.bf16.mxu0 %v1883
    %2886 = vmatpush2.bf16.msra.mxu0 %v1882
    %2887 = vmatprep.subr.bf16.mxu0 %v1877
    %2888 = vmatpush2.bf16.msra.mxu0 %v1876
    %2889 = vmatprep.subr.bf16.mxu0 %v1871
    %2890 = vmatpush2.bf16.msra.mxu0 %v1870
    %2891 = vmatprep.mubr.bf16.mxu0 %v565
    %2892 = vmatmul.mubr.bf16.gmra.mxu0 %v564
    %v2893 = vpop.f32.mrf.mxu0
    %v2894 = vadd.f32 %v2853, %v2893
    %v2895 = vpop.f32.mrf.mxu0
    %v2896 = vadd.f32 %v2855, %v2895
    %v2897 = vpop.f32.mrf.mxu0
    %v2898 = vpop.f32.mrf.mxu0
    %2899 = vdwg.mxu0
    %2900 = vmatprep.subr.bf16.mxu0 %v1961
    %2901 = vmatpush1.bf16.msra.mxu0 %v1960
    %2902 = vmatprep.subr.bf16.mxu0 %v1955
    %2903 = vmatpush1.bf16.msra.mxu0 %v1954
    %2904 = vmatprep.subr.bf16.mxu0 %v1949
    %2905 = vmatpush1.bf16.msra.mxu0 %v1948
    %2906 = vmatprep.subr.bf16.mxu0 %v1943
    %2907 = vmatpush1.bf16.msra.mxu0 %v1942
    %2908 = vmatprep.subr.bf16.mxu0 %v1937
    %2909 = vmatpush1.bf16.msra.mxu0 %v1936
    %2910 = vmatprep.subr.bf16.mxu0 %v1931
    %2911 = vmatpush1.bf16.msra.mxu0 %v1930
    %2912 = vmatprep.subr.bf16.mxu0 %v1925
    %2913 = vmatpush1.bf16.msra.mxu0 %v1924
    %2914 = vmatprep.subr.bf16.mxu0 %v1919
    %2915 = vmatpush1.bf16.msra.mxu0 %v1918
    %2916 = vmatprep.subr.bf16.mxu0 %v2009
    %2917 = vmatpush2.bf16.msra.mxu0 %v2008
    %2918 = vmatprep.subr.bf16.mxu0 %v2003
    %2919 = vmatpush2.bf16.msra.mxu0 %v2002
    %2920 = vmatprep.subr.bf16.mxu0 %v1997
    %2921 = vmatpush2.bf16.msra.mxu0 %v1996
    %2922 = vmatprep.subr.bf16.mxu0 %v1991
    %2923 = vmatpush2.bf16.msra.mxu0 %v1990
    %2924 = vmatprep.subr.bf16.mxu0 %v1985
    %2925 = vmatpush2.bf16.msra.mxu0 %v1984
    %2926 = vmatprep.subr.bf16.mxu0 %v1979
    %2927 = vmatpush2.bf16.msra.mxu0 %v1978
    %2928 = vmatprep.subr.bf16.mxu0 %v1973
    %2929 = vmatpush2.bf16.msra.mxu0 %v1972
    %2930 = vmatprep.subr.bf16.mxu0 %v1967
    %2931 = vmatpush2.bf16.msra.mxu0 %v1966
    %2932 = vmatprep.mubr.bf16.mxu0 %v567
    %2933 = vmatmul.mubr.bf16.gmra.mxu0 %v566
    %v2934 = vpop.f32.mrf.mxu0
    %v2935 = vadd.f32 %v2894, %v2934
    %v2936 = vpop.f32.mrf.mxu0
    %v2937 = vadd.f32 %v2896, %v2936
    %v2938 = vpop.f32.mrf.mxu0
    %v2939 = vpop.f32.mrf.mxu0
    %2940 = vdwg.mxu0
    %2941 = vmatprep.subr.bf16.mxu0 %v2057
    %2942 = vmatpush1.bf16.msra.mxu0 %v2056
    %2943 = vmatprep.subr.bf16.mxu0 %v2051
    %2944 = vmatpush1.bf16.msra.mxu0 %v2050
    %2945 = vmatprep.subr.bf16.mxu0 %v2045
    %2946 = vmatpush1.bf16.msra.mxu0 %v2044
    %2947 = vmatprep.subr.bf16.mxu0 %v2039
    %2948 = vmatpush1.bf16.msra.mxu0 %v2038
    %2949 = vmatprep.subr.bf16.mxu0 %v2033
    %2950 = vmatpush1.bf16.msra.mxu0 %v2032
    %2951 = vmatprep.subr.bf16.mxu0 %v2027
    %2952 = vmatpush1.bf16.msra.mxu0 %v2026
    %2953 = vmatprep.subr.bf16.mxu0 %v2021
    %2954 = vmatpush1.bf16.msra.mxu0 %v2020
    %2955 = vmatprep.subr.bf16.mxu0 %v2015
    %2956 = vmatpush1.bf16.msra.mxu0 %v2014
    %2957 = vmatprep.subr.bf16.mxu0 %v2105
    %2958 = vmatpush2.bf16.msra.mxu0 %v2104
    %2959 = vmatprep.subr.bf16.mxu0 %v2099
    %2960 = vmatpush2.bf16.msra.mxu0 %v2098
    %2961 = vmatprep.subr.bf16.mxu0 %v2093
    %2962 = vmatpush2.bf16.msra.mxu0 %v2092
    %2963 = vmatprep.subr.bf16.mxu0 %v2087
    %2964 = vmatpush2.bf16.msra.mxu0 %v2086
    %2965 = vmatprep.subr.bf16.mxu0 %v2081
    %2966 = vmatpush2.bf16.msra.mxu0 %v2080
    %2967 = vmatprep.subr.bf16.mxu0 %v2075
    %2968 = vmatpush2.bf16.msra.mxu0 %v2074
    %2969 = vmatprep.subr.bf16.mxu0 %v2069
    %2970 = vmatpush2.bf16.msra.mxu0 %v2068
    %2971 = vmatprep.subr.bf16.mxu0 %v2063
    %2972 = vmatpush2.bf16.msra.mxu0 %v2062
    %2973 = vmatprep.mubr.bf16.mxu0 %v569
    %2974 = vmatmul.mubr.bf16.gmra.mxu0 %v568
    %v2975 = vpop.f32.mrf.mxu0
    %v2976 = vadd.f32 %v2935, %v2975
    %v2977 = vpop.f32.mrf.mxu0
    %v2978 = vadd.f32 %v2937, %v2977
    %v2979 = vpop.f32.mrf.mxu0
    %v2980 = vpop.f32.mrf.mxu0
    %2981 = vdwg.mxu0
    %v2982 = vadd.f32 %v548, %v2648
    %v2983 = vadd.f32 %v549, %v2650
    %v2984 = vadd.f32 %v550, %v2812
    %v2985 = vadd.f32 %v551, %v2814
    %v2986 = vadd.f32 %v552, %v2976
    %v2987 = vadd.f32 %v553, %v2978
    %2988 = vst [vmem:[#allocation2] sm:$0xff] %v2982
    %2989 = vst [vmem:[#allocation2 + $0x8] sm:$0xff] %v2983
    %2990 = vst [vmem:[#allocation2 + $0x10] sm:$0xff] %v2984
    %2991 = vst [vmem:[#allocation2 + $0x18] sm:$0xff] %v2985
    %2992 = vst [vmem:[#allocation2 + $0x20] sm:$0xff] %v2986
    %2993 = vst [vmem:[#allocation2 + $0x28] sm:$0xff] %v2987
    %v2994 = vld [vmem:[#allocation3] sm:$0xff]
    %v2995 = vld [vmem:[#allocation3 + $0x8] sm:$0xff]
    %v2996 = vld [vmem:[#allocation3 + $0x10] sm:$0xff]
    %v2997 = vld [vmem:[#allocation3 + $0x18] sm:$0xff]
    %v2998 = vld [vmem:[#allocation3 + $0x20] sm:$0xff]
    %v2999 = vld [vmem:[#allocation3 + $0x28] sm:$0xff]
    %v3000 = vld [vmem:[#allocation8] sm:$0xff]
    %v3001 = vld [vmem:[#allocation8 + $0x8] sm:$0xff]
    %v3002 = vld [vmem:[#allocation8 + $0x10] sm:$0xff]
    %v3003 = vld [vmem:[#allocation8 + $0x18] sm:$0xff]
    %v3004 = vld [vmem:[#allocation8 + $0x20] sm:$0xff]
    %v3005 = vld [vmem:[#allocation8 + $0x28] sm:$0xff]
    %v3006 = vld [vmem:[#allocation8 + $0x30] sm:$0xff]
    %v3007 = vld [vmem:[#allocation8 + $0x38] sm:$0xff]
    %v3008 = vpack.c.bf16 %v3000, %v3000
    %v3009 = vpack.c.bf16 %v3001, %v3001
    %v3010 = vpack.c.bf16 %v3002, %v3002
    %v3011 = vpack.c.bf16 %v3003, %v3003
    %v3012 = vpack.c.bf16 %v3004, %v3004
    %v3013 = vpack.c.bf16 %v3005, %v3005
    %v3014 = vpack.c.bf16 %v3006, %v3006
    %v3015 = vpack.c.bf16 %v3007, %v3007
    %3016 = vmatprep.subr.bf16.mxu0 %v1765
    %3017 = vmatpush1.bf16.msra.mxu0 %v1764
    %3018 = vmatprep.subr.bf16.mxu0 %v1759
    %3019 = vmatpush1.bf16.msra.mxu0 %v1758
    %3020 = vmatprep.subr.bf16.mxu0 %v1753
    %3021 = vmatpush1.bf16.msra.mxu0 %v1752
    %3022 = vmatprep.subr.bf16.mxu0 %v1747
    %3023 = vmatpush1.bf16.msra.mxu0 %v1746
    %3024 = vmatprep.subr.bf16.mxu0 %v1741
    %3025 = vmatpush1.bf16.msra.mxu0 %v1740
    %3026 = vmatprep.subr.bf16.mxu0 %v1735
    %3027 = vmatpush1.bf16.msra.mxu0 %v1734
    %3028 = vmatprep.subr.bf16.mxu0 %v1729
    %3029 = vmatpush1.bf16.msra.mxu0 %v1728
    %3030 = vmatprep.subr.bf16.mxu0 %v1723
    %3031 = vmatpush1.bf16.msra.mxu0 %v1722
    %3032 = vmatprep.subr.bf16.mxu0 %v1813
    %3033 = vmatpush2.bf16.msra.mxu0 %v1812
    %3034 = vmatprep.subr.bf16.mxu0 %v1807
    %3035 = vmatpush2.bf16.msra.mxu0 %v1806
    %3036 = vmatprep.subr.bf16.mxu0 %v1801
    %3037 = vmatpush2.bf16.msra.mxu0 %v1800
    %3038 = vmatprep.subr.bf16.mxu0 %v1795
    %3039 = vmatpush2.bf16.msra.mxu0 %v1794
    %3040 = vmatprep.subr.bf16.mxu0 %v1789
    %3041 = vmatpush2.bf16.msra.mxu0 %v1788
    %3042 = vmatprep.subr.bf16.mxu0 %v1783
    %3043 = vmatpush2.bf16.msra.mxu0 %v1782
    %3044 = vmatprep.subr.bf16.mxu0 %v1777
    %3045 = vmatpush2.bf16.msra.mxu0 %v1776
    %3046 = vmatprep.subr.bf16.mxu0 %v1771
    %3047 = vmatpush2.bf16.msra.mxu0 %v1770
    %3048 = vmatprep.mubr.bf16.mxu0 %v3009
    %3049 = vmatmul.mubr.bf16.gmra.mxu0 %v3008
    %v3050 = vpop.f32.mrf.mxu0
    %v3051 = vadd.f32 0.0, %v3050
    %v3052 = vpop.f32.mrf.mxu0
    %v3053 = vadd.f32 0.0, %v3052
    %v3054 = vpop.f32.mrf.mxu0
    %v3055 = vpop.f32.mrf.mxu0
    %3056 = vdwg.mxu0
    %3057 = vmatprep.subr.bf16.mxu0 %v1861
    %3058 = vmatpush1.bf16.msra.mxu0 %v1860
    %3059 = vmatprep.subr.bf16.mxu0 %v1855
    %3060 = vmatpush1.bf16.msra.mxu0 %v1854
    %3061 = vmatprep.subr.bf16.mxu0 %v1849
    %3062 = vmatpush1.bf16.msra.mxu0 %v1848
    %3063 = vmatprep.subr.bf16.mxu0 %v1843
    %3064 = vmatpush1.bf16.msra.mxu0 %v1842
    %3065 = vmatprep.subr.bf16.mxu0 %v1837
    %3066 = vmatpush1.bf16.msra.mxu0 %v1836
    %3067 = vmatprep.subr.bf16.mxu0 %v1831
    %3068 = vmatpush1.bf16.msra.mxu0 %v1830
    %3069 = vmatprep.subr.bf16.mxu0 %v1825
    %3070 = vmatpush1.bf16.msra.mxu0 %v1824
    %3071 = vmatprep.subr.bf16.mxu0 %v1819
    %3072 = vmatpush1.bf16.msra.mxu0 %v1818
    %3073 = vmatprep.subr.bf16.mxu0 %v1909
    %3074 = vmatpush2.bf16.msra.mxu0 %v1908
    %3075 = vmatprep.subr.bf16.mxu0 %v1903
    %3076 = vmatpush2.bf16.msra.mxu0 %v1902
    %3077 = vmatprep.subr.bf16.mxu0 %v1897
    %3078 = vmatpush2.bf16.msra.mxu0 %v1896
    %3079 = vmatprep.subr.bf16.mxu0 %v1891
    %3080 = vmatpush2.bf16.msra.mxu0 %v1890
    %3081 = vmatprep.subr.bf16.mxu0 %v1885
    %3082 = vmatpush2.bf16.msra.mxu0 %v1884
    %3083 = vmatprep.subr.bf16.mxu0 %v1879
    %3084 = vmatpush2.bf16.msra.mxu0 %v1878
    %3085 = vmatprep.subr.bf16.mxu0 %v1873
    %3086 = vmatpush2.bf16.msra.mxu0 %v1872
    %3087 = vmatprep.subr.bf16.mxu0 %v1867
    %3088 = vmatpush2.bf16.msra.mxu0 %v1866
    %3089 = vmatprep.mubr.bf16.mxu0 %v3011
    %3090 = vmatmul.mubr.bf16.gmra.mxu0 %v3010
    %v3091 = vpop.f32.mrf.mxu0
    %v3092 = vadd.f32 %v3051, %v3091
    %v3093 = vpop.f32.mrf.mxu0
    %v3094 = vadd.f32 %v3053, %v3093
    %v3095 = vpop.f32.mrf.mxu0
    %v3096 = vpop.f32.mrf.mxu0
    %3097 = vdwg.mxu0
    %3098 = vmatprep.subr.bf16.mxu0 %v1957
    %3099 = vmatpush1.bf16.msra.mxu0 %v1956
    %3100 = vmatprep.subr.bf16.mxu0 %v1951
    %3101 = vmatpush1.bf16.msra.mxu0 %v1950
    %3102 = vmatprep.subr.bf16.mxu0 %v1945
    %3103 = vmatpush1.bf16.msra.mxu0 %v1944
    %3104 = vmatprep.subr.bf16.mxu0 %v1939
    %3105 = vmatpush1.bf16.msra.mxu0 %v1938
    %3106 = vmatprep.subr.bf16.mxu0 %v1933
    %3107 = vmatpush1.bf16.msra.mxu0 %v1932
    %3108 = vmatprep.subr.bf16.mxu0 %v1927
    %3109 = vmatpush1.bf16.msra.mxu0 %v1926
    %3110 = vmatprep.subr.bf16.mxu0 %v1921
    %3111 = vmatpush1.bf16.msra.mxu0 %v1920
    %3112 = vmatprep.subr.bf16.mxu0 %v1915
    %3113 = vmatpush1.bf16.msra.mxu0 %v1914
    %3114 = vmatprep.subr.bf16.mxu0 %v2005
    %3115 = vmatpush2.bf16.msra.mxu0 %v2004
    %3116 = vmatprep.subr.bf16.mxu0 %v1999
    %3117 = vmatpush2.bf16.msra.mxu0 %v1998
    %3118 = vmatprep.subr.bf16.mxu0 %v1993
    %3119 = vmatpush2.bf16.msra.mxu0 %v1992
    %3120 = vmatprep.subr.bf16.mxu0 %v1987
    %3121 = vmatpush2.bf16.msra.mxu0 %v1986
    %3122 = vmatprep.subr.bf16.mxu0 %v1981
    %3123 = vmatpush2.bf16.msra.mxu0 %v1980
    %3124 = vmatprep.subr.bf16.mxu0 %v1975
    %3125 = vmatpush2.bf16.msra.mxu0 %v1974
    %3126 = vmatprep.subr.bf16.mxu0 %v1969
    %3127 = vmatpush2.bf16.msra.mxu0 %v1968
    %3128 = vmatprep.subr.bf16.mxu0 %v1963
    %3129 = vmatpush2.bf16.msra.mxu0 %v1962
    %3130 = vmatprep.mubr.bf16.mxu0 %v3013
    %3131 = vmatmul.mubr.bf16.gmra.mxu0 %v3012
    %v3132 = vpop.f32.mrf.mxu0
    %v3133 = vadd.f32 %v3092, %v3132
    %v3134 = vpop.f32.mrf.mxu0
    %v3135 = vadd.f32 %v3094, %v3134
    %v3136 = vpop.f32.mrf.mxu0
    %v3137 = vpop.f32.mrf.mxu0
    %3138 = vdwg.mxu0
    %3139 = vmatprep.subr.bf16.mxu0 %v2053
    %3140 = vmatpush1.bf16.msra.mxu0 %v2052
    %3141 = vmatprep.subr.bf16.mxu0 %v2047
    %3142 = vmatpush1.bf16.msra.mxu0 %v2046
    %3143 = vmatprep.subr.bf16.mxu0 %v2041
    %3144 = vmatpush1.bf16.msra.mxu0 %v2040
    %3145 = vmatprep.subr.bf16.mxu0 %v2035
    %3146 = vmatpush1.bf16.msra.mxu0 %v2034
    %3147 = vmatprep.subr.bf16.mxu0 %v2029
    %3148 = vmatpush1.bf16.msra.mxu0 %v2028
    %3149 = vmatprep.subr.bf16.mxu0 %v2023
    %3150 = vmatpush1.bf16.msra.mxu0 %v2022
    %3151 = vmatprep.subr.bf16.mxu0 %v2017
    %3152 = vmatpush1.bf16.msra.mxu0 %v2016
    %3153 = vmatprep.subr.bf16.mxu0 %v2011
    %3154 = vmatpush1.bf16.msra.mxu0 %v2010
    %3155 = vmatprep.subr.bf16.mxu0 %v2101
    %3156 = vmatpush2.bf16.msra.mxu0 %v2100
    %3157 = vmatprep.subr.bf16.mxu0 %v2095
    %3158 = vmatpush2.bf16.msra.mxu0 %v2094
    %3159 = vmatprep.subr.bf16.mxu0 %v2089
    %3160 = vmatpush2.bf16.msra.mxu0 %v2088
    %3161 = vmatprep.subr.bf16.mxu0 %v2083
    %3162 = vmatpush2.bf16.msra.mxu0 %v2082
    %3163 = vmatprep.subr.bf16.mxu0 %v2077
    %3164 = vmatpush2.bf16.msra.mxu0 %v2076
    %3165 = vmatprep.subr.bf16.mxu0 %v2071
    %3166 = vmatpush2.bf16.msra.mxu0 %v2070
    %3167 = vmatprep.subr.bf16.mxu0 %v2065
    %3168 = vmatpush2.bf16.msra.mxu0 %v2064
    %3169 = vmatprep.subr.bf16.mxu0 %v2059
    %3170 = vmatpush2.bf16.msra.mxu0 %v2058
    %3171 = vmatprep.mubr.bf16.mxu0 %v3015
    %3172 = vmatmul.mubr.bf16.gmra.mxu0 %v3014
    %v3173 = vpop.f32.mrf.mxu0
    %v3174 = vadd.f32 %v3133, %v3173
    %v3175 = vpop.f32.mrf.mxu0
    %v3176 = vadd.f32 %v3135, %v3175
    %v3177 = vpop.f32.mrf.mxu0
    %v3178 = vpop.f32.mrf.mxu0
    %3179 = vdwg.mxu0
    %3180 = vmatprep.subr.bf16.mxu0 %v1767
    %3181 = vmatpush1.bf16.msra.mxu0 %v1766
    %3182 = vmatprep.subr.bf16.mxu0 %v1761
    %3183 = vmatpush1.bf16.msra.mxu0 %v1760
    %3184 = vmatprep.subr.bf16.mxu0 %v1755
    %3185 = vmatpush1.bf16.msra.mxu0 %v1754
    %3186 = vmatprep.subr.bf16.mxu0 %v1749
    %3187 = vmatpush1.bf16.msra.mxu0 %v1748
    %3188 = vmatprep.subr.bf16.mxu0 %v1743
    %3189 = vmatpush1.bf16.msra.mxu0 %v1742
    %3190 = vmatprep.subr.bf16.mxu0 %v1737
    %3191 = vmatpush1.bf16.msra.mxu0 %v1736
    %3192 = vmatprep.subr.bf16.mxu0 %v1731
    %3193 = vmatpush1.bf16.msra.mxu0 %v1730
    %3194 = vmatprep.subr.bf16.mxu0 %v1725
    %3195 = vmatpush1.bf16.msra.mxu0 %v1724
    %3196 = vmatprep.subr.bf16.mxu0 %v1815
    %3197 = vmatpush2.bf16.msra.mxu0 %v1814
    %3198 = vmatprep.subr.bf16.mxu0 %v1809
    %3199 = vmatpush2.bf16.msra.mxu0 %v1808
    %3200 = vmatprep.subr.bf16.mxu0 %v1803
    %3201 = vmatpush2.bf16.msra.mxu0 %v1802
    %3202 = vmatprep.subr.bf16.mxu0 %v1797
    %3203 = vmatpush2.bf16.msra.mxu0 %v1796
    %3204 = vmatprep.subr.bf16.mxu0 %v1791
    %3205 = vmatpush2.bf16.msra.mxu0 %v1790
    %3206 = vmatprep.subr.bf16.mxu0 %v1785
    %3207 = vmatpush2.bf16.msra.mxu0 %v1784
    %3208 = vmatprep.subr.bf16.mxu0 %v1779
    %3209 = vmatpush2.bf16.msra.mxu0 %v1778
    %3210 = vmatprep.subr.bf16.mxu0 %v1773
    %3211 = vmatpush2.bf16.msra.mxu0 %v1772
    %3212 = vmatprep.mubr.bf16.mxu0 %v3009
    %3213 = vmatmul.mubr.bf16.gmra.mxu0 %v3008
    %v3214 = vpop.f32.mrf.mxu0
    %v3215 = vadd.f32 0.0, %v3214
    %v3216 = vpop.f32.mrf.mxu0
    %v3217 = vadd.f32 0.0, %v3216
    %v3218 = vpop.f32.mrf.mxu0
    %v3219 = vpop.f32.mrf.mxu0
    %3220 = vdwg.mxu0
    %3221 = vmatprep.subr.bf16.mxu0 %v1863
    %3222 = vmatpush1.bf16.msra.mxu0 %v1862
    %3223 = vmatprep.subr.bf16.mxu0 %v1857
    %3224 = vmatpush1.bf16.msra.mxu0 %v1856
    %3225 = vmatprep.subr.bf16.mxu0 %v1851
    %3226 = vmatpush1.bf16.msra.mxu0 %v1850
    %3227 = vmatprep.subr.bf16.mxu0 %v1845
    %3228 = vmatpush1.bf16.msra.mxu0 %v1844
    %3229 = vmatprep.subr.bf16.mxu0 %v1839
    %3230 = vmatpush1.bf16.msra.mxu0 %v1838
    %3231 = vmatprep.subr.bf16.mxu0 %v1833
    %3232 = vmatpush1.bf16.msra.mxu0 %v1832
    %3233 = vmatprep.subr.bf16.mxu0 %v1827
    %3234 = vmatpush1.bf16.msra.mxu0 %v1826
    %3235 = vmatprep.subr.bf16.mxu0 %v1821
    %3236 = vmatpush1.bf16.msra.mxu0 %v1820
    %3237 = vmatprep.subr.bf16.mxu0 %v1911
    %3238 = vmatpush2.bf16.msra.mxu0 %v1910
    %3239 = vmatprep.subr.bf16.mxu0 %v1905
    %3240 = vmatpush2.bf16.msra.mxu0 %v1904
    %3241 = vmatprep.subr.bf16.mxu0 %v1899
    %3242 = vmatpush2.bf16.msra.mxu0 %v1898
    %3243 = vmatprep.subr.bf16.mxu0 %v1893
    %3244 = vmatpush2.bf16.msra.mxu0 %v1892
    %3245 = vmatprep.subr.bf16.mxu0 %v1887
    %3246 = vmatpush2.bf16.msra.mxu0 %v1886
    %3247 = vmatprep.subr.bf16.mxu0 %v1881
    %3248 = vmatpush2.bf16.msra.mxu0 %v1880
    %3249 = vmatprep.subr.bf16.mxu0 %v1875
    %3250 = vmatpush2.bf16.msra.mxu0 %v1874
    %3251 = vmatprep.subr.bf16.mxu0 %v1869
    %3252 = vmatpush2.bf16.msra.mxu0 %v1868
    %3253 = vmatprep.mubr.bf16.mxu0 %v3011
    %3254 = vmatmul.mubr.bf16.gmra.mxu0 %v3010
    %v3255 = vpop.f32.mrf.mxu0
    %v3256 = vadd.f32 %v3215, %v3255
    %v3257 = vpop.f32.mrf.mxu0
    %v3258 = vadd.f32 %v3217, %v3257
    %v3259 = vpop.f32.mrf.mxu0
    %v3260 = vpop.f32.mrf.mxu0
    %3261 = vdwg.mxu0
    %3262 = vmatprep.subr.bf16.mxu0 %v1959
    %3263 = vmatpush1.bf16.msra.mxu0 %v1958
    %3264 = vmatprep.subr.bf16.mxu0 %v1953
    %3265 = vmatpush1.bf16.msra.mxu0 %v1952
    %3266 = vmatprep.subr.bf16.mxu0 %v1947
    %3267 = vmatpush1.bf16.msra.mxu0 %v1946
    %3268 = vmatprep.subr.bf16.mxu0 %v1941
    %3269 = vmatpush1.bf16.msra.mxu0 %v1940
    %3270 = vmatprep.subr.bf16.mxu0 %v1935
    %3271 = vmatpush1.bf16.msra.mxu0 %v1934
    %3272 = vmatprep.subr.bf16.mxu0 %v1929
    %3273 = vmatpush1.bf16.msra.mxu0 %v1928
    %3274 = vmatprep.subr.bf16.mxu0 %v1923
    %3275 = vmatpush1.bf16.msra.mxu0 %v1922
    %3276 = vmatprep.subr.bf16.mxu0 %v1917
    %3277 = vmatpush1.bf16.msra.mxu0 %v1916
    %3278 = vmatprep.subr.bf16.mxu0 %v2007
    %3279 = vmatpush2.bf16.msra.mxu0 %v2006
    %3280 = vmatprep.subr.bf16.mxu0 %v2001
    %3281 = vmatpush2.bf16.msra.mxu0 %v2000
    %3282 = vmatprep.subr.bf16.mxu0 %v1995
    %3283 = vmatpush2.bf16.msra.mxu0 %v1994
    %3284 = vmatprep.subr.bf16.mxu0 %v1989
    %3285 = vmatpush2.bf16.msra.mxu0 %v1988
    %3286 = vmatprep.subr.bf16.mxu0 %v1983
    %3287 = vmatpush2.bf16.msra.mxu0 %v1982
    %3288 = vmatprep.subr.bf16.mxu0 %v1977
    %3289 = vmatpush2.bf16.msra.mxu0 %v1976
    %3290 = vmatprep.subr.bf16.mxu0 %v1971
    %3291 = vmatpush2.bf16.msra.mxu0 %v1970
    %3292 = vmatprep.subr.bf16.mxu0 %v1965
    %3293 = vmatpush2.bf16.msra.mxu0 %v1964
    %3294 = vmatprep.mubr.bf16.mxu0 %v3013
    %3295 = vmatmul.mubr.bf16.gmra.mxu0 %v3012
    %v3296 = vpop.f32.mrf.mxu0
    %v3297 = vadd.f32 %v3256, %v3296
    %v3298 = vpop.f32.mrf.mxu0
    %v3299 = vadd.f32 %v3258, %v3298
    %v3300 = vpop.f32.mrf.mxu0
    %v3301 = vpop.f32.mrf.mxu0
    %3302 = vdwg.mxu0
    %3303 = vmatprep.subr.bf16.mxu0 %v2055
    %3304 = vmatpush1.bf16.msra.mxu0 %v2054
    %3305 = vmatprep.subr.bf16.mxu0 %v2049
    %3306 = vmatpush1.bf16.msra.mxu0 %v2048
    %3307 = vmatprep.subr.bf16.mxu0 %v2043
    %3308 = vmatpush1.bf16.msra.mxu0 %v2042
    %3309 = vmatprep.subr.bf16.mxu0 %v2037
    %3310 = vmatpush1.bf16.msra.mxu0 %v2036
    %3311 = vmatprep.subr.bf16.mxu0 %v2031
    %3312 = vmatpush1.bf16.msra.mxu0 %v2030
    %3313 = vmatprep.subr.bf16.mxu0 %v2025
    %3314 = vmatpush1.bf16.msra.mxu0 %v2024
    %3315 = vmatprep.subr.bf16.mxu0 %v2019
    %3316 = vmatpush1.bf16.msra.mxu0 %v2018
    %3317 = vmatprep.subr.bf16.mxu0 %v2013
    %3318 = vmatpush1.bf16.msra.mxu0 %v2012
    %3319 = vmatprep.subr.bf16.mxu0 %v2103
    %3320 = vmatpush2.bf16.msra.mxu0 %v2102
    %3321 = vmatprep.subr.bf16.mxu0 %v2097
    %3322 = vmatpush2.bf16.msra.mxu0 %v2096
    %3323 = vmatprep.subr.bf16.mxu0 %v2091
    %3324 = vmatpush2.bf16.msra.mxu0 %v2090
    %3325 = vmatprep.subr.bf16.mxu0 %v2085
    %3326 = vmatpush2.bf16.msra.mxu0 %v2084
    %3327 = vmatprep.subr.bf16.mxu0 %v2079
    %3328 = vmatpush2.bf16.msra.mxu0 %v2078
    %3329 = vmatprep.subr.bf16.mxu0 %v2073
    %3330 = vmatpush2.bf16.msra.mxu0 %v2072
    %3331 = vmatprep.subr.bf16.mxu0 %v2067
    %3332 = vmatpush2.bf16.msra.mxu0 %v2066
    %3333 = vmatprep.subr.bf16.mxu0 %v2061
    %3334 = vmatpush2.bf16.msra.mxu0 %v2060
    %3335 = vmatprep.mubr.bf16.mxu0 %v3015
    %3336 = vmatmul.mubr.bf16.gmra.mxu0 %v3014
    %v3337 = vpop.f32.mrf.mxu0
    %v3338 = vadd.f32 %v3297, %v3337
    %v3339 = vpop.f32.mrf.mxu0
    %v3340 = vadd.f32 %v3299, %v3339
    %v3341 = vpop.f32.mrf.mxu0
    %v3342 = vpop.f32.mrf.mxu0
    %3343 = vdwg.mxu0
    %3344 = vmatprep.subr.bf16.mxu0 %v1769
    %3345 = vmatpush1.bf16.msra.mxu0 %v1768
    %3346 = vmatprep.subr.bf16.mxu0 %v1763
    %3347 = vmatpush1.bf16.msra.mxu0 %v1762
    %3348 = vmatprep.subr.bf16.mxu0 %v1757
    %3349 = vmatpush1.bf16.msra.mxu0 %v1756
    %3350 = vmatprep.subr.bf16.mxu0 %v1751
    %3351 = vmatpush1.bf16.msra.mxu0 %v1750
    %3352 = vmatprep.subr.bf16.mxu0 %v1745
    %3353 = vmatpush1.bf16.msra.mxu0 %v1744
    %3354 = vmatprep.subr.bf16.mxu0 %v1739
    %3355 = vmatpush1.bf16.msra.mxu0 %v1738
    %3356 = vmatprep.subr.bf16.mxu0 %v1733
    %3357 = vmatpush1.bf16.msra.mxu0 %v1732
    %3358 = vmatprep.subr.bf16.mxu0 %v1727
    %3359 = vmatpush1.bf16.msra.mxu0 %v1726
    %3360 = vmatprep.subr.bf16.mxu0 %v1817
    %3361 = vmatpush2.bf16.msra.mxu0 %v1816
    %3362 = vmatprep.subr.bf16.mxu0 %v1811
    %3363 = vmatpush2.bf16.msra.mxu0 %v1810
    %3364 = vmatprep.subr.bf16.mxu0 %v1805
    %3365 = vmatpush2.bf16.msra.mxu0 %v1804
    %3366 = vmatprep.subr.bf16.mxu0 %v1799
    %3367 = vmatpush2.bf16.msra.mxu0 %v1798
    %3368 = vmatprep.subr.bf16.mxu0 %v1793
    %3369 = vmatpush2.bf16.msra.mxu0 %v1792
    %3370 = vmatprep.subr.bf16.mxu0 %v1787
    %3371 = vmatpush2.bf16.msra.mxu0 %v1786
    %3372 = vmatprep.subr.bf16.mxu0 %v1781
    %3373 = vmatpush2.bf16.msra.mxu0 %v1780
    %3374 = vmatprep.subr.bf16.mxu0 %v1775
    %3375 = vmatpush2.bf16.msra.mxu0 %v1774
    %3376 = vmatprep.mubr.bf16.mxu0 %v3009
    %3377 = vmatmul.mubr.bf16.gmra.mxu0 %v3008
    %v3378 = vpop.f32.mrf.mxu0
    %v3379 = vadd.f32 0.0, %v3378
    %v3380 = vpop.f32.mrf.mxu0
    %v3381 = vadd.f32 0.0, %v3380
    %v3382 = vpop.f32.mrf.mxu0
    %v3383 = vpop.f32.mrf.mxu0
    %3384 = vdwg.mxu0
    %3385 = vmatprep.subr.bf16.mxu0 %v1865
    %3386 = vmatpush1.bf16.msra.mxu0 %v1864
    %3387 = vmatprep.subr.bf16.mxu0 %v1859
    %3388 = vmatpush1.bf16.msra.mxu0 %v1858
    %3389 = vmatprep.subr.bf16.mxu0 %v1853
    %3390 = vmatpush1.bf16.msra.mxu0 %v1852
    %3391 = vmatprep.subr.bf16.mxu0 %v1847
    %3392 = vmatpush1.bf16.msra.mxu0 %v1846
    %3393 = vmatprep.subr.bf16.mxu0 %v1841
    %3394 = vmatpush1.bf16.msra.mxu0 %v1840
    %3395 = vmatprep.subr.bf16.mxu0 %v1835
    %3396 = vmatpush1.bf16.msra.mxu0 %v1834
    %3397 = vmatprep.subr.bf16.mxu0 %v1829
    %3398 = vmatpush1.bf16.msra.mxu0 %v1828
    %3399 = vmatprep.subr.bf16.mxu0 %v1823
    %3400 = vmatpush1.bf16.msra.mxu0 %v1822
    %3401 = vmatprep.subr.bf16.mxu0 %v1913
    %3402 = vmatpush2.bf16.msra.mxu0 %v1912
    %3403 = vmatprep.subr.bf16.mxu0 %v1907
    %3404 = vmatpush2.bf16.msra.mxu0 %v1906
    %3405 = vmatprep.subr.bf16.mxu0 %v1901
    %3406 = vmatpush2.bf16.msra.mxu0 %v1900
    %3407 = vmatprep.subr.bf16.mxu0 %v1895
    %3408 = vmatpush2.bf16.msra.mxu0 %v1894
    %3409 = vmatprep.subr.bf16.mxu0 %v1889
    %3410 = vmatpush2.bf16.msra.mxu0 %v1888
    %3411 = vmatprep.subr.bf16.mxu0 %v1883
    %3412 = vmatpush2.bf16.msra.mxu0 %v1882
    %3413 = vmatprep.subr.bf16.mxu0 %v1877
    %3414 = vmatpush2.bf16.msra.mxu0 %v1876
    %3415 = vmatprep.subr.bf16.mxu0 %v1871
    %3416 = vmatpush2.bf16.msra.mxu0 %v1870
    %3417 = vmatprep.mubr.bf16.mxu0 %v3011
    %3418 = vmatmul.mubr.bf16.gmra.mxu0 %v3010
    %v3419 = vpop.f32.mrf.mxu0
    %v3420 = vadd.f32 %v3379, %v3419
    %v3421 = vpop.f32.mrf.mxu0
    %v3422 = vadd.f32 %v3381, %v3421
    %v3423 = vpop.f32.mrf.mxu0
    %v3424 = vpop.f32.mrf.mxu0
    %3425 = vdwg.mxu0
    %3426 = vmatprep.subr.bf16.mxu0 %v1961
    %3427 = vmatpush1.bf16.msra.mxu0 %v1960
    %3428 = vmatprep.subr.bf16.mxu0 %v1955
    %3429 = vmatpush1.bf16.msra.mxu0 %v1954
    %3430 = vmatprep.subr.bf16.mxu0 %v1949
    %3431 = vmatpush1.bf16.msra.mxu0 %v1948
    %3432 = vmatprep.subr.bf16.mxu0 %v1943
    %3433 = vmatpush1.bf16.msra.mxu0 %v1942
    %3434 = vmatprep.subr.bf16.mxu0 %v1937
    %3435 = vmatpush1.bf16.msra.mxu0 %v1936
    %3436 = vmatprep.subr.bf16.mxu0 %v1931
    %3437 = vmatpush1.bf16.msra.mxu0 %v1930
    %3438 = vmatprep.subr.bf16.mxu0 %v1925
    %3439 = vmatpush1.bf16.msra.mxu0 %v1924
    %3440 = vmatprep.subr.bf16.mxu0 %v1919
    %3441 = vmatpush1.bf16.msra.mxu0 %v1918
    %3442 = vmatprep.subr.bf16.mxu0 %v2009
    %3443 = vmatpush2.bf16.msra.mxu0 %v2008
    %3444 = vmatprep.subr.bf16.mxu0 %v2003
    %3445 = vmatpush2.bf16.msra.mxu0 %v2002
    %3446 = vmatprep.subr.bf16.mxu0 %v1997
    %3447 = vmatpush2.bf16.msra.mxu0 %v1996
    %3448 = vmatprep.subr.bf16.mxu0 %v1991
    %3449 = vmatpush2.bf16.msra.mxu0 %v1990
    %3450 = vmatprep.subr.bf16.mxu0 %v1985
    %3451 = vmatpush2.bf16.msra.mxu0 %v1984
    %3452 = vmatprep.subr.bf16.mxu0 %v1979
    %3453 = vmatpush2.bf16.msra.mxu0 %v1978
    %3454 = vmatprep.subr.bf16.mxu0 %v1973
    %3455 = vmatpush2.bf16.msra.mxu0 %v1972
    %3456 = vmatprep.subr.bf16.mxu0 %v1967
    %3457 = vmatpush2.bf16.msra.mxu0 %v1966
    %3458 = vmatprep.mubr.bf16.mxu0 %v3013
    %3459 = vmatmul.mubr.bf16.gmra.mxu0 %v3012
    %v3460 = vpop.f32.mrf.mxu0
    %v3461 = vadd.f32 %v3420, %v3460
    %v3462 = vpop.f32.mrf.mxu0
    %v3463 = vadd.f32 %v3422, %v3462
    %v3464 = vpop.f32.mrf.mxu0
    %v3465 = vpop.f32.mrf.mxu0
    %3466 = vdwg.mxu0
    %3467 = vmatprep.subr.bf16.mxu0 %v2057
    %3468 = vmatpush1.bf16.msra.mxu0 %v2056
    %3469 = vmatprep.subr.bf16.mxu0 %v2051
    %3470 = vmatpush1.bf16.msra.mxu0 %v2050
    %3471 = vmatprep.subr.bf16.mxu0 %v2045
    %3472 = vmatpush1.bf16.msra.mxu0 %v2044
    %3473 = vmatprep.subr.bf16.mxu0 %v2039
    %3474 = vmatpush1.bf16.msra.mxu0 %v2038
    %3475 = vmatprep.subr.bf16.mxu0 %v2033
    %3476 = vmatpush1.bf16.msra.mxu0 %v2032
    %3477 = vmatprep.subr.bf16.mxu0 %v2027
    %3478 = vmatpush1.bf16.msra.mxu0 %v2026
    %3479 = vmatprep.subr.bf16.mxu0 %v2021
    %3480 = vmatpush1.bf16.msra.mxu0 %v2020
    %3481 = vmatprep.subr.bf16.mxu0 %v2015
    %3482 = vmatpush1.bf16.msra.mxu0 %v2014
    %3483 = vmatprep.subr.bf16.mxu0 %v2105
    %3484 = vmatpush2.bf16.msra.mxu0 %v2104
    %3485 = vmatprep.subr.bf16.mxu0 %v2099
    %3486 = vmatpush2.bf16.msra.mxu0 %v2098
    %3487 = vmatprep.subr.bf16.mxu0 %v2093
    %3488 = vmatpush2.bf16.msra.mxu0 %v2092
    %3489 = vmatprep.subr.bf16.mxu0 %v2087
    %3490 = vmatpush2.bf16.msra.mxu0 %v2086
    %3491 = vmatprep.subr.bf16.mxu0 %v2081
    %3492 = vmatpush2.bf16.msra.mxu0 %v2080
    %3493 = vmatprep.subr.bf16.mxu0 %v2075
    %3494 = vmatpush2.bf16.msra.mxu0 %v2074
    %3495 = vmatprep.subr.bf16.mxu0 %v2069
    %3496 = vmatpush2.bf16.msra.mxu0 %v2068
    %3497 = vmatprep.subr.bf16.mxu0 %v2063
    %3498 = vmatpush2.bf16.msra.mxu0 %v2062
    %3499 = vmatprep.mubr.bf16.mxu0 %v3015
    %3500 = vmatmul.mubr.bf16.gmra.mxu0 %v3014
    %v3501 = vpop.f32.mrf.mxu0
    %v3502 = vadd.f32 %v3461, %v3501
    %v3503 = vpop.f32.mrf.mxu0
    %v3504 = vadd.f32 %v3463, %v3503
    %v3505 = vpop.f32.mrf.mxu0
    %v3506 = vpop.f32.mrf.mxu0
    %3507 = vdwg.mxu0
    %v3508 = vadd.f32 %v2994, %v3174
    %v3509 = vadd.f32 %v2995, %v3176
    %v3510 = vadd.f32 %v2996, %v3338
    %v3511 = vadd.f32 %v2997, %v3340
    %v3512 = vadd.f32 %v2998, %v3502
    %v3513 = vadd.f32 %v2999, %v3504
    %3514 = vst [vmem:[#allocation3] sm:$0xff] %v3508
    %3515 = vst [vmem:[#allocation3 + $0x8] sm:$0xff] %v3509
    %3516 = vst [vmem:[#allocation3 + $0x10] sm:$0xff] %v3510
    %3517 = vst [vmem:[#allocation3 + $0x18] sm:$0xff] %v3511
    %3518 = vst [vmem:[#allocation3 + $0x20] sm:$0xff] %v3512
    %3519 = vst [vmem:[#allocation3 + $0x28] sm:$0xff] %v3513
    // Predicated region
    $region82: #{tpu_custom_call.1} parent=1 // pred_check
      %p3520 = pneg %p148
    $region83: #{tpu_custom_call.1} parent=1 // pred_check_branch
      %3522 = sbr.rel (%p3520) target = $region85
    $region84: #{tpu_custom_call.1} parent=1 // pred_region
      %v3523 = vld [vmem:[#allocation2] sm:$0xff]
      %v3524 = vld [vmem:[#allocation2 + $0x8] sm:$0xff]
      %v3525 = vld [vmem:[#allocation2 + $0x10] sm:$0xff]
      %v3526 = vld [vmem:[#allocation2 + $0x18] sm:$0xff]
      %v3527 = vld [vmem:[#allocation2 + $0x20] sm:$0xff]
      %v3528 = vld [vmem:[#allocation2 + $0x28] sm:$0xff]
      %v3529 = vld [vmem:[#allocation11] sm:$0x3f]
      %v3531 = vlaneseq
      %v3532 = vshrl.u32 %v3531, 7
      %v3533 = vsub.s32 0, %v3532
      %v3534 = vrot.slane %v3529, %v3533
      %v3535 = vlaneseq
      %v3536 = vshrl.u32 %v3535, 7
      %v3537 = vsub.s32 1, %v3536
      %v3538 = vrot.slane %v3529, %v3537
      %v3539 = vlaneseq
      %v3540 = vshrl.u32 %v3539, 7
      %v3541 = vsub.s32 2, %v3540
      %v3542 = vrot.slane %v3529, %v3541
      %v3543 = vlaneseq
      %v3544 = vshrl.u32 %v3543, 7
      %v3545 = vsub.s32 3, %v3544
      %v3546 = vrot.slane %v3529, %v3545
      %v3547 = vlaneseq
      %v3548 = vshrl.u32 %v3547, 7
      %v3549 = vsub.s32 4, %v3548
      %v3550 = vrot.slane %v3529, %v3549
      %v3551 = vlaneseq
      %v3552 = vshrl.u32 %v3551, 7
      %v3553 = vsub.s32 5, %v3552
      %v3554 = vrot.slane %v3529, %v3553
      %v3561 = vadd.f32 %v3523, %v3534
      %v3562 = vadd.f32 %v3524, %v3538
      %v3563 = vadd.f32 %v3525, %v3542
      %v3564 = vadd.f32 %v3526, %v3546
      %v3565 = vadd.f32 %v3527, %v3550
      %v3566 = vadd.f32 %v3528, %v3554
      %v3567 = vld [vmem:[#allocation3] sm:$0xff]
      %v3568 = vld [vmem:[#allocation3 + $0x8] sm:$0xff]
      %v3569 = vld [vmem:[#allocation3 + $0x10] sm:$0xff]
      %v3570 = vld [vmem:[#allocation3 + $0x18] sm:$0xff]
      %v3571 = vld [vmem:[#allocation3 + $0x20] sm:$0xff]
      %v3572 = vld [vmem:[#allocation3 + $0x28] sm:$0xff]
      %v3573 = vadd.f32 %v3567, %v3534
      %v3574 = vadd.f32 %v3568, %v3538
      %v3575 = vadd.f32 %v3569, %v3542
      %v3576 = vadd.f32 %v3570, %v3546
      %v3577 = vadd.f32 %v3571, %v3550
      %v3578 = vadd.f32 %v3572, %v3554
      %v3579 = vsub.f32 %v3561, %v3573
      %v3580 = vsub.f32 %v3562, %v3574
      %v3581 = vsub.f32 %v3563, %v3575
      %v3582 = vsub.f32 %v3564, %v3576
      %v3583 = vsub.f32 %v3565, %v3577
      %v3584 = vsub.f32 %v3566, %v3578
      %v3585 = vand.u32 2147483647, %v3579
      %v3586 = vand.u32 2147483647, %v3580
      %v3587 = vand.u32 2147483647, %v3581
      %v3588 = vand.u32 2147483647, %v3582
      %v3589 = vand.u32 2147483647, %v3583
      %v3590 = vand.u32 2147483647, %v3584
      %v3591 = vpack.c.bf16 %v3561, %v3561
      %v3592 = vpack.c.bf16 %v3562, %v3562
      %v3593 = vpack.c.bf16 %v3563, %v3563
      %v3594 = vpack.c.bf16 %v3564, %v3564
      %v3595 = vpack.c.bf16 %v3565, %v3565
      %v3596 = vpack.c.bf16 %v3566, %v3566
      %v3597 = vld [vmem:[#allocation13] sm:$0xff]
      %v3598 = vld [vmem:[#allocation13 + $0x8] sm:$0xff]
      %v3599 = vld [vmem:[#allocation13 + $0x10] sm:$0xff]
      %v3600 = vld [vmem:[#allocation13 + $0x18] sm:$0xff]
      %v3601 = vld [vmem:[#allocation13 + $0x20] sm:$0xff]
      %v3602 = vld [vmem:[#allocation13 + $0x28] sm:$0xff]
      %v3603 = vld [vmem:[#allocation13 + $0x30] sm:$0xff]
      %v3604 = vld [vmem:[#allocation13 + $0x38] sm:$0xff]
      %v3605 = vld [vmem:[#allocation13 + $0x40] sm:$0xff]
      %v3606 = vld [vmem:[#allocation13 + $0x48] sm:$0xff]
      %v3607 = vld [vmem:[#allocation13 + $0x50] sm:$0xff]
      %v3608 = vld [vmem:[#allocation13 + $0x58] sm:$0xff]
      %v3609 = vld [vmem:[#allocation13 + $0x60] sm:$0xff]
      %v3610 = vld [vmem:[#allocation13 + $0x68] sm:$0xff]
      %v3611 = vld [vmem:[#allocation13 + $0x70] sm:$0xff]
      %v3612 = vld [vmem:[#allocation13 + $0x78] sm:$0xff]
      %v3613 = vld [vmem:[#allocation13 + $0x80] sm:$0xff]
      %v3614 = vld [vmem:[#allocation13 + $0x88] sm:$0xff]
      %v3615 = vld [vmem:[#allocation13 + $0x90] sm:$0xff]
      %v3616 = vld [vmem:[#allocation13 + $0x98] sm:$0xff]
      %v3617 = vld [vmem:[#allocation13 + $0xa0] sm:$0xff]
      %v3618 = vld [vmem:[#allocation13 + $0xa8] sm:$0xff]
      %v3619 = vld [vmem:[#allocation13 + $0xb0] sm:$0xff]
      %v3620 = vld [vmem:[#allocation13 + $0xb8] sm:$0xff]
      %v3621 = vld [vmem:[#allocation13 + $0xc0] sm:$0xff]
      %v3622 = vld [vmem:[#allocation13 + $0xc8] sm:$0xff]
      %v3623 = vld [vmem:[#allocation13 + $0xd0] sm:$0xff]
      %v3624 = vld [vmem:[#allocation13 + $0xd8] sm:$0xff]
      %v3625 = vld [vmem:[#allocation13 + $0xe0] sm:$0xff]
      %v3626 = vld [vmem:[#allocation13 + $0xe8] sm:$0xff]
      %v3627 = vld [vmem:[#allocation13 + $0xf0] sm:$0xff]
      %v3628 = vld [vmem:[#allocation13 + $0xf8] sm:$0xff]
      %v3629 = vld [vmem:[#allocation13 + $0x100] sm:$0xff]
      %v3630 = vld [vmem:[#allocation13 + $0x108] sm:$0xff]
      %v3631 = vld [vmem:[#allocation13 + $0x110] sm:$0xff]
      %v3632 = vld [vmem:[#allocation13 + $0x118] sm:$0xff]
      %v3633 = vld [vmem:[#allocation13 + $0x120] sm:$0xff]
      %v3634 = vld [vmem:[#allocation13 + $0x128] sm:$0xff]
      %v3635 = vld [vmem:[#allocation13 + $0x130] sm:$0xff]
      %v3636 = vld [vmem:[#allocation13 + $0x138] sm:$0xff]
      %v3637 = vld [vmem:[#allocation13 + $0x140] sm:$0xff]
      %v3638 = vld [vmem:[#allocation13 + $0x148] sm:$0xff]
      %v3639 = vld [vmem:[#allocation13 + $0x150] sm:$0xff]
      %v3640 = vld [vmem:[#allocation13 + $0x158] sm:$0xff]
      %v3641 = vld [vmem:[#allocation13 + $0x160] sm:$0xff]
      %v3642 = vld [vmem:[#allocation13 + $0x168] sm:$0xff]
      %v3643 = vld [vmem:[#allocation13 + $0x170] sm:$0xff]
      %v3644 = vld [vmem:[#allocation13 + $0x178] sm:$0xff]
      %v3645 = vld [vmem:[#allocation13 + $0x180] sm:$0xff]
      %v3646 = vld [vmem:[#allocation13 + $0x188] sm:$0xff]
      %v3647 = vld [vmem:[#allocation13 + $0x190] sm:$0xff]
      %v3648 = vld [vmem:[#allocation13 + $0x198] sm:$0xff]
      %v3649 = vld [vmem:[#allocation13 + $0x1a0] sm:$0xff]
      %v3650 = vld [vmem:[#allocation13 + $0x1a8] sm:$0xff]
      %v3651 = vld [vmem:[#allocation13 + $0x1b0] sm:$0xff]
      %v3652 = vld [vmem:[#allocation13 + $0x1b8] sm:$0xff]
      %v3653 = vld [vmem:[#allocation13 + $0x1c0] sm:$0xff]
      %v3654 = vld [vmem:[#allocation13 + $0x1c8] sm:$0xff]
      %v3655 = vld [vmem:[#allocation13 + $0x1d0] sm:$0xff]
      %v3656 = vld [vmem:[#allocation13 + $0x1d8] sm:$0xff]
      %v3657 = vld [vmem:[#allocation13 + $0x1e0] sm:$0xff]
      %v3658 = vld [vmem:[#allocation13 + $0x1e8] sm:$0xff]
      %v3659 = vld [vmem:[#allocation13 + $0x1f0] sm:$0xff]
      %v3660 = vld [vmem:[#allocation13 + $0x1f8] sm:$0xff]
      %v3661 = vld [vmem:[#allocation13 + $0x200] sm:$0xff]
      %v3662 = vld [vmem:[#allocation13 + $0x208] sm:$0xff]
      %v3663 = vld [vmem:[#allocation13 + $0x210] sm:$0xff]
      %v3664 = vld [vmem:[#allocation13 + $0x218] sm:$0xff]
      %v3665 = vld [vmem:[#allocation13 + $0x220] sm:$0xff]
      %v3666 = vld [vmem:[#allocation13 + $0x228] sm:$0xff]
      %v3667 = vld [vmem:[#allocation13 + $0x230] sm:$0xff]
      %v3668 = vld [vmem:[#allocation13 + $0x238] sm:$0xff]
      %v3669 = vld [vmem:[#allocation13 + $0x240] sm:$0xff]
      %v3670 = vld [vmem:[#allocation13 + $0x248] sm:$0xff]
      %v3671 = vld [vmem:[#allocation13 + $0x250] sm:$0xff]
      %v3672 = vld [vmem:[#allocation13 + $0x258] sm:$0xff]
      %v3673 = vld [vmem:[#allocation13 + $0x260] sm:$0xff]
      %v3674 = vld [vmem:[#allocation13 + $0x268] sm:$0xff]
      %v3675 = vld [vmem:[#allocation13 + $0x270] sm:$0xff]
      %v3676 = vld [vmem:[#allocation13 + $0x278] sm:$0xff]
      %v3677 = vld [vmem:[#allocation13 + $0x280] sm:$0xff]
      %v3678 = vld [vmem:[#allocation13 + $0x288] sm:$0xff]
      %v3679 = vld [vmem:[#allocation13 + $0x290] sm:$0xff]
      %v3680 = vld [vmem:[#allocation13 + $0x298] sm:$0xff]
      %v3681 = vld [vmem:[#allocation13 + $0x2a0] sm:$0xff]
      %v3682 = vld [vmem:[#allocation13 + $0x2a8] sm:$0xff]
      %v3683 = vld [vmem:[#allocation13 + $0x2b0] sm:$0xff]
      %v3684 = vld [vmem:[#allocation13 + $0x2b8] sm:$0xff]
      %v3685 = vld [vmem:[#allocation13 + $0x2c0] sm:$0xff]
      %v3686 = vld [vmem:[#allocation13 + $0x2c8] sm:$0xff]
      %v3687 = vld [vmem:[#allocation13 + $0x2d0] sm:$0xff]
      %v3688 = vld [vmem:[#allocation13 + $0x2d8] sm:$0xff]
      %v3689 = vld [vmem:[#allocation13 + $0x2e0] sm:$0xff]
      %v3690 = vld [vmem:[#allocation13 + $0x2e8] sm:$0xff]
      %v3691 = vld [vmem:[#allocation13 + $0x2f0] sm:$0xff]
      %v3692 = vld [vmem:[#allocation13 + $0x2f8] sm:$0xff]
      %v3693 = vld [vmem:[#allocation13 + $0x300] sm:$0xff]
      %v3694 = vld [vmem:[#allocation13 + $0x308] sm:$0xff]
      %v3695 = vld [vmem:[#allocation13 + $0x310] sm:$0xff]
      %v3696 = vld [vmem:[#allocation13 + $0x318] sm:$0xff]
      %v3697 = vld [vmem:[#allocation13 + $0x320] sm:$0xff]
      %v3698 = vld [vmem:[#allocation13 + $0x328] sm:$0xff]
      %v3699 = vld [vmem:[#allocation13 + $0x330] sm:$0xff]
      %v3700 = vld [vmem:[#allocation13 + $0x338] sm:$0xff]
      %v3701 = vld [vmem:[#allocation13 + $0x340] sm:$0xff]
      %v3702 = vld [vmem:[#allocation13 + $0x348] sm:$0xff]
      %v3703 = vld [vmem:[#allocation13 + $0x350] sm:$0xff]
      %v3704 = vld [vmem:[#allocation13 + $0x358] sm:$0xff]
      %v3705 = vld [vmem:[#allocation13 + $0x360] sm:$0xff]
      %v3706 = vld [vmem:[#allocation13 + $0x368] sm:$0xff]
      %v3707 = vld [vmem:[#allocation13 + $0x370] sm:$0xff]
      %v3708 = vld [vmem:[#allocation13 + $0x378] sm:$0xff]
      %v3709 = vld [vmem:[#allocation13 + $0x380] sm:$0xff]
      %v3710 = vld [vmem:[#allocation13 + $0x388] sm:$0xff]
      %v3711 = vld [vmem:[#allocation13 + $0x390] sm:$0xff]
      %v3712 = vld [vmem:[#allocation13 + $0x398] sm:$0xff]
      %v3713 = vld [vmem:[#allocation13 + $0x3a0] sm:$0xff]
      %v3714 = vld [vmem:[#allocation13 + $0x3a8] sm:$0xff]
      %v3715 = vld [vmem:[#allocation13 + $0x3b0] sm:$0xff]
      %v3716 = vld [vmem:[#allocation13 + $0x3b8] sm:$0xff]
      %v3717 = vld [vmem:[#allocation13 + $0x3c0] sm:$0xff]
      %v3718 = vld [vmem:[#allocation13 + $0x3c8] sm:$0xff]
      %v3719 = vld [vmem:[#allocation13 + $0x3d0] sm:$0xff]
      %v3720 = vld [vmem:[#allocation13 + $0x3d8] sm:$0xff]
      %v3721 = vld [vmem:[#allocation13 + $0x3e0] sm:$0xff]
      %v3722 = vld [vmem:[#allocation13 + $0x3e8] sm:$0xff]
      %v3723 = vld [vmem:[#allocation13 + $0x3f0] sm:$0xff]
      %v3724 = vld [vmem:[#allocation13 + $0x3f8] sm:$0xff]
      %v3725 = vld [vmem:[#allocation13 + $0x400] sm:$0xff]
      %v3726 = vld [vmem:[#allocation13 + $0x408] sm:$0xff]
      %v3727 = vld [vmem:[#allocation13 + $0x410] sm:$0xff]
      %v3728 = vld [vmem:[#allocation13 + $0x418] sm:$0xff]
      %v3729 = vld [vmem:[#allocation13 + $0x420] sm:$0xff]
      %v3730 = vld [vmem:[#allocation13 + $0x428] sm:$0xff]
      %v3731 = vld [vmem:[#allocation13 + $0x430] sm:$0xff]
      %v3732 = vld [vmem:[#allocation13 + $0x438] sm:$0xff]
      %v3733 = vld [vmem:[#allocation13 + $0x440] sm:$0xff]
      %v3734 = vld [vmem:[#allocation13 + $0x448] sm:$0xff]
      %v3735 = vld [vmem:[#allocation13 + $0x450] sm:$0xff]
      %v3736 = vld [vmem:[#allocation13 + $0x458] sm:$0xff]
      %v3737 = vld [vmem:[#allocation13 + $0x460] sm:$0xff]
      %v3738 = vld [vmem:[#allocation13 + $0x468] sm:$0xff]
      %v3739 = vld [vmem:[#allocation13 + $0x470] sm:$0xff]
      %v3740 = vld [vmem:[#allocation13 + $0x478] sm:$0xff]
      %v3741 = vld [vmem:[#allocation13 + $0x480] sm:$0xff]
      %v3742 = vld [vmem:[#allocation13 + $0x488] sm:$0xff]
      %v3743 = vld [vmem:[#allocation13 + $0x490] sm:$0xff]
      %v3744 = vld [vmem:[#allocation13 + $0x498] sm:$0xff]
      %v3745 = vld [vmem:[#allocation13 + $0x4a0] sm:$0xff]
      %v3746 = vld [vmem:[#allocation13 + $0x4a8] sm:$0xff]
      %v3747 = vld [vmem:[#allocation13 + $0x4b0] sm:$0xff]
      %v3748 = vld [vmem:[#allocation13 + $0x4b8] sm:$0xff]
      %v3749 = vld [vmem:[#allocation13 + $0x4c0] sm:$0xff]
      %v3750 = vld [vmem:[#allocation13 + $0x4c8] sm:$0xff]
      %v3751 = vld [vmem:[#allocation13 + $0x4d0] sm:$0xff]
      %v3752 = vld [vmem:[#allocation13 + $0x4d8] sm:$0xff]
      %v3753 = vld [vmem:[#allocation13 + $0x4e0] sm:$0xff]
      %v3754 = vld [vmem:[#allocation13 + $0x4e8] sm:$0xff]
      %v3755 = vld [vmem:[#allocation13 + $0x4f0] sm:$0xff]
      %v3756 = vld [vmem:[#allocation13 + $0x4f8] sm:$0xff]
      %v3757 = vld [vmem:[#allocation13 + $0x500] sm:$0xff]
      %v3758 = vld [vmem:[#allocation13 + $0x508] sm:$0xff]
      %v3759 = vld [vmem:[#allocation13 + $0x510] sm:$0xff]
      %v3760 = vld [vmem:[#allocation13 + $0x518] sm:$0xff]
      %v3761 = vld [vmem:[#allocation13 + $0x520] sm:$0xff]
      %v3762 = vld [vmem:[#allocation13 + $0x528] sm:$0xff]
      %v3763 = vld [vmem:[#allocation13 + $0x530] sm:$0xff]
      %v3764 = vld [vmem:[#allocation13 + $0x538] sm:$0xff]
      %v3765 = vld [vmem:[#allocation13 + $0x540] sm:$0xff]
      %v3766 = vld [vmem:[#allocation13 + $0x548] sm:$0xff]
      %v3767 = vld [vmem:[#allocation13 + $0x550] sm:$0xff]
      %v3768 = vld [vmem:[#allocation13 + $0x558] sm:$0xff]
      %v3769 = vld [vmem:[#allocation13 + $0x560] sm:$0xff]
      %v3770 = vld [vmem:[#allocation13 + $0x568] sm:$0xff]
      %v3771 = vld [vmem:[#allocation13 + $0x570] sm:$0xff]
      %v3772 = vld [vmem:[#allocation13 + $0x578] sm:$0xff]
      %v3773 = vld [vmem:[#allocation13 + $0x580] sm:$0xff]
      %v3774 = vld [vmem:[#allocation13 + $0x588] sm:$0xff]
      %v3775 = vld [vmem:[#allocation13 + $0x590] sm:$0xff]
      %v3776 = vld [vmem:[#allocation13 + $0x598] sm:$0xff]
      %v3777 = vld [vmem:[#allocation13 + $0x5a0] sm:$0xff]
      %v3778 = vld [vmem:[#allocation13 + $0x5a8] sm:$0xff]
      %v3779 = vld [vmem:[#allocation13 + $0x5b0] sm:$0xff]
      %v3780 = vld [vmem:[#allocation13 + $0x5b8] sm:$0xff]
      %v3781 = vld [vmem:[#allocation13 + $0x5c0] sm:$0xff]
      %v3782 = vld [vmem:[#allocation13 + $0x5c8] sm:$0xff]
      %v3783 = vld [vmem:[#allocation13 + $0x5d0] sm:$0xff]
      %v3784 = vld [vmem:[#allocation13 + $0x5d8] sm:$0xff]
      %v3785 = vld [vmem:[#allocation13 + $0x5e0] sm:$0xff]
      %v3786 = vld [vmem:[#allocation13 + $0x5e8] sm:$0xff]
      %v3787 = vld [vmem:[#allocation13 + $0x5f0] sm:$0xff]
      %v3788 = vld [vmem:[#allocation13 + $0x5f8] sm:$0xff]
      %v3789 = vpack.c.bf16 %v3573, %v3573
      %v3790 = vpack.c.bf16 %v3574, %v3574
      %v3791 = vpack.c.bf16 %v3575, %v3575
      %v3792 = vpack.c.bf16 %v3576, %v3576
      %v3793 = vpack.c.bf16 %v3577, %v3577
      %v3794 = vpack.c.bf16 %v3578, %v3578
      %v3795 = vld [vmem:[#allocation13 + $0x600] sm:$0xff]
      %v3796 = vld [vmem:[#allocation13 + $0x608] sm:$0xff]
      %v3797 = vld [vmem:[#allocation13 + $0x610] sm:$0xff]
      %v3798 = vld [vmem:[#allocation13 + $0x618] sm:$0xff]
      %v3799 = vld [vmem:[#allocation13 + $0x620] sm:$0xff]
      %v3800 = vld [vmem:[#allocation13 + $0x628] sm:$0xff]
      %v3801 = vld [vmem:[#allocation13 + $0x630] sm:$0xff]
      %v3802 = vld [vmem:[#allocation13 + $0x638] sm:$0xff]
      %v3803 = vld [vmem:[#allocation13 + $0x640] sm:$0xff]
      %v3804 = vld [vmem:[#allocation13 + $0x648] sm:$0xff]
      %v3805 = vld [vmem:[#allocation13 + $0x650] sm:$0xff]
      %v3806 = vld [vmem:[#allocation13 + $0x658] sm:$0xff]
      %v3807 = vld [vmem:[#allocation13 + $0x660] sm:$0xff]
      %v3808 = vld [vmem:[#allocation13 + $0x668] sm:$0xff]
      %v3809 = vld [vmem:[#allocation13 + $0x670] sm:$0xff]
      %v3810 = vld [vmem:[#allocation13 + $0x678] sm:$0xff]
      %v3811 = vld [vmem:[#allocation13 + $0x680] sm:$0xff]
      %v3812 = vld [vmem:[#allocation13 + $0x688] sm:$0xff]
      %v3813 = vld [vmem:[#allocation13 + $0x690] sm:$0xff]
      %v3814 = vld [vmem:[#allocation13 + $0x698] sm:$0xff]
      %v3815 = vld [vmem:[#allocation13 + $0x6a0] sm:$0xff]
      %v3816 = vld [vmem:[#allocation13 + $0x6a8] sm:$0xff]
      %v3817 = vld [vmem:[#allocation13 + $0x6b0] sm:$0xff]
      %v3818 = vld [vmem:[#allocation13 + $0x6b8] sm:$0xff]
      %v3819 = vld [vmem:[#allocation13 + $0x6c0] sm:$0xff]
      %v3820 = vld [vmem:[#allocation13 + $0x6c8] sm:$0xff]
      %v3821 = vld [vmem:[#allocation13 + $0x6d0] sm:$0xff]
      %v3822 = vld [vmem:[#allocation13 + $0x6d8] sm:$0xff]
      %v3823 = vld [vmem:[#allocation13 + $0x6e0] sm:$0xff]
      %v3824 = vld [vmem:[#allocation13 + $0x6e8] sm:$0xff]
      %v3825 = vld [vmem:[#allocation13 + $0x6f0] sm:$0xff]
      %v3826 = vld [vmem:[#allocation13 + $0x6f8] sm:$0xff]
      %v3827 = vld [vmem:[#allocation13 + $0x700] sm:$0xff]
      %v3828 = vld [vmem:[#allocation13 + $0x708] sm:$0xff]
      %v3829 = vld [vmem:[#allocation13 + $0x710] sm:$0xff]
      %v3830 = vld [vmem:[#allocation13 + $0x718] sm:$0xff]
      %v3831 = vld [vmem:[#allocation13 + $0x720] sm:$0xff]
      %v3832 = vld [vmem:[#allocation13 + $0x728] sm:$0xff]
      %v3833 = vld [vmem:[#allocation13 + $0x730] sm:$0xff]
      %v3834 = vld [vmem:[#allocation13 + $0x738] sm:$0xff]
      %v3835 = vld [vmem:[#allocation13 + $0x740] sm:$0xff]
      %v3836 = vld [vmem:[#allocation13 + $0x748] sm:$0xff]
      %v3837 = vld [vmem:[#allocation13 + $0x750] sm:$0xff]
      %v3838 = vld [vmem:[#allocation13 + $0x758] sm:$0xff]
      %v3839 = vld [vmem:[#allocation13 + $0x760] sm:$0xff]
      %v3840 = vld [vmem:[#allocation13 + $0x768] sm:$0xff]
      %v3841 = vld [vmem:[#allocation13 + $0x770] sm:$0xff]
      %v3842 = vld [vmem:[#allocation13 + $0x778] sm:$0xff]
      %v3843 = vld [vmem:[#allocation13 + $0x780] sm:$0xff]
      %v3844 = vld [vmem:[#allocation13 + $0x788] sm:$0xff]
      %v3845 = vld [vmem:[#allocation13 + $0x790] sm:$0xff]
      %v3846 = vld [vmem:[#allocation13 + $0x798] sm:$0xff]
      %v3847 = vld [vmem:[#allocation13 + $0x7a0] sm:$0xff]
      %v3848 = vld [vmem:[#allocation13 + $0x7a8] sm:$0xff]
      %v3849 = vld [vmem:[#allocation13 + $0x7b0] sm:$0xff]
      %v3850 = vld [vmem:[#allocation13 + $0x7b8] sm:$0xff]
      %v3851 = vld [vmem:[#allocation13 + $0x7c0] sm:$0xff]
      %v3852 = vld [vmem:[#allocation13 + $0x7c8] sm:$0xff]
      %v3853 = vld [vmem:[#allocation13 + $0x7d0] sm:$0xff]
      %v3854 = vld [vmem:[#allocation13 + $0x7d8] sm:$0xff]
      %v3855 = vld [vmem:[#allocation13 + $0x7e0] sm:$0xff]
      %v3856 = vld [vmem:[#allocation13 + $0x7e8] sm:$0xff]
      %v3857 = vld [vmem:[#allocation13 + $0x7f0] sm:$0xff]
      %v3858 = vld [vmem:[#allocation13 + $0x7f8] sm:$0xff]
      %v3859 = vld [vmem:[#allocation13 + $0x800] sm:$0xff]
      %v3860 = vld [vmem:[#allocation13 + $0x808] sm:$0xff]
      %v3861 = vld [vmem:[#allocation13 + $0x810] sm:$0xff]
      %v3862 = vld [vmem:[#allocation13 + $0x818] sm:$0xff]
      %v3863 = vld [vmem:[#allocation13 + $0x820] sm:$0xff]
      %v3864 = vld [vmem:[#allocation13 + $0x828] sm:$0xff]
      %v3865 = vld [vmem:[#allocation13 + $0x830] sm:$0xff]
      %v3866 = vld [vmem:[#allocation13 + $0x838] sm:$0xff]
      %v3867 = vld [vmem:[#allocation13 + $0x840] sm:$0xff]
      %v3868 = vld [vmem:[#allocation13 + $0x848] sm:$0xff]
      %v3869 = vld [vmem:[#allocation13 + $0x850] sm:$0xff]
      %v3870 = vld [vmem:[#allocation13 + $0x858] sm:$0xff]
      %v3871 = vld [vmem:[#allocation13 + $0x860] sm:$0xff]
      %v3872 = vld [vmem:[#allocation13 + $0x868] sm:$0xff]
      %v3873 = vld [vmem:[#allocation13 + $0x870] sm:$0xff]
      %v3874 = vld [vmem:[#allocation13 + $0x878] sm:$0xff]
      %v3875 = vld [vmem:[#allocation13 + $0x880] sm:$0xff]
      %v3876 = vld [vmem:[#allocation13 + $0x888] sm:$0xff]
      %v3877 = vld [vmem:[#allocation13 + $0x890] sm:$0xff]
      %v3878 = vld [vmem:[#allocation13 + $0x898] sm:$0xff]
      %v3879 = vld [vmem:[#allocation13 + $0x8a0] sm:$0xff]
      %v3880 = vld [vmem:[#allocation13 + $0x8a8] sm:$0xff]
      %v3881 = vld [vmem:[#allocation13 + $0x8b0] sm:$0xff]
      %v3882 = vld [vmem:[#allocation13 + $0x8b8] sm:$0xff]
      %v3883 = vld [vmem:[#allocation13 + $0x8c0] sm:$0xff]
      %v3884 = vld [vmem:[#allocation13 + $0x8c8] sm:$0xff]
      %v3885 = vld [vmem:[#allocation13 + $0x8d0] sm:$0xff]
      %v3886 = vld [vmem:[#allocation13 + $0x8d8] sm:$0xff]
      %v3887 = vld [vmem:[#allocation13 + $0x8e0] sm:$0xff]
      %v3888 = vld [vmem:[#allocation13 + $0x8e8] sm:$0xff]
      %v3889 = vld [vmem:[#allocation13 + $0x8f0] sm:$0xff]
      %v3890 = vld [vmem:[#allocation13 + $0x8f8] sm:$0xff]
      %v3891 = vld [vmem:[#allocation13 + $0x900] sm:$0xff]
      %v3892 = vld [vmem:[#allocation13 + $0x908] sm:$0xff]
      %v3893 = vld [vmem:[#allocation13 + $0x910] sm:$0xff]
      %v3894 = vld [vmem:[#allocation13 + $0x918] sm:$0xff]
      %v3895 = vld [vmem:[#allocation13 + $0x920] sm:$0xff]
      %v3896 = vld [vmem:[#allocation13 + $0x928] sm:$0xff]
      %v3897 = vld [vmem:[#allocation13 + $0x930] sm:$0xff]
      %v3898 = vld [vmem:[#allocation13 + $0x938] sm:$0xff]
      %v3899 = vld [vmem:[#allocation13 + $0x940] sm:$0xff]
      %v3900 = vld [vmem:[#allocation13 + $0x948] sm:$0xff]
      %v3901 = vld [vmem:[#allocation13 + $0x950] sm:$0xff]
      %v3902 = vld [vmem:[#allocation13 + $0x958] sm:$0xff]
      %v3903 = vld [vmem:[#allocation13 + $0x960] sm:$0xff]
      %v3904 = vld [vmem:[#allocation13 + $0x968] sm:$0xff]
      %v3905 = vld [vmem:[#allocation13 + $0x970] sm:$0xff]
      %v3906 = vld [vmem:[#allocation13 + $0x978] sm:$0xff]
      %v3907 = vld [vmem:[#allocation13 + $0x980] sm:$0xff]
      %v3908 = vld [vmem:[#allocation13 + $0x988] sm:$0xff]
      %v3909 = vld [vmem:[#allocation13 + $0x990] sm:$0xff]
      %v3910 = vld [vmem:[#allocation13 + $0x998] sm:$0xff]
      %v3911 = vld [vmem:[#allocation13 + $0x9a0] sm:$0xff]
      %v3912 = vld [vmem:[#allocation13 + $0x9a8] sm:$0xff]
      %v3913 = vld [vmem:[#allocation13 + $0x9b0] sm:$0xff]
      %v3914 = vld [vmem:[#allocation13 + $0x9b8] sm:$0xff]
      %v3915 = vld [vmem:[#allocation13 + $0x9c0] sm:$0xff]
      %v3916 = vld [vmem:[#allocation13 + $0x9c8] sm:$0xff]
      %v3917 = vld [vmem:[#allocation13 + $0x9d0] sm:$0xff]
      %v3918 = vld [vmem:[#allocation13 + $0x9d8] sm:$0xff]
      %v3919 = vld [vmem:[#allocation13 + $0x9e0] sm:$0xff]
      %v3920 = vld [vmem:[#allocation13 + $0x9e8] sm:$0xff]
      %v3921 = vld [vmem:[#allocation13 + $0x9f0] sm:$0xff]
      %v3922 = vld [vmem:[#allocation13 + $0x9f8] sm:$0xff]
      %v3923 = vld [vmem:[#allocation13 + $0xa00] sm:$0xff]
      %v3924 = vld [vmem:[#allocation13 + $0xa08] sm:$0xff]
      %v3925 = vld [vmem:[#allocation13 + $0xa10] sm:$0xff]
      %v3926 = vld [vmem:[#allocation13 + $0xa18] sm:$0xff]
      %v3927 = vld [vmem:[#allocation13 + $0xa20] sm:$0xff]
      %v3928 = vld [vmem:[#allocation13 + $0xa28] sm:$0xff]
      %v3929 = vld [vmem:[#allocation13 + $0xa30] sm:$0xff]
      %v3930 = vld [vmem:[#allocation13 + $0xa38] sm:$0xff]
      %v3931 = vld [vmem:[#allocation13 + $0xa40] sm:$0xff]
      %v3932 = vld [vmem:[#allocation13 + $0xa48] sm:$0xff]
      %v3933 = vld [vmem:[#allocation13 + $0xa50] sm:$0xff]
      %v3934 = vld [vmem:[#allocation13 + $0xa58] sm:$0xff]
      %v3935 = vld [vmem:[#allocation13 + $0xa60] sm:$0xff]
      %v3936 = vld [vmem:[#allocation13 + $0xa68] sm:$0xff]
      %v3937 = vld [vmem:[#allocation13 + $0xa70] sm:$0xff]
      %v3938 = vld [vmem:[#allocation13 + $0xa78] sm:$0xff]
      %v3939 = vld [vmem:[#allocation13 + $0xa80] sm:$0xff]
      %v3940 = vld [vmem:[#allocation13 + $0xa88] sm:$0xff]
      %v3941 = vld [vmem:[#allocation13 + $0xa90] sm:$0xff]
      %v3942 = vld [vmem:[#allocation13 + $0xa98] sm:$0xff]
      %v3943 = vld [vmem:[#allocation13 + $0xaa0] sm:$0xff]
      %v3944 = vld [vmem:[#allocation13 + $0xaa8] sm:$0xff]
      %v3945 = vld [vmem:[#allocation13 + $0xab0] sm:$0xff]
      %v3946 = vld [vmem:[#allocation13 + $0xab8] sm:$0xff]
      %v3947 = vld [vmem:[#allocation13 + $0xac0] sm:$0xff]
      %v3948 = vld [vmem:[#allocation13 + $0xac8] sm:$0xff]
      %v3949 = vld [vmem:[#allocation13 + $0xad0] sm:$0xff]
      %v3950 = vld [vmem:[#allocation13 + $0xad8] sm:$0xff]
      %v3951 = vld [vmem:[#allocation13 + $0xae0] sm:$0xff]
      %v3952 = vld [vmem:[#allocation13 + $0xae8] sm:$0xff]
      %v3953 = vld [vmem:[#allocation13 + $0xaf0] sm:$0xff]
      %v3954 = vld [vmem:[#allocation13 + $0xaf8] sm:$0xff]
      %v3955 = vld [vmem:[#allocation13 + $0xb00] sm:$0xff]
      %v3956 = vld [vmem:[#allocation13 + $0xb08] sm:$0xff]
      %v3957 = vld [vmem:[#allocation13 + $0xb10] sm:$0xff]
      %v3958 = vld [vmem:[#allocation13 + $0xb18] sm:$0xff]
      %v3959 = vld [vmem:[#allocation13 + $0xb20] sm:$0xff]
      %v3960 = vld [vmem:[#allocation13 + $0xb28] sm:$0xff]
      %v3961 = vld [vmem:[#allocation13 + $0xb30] sm:$0xff]
      %v3962 = vld [vmem:[#allocation13 + $0xb38] sm:$0xff]
      %v3963 = vld [vmem:[#allocation13 + $0xb40] sm:$0xff]
      %v3964 = vld [vmem:[#allocation13 + $0xb48] sm:$0xff]
      %v3965 = vld [vmem:[#allocation13 + $0xb50] sm:$0xff]
      %v3966 = vld [vmem:[#allocation13 + $0xb58] sm:$0xff]
      %v3967 = vld [vmem:[#allocation13 + $0xb60] sm:$0xff]
      %v3968 = vld [vmem:[#allocation13 + $0xb68] sm:$0xff]
      %v3969 = vld [vmem:[#allocation13 + $0xb70] sm:$0xff]
      %v3970 = vld [vmem:[#allocation13 + $0xb78] sm:$0xff]
      %v3971 = vld [vmem:[#allocation13 + $0xb80] sm:$0xff]
      %v3972 = vld [vmem:[#allocation13 + $0xb88] sm:$0xff]
      %v3973 = vld [vmem:[#allocation13 + $0xb90] sm:$0xff]
      %v3974 = vld [vmem:[#allocation13 + $0xb98] sm:$0xff]
      %v3975 = vld [vmem:[#allocation13 + $0xba0] sm:$0xff]
      %v3976 = vld [vmem:[#allocation13 + $0xba8] sm:$0xff]
      %v3977 = vld [vmem:[#allocation13 + $0xbb0] sm:$0xff]
      %v3978 = vld [vmem:[#allocation13 + $0xbb8] sm:$0xff]
      %v3979 = vld [vmem:[#allocation13 + $0xbc0] sm:$0xff]
      %v3980 = vld [vmem:[#allocation13 + $0xbc8] sm:$0xff]
      %v3981 = vld [vmem:[#allocation13 + $0xbd0] sm:$0xff]
      %v3982 = vld [vmem:[#allocation13 + $0xbd8] sm:$0xff]
      %v3983 = vld [vmem:[#allocation13 + $0xbe0] sm:$0xff]
      %v3984 = vld [vmem:[#allocation13 + $0xbe8] sm:$0xff]
      %v3985 = vld [vmem:[#allocation13 + $0xbf0] sm:$0xff]
      %v3986 = vld [vmem:[#allocation13 + $0xbf8] sm:$0xff]
      %v4179 = vunpack.c.l.b16 %v3795
      %v4180 = vunpack.c.h.b16 %v3795
      %v4181 = vunpack.c.l.b16 %v3796
      %v4182 = vunpack.c.h.b16 %v3796
      %v4183 = vunpack.c.l.b16 %v3797
      %v4184 = vunpack.c.h.b16 %v3797
      %v4185 = vunpack.c.l.b16 %v3798
      %v4186 = vunpack.c.h.b16 %v3798
      %v4187 = vunpack.c.l.b16 %v3799
      %v4188 = vunpack.c.h.b16 %v3799
      %v4189 = vunpack.c.l.b16 %v3800
      %v4190 = vunpack.c.h.b16 %v3800
      %v4191 = vunpack.c.l.b16 %v3801
      %v4192 = vunpack.c.h.b16 %v3801
      %v4193 = vunpack.c.l.b16 %v3802
      %v4194 = vunpack.c.h.b16 %v3802
      %v4195 = vunpack.c.l.b16 %v3803
      %v4196 = vunpack.c.h.b16 %v3803
      %v4197 = vunpack.c.l.b16 %v3804
      %v4198 = vunpack.c.h.b16 %v3804
      %v4199 = vunpack.c.l.b16 %v3805
      %v4200 = vunpack.c.h.b16 %v3805
      %v4201 = vunpack.c.l.b16 %v3806
      %v4202 = vunpack.c.h.b16 %v3806
      %v4203 = vunpack.c.l.b16 %v3807
      %v4204 = vunpack.c.h.b16 %v3807
      %v4205 = vunpack.c.l.b16 %v3808
      %v4206 = vunpack.c.h.b16 %v3808
      %v4207 = vunpack.c.l.b16 %v3809
      %v4208 = vunpack.c.h.b16 %v3809
      %v4209 = vunpack.c.l.b16 %v3810
      %v4210 = vunpack.c.h.b16 %v3810
      %v4211 = vunpack.c.l.b16 %v3811
      %v4212 = vunpack.c.h.b16 %v3811
      %v4213 = vunpack.c.l.b16 %v3812
      %v4214 = vunpack.c.h.b16 %v3812
      %v4215 = vunpack.c.l.b16 %v3813
      %v4216 = vunpack.c.h.b16 %v3813
      %v4217 = vunpack.c.l.b16 %v3814
      %v4218 = vunpack.c.h.b16 %v3814
      %v4219 = vunpack.c.l.b16 %v3815
      %v4220 = vunpack.c.h.b16 %v3815
      %v4221 = vunpack.c.l.b16 %v3816
      %v4222 = vunpack.c.h.b16 %v3816
      %v4223 = vunpack.c.l.b16 %v3817
      %v4224 = vunpack.c.h.b16 %v3817
      %v4225 = vunpack.c.l.b16 %v3818
      %v4226 = vunpack.c.h.b16 %v3818
      %v4227 = vunpack.c.l.b16 %v3819
      %v4228 = vunpack.c.h.b16 %v3819
      %v4229 = vunpack.c.l.b16 %v3820
      %v4230 = vunpack.c.h.b16 %v3820
      %v4231 = vunpack.c.l.b16 %v3821
      %v4232 = vunpack.c.h.b16 %v3821
      %v4233 = vunpack.c.l.b16 %v3822
      %v4234 = vunpack.c.h.b16 %v3822
      %v4235 = vunpack.c.l.b16 %v3823
      %v4236 = vunpack.c.h.b16 %v3823
      %v4237 = vunpack.c.l.b16 %v3824
      %v4238 = vunpack.c.h.b16 %v3824
      %v4239 = vunpack.c.l.b16 %v3825
      %v4240 = vunpack.c.h.b16 %v3825
      %v4241 = vunpack.c.l.b16 %v3826
      %v4242 = vunpack.c.h.b16 %v3826
      %v4243 = vunpack.c.l.b16 %v3827
      %v4244 = vunpack.c.h.b16 %v3827
      %v4245 = vunpack.c.l.b16 %v3828
      %v4246 = vunpack.c.h.b16 %v3828
      %v4247 = vunpack.c.l.b16 %v3829
      %v4248 = vunpack.c.h.b16 %v3829
      %v4249 = vunpack.c.l.b16 %v3830
      %v4250 = vunpack.c.h.b16 %v3830
      %v4251 = vunpack.c.l.b16 %v3831
      %v4252 = vunpack.c.h.b16 %v3831
      %v4253 = vunpack.c.l.b16 %v3832
      %v4254 = vunpack.c.h.b16 %v3832
      %v4255 = vunpack.c.l.b16 %v3833
      %v4256 = vunpack.c.h.b16 %v3833
      %v4257 = vunpack.c.l.b16 %v3834
      %v4258 = vunpack.c.h.b16 %v3834
      %v4259 = vunpack.c.l.b16 %v3835
      %v4260 = vunpack.c.h.b16 %v3835
      %v4261 = vunpack.c.l.b16 %v3836
      %v4262 = vunpack.c.h.b16 %v3836
      %v4263 = vunpack.c.l.b16 %v3837
      %v4264 = vunpack.c.h.b16 %v3837
      %v4265 = vunpack.c.l.b16 %v3838
      %v4266 = vunpack.c.h.b16 %v3838
      %v4267 = vunpack.c.l.b16 %v3839
      %v4268 = vunpack.c.h.b16 %v3839
      %v4269 = vunpack.c.l.b16 %v3840
      %v4270 = vunpack.c.h.b16 %v3840
      %v4271 = vunpack.c.l.b16 %v3841
      %v4272 = vunpack.c.h.b16 %v3841
      %v4273 = vunpack.c.l.b16 %v3842
      %v4274 = vunpack.c.h.b16 %v3842
      %v4275 = vunpack.c.l.b16 %v3843
      %v4276 = vunpack.c.h.b16 %v3843
      %v4277 = vunpack.c.l.b16 %v3844
      %v4278 = vunpack.c.h.b16 %v3844
      %v4279 = vunpack.c.l.b16 %v3845
      %v4280 = vunpack.c.h.b16 %v3845
      %v4281 = vunpack.c.l.b16 %v3846
      %v4282 = vunpack.c.h.b16 %v3846
      %v4283 = vunpack.c.l.b16 %v3847
      %v4284 = vunpack.c.h.b16 %v3847
      %v4285 = vunpack.c.l.b16 %v3848
      %v4286 = vunpack.c.h.b16 %v3848
      %v4287 = vunpack.c.l.b16 %v3849
      %v4288 = vunpack.c.h.b16 %v3849
      %v4289 = vunpack.c.l.b16 %v3850
      %v4290 = vunpack.c.h.b16 %v3850
      %v4291 = vunpack.c.l.b16 %v3851
      %v4292 = vunpack.c.h.b16 %v3851
      %v4293 = vunpack.c.l.b16 %v3852
      %v4294 = vunpack.c.h.b16 %v3852
      %v4295 = vunpack.c.l.b16 %v3853
      %v4296 = vunpack.c.h.b16 %v3853
      %v4297 = vunpack.c.l.b16 %v3854
      %v4298 = vunpack.c.h.b16 %v3854
      %v4299 = vunpack.c.l.b16 %v3855
      %v4300 = vunpack.c.h.b16 %v3855
      %v4301 = vunpack.c.l.b16 %v3856
      %v4302 = vunpack.c.h.b16 %v3856
      %v4303 = vunpack.c.l.b16 %v3857
      %v4304 = vunpack.c.h.b16 %v3857
      %v4305 = vunpack.c.l.b16 %v3858
      %v4306 = vunpack.c.h.b16 %v3858
      %v4307 = vunpack.c.l.b16 %v3859
      %v4308 = vunpack.c.h.b16 %v3859
      %v4309 = vunpack.c.l.b16 %v3860
      %v4310 = vunpack.c.h.b16 %v3860
      %v4311 = vunpack.c.l.b16 %v3861
      %v4312 = vunpack.c.h.b16 %v3861
      %v4313 = vunpack.c.l.b16 %v3862
      %v4314 = vunpack.c.h.b16 %v3862
      %v4315 = vunpack.c.l.b16 %v3863
      %v4316 = vunpack.c.h.b16 %v3863
      %v4317 = vunpack.c.l.b16 %v3864
      %v4318 = vunpack.c.h.b16 %v3864
      %v4319 = vunpack.c.l.b16 %v3865
      %v4320 = vunpack.c.h.b16 %v3865
      %v4321 = vunpack.c.l.b16 %v3866
      %v4322 = vunpack.c.h.b16 %v3866
      %v4323 = vunpack.c.l.b16 %v3867
      %v4324 = vunpack.c.h.b16 %v3867
      %v4325 = vunpack.c.l.b16 %v3868
      %v4326 = vunpack.c.h.b16 %v3868
      %v4327 = vunpack.c.l.b16 %v3869
      %v4328 = vunpack.c.h.b16 %v3869
      %v4329 = vunpack.c.l.b16 %v3870
      %v4330 = vunpack.c.h.b16 %v3870
      %v4331 = vunpack.c.l.b16 %v3871
      %v4332 = vunpack.c.h.b16 %v3871
      %v4333 = vunpack.c.l.b16 %v3872
      %v4334 = vunpack.c.h.b16 %v3872
      %v4335 = vunpack.c.l.b16 %v3873
      %v4336 = vunpack.c.h.b16 %v3873
      %v4337 = vunpack.c.l.b16 %v3874
      %v4338 = vunpack.c.h.b16 %v3874
      %v4339 = vunpack.c.l.b16 %v3875
      %v4340 = vunpack.c.h.b16 %v3875
      %v4341 = vunpack.c.l.b16 %v3876
      %v4342 = vunpack.c.h.b16 %v3876
      %v4343 = vunpack.c.l.b16 %v3877
      %v4344 = vunpack.c.h.b16 %v3877
      %v4345 = vunpack.c.l.b16 %v3878
      %v4346 = vunpack.c.h.b16 %v3878
      %v4347 = vunpack.c.l.b16 %v3879
      %v4348 = vunpack.c.h.b16 %v3879
      %v4349 = vunpack.c.l.b16 %v3880
      %v4350 = vunpack.c.h.b16 %v3880
      %v4351 = vunpack.c.l.b16 %v3881
      %v4352 = vunpack.c.h.b16 %v3881
      %v4353 = vunpack.c.l.b16 %v3882
      %v4354 = vunpack.c.h.b16 %v3882
      %v4355 = vunpack.c.l.b16 %v3883
      %v4356 = vunpack.c.h.b16 %v3883
      %v4357 = vunpack.c.l.b16 %v3884
      %v4358 = vunpack.c.h.b16 %v3884
      %v4359 = vunpack.c.l.b16 %v3885
      %v4360 = vunpack.c.h.b16 %v3885
      %v4361 = vunpack.c.l.b16 %v3886
      %v4362 = vunpack.c.h.b16 %v3886
      %v4363 = vunpack.c.l.b16 %v3887
      %v4364 = vunpack.c.h.b16 %v3887
      %v4365 = vunpack.c.l.b16 %v3888
      %v4366 = vunpack.c.h.b16 %v3888
      %v4367 = vunpack.c.l.b16 %v3889
      %v4368 = vunpack.c.h.b16 %v3889
      %v4369 = vunpack.c.l.b16 %v3890
      %v4370 = vunpack.c.h.b16 %v3890
      %v4371 = vunpack.c.l.b16 %v3891
      %v4372 = vunpack.c.h.b16 %v3891
      %v4373 = vunpack.c.l.b16 %v3892
      %v4374 = vunpack.c.h.b16 %v3892
      %v4375 = vunpack.c.l.b16 %v3893
      %v4376 = vunpack.c.h.b16 %v3893
      %v4377 = vunpack.c.l.b16 %v3894
      %v4378 = vunpack.c.h.b16 %v3894
      %v4379 = vunpack.c.l.b16 %v3895
      %v4380 = vunpack.c.h.b16 %v3895
      %v4381 = vunpack.c.l.b16 %v3896
      %v4382 = vunpack.c.h.b16 %v3896
      %v4383 = vunpack.c.l.b16 %v3897
      %v4384 = vunpack.c.h.b16 %v3897
      %v4385 = vunpack.c.l.b16 %v3898
      %v4386 = vunpack.c.h.b16 %v3898
      %v4387 = vunpack.c.l.b16 %v3899
      %v4388 = vunpack.c.h.b16 %v3899
      %v4389 = vunpack.c.l.b16 %v3900
      %v4390 = vunpack.c.h.b16 %v3900
      %v4391 = vunpack.c.l.b16 %v3901
      %v4392 = vunpack.c.h.b16 %v3901
      %v4393 = vunpack.c.l.b16 %v3902
      %v4394 = vunpack.c.h.b16 %v3902
      %v4395 = vunpack.c.l.b16 %v3903
      %v4396 = vunpack.c.h.b16 %v3903
      %v4397 = vunpack.c.l.b16 %v3904
      %v4398 = vunpack.c.h.b16 %v3904
      %v4399 = vunpack.c.l.b16 %v3905
      %v4400 = vunpack.c.h.b16 %v3905
      %v4401 = vunpack.c.l.b16 %v3906
      %v4402 = vunpack.c.h.b16 %v3906
      %v4403 = vunpack.c.l.b16 %v3907
      %v4404 = vunpack.c.h.b16 %v3907
      %v4405 = vunpack.c.l.b16 %v3908
      %v4406 = vunpack.c.h.b16 %v3908
      %v4407 = vunpack.c.l.b16 %v3909
      %v4408 = vunpack.c.h.b16 %v3909
      %v4409 = vunpack.c.l.b16 %v3910
      %v4410 = vunpack.c.h.b16 %v3910
      %v4411 = vunpack.c.l.b16 %v3911
      %v4412 = vunpack.c.h.b16 %v3911
      %v4413 = vunpack.c.l.b16 %v3912
      %v4414 = vunpack.c.h.b16 %v3912
      %v4415 = vunpack.c.l.b16 %v3913
      %v4416 = vunpack.c.h.b16 %v3913
      %v4417 = vunpack.c.l.b16 %v3914
      %v4418 = vunpack.c.h.b16 %v3914
      %v4419 = vunpack.c.l.b16 %v3915
      %v4420 = vunpack.c.h.b16 %v3915
      %v4421 = vunpack.c.l.b16 %v3916
      %v4422 = vunpack.c.h.b16 %v3916
      %v4423 = vunpack.c.l.b16 %v3917
      %v4424 = vunpack.c.h.b16 %v3917
      %v4425 = vunpack.c.l.b16 %v3918
      %v4426 = vunpack.c.h.b16 %v3918
      %v4427 = vunpack.c.l.b16 %v3919
      %v4428 = vunpack.c.h.b16 %v3919
      %v4429 = vunpack.c.l.b16 %v3920
      %v4430 = vunpack.c.h.b16 %v3920
      %v4431 = vunpack.c.l.b16 %v3921
      %v4432 = vunpack.c.h.b16 %v3921
      %v4433 = vunpack.c.l.b16 %v3922
      %v4434 = vunpack.c.h.b16 %v3922
      %v4435 = vunpack.c.l.b16 %v3923
      %v4436 = vunpack.c.h.b16 %v3923
      %v4437 = vunpack.c.l.b16 %v3924
      %v4438 = vunpack.c.h.b16 %v3924
      %v4439 = vunpack.c.l.b16 %v3925
      %v4440 = vunpack.c.h.b16 %v3925
      %v4441 = vunpack.c.l.b16 %v3926
      %v4442 = vunpack.c.h.b16 %v3926
      %v4443 = vunpack.c.l.b16 %v3927
      %v4444 = vunpack.c.h.b16 %v3927
      %v4445 = vunpack.c.l.b16 %v3928
      %v4446 = vunpack.c.h.b16 %v3928
      %v4447 = vunpack.c.l.b16 %v3929
      %v4448 = vunpack.c.h.b16 %v3929
      %v4449 = vunpack.c.l.b16 %v3930
      %v4450 = vunpack.c.h.b16 %v3930
      %v4451 = vunpack.c.l.b16 %v3931
      %v4452 = vunpack.c.h.b16 %v3931
      %v4453 = vunpack.c.l.b16 %v3932
      %v4454 = vunpack.c.h.b16 %v3932
      %v4455 = vunpack.c.l.b16 %v3933
      %v4456 = vunpack.c.h.b16 %v3933
      %v4457 = vunpack.c.l.b16 %v3934
      %v4458 = vunpack.c.h.b16 %v3934
      %v4459 = vunpack.c.l.b16 %v3935
      %v4460 = vunpack.c.h.b16 %v3935
      %v4461 = vunpack.c.l.b16 %v3936
      %v4462 = vunpack.c.h.b16 %v3936
      %v4463 = vunpack.c.l.b16 %v3937
      %v4464 = vunpack.c.h.b16 %v3937
      %v4465 = vunpack.c.l.b16 %v3938
      %v4466 = vunpack.c.h.b16 %v3938
      %v4467 = vunpack.c.l.b16 %v3939
      %v4468 = vunpack.c.h.b16 %v3939
      %v4469 = vunpack.c.l.b16 %v3940
      %v4470 = vunpack.c.h.b16 %v3940
      %v4471 = vunpack.c.l.b16 %v3941
      %v4472 = vunpack.c.h.b16 %v3941
      %v4473 = vunpack.c.l.b16 %v3942
      %v4474 = vunpack.c.h.b16 %v3942
      %v4475 = vunpack.c.l.b16 %v3943
      %v4476 = vunpack.c.h.b16 %v3943
      %v4477 = vunpack.c.l.b16 %v3944
      %v4478 = vunpack.c.h.b16 %v3944
      %v4479 = vunpack.c.l.b16 %v3945
      %v4480 = vunpack.c.h.b16 %v3945
      %v4481 = vunpack.c.l.b16 %v3946
      %v4482 = vunpack.c.h.b16 %v3946
      %v4483 = vunpack.c.l.b16 %v3947
      %v4484 = vunpack.c.h.b16 %v3947
      %v4485 = vunpack.c.l.b16 %v3948
      %v4486 = vunpack.c.h.b16 %v3948
      %v4487 = vunpack.c.l.b16 %v3949
      %v4488 = vunpack.c.h.b16 %v3949
      %v4489 = vunpack.c.l.b16 %v3950
      %v4490 = vunpack.c.h.b16 %v3950
      %v4491 = vunpack.c.l.b16 %v3951
      %v4492 = vunpack.c.h.b16 %v3951
      %v4493 = vunpack.c.l.b16 %v3952
      %v4494 = vunpack.c.h.b16 %v3952
      %v4495 = vunpack.c.l.b16 %v3953
      %v4496 = vunpack.c.h.b16 %v3953
      %v4497 = vunpack.c.l.b16 %v3954
      %v4498 = vunpack.c.h.b16 %v3954
      %v4499 = vunpack.c.l.b16 %v3955
      %v4500 = vunpack.c.h.b16 %v3955
      %v4501 = vunpack.c.l.b16 %v3956
      %v4502 = vunpack.c.h.b16 %v3956
      %v4503 = vunpack.c.l.b16 %v3957
      %v4504 = vunpack.c.h.b16 %v3957
      %v4505 = vunpack.c.l.b16 %v3958
      %v4506 = vunpack.c.h.b16 %v3958
      %v4507 = vunpack.c.l.b16 %v3959
      %v4508 = vunpack.c.h.b16 %v3959
      %v4509 = vunpack.c.l.b16 %v3960
      %v4510 = vunpack.c.h.b16 %v3960
      %v4511 = vunpack.c.l.b16 %v3961
      %v4512 = vunpack.c.h.b16 %v3961
      %v4513 = vunpack.c.l.b16 %v3962
      %v4514 = vunpack.c.h.b16 %v3962
      %v4515 = vunpack.c.l.b16 %v3963
      %v4516 = vunpack.c.h.b16 %v3963
      %v4517 = vunpack.c.l.b16 %v3964
      %v4518 = vunpack.c.h.b16 %v3964
      %v4519 = vunpack.c.l.b16 %v3965
      %v4520 = vunpack.c.h.b16 %v3965
      %v4521 = vunpack.c.l.b16 %v3966
      %v4522 = vunpack.c.h.b16 %v3966
      %v4523 = vunpack.c.l.b16 %v3967
      %v4524 = vunpack.c.h.b16 %v3967
      %v4525 = vunpack.c.l.b16 %v3968
      %v4526 = vunpack.c.h.b16 %v3968
      %v4527 = vunpack.c.l.b16 %v3969
      %v4528 = vunpack.c.h.b16 %v3969
      %v4529 = vunpack.c.l.b16 %v3970
      %v4530 = vunpack.c.h.b16 %v3970
      %v4531 = vunpack.c.l.b16 %v3971
      %v4532 = vunpack.c.h.b16 %v3971
      %v4533 = vunpack.c.l.b16 %v3972
      %v4534 = vunpack.c.h.b16 %v3972
      %v4535 = vunpack.c.l.b16 %v3973
      %v4536 = vunpack.c.h.b16 %v3973
      %v4537 = vunpack.c.l.b16 %v3974
      %v4538 = vunpack.c.h.b16 %v3974
      %v4539 = vunpack.c.l.b16 %v3975
      %v4540 = vunpack.c.h.b16 %v3975
      %v4541 = vunpack.c.l.b16 %v3976
      %v4542 = vunpack.c.h.b16 %v3976
      %v4543 = vunpack.c.l.b16 %v3977
      %v4544 = vunpack.c.h.b16 %v3977
      %v4545 = vunpack.c.l.b16 %v3978
      %v4546 = vunpack.c.h.b16 %v3978
      %v4547 = vunpack.c.l.b16 %v3979
      %v4548 = vunpack.c.h.b16 %v3979
      %v4549 = vunpack.c.l.b16 %v3980
      %v4550 = vunpack.c.h.b16 %v3980
      %v4551 = vunpack.c.l.b16 %v3981
      %v4552 = vunpack.c.h.b16 %v3981
      %v4553 = vunpack.c.l.b16 %v3982
      %v4554 = vunpack.c.h.b16 %v3982
      %v4555 = vunpack.c.l.b16 %v3983
      %v4556 = vunpack.c.h.b16 %v3983
      %v4557 = vunpack.c.l.b16 %v3984
      %v4558 = vunpack.c.h.b16 %v3984
      %v4559 = vunpack.c.l.b16 %v3985
      %v4560 = vunpack.c.h.b16 %v3985
      %v4561 = vunpack.c.l.b16 %v3986
      %v4562 = vunpack.c.h.b16 %v3986
      %v4563 = vpack.c.b16 %v4183, %v4179
      %v4564 = vpack.c.b16 %v4184, %v4180
      %v4565 = vpack.c.b16 %v4185, %v4181
      %v4566 = vpack.c.b16 %v4186, %v4182
      %v4567 = vpack.c.b16 %v4191, %v4187
      %v4568 = vpack.c.b16 %v4192, %v4188
      %v4569 = vpack.c.b16 %v4193, %v4189
      %v4570 = vpack.c.b16 %v4194, %v4190
      %v4571 = vpack.c.b16 %v4199, %v4195
      %v4572 = vpack.c.b16 %v4200, %v4196
      %v4573 = vpack.c.b16 %v4201, %v4197
      %v4574 = vpack.c.b16 %v4202, %v4198
      %v4575 = vpack.c.b16 %v4207, %v4203
      %v4576 = vpack.c.b16 %v4208, %v4204
      %v4577 = vpack.c.b16 %v4209, %v4205
      %v4578 = vpack.c.b16 %v4210, %v4206
      %v4579 = vpack.c.b16 %v4215, %v4211
      %v4580 = vpack.c.b16 %v4216, %v4212
      %v4581 = vpack.c.b16 %v4217, %v4213
      %v4582 = vpack.c.b16 %v4218, %v4214
      %v4583 = vpack.c.b16 %v4223, %v4219
      %v4584 = vpack.c.b16 %v4224, %v4220
      %v4585 = vpack.c.b16 %v4225, %v4221
      %v4586 = vpack.c.b16 %v4226, %v4222
      %v4587 = vpack.c.b16 %v4231, %v4227
      %v4588 = vpack.c.b16 %v4232, %v4228
      %v4589 = vpack.c.b16 %v4233, %v4229
      %v4590 = vpack.c.b16 %v4234, %v4230
      %v4591 = vpack.c.b16 %v4239, %v4235
      %v4592 = vpack.c.b16 %v4240, %v4236
      %v4593 = vpack.c.b16 %v4241, %v4237
      %v4594 = vpack.c.b16 %v4242, %v4238
      %v4595 = vpack.c.b16 %v4247, %v4243
      %v4596 = vpack.c.b16 %v4248, %v4244
      %v4597 = vpack.c.b16 %v4249, %v4245
      %v4598 = vpack.c.b16 %v4250, %v4246
      %v4599 = vpack.c.b16 %v4255, %v4251
      %v4600 = vpack.c.b16 %v4256, %v4252
      %v4601 = vpack.c.b16 %v4257, %v4253
      %v4602 = vpack.c.b16 %v4258, %v4254
      %v4603 = vpack.c.b16 %v4263, %v4259
      %v4604 = vpack.c.b16 %v4264, %v4260
      %v4605 = vpack.c.b16 %v4265, %v4261
      %v4606 = vpack.c.b16 %v4266, %v4262
      %v4607 = vpack.c.b16 %v4271, %v4267
      %v4608 = vpack.c.b16 %v4272, %v4268
      %v4609 = vpack.c.b16 %v4273, %v4269
      %v4610 = vpack.c.b16 %v4274, %v4270
      %v4611 = vpack.c.b16 %v4279, %v4275
      %v4612 = vpack.c.b16 %v4280, %v4276
      %v4613 = vpack.c.b16 %v4281, %v4277
      %v4614 = vpack.c.b16 %v4282, %v4278
      %v4615 = vpack.c.b16 %v4287, %v4283
      %v4616 = vpack.c.b16 %v4288, %v4284
      %v4617 = vpack.c.b16 %v4289, %v4285
      %v4618 = vpack.c.b16 %v4290, %v4286
      %v4619 = vpack.c.b16 %v4295, %v4291
      %v4620 = vpack.c.b16 %v4296, %v4292
      %v4621 = vpack.c.b16 %v4297, %v4293
      %v4622 = vpack.c.b16 %v4298, %v4294
      %v4623 = vpack.c.b16 %v4303, %v4299
      %v4624 = vpack.c.b16 %v4304, %v4300
      %v4625 = vpack.c.b16 %v4305, %v4301
      %v4626 = vpack.c.b16 %v4306, %v4302
      %v4627 = vpack.c.b16 %v4311, %v4307
      %v4628 = vpack.c.b16 %v4312, %v4308
      %v4629 = vpack.c.b16 %v4313, %v4309
      %v4630 = vpack.c.b16 %v4314, %v4310
      %v4631 = vpack.c.b16 %v4319, %v4315
      %v4632 = vpack.c.b16 %v4320, %v4316
      %v4633 = vpack.c.b16 %v4321, %v4317
      %v4634 = vpack.c.b16 %v4322, %v4318
      %v4635 = vpack.c.b16 %v4327, %v4323
      %v4636 = vpack.c.b16 %v4328, %v4324
      %v4637 = vpack.c.b16 %v4329, %v4325
      %v4638 = vpack.c.b16 %v4330, %v4326
      %v4639 = vpack.c.b16 %v4335, %v4331
      %v4640 = vpack.c.b16 %v4336, %v4332
      %v4641 = vpack.c.b16 %v4337, %v4333
      %v4642 = vpack.c.b16 %v4338, %v4334
      %v4643 = vpack.c.b16 %v4343, %v4339
      %v4644 = vpack.c.b16 %v4344, %v4340
      %v4645 = vpack.c.b16 %v4345, %v4341
      %v4646 = vpack.c.b16 %v4346, %v4342
      %v4647 = vpack.c.b16 %v4351, %v4347
      %v4648 = vpack.c.b16 %v4352, %v4348
      %v4649 = vpack.c.b16 %v4353, %v4349
      %v4650 = vpack.c.b16 %v4354, %v4350
      %v4651 = vpack.c.b16 %v4359, %v4355
      %v4652 = vpack.c.b16 %v4360, %v4356
      %v4653 = vpack.c.b16 %v4361, %v4357
      %v4654 = vpack.c.b16 %v4362, %v4358
      %v4655 = vpack.c.b16 %v4367, %v4363
      %v4656 = vpack.c.b16 %v4368, %v4364
      %v4657 = vpack.c.b16 %v4369, %v4365
      %v4658 = vpack.c.b16 %v4370, %v4366
      %v4659 = vpack.c.b16 %v4375, %v4371
      %v4660 = vpack.c.b16 %v4376, %v4372
      %v4661 = vpack.c.b16 %v4377, %v4373
      %v4662 = vpack.c.b16 %v4378, %v4374
      %v4663 = vpack.c.b16 %v4383, %v4379
      %v4664 = vpack.c.b16 %v4384, %v4380
      %v4665 = vpack.c.b16 %v4385, %v4381
      %v4666 = vpack.c.b16 %v4386, %v4382
      %v4667 = vpack.c.b16 %v4391, %v4387
      %v4668 = vpack.c.b16 %v4392, %v4388
      %v4669 = vpack.c.b16 %v4393, %v4389
      %v4670 = vpack.c.b16 %v4394, %v4390
      %v4671 = vpack.c.b16 %v4399, %v4395
      %v4672 = vpack.c.b16 %v4400, %v4396
      %v4673 = vpack.c.b16 %v4401, %v4397
      %v4674 = vpack.c.b16 %v4402, %v4398
      %v4675 = vpack.c.b16 %v4407, %v4403
      %v4676 = vpack.c.b16 %v4408, %v4404
      %v4677 = vpack.c.b16 %v4409, %v4405
      %v4678 = vpack.c.b16 %v4410, %v4406
      %v4679 = vpack.c.b16 %v4415, %v4411
      %v4680 = vpack.c.b16 %v4416, %v4412
      %v4681 = vpack.c.b16 %v4417, %v4413
      %v4682 = vpack.c.b16 %v4418, %v4414
      %v4683 = vpack.c.b16 %v4423, %v4419
      %v4684 = vpack.c.b16 %v4424, %v4420
      %v4685 = vpack.c.b16 %v4425, %v4421
      %v4686 = vpack.c.b16 %v4426, %v4422
      %v4687 = vpack.c.b16 %v4431, %v4427
      %v4688 = vpack.c.b16 %v4432, %v4428
      %v4689 = vpack.c.b16 %v4433, %v4429
      %v4690 = vpack.c.b16 %v4434, %v4430
      %v4691 = vpack.c.b16 %v4439, %v4435
      %v4692 = vpack.c.b16 %v4440, %v4436
      %v4693 = vpack.c.b16 %v4441, %v4437
      %v4694 = vpack.c.b16 %v4442, %v4438
      %v4695 = vpack.c.b16 %v4447, %v4443
      %v4696 = vpack.c.b16 %v4448, %v4444
      %v4697 = vpack.c.b16 %v4449, %v4445
      %v4698 = vpack.c.b16 %v4450, %v4446
      %v4699 = vpack.c.b16 %v4455, %v4451
      %v4700 = vpack.c.b16 %v4456, %v4452
      %v4701 = vpack.c.b16 %v4457, %v4453
      %v4702 = vpack.c.b16 %v4458, %v4454
      %v4703 = vpack.c.b16 %v4463, %v4459
      %v4704 = vpack.c.b16 %v4464, %v4460
      %v4705 = vpack.c.b16 %v4465, %v4461
      %v4706 = vpack.c.b16 %v4466, %v4462
      %v4707 = vpack.c.b16 %v4471, %v4467
      %v4708 = vpack.c.b16 %v4472, %v4468
      %v4709 = vpack.c.b16 %v4473, %v4469
      %v4710 = vpack.c.b16 %v4474, %v4470
      %v4711 = vpack.c.b16 %v4479, %v4475
      %v4712 = vpack.c.b16 %v4480, %v4476
      %v4713 = vpack.c.b16 %v4481, %v4477
      %v4714 = vpack.c.b16 %v4482, %v4478
      %v4715 = vpack.c.b16 %v4487, %v4483
      %v4716 = vpack.c.b16 %v4488, %v4484
      %v4717 = vpack.c.b16 %v4489, %v4485
      %v4718 = vpack.c.b16 %v4490, %v4486
      %v4719 = vpack.c.b16 %v4495, %v4491
      %v4720 = vpack.c.b16 %v4496, %v4492
      %v4721 = vpack.c.b16 %v4497, %v4493
      %v4722 = vpack.c.b16 %v4498, %v4494
      %v4723 = vpack.c.b16 %v4503, %v4499
      %v4724 = vpack.c.b16 %v4504, %v4500
      %v4725 = vpack.c.b16 %v4505, %v4501
      %v4726 = vpack.c.b16 %v4506, %v4502
      %v4727 = vpack.c.b16 %v4511, %v4507
      %v4728 = vpack.c.b16 %v4512, %v4508
      %v4729 = vpack.c.b16 %v4513, %v4509
      %v4730 = vpack.c.b16 %v4514, %v4510
      %v4731 = vpack.c.b16 %v4519, %v4515
      %v4732 = vpack.c.b16 %v4520, %v4516
      %v4733 = vpack.c.b16 %v4521, %v4517
      %v4734 = vpack.c.b16 %v4522, %v4518
      %v4735 = vpack.c.b16 %v4527, %v4523
      %v4736 = vpack.c.b16 %v4528, %v4524
      %v4737 = vpack.c.b16 %v4529, %v4525
      %v4738 = vpack.c.b16 %v4530, %v4526
      %v4739 = vpack.c.b16 %v4535, %v4531
      %v4740 = vpack.c.b16 %v4536, %v4532
      %v4741 = vpack.c.b16 %v4537, %v4533
      %v4742 = vpack.c.b16 %v4538, %v4534
      %v4743 = vpack.c.b16 %v4543, %v4539
      %v4744 = vpack.c.b16 %v4544, %v4540
      %v4745 = vpack.c.b16 %v4545, %v4541
      %v4746 = vpack.c.b16 %v4546, %v4542
      %v4747 = vpack.c.b16 %v4551, %v4547
      %v4748 = vpack.c.b16 %v4552, %v4548
      %v4749 = vpack.c.b16 %v4553, %v4549
      %v4750 = vpack.c.b16 %v4554, %v4550
      %v4751 = vpack.c.b16 %v4559, %v4555
      %v4752 = vpack.c.b16 %v4560, %v4556
      %v4753 = vpack.c.b16 %v4561, %v4557
      %v4754 = vpack.c.b16 %v4562, %v4558
      %4947 = vmatprep.subr.bf16.mxu0 %v4592
      %4948 = vmatpush1.bf16.msra.mxu0 %v4591
      %4949 = vmatprep.subr.bf16.mxu0 %v4588
      %4950 = vmatpush1.bf16.msra.mxu0 %v4587
      %4951 = vmatprep.subr.bf16.mxu0 %v4584
      %4952 = vmatpush1.bf16.msra.mxu0 %v4583
      %4953 = vmatprep.subr.bf16.mxu0 %v4580
      %4954 = vmatpush1.bf16.msra.mxu0 %v4579
      %4955 = vmatprep.subr.bf16.mxu0 %v4576
      %4956 = vmatpush1.bf16.msra.mxu0 %v4575
      %4957 = vmatprep.subr.bf16.mxu0 %v4572
      %4958 = vmatpush1.bf16.msra.mxu0 %v4571
      %4959 = vmatprep.subr.bf16.mxu0 %v4568
      %4960 = vmatpush1.bf16.msra.mxu0 %v4567
      %4961 = vmatprep.subr.bf16.mxu0 %v4564
      %4962 = vmatpush1.bf16.msra.mxu0 %v4563
      %4963 = vmatprep.subr.bf16.mxu0 %v4624
      %4964 = vmatpush2.bf16.msra.mxu0 %v4623
      %4965 = vmatprep.subr.bf16.mxu0 %v4620
      %4966 = vmatpush2.bf16.msra.mxu0 %v4619
      %4967 = vmatprep.subr.bf16.mxu0 %v4616
      %4968 = vmatpush2.bf16.msra.mxu0 %v4615
      %4969 = vmatprep.subr.bf16.mxu0 %v4612
      %4970 = vmatpush2.bf16.msra.mxu0 %v4611
      %4971 = vmatprep.subr.bf16.mxu0 %v4608
      %4972 = vmatpush2.bf16.msra.mxu0 %v4607
      %4973 = vmatprep.subr.bf16.mxu0 %v4604
      %4974 = vmatpush2.bf16.msra.mxu0 %v4603
      %4975 = vmatprep.subr.bf16.mxu0 %v4600
      %4976 = vmatpush2.bf16.msra.mxu0 %v4599
      %4977 = vmatprep.subr.bf16.mxu0 %v4596
      %4978 = vmatpush2.bf16.msra.mxu0 %v4595
      %4979 = vmatprep.mubr.bf16.mxu0 %v3790
      %4980 = vmatmul.mubr.bf16.gmra.mxu0 %v3789
      %v4981 = vpop.f32.mrf.mxu0
      %v4982 = vadd.f32 0.0, %v4981
      %v4983 = vpop.f32.mrf.mxu0
      %v4984 = vadd.f32 0.0, %v4983
      %v4985 = vpop.f32.mrf.mxu0
      %v4986 = vpop.f32.mrf.mxu0
      %4987 = vdwg.mxu0
      %4988 = vmatprep.subr.bf16.mxu0 %v4656
      %4989 = vmatpush1.bf16.msra.mxu0 %v4655
      %4990 = vmatprep.subr.bf16.mxu0 %v4652
      %4991 = vmatpush1.bf16.msra.mxu0 %v4651
      %4992 = vmatprep.subr.bf16.mxu0 %v4648
      %4993 = vmatpush1.bf16.msra.mxu0 %v4647
      %4994 = vmatprep.subr.bf16.mxu0 %v4644
      %4995 = vmatpush1.bf16.msra.mxu0 %v4643
      %4996 = vmatprep.subr.bf16.mxu0 %v4640
      %4997 = vmatpush1.bf16.msra.mxu0 %v4639
      %4998 = vmatprep.subr.bf16.mxu0 %v4636
      %4999 = vmatpush1.bf16.msra.mxu0 %v4635
      %5000 = vmatprep.subr.bf16.mxu0 %v4632
      %5001 = vmatpush1.bf16.msra.mxu0 %v4631
      %5002 = vmatprep.subr.bf16.mxu0 %v4628
      %5003 = vmatpush1.bf16.msra.mxu0 %v4627
      %5004 = vmatprep.subr.bf16.mxu0 %v4688
      %5005 = vmatpush2.bf16.msra.mxu0 %v4687
      %5006 = vmatprep.subr.bf16.mxu0 %v4684
      %5007 = vmatpush2.bf16.msra.mxu0 %v4683
      %5008 = vmatprep.subr.bf16.mxu0 %v4680
      %5009 = vmatpush2.bf16.msra.mxu0 %v4679
      %5010 = vmatprep.subr.bf16.mxu0 %v4676
      %5011 = vmatpush2.bf16.msra.mxu0 %v4675
      %5012 = vmatprep.subr.bf16.mxu0 %v4672
      %5013 = vmatpush2.bf16.msra.mxu0 %v4671
      %5014 = vmatprep.subr.bf16.mxu0 %v4668
      %5015 = vmatpush2.bf16.msra.mxu0 %v4667
      %5016 = vmatprep.subr.bf16.mxu0 %v4664
      %5017 = vmatpush2.bf16.msra.mxu0 %v4663
      %5018 = vmatprep.subr.bf16.mxu0 %v4660
      %5019 = vmatpush2.bf16.msra.mxu0 %v4659
      %5020 = vmatprep.mubr.bf16.mxu0 %v3792
      %5021 = vmatmul.mubr.bf16.gmra.mxu0 %v3791
      %v5022 = vpop.f32.mrf.mxu0
      %v5023 = vadd.f32 %v4982, %v5022
      %v5024 = vpop.f32.mrf.mxu0
      %v5025 = vadd.f32 %v4984, %v5024
      %v5026 = vpop.f32.mrf.mxu0
      %v5027 = vpop.f32.mrf.mxu0
      %5028 = vdwg.mxu0
      %5029 = vmatprep.subr.bf16.mxu0 %v4720
      %5030 = vmatpush1.bf16.msra.mxu0 %v4719
      %5031 = vmatprep.subr.bf16.mxu0 %v4716
      %5032 = vmatpush1.bf16.msra.mxu0 %v4715
      %5033 = vmatprep.subr.bf16.mxu0 %v4712
      %5034 = vmatpush1.bf16.msra.mxu0 %v4711
      %5035 = vmatprep.subr.bf16.mxu0 %v4708
      %5036 = vmatpush1.bf16.msra.mxu0 %v4707
      %5037 = vmatprep.subr.bf16.mxu0 %v4704
      %5038 = vmatpush1.bf16.msra.mxu0 %v4703
      %5039 = vmatprep.subr.bf16.mxu0 %v4700
      %5040 = vmatpush1.bf16.msra.mxu0 %v4699
      %5041 = vmatprep.subr.bf16.mxu0 %v4696
      %5042 = vmatpush1.bf16.msra.mxu0 %v4695
      %5043 = vmatprep.subr.bf16.mxu0 %v4692
      %5044 = vmatpush1.bf16.msra.mxu0 %v4691
      %5045 = vmatprep.subr.bf16.mxu0 %v4752
      %5046 = vmatpush2.bf16.msra.mxu0 %v4751
      %5047 = vmatprep.subr.bf16.mxu0 %v4748
      %5048 = vmatpush2.bf16.msra.mxu0 %v4747
      %5049 = vmatprep.subr.bf16.mxu0 %v4744
      %5050 = vmatpush2.bf16.msra.mxu0 %v4743
      %5051 = vmatprep.subr.bf16.mxu0 %v4740
      %5052 = vmatpush2.bf16.msra.mxu0 %v4739
      %5053 = vmatprep.subr.bf16.mxu0 %v4736
      %5054 = vmatpush2.bf16.msra.mxu0 %v4735
      %5055 = vmatprep.subr.bf16.mxu0 %v4732
      %5056 = vmatpush2.bf16.msra.mxu0 %v4731
      %5057 = vmatprep.subr.bf16.mxu0 %v4728
      %5058 = vmatpush2.bf16.msra.mxu0 %v4727
      %5059 = vmatprep.subr.bf16.mxu0 %v4724
      %5060 = vmatpush2.bf16.msra.mxu0 %v4723
      %5061 = vmatprep.mubr.bf16.mxu0 %v3794
      %5062 = vmatmul.mubr.bf16.gmra.mxu0 %v3793
      %v5063 = vpop.f32.mrf.mxu0
      %v5064 = vadd.f32 %v5023, %v5063
      %v5065 = vpop.f32.mrf.mxu0
      %v5066 = vadd.f32 %v5025, %v5065
      %v5067 = vpop.f32.mrf.mxu0
      %v5068 = vpop.f32.mrf.mxu0
      %5069 = vdwg.mxu0
      %5070 = vmatprep.subr.bf16.mxu0 %v4594
      %5071 = vmatpush1.bf16.msra.mxu0 %v4593
      %5072 = vmatprep.subr.bf16.mxu0 %v4590
      %5073 = vmatpush1.bf16.msra.mxu0 %v4589
      %5074 = vmatprep.subr.bf16.mxu0 %v4586
      %5075 = vmatpush1.bf16.msra.mxu0 %v4585
      %5076 = vmatprep.subr.bf16.mxu0 %v4582
      %5077 = vmatpush1.bf16.msra.mxu0 %v4581
      %5078 = vmatprep.subr.bf16.mxu0 %v4578
      %5079 = vmatpush1.bf16.msra.mxu0 %v4577
      %5080 = vmatprep.subr.bf16.mxu0 %v4574
      %5081 = vmatpush1.bf16.msra.mxu0 %v4573
      %5082 = vmatprep.subr.bf16.mxu0 %v4570
      %5083 = vmatpush1.bf16.msra.mxu0 %v4569
      %5084 = vmatprep.subr.bf16.mxu0 %v4566
      %5085 = vmatpush1.bf16.msra.mxu0 %v4565
      %5086 = vmatprep.subr.bf16.mxu0 %v4626
      %5087 = vmatpush2.bf16.msra.mxu0 %v4625
      %5088 = vmatprep.subr.bf16.mxu0 %v4622
      %5089 = vmatpush2.bf16.msra.mxu0 %v4621
      %5090 = vmatprep.subr.bf16.mxu0 %v4618
      %5091 = vmatpush2.bf16.msra.mxu0 %v4617
      %5092 = vmatprep.subr.bf16.mxu0 %v4614
      %5093 = vmatpush2.bf16.msra.mxu0 %v4613
      %5094 = vmatprep.subr.bf16.mxu0 %v4610
      %5095 = vmatpush2.bf16.msra.mxu0 %v4609
      %5096 = vmatprep.subr.bf16.mxu0 %v4606
      %5097 = vmatpush2.bf16.msra.mxu0 %v4605
      %5098 = vmatprep.subr.bf16.mxu0 %v4602
      %5099 = vmatpush2.bf16.msra.mxu0 %v4601
      %5100 = vmatprep.subr.bf16.mxu0 %v4598
      %5101 = vmatpush2.bf16.msra.mxu0 %v4597
      %5102 = vmatprep.mubr.bf16.mxu0 %v3790
      %5103 = vmatmul.mubr.bf16.gmra.mxu0 %v3789
      %v5104 = vpop.f32.mrf.mxu0
      %v5105 = vadd.f32 0.0, %v5104
      %v5106 = vpop.f32.mrf.mxu0
      %v5107 = vadd.f32 0.0, %v5106
      %v5108 = vpop.f32.mrf.mxu0
      %v5109 = vpop.f32.mrf.mxu0
      %5110 = vdwg.mxu0
      %5111 = vmatprep.subr.bf16.mxu0 %v4658
      %5112 = vmatpush1.bf16.msra.mxu0 %v4657
      %5113 = vmatprep.subr.bf16.mxu0 %v4654
      %5114 = vmatpush1.bf16.msra.mxu0 %v4653
      %5115 = vmatprep.subr.bf16.mxu0 %v4650
      %5116 = vmatpush1.bf16.msra.mxu0 %v4649
      %5117 = vmatprep.subr.bf16.mxu0 %v4646
      %5118 = vmatpush1.bf16.msra.mxu0 %v4645
      %5119 = vmatprep.subr.bf16.mxu0 %v4642
      %5120 = vmatpush1.bf16.msra.mxu0 %v4641
      %5121 = vmatprep.subr.bf16.mxu0 %v4638
      %5122 = vmatpush1.bf16.msra.mxu0 %v4637
      %5123 = vmatprep.subr.bf16.mxu0 %v4634
      %5124 = vmatpush1.bf16.msra.mxu0 %v4633
      %5125 = vmatprep.subr.bf16.mxu0 %v4630
      %5126 = vmatpush1.bf16.msra.mxu0 %v4629
      %5127 = vmatprep.subr.bf16.mxu0 %v4690
      %5128 = vmatpush2.bf16.msra.mxu0 %v4689
      %5129 = vmatprep.subr.bf16.mxu0 %v4686
      %5130 = vmatpush2.bf16.msra.mxu0 %v4685
      %5131 = vmatprep.subr.bf16.mxu0 %v4682
      %5132 = vmatpush2.bf16.msra.mxu0 %v4681
      %5133 = vmatprep.subr.bf16.mxu0 %v4678
      %5134 = vmatpush2.bf16.msra.mxu0 %v4677
      %5135 = vmatprep.subr.bf16.mxu0 %v4674
      %5136 = vmatpush2.bf16.msra.mxu0 %v4673
      %5137 = vmatprep.subr.bf16.mxu0 %v4670
      %5138 = vmatpush2.bf16.msra.mxu0 %v4669
      %5139 = vmatprep.subr.bf16.mxu0 %v4666
      %5140 = vmatpush2.bf16.msra.mxu0 %v4665
      %5141 = vmatprep.subr.bf16.mxu0 %v4662
      %5142 = vmatpush2.bf16.msra.mxu0 %v4661
      %5143 = vmatprep.mubr.bf16.mxu0 %v3792
      %5144 = vmatmul.mubr.bf16.gmra.mxu0 %v3791
      %v5145 = vpop.f32.mrf.mxu0
      %v5146 = vadd.f32 %v5105, %v5145
      %v5147 = vpop.f32.mrf.mxu0
      %v5148 = vadd.f32 %v5107, %v5147
      %v5149 = vpop.f32.mrf.mxu0
      %v5150 = vpop.f32.mrf.mxu0
      %5151 = vdwg.mxu0
      %5152 = vmatprep.subr.bf16.mxu0 %v4722
      %5153 = vmatpush1.bf16.msra.mxu0 %v4721
      %5154 = vmatprep.subr.bf16.mxu0 %v4718
      %5155 = vmatpush1.bf16.msra.mxu0 %v4717
      %5156 = vmatprep.subr.bf16.mxu0 %v4714
      %5157 = vmatpush1.bf16.msra.mxu0 %v4713
      %5158 = vmatprep.subr.bf16.mxu0 %v4710
      %5159 = vmatpush1.bf16.msra.mxu0 %v4709
      %5160 = vmatprep.subr.bf16.mxu0 %v4706
      %5161 = vmatpush1.bf16.msra.mxu0 %v4705
      %5162 = vmatprep.subr.bf16.mxu0 %v4702
      %5163 = vmatpush1.bf16.msra.mxu0 %v4701
      %5164 = vmatprep.subr.bf16.mxu0 %v4698
      %5165 = vmatpush1.bf16.msra.mxu0 %v4697
      %5166 = vmatprep.subr.bf16.mxu0 %v4694
      %5167 = vmatpush1.bf16.msra.mxu0 %v4693
      %5168 = vmatprep.subr.bf16.mxu0 %v4754
      %5169 = vmatpush2.bf16.msra.mxu0 %v4753
      %5170 = vmatprep.subr.bf16.mxu0 %v4750
      %5171 = vmatpush2.bf16.msra.mxu0 %v4749
      %5172 = vmatprep.subr.bf16.mxu0 %v4746
      %5173 = vmatpush2.bf16.msra.mxu0 %v4745
      %5174 = vmatprep.subr.bf16.mxu0 %v4742
      %5175 = vmatpush2.bf16.msra.mxu0 %v4741
      %5176 = vmatprep.subr.bf16.mxu0 %v4738
      %5177 = vmatpush2.bf16.msra.mxu0 %v4737
      %5178 = vmatprep.subr.bf16.mxu0 %v4734
      %5179 = vmatpush2.bf16.msra.mxu0 %v4733
      %5180 = vmatprep.subr.bf16.mxu0 %v4730
      %5181 = vmatpush2.bf16.msra.mxu0 %v4729
      %5182 = vmatprep.subr.bf16.mxu0 %v4726
      %5183 = vmatpush2.bf16.msra.mxu0 %v4725
      %5184 = vmatprep.mubr.bf16.mxu0 %v3794
      %5185 = vmatmul.mubr.bf16.gmra.mxu0 %v3793
      %v5186 = vpop.f32.mrf.mxu0
      %v5187 = vadd.f32 %v5146, %v5186
      %v5188 = vpop.f32.mrf.mxu0
      %v5189 = vadd.f32 %v5148, %v5188
      %v5190 = vpop.f32.mrf.mxu0
      %v5191 = vpop.f32.mrf.mxu0
      %5192 = vdwg.mxu0
      %v5385 = vunpack.c.l.b16 %v3597
      %v5386 = vunpack.c.h.b16 %v3597
      %v5387 = vunpack.c.l.b16 %v3598
      %v5388 = vunpack.c.h.b16 %v3598
      %v5389 = vunpack.c.l.b16 %v3599
      %v5390 = vunpack.c.h.b16 %v3599
      %v5391 = vunpack.c.l.b16 %v3600
      %v5392 = vunpack.c.h.b16 %v3600
      %v5393 = vunpack.c.l.b16 %v3601
      %v5394 = vunpack.c.h.b16 %v3601
      %v5395 = vunpack.c.l.b16 %v3602
      %v5396 = vunpack.c.h.b16 %v3602
      %v5397 = vunpack.c.l.b16 %v3603
      %v5398 = vunpack.c.h.b16 %v3603
      %v5399 = vunpack.c.l.b16 %v3604
      %v5400 = vunpack.c.h.b16 %v3604
      %v5401 = vunpack.c.l.b16 %v3605
      %v5402 = vunpack.c.h.b16 %v3605
      %v5403 = vunpack.c.l.b16 %v3606
      %v5404 = vunpack.c.h.b16 %v3606
      %v5405 = vunpack.c.l.b16 %v3607
      %v5406 = vunpack.c.h.b16 %v3607
      %v5407 = vunpack.c.l.b16 %v3608
      %v5408 = vunpack.c.h.b16 %v3608
      %v5409 = vunpack.c.l.b16 %v3609
      %v5410 = vunpack.c.h.b16 %v3609
      %v5411 = vunpack.c.l.b16 %v3610
      %v5412 = vunpack.c.h.b16 %v3610
      %v5413 = vunpack.c.l.b16 %v3611
      %v5414 = vunpack.c.h.b16 %v3611
      %v5415 = vunpack.c.l.b16 %v3612
      %v5416 = vunpack.c.h.b16 %v3612
      %v5417 = vunpack.c.l.b16 %v3613
      %v5418 = vunpack.c.h.b16 %v3613
      %v5419 = vunpack.c.l.b16 %v3614
      %v5420 = vunpack.c.h.b16 %v3614
      %v5421 = vunpack.c.l.b16 %v3615
      %v5422 = vunpack.c.h.b16 %v3615
      %v5423 = vunpack.c.l.b16 %v3616
      %v5424 = vunpack.c.h.b16 %v3616
      %v5425 = vunpack.c.l.b16 %v3617
      %v5426 = vunpack.c.h.b16 %v3617
      %v5427 = vunpack.c.l.b16 %v3618
      %v5428 = vunpack.c.h.b16 %v3618
      %v5429 = vunpack.c.l.b16 %v3619
      %v5430 = vunpack.c.h.b16 %v3619
      %v5431 = vunpack.c.l.b16 %v3620
      %v5432 = vunpack.c.h.b16 %v3620
      %v5433 = vunpack.c.l.b16 %v3621
      %v5434 = vunpack.c.h.b16 %v3621
      %v5435 = vunpack.c.l.b16 %v3622
      %v5436 = vunpack.c.h.b16 %v3622
      %v5437 = vunpack.c.l.b16 %v3623
      %v5438 = vunpack.c.h.b16 %v3623
      %v5439 = vunpack.c.l.b16 %v3624
      %v5440 = vunpack.c.h.b16 %v3624
      %v5441 = vunpack.c.l.b16 %v3625
      %v5442 = vunpack.c.h.b16 %v3625
      %v5443 = vunpack.c.l.b16 %v3626
      %v5444 = vunpack.c.h.b16 %v3626
      %v5445 = vunpack.c.l.b16 %v3627
      %v5446 = vunpack.c.h.b16 %v3627
      %v5447 = vunpack.c.l.b16 %v3628
      %v5448 = vunpack.c.h.b16 %v3628
      %v5449 = vunpack.c.l.b16 %v3629
      %v5450 = vunpack.c.h.b16 %v3629
      %v5451 = vunpack.c.l.b16 %v3630
      %v5452 = vunpack.c.h.b16 %v3630
      %v5453 = vunpack.c.l.b16 %v3631
      %v5454 = vunpack.c.h.b16 %v3631
      %v5455 = vunpack.c.l.b16 %v3632
      %v5456 = vunpack.c.h.b16 %v3632
      %v5457 = vunpack.c.l.b16 %v3633
      %v5458 = vunpack.c.h.b16 %v3633
      %v5459 = vunpack.c.l.b16 %v3634
      %v5460 = vunpack.c.h.b16 %v3634
      %v5461 = vunpack.c.l.b16 %v3635
      %v5462 = vunpack.c.h.b16 %v3635
      %v5463 = vunpack.c.l.b16 %v3636
      %v5464 = vunpack.c.h.b16 %v3636
      %v5465 = vunpack.c.l.b16 %v3637
      %v5466 = vunpack.c.h.b16 %v3637
      %v5467 = vunpack.c.l.b16 %v3638
      %v5468 = vunpack.c.h.b16 %v3638
      %v5469 = vunpack.c.l.b16 %v3639
      %v5470 = vunpack.c.h.b16 %v3639
      %v5471 = vunpack.c.l.b16 %v3640
      %v5472 = vunpack.c.h.b16 %v3640
      %v5473 = vunpack.c.l.b16 %v3641
      %v5474 = vunpack.c.h.b16 %v3641
      %v5475 = vunpack.c.l.b16 %v3642
      %v5476 = vunpack.c.h.b16 %v3642
      %v5477 = vunpack.c.l.b16 %v3643
      %v5478 = vunpack.c.h.b16 %v3643
      %v5479 = vunpack.c.l.b16 %v3644
      %v5480 = vunpack.c.h.b16 %v3644
      %v5481 = vunpack.c.l.b16 %v3645
      %v5482 = vunpack.c.h.b16 %v3645
      %v5483 = vunpack.c.l.b16 %v3646
      %v5484 = vunpack.c.h.b16 %v3646
      %v5485 = vunpack.c.l.b16 %v3647
      %v5486 = vunpack.c.h.b16 %v3647
      %v5487 = vunpack.c.l.b16 %v3648
      %v5488 = vunpack.c.h.b16 %v3648
      %v5489 = vunpack.c.l.b16 %v3649
      %v5490 = vunpack.c.h.b16 %v3649
      %v5491 = vunpack.c.l.b16 %v3650
      %v5492 = vunpack.c.h.b16 %v3650
      %v5493 = vunpack.c.l.b16 %v3651
      %v5494 = vunpack.c.h.b16 %v3651
      %v5495 = vunpack.c.l.b16 %v3652
      %v5496 = vunpack.c.h.b16 %v3652
      %v5497 = vunpack.c.l.b16 %v3653
      %v5498 = vunpack.c.h.b16 %v3653
      %v5499 = vunpack.c.l.b16 %v3654
      %v5500 = vunpack.c.h.b16 %v3654
      %v5501 = vunpack.c.l.b16 %v3655
      %v5502 = vunpack.c.h.b16 %v3655
      %v5503 = vunpack.c.l.b16 %v3656
      %v5504 = vunpack.c.h.b16 %v3656
      %v5505 = vunpack.c.l.b16 %v3657
      %v5506 = vunpack.c.h.b16 %v3657
      %v5507 = vunpack.c.l.b16 %v3658
      %v5508 = vunpack.c.h.b16 %v3658
      %v5509 = vunpack.c.l.b16 %v3659
      %v5510 = vunpack.c.h.b16 %v3659
      %v5511 = vunpack.c.l.b16 %v3660
      %v5512 = vunpack.c.h.b16 %v3660
      %v5513 = vunpack.c.l.b16 %v3661
      %v5514 = vunpack.c.h.b16 %v3661
      %v5515 = vunpack.c.l.b16 %v3662
      %v5516 = vunpack.c.h.b16 %v3662
      %v5517 = vunpack.c.l.b16 %v3663
      %v5518 = vunpack.c.h.b16 %v3663
      %v5519 = vunpack.c.l.b16 %v3664
      %v5520 = vunpack.c.h.b16 %v3664
      %v5521 = vunpack.c.l.b16 %v3665
      %v5522 = vunpack.c.h.b16 %v3665
      %v5523 = vunpack.c.l.b16 %v3666
      %v5524 = vunpack.c.h.b16 %v3666
      %v5525 = vunpack.c.l.b16 %v3667
      %v5526 = vunpack.c.h.b16 %v3667
      %v5527 = vunpack.c.l.b16 %v3668
      %v5528 = vunpack.c.h.b16 %v3668
      %v5529 = vunpack.c.l.b16 %v3669
      %v5530 = vunpack.c.h.b16 %v3669
      %v5531 = vunpack.c.l.b16 %v3670
      %v5532 = vunpack.c.h.b16 %v3670
      %v5533 = vunpack.c.l.b16 %v3671
      %v5534 = vunpack.c.h.b16 %v3671
      %v5535 = vunpack.c.l.b16 %v3672
      %v5536 = vunpack.c.h.b16 %v3672
      %v5537 = vunpack.c.l.b16 %v3673
      %v5538 = vunpack.c.h.b16 %v3673
      %v5539 = vunpack.c.l.b16 %v3674
      %v5540 = vunpack.c.h.b16 %v3674
      %v5541 = vunpack.c.l.b16 %v3675
      %v5542 = vunpack.c.h.b16 %v3675
      %v5543 = vunpack.c.l.b16 %v3676
      %v5544 = vunpack.c.h.b16 %v3676
      %v5545 = vunpack.c.l.b16 %v3677
      %v5546 = vunpack.c.h.b16 %v3677
      %v5547 = vunpack.c.l.b16 %v3678
      %v5548 = vunpack.c.h.b16 %v3678
      %v5549 = vunpack.c.l.b16 %v3679
      %v5550 = vunpack.c.h.b16 %v3679
      %v5551 = vunpack.c.l.b16 %v3680
      %v5552 = vunpack.c.h.b16 %v3680
      %v5553 = vunpack.c.l.b16 %v3681
      %v5554 = vunpack.c.h.b16 %v3681
      %v5555 = vunpack.c.l.b16 %v3682
      %v5556 = vunpack.c.h.b16 %v3682
      %v5557 = vunpack.c.l.b16 %v3683
      %v5558 = vunpack.c.h.b16 %v3683
      %v5559 = vunpack.c.l.b16 %v3684
      %v5560 = vunpack.c.h.b16 %v3684
      %v5561 = vunpack.c.l.b16 %v3685
      %v5562 = vunpack.c.h.b16 %v3685
      %v5563 = vunpack.c.l.b16 %v3686
      %v5564 = vunpack.c.h.b16 %v3686
      %v5565 = vunpack.c.l.b16 %v3687
      %v5566 = vunpack.c.h.b16 %v3687
      %v5567 = vunpack.c.l.b16 %v3688
      %v5568 = vunpack.c.h.b16 %v3688
      %v5569 = vunpack.c.l.b16 %v3689
      %v5570 = vunpack.c.h.b16 %v3689
      %v5571 = vunpack.c.l.b16 %v3690
      %v5572 = vunpack.c.h.b16 %v3690
      %v5573 = vunpack.c.l.b16 %v3691
      %v5574 = vunpack.c.h.b16 %v3691
      %v5575 = vunpack.c.l.b16 %v3692
      %v5576 = vunpack.c.h.b16 %v3692
      %v5577 = vunpack.c.l.b16 %v3693
      %v5578 = vunpack.c.h.b16 %v3693
      %v5579 = vunpack.c.l.b16 %v3694
      %v5580 = vunpack.c.h.b16 %v3694
      %v5581 = vunpack.c.l.b16 %v3695
      %v5582 = vunpack.c.h.b16 %v3695
      %v5583 = vunpack.c.l.b16 %v3696
      %v5584 = vunpack.c.h.b16 %v3696
      %v5585 = vunpack.c.l.b16 %v3697
      %v5586 = vunpack.c.h.b16 %v3697
      %v5587 = vunpack.c.l.b16 %v3698
      %v5588 = vunpack.c.h.b16 %v3698
      %v5589 = vunpack.c.l.b16 %v3699
      %v5590 = vunpack.c.h.b16 %v3699
      %v5591 = vunpack.c.l.b16 %v3700
      %v5592 = vunpack.c.h.b16 %v3700
      %v5593 = vunpack.c.l.b16 %v3701
      %v5594 = vunpack.c.h.b16 %v3701
      %v5595 = vunpack.c.l.b16 %v3702
      %v5596 = vunpack.c.h.b16 %v3702
      %v5597 = vunpack.c.l.b16 %v3703
      %v5598 = vunpack.c.h.b16 %v3703
      %v5599 = vunpack.c.l.b16 %v3704
      %v5600 = vunpack.c.h.b16 %v3704
      %v5601 = vunpack.c.l.b16 %v3705
      %v5602 = vunpack.c.h.b16 %v3705
      %v5603 = vunpack.c.l.b16 %v3706
      %v5604 = vunpack.c.h.b16 %v3706
      %v5605 = vunpack.c.l.b16 %v3707
      %v5606 = vunpack.c.h.b16 %v3707
      %v5607 = vunpack.c.l.b16 %v3708
      %v5608 = vunpack.c.h.b16 %v3708
      %v5609 = vunpack.c.l.b16 %v3709
      %v5610 = vunpack.c.h.b16 %v3709
      %v5611 = vunpack.c.l.b16 %v3710
      %v5612 = vunpack.c.h.b16 %v3710
      %v5613 = vunpack.c.l.b16 %v3711
      %v5614 = vunpack.c.h.b16 %v3711
      %v5615 = vunpack.c.l.b16 %v3712
      %v5616 = vunpack.c.h.b16 %v3712
      %v5617 = vunpack.c.l.b16 %v3713
      %v5618 = vunpack.c.h.b16 %v3713
      %v5619 = vunpack.c.l.b16 %v3714
      %v5620 = vunpack.c.h.b16 %v3714
      %v5621 = vunpack.c.l.b16 %v3715
      %v5622 = vunpack.c.h.b16 %v3715
      %v5623 = vunpack.c.l.b16 %v3716
      %v5624 = vunpack.c.h.b16 %v3716
      %v5625 = vunpack.c.l.b16 %v3717
      %v5626 = vunpack.c.h.b16 %v3717
      %v5627 = vunpack.c.l.b16 %v3718
      %v5628 = vunpack.c.h.b16 %v3718
      %v5629 = vunpack.c.l.b16 %v3719
      %v5630 = vunpack.c.h.b16 %v3719
      %v5631 = vunpack.c.l.b16 %v3720
      %v5632 = vunpack.c.h.b16 %v3720
      %v5633 = vunpack.c.l.b16 %v3721
      %v5634 = vunpack.c.h.b16 %v3721
      %v5635 = vunpack.c.l.b16 %v3722
      %v5636 = vunpack.c.h.b16 %v3722
      %v5637 = vunpack.c.l.b16 %v3723
      %v5638 = vunpack.c.h.b16 %v3723
      %v5639 = vunpack.c.l.b16 %v3724
      %v5640 = vunpack.c.h.b16 %v3724
      %v5641 = vunpack.c.l.b16 %v3725
      %v5642 = vunpack.c.h.b16 %v3725
      %v5643 = vunpack.c.l.b16 %v3726
      %v5644 = vunpack.c.h.b16 %v3726
      %v5645 = vunpack.c.l.b16 %v3727
      %v5646 = vunpack.c.h.b16 %v3727
      %v5647 = vunpack.c.l.b16 %v3728
      %v5648 = vunpack.c.h.b16 %v3728
      %v5649 = vunpack.c.l.b16 %v3729
      %v5650 = vunpack.c.h.b16 %v3729
      %v5651 = vunpack.c.l.b16 %v3730
      %v5652 = vunpack.c.h.b16 %v3730
      %v5653 = vunpack.c.l.b16 %v3731
      %v5654 = vunpack.c.h.b16 %v3731
      %v5655 = vunpack.c.l.b16 %v3732
      %v5656 = vunpack.c.h.b16 %v3732
      %v5657 = vunpack.c.l.b16 %v3733
      %v5658 = vunpack.c.h.b16 %v3733
      %v5659 = vunpack.c.l.b16 %v3734
      %v5660 = vunpack.c.h.b16 %v3734
      %v5661 = vunpack.c.l.b16 %v3735
      %v5662 = vunpack.c.h.b16 %v3735
      %v5663 = vunpack.c.l.b16 %v3736
      %v5664 = vunpack.c.h.b16 %v3736
      %v5665 = vunpack.c.l.b16 %v3737
      %v5666 = vunpack.c.h.b16 %v3737
      %v5667 = vunpack.c.l.b16 %v3738
      %v5668 = vunpack.c.h.b16 %v3738
      %v5669 = vunpack.c.l.b16 %v3739
      %v5670 = vunpack.c.h.b16 %v3739
      %v5671 = vunpack.c.l.b16 %v3740
      %v5672 = vunpack.c.h.b16 %v3740
      %v5673 = vunpack.c.l.b16 %v3741
      %v5674 = vunpack.c.h.b16 %v3741
      %v5675 = vunpack.c.l.b16 %v3742
      %v5676 = vunpack.c.h.b16 %v3742
      %v5677 = vunpack.c.l.b16 %v3743
      %v5678 = vunpack.c.h.b16 %v3743
      %v5679 = vunpack.c.l.b16 %v3744
      %v5680 = vunpack.c.h.b16 %v3744
      %v5681 = vunpack.c.l.b16 %v3745
      %v5682 = vunpack.c.h.b16 %v3745
      %v5683 = vunpack.c.l.b16 %v3746
      %v5684 = vunpack.c.h.b16 %v3746
      %v5685 = vunpack.c.l.b16 %v3747
      %v5686 = vunpack.c.h.b16 %v3747
      %v5687 = vunpack.c.l.b16 %v3748
      %v5688 = vunpack.c.h.b16 %v3748
      %v5689 = vunpack.c.l.b16 %v3749
      %v5690 = vunpack.c.h.b16 %v3749
      %v5691 = vunpack.c.l.b16 %v3750
      %v5692 = vunpack.c.h.b16 %v3750
      %v5693 = vunpack.c.l.b16 %v3751
      %v5694 = vunpack.c.h.b16 %v3751
      %v5695 = vunpack.c.l.b16 %v3752
      %v5696 = vunpack.c.h.b16 %v3752
      %v5697 = vunpack.c.l.b16 %v3753
      %v5698 = vunpack.c.h.b16 %v3753
      %v5699 = vunpack.c.l.b16 %v3754
      %v5700 = vunpack.c.h.b16 %v3754
      %v5701 = vunpack.c.l.b16 %v3755
      %v5702 = vunpack.c.h.b16 %v3755
      %v5703 = vunpack.c.l.b16 %v3756
      %v5704 = vunpack.c.h.b16 %v3756
      %v5705 = vunpack.c.l.b16 %v3757
      %v5706 = vunpack.c.h.b16 %v3757
      %v5707 = vunpack.c.l.b16 %v3758
      %v5708 = vunpack.c.h.b16 %v3758
      %v5709 = vunpack.c.l.b16 %v3759
      %v5710 = vunpack.c.h.b16 %v3759
      %v5711 = vunpack.c.l.b16 %v3760
      %v5712 = vunpack.c.h.b16 %v3760
      %v5713 = vunpack.c.l.b16 %v3761
      %v5714 = vunpack.c.h.b16 %v3761
      %v5715 = vunpack.c.l.b16 %v3762
      %v5716 = vunpack.c.h.b16 %v3762
      %v5717 = vunpack.c.l.b16 %v3763
      %v5718 = vunpack.c.h.b16 %v3763
      %v5719 = vunpack.c.l.b16 %v3764
      %v5720 = vunpack.c.h.b16 %v3764
      %v5721 = vunpack.c.l.b16 %v3765
      %v5722 = vunpack.c.h.b16 %v3765
      %v5723 = vunpack.c.l.b16 %v3766
      %v5724 = vunpack.c.h.b16 %v3766
      %v5725 = vunpack.c.l.b16 %v3767
      %v5726 = vunpack.c.h.b16 %v3767
      %v5727 = vunpack.c.l.b16 %v3768
      %v5728 = vunpack.c.h.b16 %v3768
      %v5729 = vunpack.c.l.b16 %v3769
      %v5730 = vunpack.c.h.b16 %v3769
      %v5731 = vunpack.c.l.b16 %v3770
      %v5732 = vunpack.c.h.b16 %v3770
      %v5733 = vunpack.c.l.b16 %v3771
      %v5734 = vunpack.c.h.b16 %v3771
      %v5735 = vunpack.c.l.b16 %v3772
      %v5736 = vunpack.c.h.b16 %v3772
      %v5737 = vunpack.c.l.b16 %v3773
      %v5738 = vunpack.c.h.b16 %v3773
      %v5739 = vunpack.c.l.b16 %v3774
      %v5740 = vunpack.c.h.b16 %v3774
      %v5741 = vunpack.c.l.b16 %v3775
      %v5742 = vunpack.c.h.b16 %v3775
      %v5743 = vunpack.c.l.b16 %v3776
      %v5744 = vunpack.c.h.b16 %v3776
      %v5745 = vunpack.c.l.b16 %v3777
      %v5746 = vunpack.c.h.b16 %v3777
      %v5747 = vunpack.c.l.b16 %v3778
      %v5748 = vunpack.c.h.b16 %v3778
      %v5749 = vunpack.c.l.b16 %v3779
      %v5750 = vunpack.c.h.b16 %v3779
      %v5751 = vunpack.c.l.b16 %v3780
      %v5752 = vunpack.c.h.b16 %v3780
      %v5753 = vunpack.c.l.b16 %v3781
      %v5754 = vunpack.c.h.b16 %v3781
      %v5755 = vunpack.c.l.b16 %v3782
      %v5756 = vunpack.c.h.b16 %v3782
      %v5757 = vunpack.c.l.b16 %v3783
      %v5758 = vunpack.c.h.b16 %v3783
      %v5759 = vunpack.c.l.b16 %v3784
      %v5760 = vunpack.c.h.b16 %v3784
      %v5761 = vunpack.c.l.b16 %v3785
      %v5762 = vunpack.c.h.b16 %v3785
      %v5763 = vunpack.c.l.b16 %v3786
      %v5764 = vunpack.c.h.b16 %v3786
      %v5765 = vunpack.c.l.b16 %v3787
      %v5766 = vunpack.c.h.b16 %v3787
      %v5767 = vunpack.c.l.b16 %v3788
      %v5768 = vunpack.c.h.b16 %v3788
      %v5769 = vpack.c.b16 %v5389, %v5385
      %v5770 = vpack.c.b16 %v5390, %v5386
      %v5771 = vpack.c.b16 %v5391, %v5387
      %v5772 = vpack.c.b16 %v5392, %v5388
      %v5773 = vpack.c.b16 %v5397, %v5393
      %v5774 = vpack.c.b16 %v5398, %v5394
      %v5775 = vpack.c.b16 %v5399, %v5395
      %v5776 = vpack.c.b16 %v5400, %v5396
      %v5777 = vpack.c.b16 %v5405, %v5401
      %v5778 = vpack.c.b16 %v5406, %v5402
      %v5779 = vpack.c.b16 %v5407, %v5403
      %v5780 = vpack.c.b16 %v5408, %v5404
      %v5781 = vpack.c.b16 %v5413, %v5409
      %v5782 = vpack.c.b16 %v5414, %v5410
      %v5783 = vpack.c.b16 %v5415, %v5411
      %v5784 = vpack.c.b16 %v5416, %v5412
      %v5785 = vpack.c.b16 %v5421, %v5417
      %v5786 = vpack.c.b16 %v5422, %v5418
      %v5787 = vpack.c.b16 %v5423, %v5419
      %v5788 = vpack.c.b16 %v5424, %v5420
      %v5789 = vpack.c.b16 %v5429, %v5425
      %v5790 = vpack.c.b16 %v5430, %v5426
      %v5791 = vpack.c.b16 %v5431, %v5427
      %v5792 = vpack.c.b16 %v5432, %v5428
      %v5793 = vpack.c.b16 %v5437, %v5433
      %v5794 = vpack.c.b16 %v5438, %v5434
      %v5795 = vpack.c.b16 %v5439, %v5435
      %v5796 = vpack.c.b16 %v5440, %v5436
      %v5797 = vpack.c.b16 %v5445, %v5441
      %v5798 = vpack.c.b16 %v5446, %v5442
      %v5799 = vpack.c.b16 %v5447, %v5443
      %v5800 = vpack.c.b16 %v5448, %v5444
      %v5801 = vpack.c.b16 %v5453, %v5449
      %v5802 = vpack.c.b16 %v5454, %v5450
      %v5803 = vpack.c.b16 %v5455, %v5451
      %v5804 = vpack.c.b16 %v5456, %v5452
      %v5805 = vpack.c.b16 %v5461, %v5457
      %v5806 = vpack.c.b16 %v5462, %v5458
      %v5807 = vpack.c.b16 %v5463, %v5459
      %v5808 = vpack.c.b16 %v5464, %v5460
      %v5809 = vpack.c.b16 %v5469, %v5465
      %v5810 = vpack.c.b16 %v5470, %v5466
      %v5811 = vpack.c.b16 %v5471, %v5467
      %v5812 = vpack.c.b16 %v5472, %v5468
      %v5813 = vpack.c.b16 %v5477, %v5473
      %v5814 = vpack.c.b16 %v5478, %v5474
      %v5815 = vpack.c.b16 %v5479, %v5475
      %v5816 = vpack.c.b16 %v5480, %v5476
      %v5817 = vpack.c.b16 %v5485, %v5481
      %v5818 = vpack.c.b16 %v5486, %v5482
      %v5819 = vpack.c.b16 %v5487, %v5483
      %v5820 = vpack.c.b16 %v5488, %v5484
      %v5821 = vpack.c.b16 %v5493, %v5489
      %v5822 = vpack.c.b16 %v5494, %v5490
      %v5823 = vpack.c.b16 %v5495, %v5491
      %v5824 = vpack.c.b16 %v5496, %v5492
      %v5825 = vpack.c.b16 %v5501, %v5497
      %v5826 = vpack.c.b16 %v5502, %v5498
      %v5827 = vpack.c.b16 %v5503, %v5499
      %v5828 = vpack.c.b16 %v5504, %v5500
      %v5829 = vpack.c.b16 %v5509, %v5505
      %v5830 = vpack.c.b16 %v5510, %v5506
      %v5831 = vpack.c.b16 %v5511, %v5507
      %v5832 = vpack.c.b16 %v5512, %v5508
      %v5833 = vpack.c.b16 %v5517, %v5513
      %v5834 = vpack.c.b16 %v5518, %v5514
      %v5835 = vpack.c.b16 %v5519, %v5515
      %v5836 = vpack.c.b16 %v5520, %v5516
      %v5837 = vpack.c.b16 %v5525, %v5521
      %v5838 = vpack.c.b16 %v5526, %v5522
      %v5839 = vpack.c.b16 %v5527, %v5523
      %v5840 = vpack.c.b16 %v5528, %v5524
      %v5841 = vpack.c.b16 %v5533, %v5529
      %v5842 = vpack.c.b16 %v5534, %v5530
      %v5843 = vpack.c.b16 %v5535, %v5531
      %v5844 = vpack.c.b16 %v5536, %v5532
      %v5845 = vpack.c.b16 %v5541, %v5537
      %v5846 = vpack.c.b16 %v5542, %v5538
      %v5847 = vpack.c.b16 %v5543, %v5539
      %v5848 = vpack.c.b16 %v5544, %v5540
      %v5849 = vpack.c.b16 %v5549, %v5545
      %v5850 = vpack.c.b16 %v5550, %v5546
      %v5851 = vpack.c.b16 %v5551, %v5547
      %v5852 = vpack.c.b16 %v5552, %v5548
      %v5853 = vpack.c.b16 %v5557, %v5553
      %v5854 = vpack.c.b16 %v5558, %v5554
      %v5855 = vpack.c.b16 %v5559, %v5555
      %v5856 = vpack.c.b16 %v5560, %v5556
      %v5857 = vpack.c.b16 %v5565, %v5561
      %v5858 = vpack.c.b16 %v5566, %v5562
      %v5859 = vpack.c.b16 %v5567, %v5563
      %v5860 = vpack.c.b16 %v5568, %v5564
      %v5861 = vpack.c.b16 %v5573, %v5569
      %v5862 = vpack.c.b16 %v5574, %v5570
      %v5863 = vpack.c.b16 %v5575, %v5571
      %v5864 = vpack.c.b16 %v5576, %v5572
      %v5865 = vpack.c.b16 %v5581, %v5577
      %v5866 = vpack.c.b16 %v5582, %v5578
      %v5867 = vpack.c.b16 %v5583, %v5579
      %v5868 = vpack.c.b16 %v5584, %v5580
      %v5869 = vpack.c.b16 %v5589, %v5585
      %v5870 = vpack.c.b16 %v5590, %v5586
      %v5871 = vpack.c.b16 %v5591, %v5587
      %v5872 = vpack.c.b16 %v5592, %v5588
      %v5873 = vpack.c.b16 %v5597, %v5593
      %v5874 = vpack.c.b16 %v5598, %v5594
      %v5875 = vpack.c.b16 %v5599, %v5595
      %v5876 = vpack.c.b16 %v5600, %v5596
      %v5877 = vpack.c.b16 %v5605, %v5601
      %v5878 = vpack.c.b16 %v5606, %v5602
      %v5879 = vpack.c.b16 %v5607, %v5603
      %v5880 = vpack.c.b16 %v5608, %v5604
      %v5881 = vpack.c.b16 %v5613, %v5609
      %v5882 = vpack.c.b16 %v5614, %v5610
      %v5883 = vpack.c.b16 %v5615, %v5611
      %v5884 = vpack.c.b16 %v5616, %v5612
      %v5885 = vpack.c.b16 %v5621, %v5617
      %v5886 = vpack.c.b16 %v5622, %v5618
      %v5887 = vpack.c.b16 %v5623, %v5619
      %v5888 = vpack.c.b16 %v5624, %v5620
      %v5889 = vpack.c.b16 %v5629, %v5625
      %v5890 = vpack.c.b16 %v5630, %v5626
      %v5891 = vpack.c.b16 %v5631, %v5627
      %v5892 = vpack.c.b16 %v5632, %v5628
      %v5893 = vpack.c.b16 %v5637, %v5633
      %v5894 = vpack.c.b16 %v5638, %v5634
      %v5895 = vpack.c.b16 %v5639, %v5635
      %v5896 = vpack.c.b16 %v5640, %v5636
      %v5897 = vpack.c.b16 %v5645, %v5641
      %v5898 = vpack.c.b16 %v5646, %v5642
      %v5899 = vpack.c.b16 %v5647, %v5643
      %v5900 = vpack.c.b16 %v5648, %v5644
      %v5901 = vpack.c.b16 %v5653, %v5649
      %v5902 = vpack.c.b16 %v5654, %v5650
      %v5903 = vpack.c.b16 %v5655, %v5651
      %v5904 = vpack.c.b16 %v5656, %v5652
      %v5905 = vpack.c.b16 %v5661, %v5657
      %v5906 = vpack.c.b16 %v5662, %v5658
      %v5907 = vpack.c.b16 %v5663, %v5659
      %v5908 = vpack.c.b16 %v5664, %v5660
      %v5909 = vpack.c.b16 %v5669, %v5665
      %v5910 = vpack.c.b16 %v5670, %v5666
      %v5911 = vpack.c.b16 %v5671, %v5667
      %v5912 = vpack.c.b16 %v5672, %v5668
      %v5913 = vpack.c.b16 %v5677, %v5673
      %v5914 = vpack.c.b16 %v5678, %v5674
      %v5915 = vpack.c.b16 %v5679, %v5675
      %v5916 = vpack.c.b16 %v5680, %v5676
      %v5917 = vpack.c.b16 %v5685, %v5681
      %v5918 = vpack.c.b16 %v5686, %v5682
      %v5919 = vpack.c.b16 %v5687, %v5683
      %v5920 = vpack.c.b16 %v5688, %v5684
      %v5921 = vpack.c.b16 %v5693, %v5689
      %v5922 = vpack.c.b16 %v5694, %v5690
      %v5923 = vpack.c.b16 %v5695, %v5691
      %v5924 = vpack.c.b16 %v5696, %v5692
      %v5925 = vpack.c.b16 %v5701, %v5697
      %v5926 = vpack.c.b16 %v5702, %v5698
      %v5927 = vpack.c.b16 %v5703, %v5699
      %v5928 = vpack.c.b16 %v5704, %v5700
      %v5929 = vpack.c.b16 %v5709, %v5705
      %v5930 = vpack.c.b16 %v5710, %v5706
      %v5931 = vpack.c.b16 %v5711, %v5707
      %v5932 = vpack.c.b16 %v5712, %v5708
      %v5933 = vpack.c.b16 %v5717, %v5713
      %v5934 = vpack.c.b16 %v5718, %v5714
      %v5935 = vpack.c.b16 %v5719, %v5715
      %v5936 = vpack.c.b16 %v5720, %v5716
      %v5937 = vpack.c.b16 %v5725, %v5721
      %v5938 = vpack.c.b16 %v5726, %v5722
      %v5939 = vpack.c.b16 %v5727, %v5723
      %v5940 = vpack.c.b16 %v5728, %v5724
      %v5941 = vpack.c.b16 %v5733, %v5729
      %v5942 = vpack.c.b16 %v5734, %v5730
      %v5943 = vpack.c.b16 %v5735, %v5731
      %v5944 = vpack.c.b16 %v5736, %v5732
      %v5945 = vpack.c.b16 %v5741, %v5737
      %v5946 = vpack.c.b16 %v5742, %v5738
      %v5947 = vpack.c.b16 %v5743, %v5739
      %v5948 = vpack.c.b16 %v5744, %v5740
      %v5949 = vpack.c.b16 %v5749, %v5745
      %v5950 = vpack.c.b16 %v5750, %v5746
      %v5951 = vpack.c.b16 %v5751, %v5747
      %v5952 = vpack.c.b16 %v5752, %v5748
      %v5953 = vpack.c.b16 %v5757, %v5753
      %v5954 = vpack.c.b16 %v5758, %v5754
      %v5955 = vpack.c.b16 %v5759, %v5755
      %v5956 = vpack.c.b16 %v5760, %v5756
      %v5957 = vpack.c.b16 %v5765, %v5761
      %v5958 = vpack.c.b16 %v5766, %v5762
      %v5959 = vpack.c.b16 %v5767, %v5763
      %v5960 = vpack.c.b16 %v5768, %v5764
      %6153 = vmatprep.subr.bf16.mxu0 %v5798
      %6154 = vmatpush1.bf16.msra.mxu0 %v5797
      %6155 = vmatprep.subr.bf16.mxu0 %v5794
      %6156 = vmatpush1.bf16.msra.mxu0 %v5793
      %6157 = vmatprep.subr.bf16.mxu0 %v5790
      %6158 = vmatpush1.bf16.msra.mxu0 %v5789
      %6159 = vmatprep.subr.bf16.mxu0 %v5786
      %6160 = vmatpush1.bf16.msra.mxu0 %v5785
      %6161 = vmatprep.subr.bf16.mxu0 %v5782
      %6162 = vmatpush1.bf16.msra.mxu0 %v5781
      %6163 = vmatprep.subr.bf16.mxu0 %v5778
      %6164 = vmatpush1.bf16.msra.mxu0 %v5777
      %6165 = vmatprep.subr.bf16.mxu0 %v5774
      %6166 = vmatpush1.bf16.msra.mxu0 %v5773
      %6167 = vmatprep.subr.bf16.mxu0 %v5770
      %6168 = vmatpush1.bf16.msra.mxu0 %v5769
      %6169 = vmatprep.subr.bf16.mxu0 %v5830
      %6170 = vmatpush2.bf16.msra.mxu0 %v5829
      %6171 = vmatprep.subr.bf16.mxu0 %v5826
      %6172 = vmatpush2.bf16.msra.mxu0 %v5825
      %6173 = vmatprep.subr.bf16.mxu0 %v5822
      %6174 = vmatpush2.bf16.msra.mxu0 %v5821
      %6175 = vmatprep.subr.bf16.mxu0 %v5818
      %6176 = vmatpush2.bf16.msra.mxu0 %v5817
      %6177 = vmatprep.subr.bf16.mxu0 %v5814
      %6178 = vmatpush2.bf16.msra.mxu0 %v5813
      %6179 = vmatprep.subr.bf16.mxu0 %v5810
      %6180 = vmatpush2.bf16.msra.mxu0 %v5809
      %6181 = vmatprep.subr.bf16.mxu0 %v5806
      %6182 = vmatpush2.bf16.msra.mxu0 %v5805
      %6183 = vmatprep.subr.bf16.mxu0 %v5802
      %6184 = vmatpush2.bf16.msra.mxu0 %v5801
      %6185 = vmatprep.mubr.bf16.mxu0 %v3592
      %6186 = vmatmul.mubr.bf16.gmra.mxu0 %v3591
      %v6187 = vpop.f32.mrf.mxu0
      %v6188 = vadd.f32 %v5064, %v6187
      %v6189 = vpop.f32.mrf.mxu0
      %v6190 = vadd.f32 %v5066, %v6189
      %v6191 = vpop.f32.mrf.mxu0
      %v6192 = vpop.f32.mrf.mxu0
      %6193 = vdwg.mxu0
      %6194 = vmatprep.subr.bf16.mxu0 %v5862
      %6195 = vmatpush1.bf16.msra.mxu0 %v5861
      %6196 = vmatprep.subr.bf16.mxu0 %v5858
      %6197 = vmatpush1.bf16.msra.mxu0 %v5857
      %6198 = vmatprep.subr.bf16.mxu0 %v5854
      %6199 = vmatpush1.bf16.msra.mxu0 %v5853
      %6200 = vmatprep.subr.bf16.mxu0 %v5850
      %6201 = vmatpush1.bf16.msra.mxu0 %v5849
      %6202 = vmatprep.subr.bf16.mxu0 %v5846
      %6203 = vmatpush1.bf16.msra.mxu0 %v5845
      %6204 = vmatprep.subr.bf16.mxu0 %v5842
      %6205 = vmatpush1.bf16.msra.mxu0 %v5841
      %6206 = vmatprep.subr.bf16.mxu0 %v5838
      %6207 = vmatpush1.bf16.msra.mxu0 %v5837
      %6208 = vmatprep.subr.bf16.mxu0 %v5834
      %6209 = vmatpush1.bf16.msra.mxu0 %v5833
      %6210 = vmatprep.subr.bf16.mxu0 %v5894
      %6211 = vmatpush2.bf16.msra.mxu0 %v5893
      %6212 = vmatprep.subr.bf16.mxu0 %v5890
      %6213 = vmatpush2.bf16.msra.mxu0 %v5889
      %6214 = vmatprep.subr.bf16.mxu0 %v5886
      %6215 = vmatpush2.bf16.msra.mxu0 %v5885
      %6216 = vmatprep.subr.bf16.mxu0 %v5882
      %6217 = vmatpush2.bf16.msra.mxu0 %v5881
      %6218 = vmatprep.subr.bf16.mxu0 %v5878
      %6219 = vmatpush2.bf16.msra.mxu0 %v5877
      %6220 = vmatprep.subr.bf16.mxu0 %v5874
      %6221 = vmatpush2.bf16.msra.mxu0 %v5873
      %6222 = vmatprep.subr.bf16.mxu0 %v5870
      %6223 = vmatpush2.bf16.msra.mxu0 %v5869
      %6224 = vmatprep.subr.bf16.mxu0 %v5866
      %6225 = vmatpush2.bf16.msra.mxu0 %v5865
      %6226 = vmatprep.mubr.bf16.mxu0 %v3594
      %6227 = vmatmul.mubr.bf16.gmra.mxu0 %v3593
      %v6228 = vpop.f32.mrf.mxu0
      %v6229 = vadd.f32 %v6188, %v6228
      %v6230 = vpop.f32.mrf.mxu0
      %v6231 = vadd.f32 %v6190, %v6230
      %v6232 = vpop.f32.mrf.mxu0
      %v6233 = vpop.f32.mrf.mxu0
      %6234 = vdwg.mxu0
      %6235 = vmatprep.subr.bf16.mxu0 %v5926
      %6236 = vmatpush1.bf16.msra.mxu0 %v5925
      %6237 = vmatprep.subr.bf16.mxu0 %v5922
      %6238 = vmatpush1.bf16.msra.mxu0 %v5921
      %6239 = vmatprep.subr.bf16.mxu0 %v5918
      %6240 = vmatpush1.bf16.msra.mxu0 %v5917
      %6241 = vmatprep.subr.bf16.mxu0 %v5914
      %6242 = vmatpush1.bf16.msra.mxu0 %v5913
      %6243 = vmatprep.subr.bf16.mxu0 %v5910
      %6244 = vmatpush1.bf16.msra.mxu0 %v5909
      %6245 = vmatprep.subr.bf16.mxu0 %v5906
      %6246 = vmatpush1.bf16.msra.mxu0 %v5905
      %6247 = vmatprep.subr.bf16.mxu0 %v5902
      %6248 = vmatpush1.bf16.msra.mxu0 %v5901
      %6249 = vmatprep.subr.bf16.mxu0 %v5898
      %6250 = vmatpush1.bf16.msra.mxu0 %v5897
      %6251 = vmatprep.subr.bf16.mxu0 %v5958
      %6252 = vmatpush2.bf16.msra.mxu0 %v5957
      %6253 = vmatprep.subr.bf16.mxu0 %v5954
      %6254 = vmatpush2.bf16.msra.mxu0 %v5953
      %6255 = vmatprep.subr.bf16.mxu0 %v5950
      %6256 = vmatpush2.bf16.msra.mxu0 %v5949
      %6257 = vmatprep.subr.bf16.mxu0 %v5946
      %6258 = vmatpush2.bf16.msra.mxu0 %v5945
      %6259 = vmatprep.subr.bf16.mxu0 %v5942
      %6260 = vmatpush2.bf16.msra.mxu0 %v5941
      %6261 = vmatprep.subr.bf16.mxu0 %v5938
      %6262 = vmatpush2.bf16.msra.mxu0 %v5937
      %6263 = vmatprep.subr.bf16.mxu0 %v5934
      %6264 = vmatpush2.bf16.msra.mxu0 %v5933
      %6265 = vmatprep.subr.bf16.mxu0 %v5930
      %6266 = vmatpush2.bf16.msra.mxu0 %v5929
      %6267 = vmatprep.mubr.bf16.mxu0 %v3596
      %6268 = vmatmul.mubr.bf16.gmra.mxu0 %v3595
      %v6269 = vpop.f32.mrf.mxu0
      %v6270 = vadd.f32 %v6229, %v6269
      %v6271 = vpop.f32.mrf.mxu0
      %v6272 = vadd.f32 %v6231, %v6271
      %v6273 = vpop.f32.mrf.mxu0
      %v6274 = vpop.f32.mrf.mxu0
      %6275 = vdwg.mxu0
      %6276 = vmatprep.subr.bf16.mxu0 %v5800
      %6277 = vmatpush1.bf16.msra.mxu0 %v5799
      %6278 = vmatprep.subr.bf16.mxu0 %v5796
      %6279 = vmatpush1.bf16.msra.mxu0 %v5795
      %6280 = vmatprep.subr.bf16.mxu0 %v5792
      %6281 = vmatpush1.bf16.msra.mxu0 %v5791
      %6282 = vmatprep.subr.bf16.mxu0 %v5788
      %6283 = vmatpush1.bf16.msra.mxu0 %v5787
      %6284 = vmatprep.subr.bf16.mxu0 %v5784
      %6285 = vmatpush1.bf16.msra.mxu0 %v5783
      %6286 = vmatprep.subr.bf16.mxu0 %v5780
      %6287 = vmatpush1.bf16.msra.mxu0 %v5779
      %6288 = vmatprep.subr.bf16.mxu0 %v5776
      %6289 = vmatpush1.bf16.msra.mxu0 %v5775
      %6290 = vmatprep.subr.bf16.mxu0 %v5772
      %6291 = vmatpush1.bf16.msra.mxu0 %v5771
      %6292 = vmatprep.subr.bf16.mxu0 %v5832
      %6293 = vmatpush2.bf16.msra.mxu0 %v5831
      %6294 = vmatprep.subr.bf16.mxu0 %v5828
      %6295 = vmatpush2.bf16.msra.mxu0 %v5827
      %6296 = vmatprep.subr.bf16.mxu0 %v5824
      %6297 = vmatpush2.bf16.msra.mxu0 %v5823
      %6298 = vmatprep.subr.bf16.mxu0 %v5820
      %6299 = vmatpush2.bf16.msra.mxu0 %v5819
      %6300 = vmatprep.subr.bf16.mxu0 %v5816
      %6301 = vmatpush2.bf16.msra.mxu0 %v5815
      %6302 = vmatprep.subr.bf16.mxu0 %v5812
      %6303 = vmatpush2.bf16.msra.mxu0 %v5811
      %6304 = vmatprep.subr.bf16.mxu0 %v5808
      %6305 = vmatpush2.bf16.msra.mxu0 %v5807
      %6306 = vmatprep.subr.bf16.mxu0 %v5804
      %6307 = vmatpush2.bf16.msra.mxu0 %v5803
      %6308 = vmatprep.mubr.bf16.mxu0 %v3592
      %6309 = vmatmul.mubr.bf16.gmra.mxu0 %v3591
      %v6310 = vpop.f32.mrf.mxu0
      %v6311 = vadd.f32 %v5187, %v6310
      %v6312 = vpop.f32.mrf.mxu0
      %v6313 = vadd.f32 %v5189, %v6312
      %v6314 = vpop.f32.mrf.mxu0
      %v6315 = vpop.f32.mrf.mxu0
      %6316 = vdwg.mxu0
      %6317 = vmatprep.subr.bf16.mxu0 %v5864
      %6318 = vmatpush1.bf16.msra.mxu0 %v5863
      %6319 = vmatprep.subr.bf16.mxu0 %v5860
      %6320 = vmatpush1.bf16.msra.mxu0 %v5859
      %6321 = vmatprep.subr.bf16.mxu0 %v5856
      %6322 = vmatpush1.bf16.msra.mxu0 %v5855
      %6323 = vmatprep.subr.bf16.mxu0 %v5852
      %6324 = vmatpush1.bf16.msra.mxu0 %v5851
      %6325 = vmatprep.subr.bf16.mxu0 %v5848
      %6326 = vmatpush1.bf16.msra.mxu0 %v5847
      %6327 = vmatprep.subr.bf16.mxu0 %v5844
      %6328 = vmatpush1.bf16.msra.mxu0 %v5843
      %6329 = vmatprep.subr.bf16.mxu0 %v5840
      %6330 = vmatpush1.bf16.msra.mxu0 %v5839
      %6331 = vmatprep.subr.bf16.mxu0 %v5836
      %6332 = vmatpush1.bf16.msra.mxu0 %v5835
      %6333 = vmatprep.subr.bf16.mxu0 %v5896
      %6334 = vmatpush2.bf16.msra.mxu0 %v5895
      %6335 = vmatprep.subr.bf16.mxu0 %v5892
      %6336 = vmatpush2.bf16.msra.mxu0 %v5891
      %6337 = vmatprep.subr.bf16.mxu0 %v5888
      %6338 = vmatpush2.bf16.msra.mxu0 %v5887
      %6339 = vmatprep.subr.bf16.mxu0 %v5884
      %6340 = vmatpush2.bf16.msra.mxu0 %v5883
      %6341 = vmatprep.subr.bf16.mxu0 %v5880
      %6342 = vmatpush2.bf16.msra.mxu0 %v5879
      %6343 = vmatprep.subr.bf16.mxu0 %v5876
      %6344 = vmatpush2.bf16.msra.mxu0 %v5875
      %6345 = vmatprep.subr.bf16.mxu0 %v5872
      %6346 = vmatpush2.bf16.msra.mxu0 %v5871
      %6347 = vmatprep.subr.bf16.mxu0 %v5868
      %6348 = vmatpush2.bf16.msra.mxu0 %v5867
      %6349 = vmatprep.mubr.bf16.mxu0 %v3594
      %6350 = vmatmul.mubr.bf16.gmra.mxu0 %v3593
      %v6351 = vpop.f32.mrf.mxu0
      %v6352 = vadd.f32 %v6311, %v6351
      %v6353 = vpop.f32.mrf.mxu0
      %v6354 = vadd.f32 %v6313, %v6353
      %v6355 = vpop.f32.mrf.mxu0
      %v6356 = vpop.f32.mrf.mxu0
      %6357 = vdwg.mxu0
      %6358 = vmatprep.subr.bf16.mxu0 %v5928
      %6359 = vmatpush1.bf16.msra.mxu0 %v5927
      %6360 = vmatprep.subr.bf16.mxu0 %v5924
      %6361 = vmatpush1.bf16.msra.mxu0 %v5923
      %6362 = vmatprep.subr.bf16.mxu0 %v5920
      %6363 = vmatpush1.bf16.msra.mxu0 %v5919
      %6364 = vmatprep.subr.bf16.mxu0 %v5916
      %6365 = vmatpush1.bf16.msra.mxu0 %v5915
      %6366 = vmatprep.subr.bf16.mxu0 %v5912
      %6367 = vmatpush1.bf16.msra.mxu0 %v5911
      %6368 = vmatprep.subr.bf16.mxu0 %v5908
      %6369 = vmatpush1.bf16.msra.mxu0 %v5907
      %6370 = vmatprep.subr.bf16.mxu0 %v5904
      %6371 = vmatpush1.bf16.msra.mxu0 %v5903
      %6372 = vmatprep.subr.bf16.mxu0 %v5900
      %6373 = vmatpush1.bf16.msra.mxu0 %v5899
      %6374 = vmatprep.subr.bf16.mxu0 %v5960
      %6375 = vmatpush2.bf16.msra.mxu0 %v5959
      %6376 = vmatprep.subr.bf16.mxu0 %v5956
      %6377 = vmatpush2.bf16.msra.mxu0 %v5955
      %6378 = vmatprep.subr.bf16.mxu0 %v5952
      %6379 = vmatpush2.bf16.msra.mxu0 %v5951
      %6380 = vmatprep.subr.bf16.mxu0 %v5948
      %6381 = vmatpush2.bf16.msra.mxu0 %v5947
      %6382 = vmatprep.subr.bf16.mxu0 %v5944
      %6383 = vmatpush2.bf16.msra.mxu0 %v5943
      %6384 = vmatprep.subr.bf16.mxu0 %v5940
      %6385 = vmatpush2.bf16.msra.mxu0 %v5939
      %6386 = vmatprep.subr.bf16.mxu0 %v5936
      %6387 = vmatpush2.bf16.msra.mxu0 %v5935
      %6388 = vmatprep.subr.bf16.mxu0 %v5932
      %6389 = vmatpush2.bf16.msra.mxu0 %v5931
      %6390 = vmatprep.mubr.bf16.mxu0 %v3596
      %6391 = vmatmul.mubr.bf16.gmra.mxu0 %v3595
      %v6392 = vpop.f32.mrf.mxu0
      %v6393 = vadd.f32 %v6352, %v6392
      %v6394 = vpop.f32.mrf.mxu0
      %v6395 = vadd.f32 %v6354, %v6394
      %v6396 = vpop.f32.mrf.mxu0
      %v6397 = vpop.f32.mrf.mxu0
      %6398 = vdwg.mxu0
      %v6399 = vpack.c.bf16 %v3585, %v3585
      %v6400 = vpack.c.bf16 %v3586, %v3586
      %v6401 = vpack.c.bf16 %v3587, %v3587
      %v6402 = vpack.c.bf16 %v3588, %v3588
      %v6403 = vpack.c.bf16 %v3589, %v3589
      %v6404 = vpack.c.bf16 %v3590, %v3590
      %v6405 = vld [vmem:[#allocation13 + $0xc00] sm:$0xff]
      %v6406 = vld [vmem:[#allocation13 + $0xc08] sm:$0xff]
      %v6407 = vld [vmem:[#allocation13 + $0xc10] sm:$0xff]
      %v6408 = vld [vmem:[#allocation13 + $0xc18] sm:$0xff]
      %v6409 = vld [vmem:[#allocation13 + $0xc20] sm:$0xff]
      %v6410 = vld [vmem:[#allocation13 + $0xc28] sm:$0xff]
      %v6411 = vld [vmem:[#allocation13 + $0xc30] sm:$0xff]
      %v6412 = vld [vmem:[#allocation13 + $0xc38] sm:$0xff]
      %v6413 = vld [vmem:[#allocation13 + $0xc40] sm:$0xff]
      %v6414 = vld [vmem:[#allocation13 + $0xc48] sm:$0xff]
      %v6415 = vld [vmem:[#allocation13 + $0xc50] sm:$0xff]
      %v6416 = vld [vmem:[#allocation13 + $0xc58] sm:$0xff]
      %v6417 = vld [vmem:[#allocation13 + $0xc60] sm:$0xff]
      %v6418 = vld [vmem:[#allocation13 + $0xc68] sm:$0xff]
      %v6419 = vld [vmem:[#allocation13 + $0xc70] sm:$0xff]
      %v6420 = vld [vmem:[#allocation13 + $0xc78] sm:$0xff]
      %v6421 = vld [vmem:[#allocation13 + $0xc80] sm:$0xff]
      %v6422 = vld [vmem:[#allocation13 + $0xc88] sm:$0xff]
      %v6423 = vld [vmem:[#allocation13 + $0xc90] sm:$0xff]
      %v6424 = vld [vmem:[#allocation13 + $0xc98] sm:$0xff]
      %v6425 = vld [vmem:[#allocation13 + $0xca0] sm:$0xff]
      %v6426 = vld [vmem:[#allocation13 + $0xca8] sm:$0xff]
      %v6427 = vld [vmem:[#allocation13 + $0xcb0] sm:$0xff]
      %v6428 = vld [vmem:[#allocation13 + $0xcb8] sm:$0xff]
      %v6429 = vld [vmem:[#allocation13 + $0xcc0] sm:$0xff]
      %v6430 = vld [vmem:[#allocation13 + $0xcc8] sm:$0xff]
      %v6431 = vld [vmem:[#allocation13 + $0xcd0] sm:$0xff]
      %v6432 = vld [vmem:[#allocation13 + $0xcd8] sm:$0xff]
      %v6433 = vld [vmem:[#allocation13 + $0xce0] sm:$0xff]
      %v6434 = vld [vmem:[#allocation13 + $0xce8] sm:$0xff]
      %v6435 = vld [vmem:[#allocation13 + $0xcf0] sm:$0xff]
      %v6436 = vld [vmem:[#allocation13 + $0xcf8] sm:$0xff]
      %v6437 = vld [vmem:[#allocation13 + $0xd00] sm:$0xff]
      %v6438 = vld [vmem:[#allocation13 + $0xd08] sm:$0xff]
      %v6439 = vld [vmem:[#allocation13 + $0xd10] sm:$0xff]
      %v6440 = vld [vmem:[#allocation13 + $0xd18] sm:$0xff]
      %v6441 = vld [vmem:[#allocation13 + $0xd20] sm:$0xff]
      %v6442 = vld [vmem:[#allocation13 + $0xd28] sm:$0xff]
      %v6443 = vld [vmem:[#allocation13 + $0xd30] sm:$0xff]
      %v6444 = vld [vmem:[#allocation13 + $0xd38] sm:$0xff]
      %v6445 = vld [vmem:[#allocation13 + $0xd40] sm:$0xff]
      %v6446 = vld [vmem:[#allocation13 + $0xd48] sm:$0xff]
      %v6447 = vld [vmem:[#allocation13 + $0xd50] sm:$0xff]
      %v6448 = vld [vmem:[#allocation13 + $0xd58] sm:$0xff]
      %v6449 = vld [vmem:[#allocation13 + $0xd60] sm:$0xff]
      %v6450 = vld [vmem:[#allocation13 + $0xd68] sm:$0xff]
      %v6451 = vld [vmem:[#allocation13 + $0xd70] sm:$0xff]
      %v6452 = vld [vmem:[#allocation13 + $0xd78] sm:$0xff]
      %v6453 = vld [vmem:[#allocation13 + $0xd80] sm:$0xff]
      %v6454 = vld [vmem:[#allocation13 + $0xd88] sm:$0xff]
      %v6455 = vld [vmem:[#allocation13 + $0xd90] sm:$0xff]
      %v6456 = vld [vmem:[#allocation13 + $0xd98] sm:$0xff]
      %v6457 = vld [vmem:[#allocation13 + $0xda0] sm:$0xff]
      %v6458 = vld [vmem:[#allocation13 + $0xda8] sm:$0xff]
      %v6459 = vld [vmem:[#allocation13 + $0xdb0] sm:$0xff]
      %v6460 = vld [vmem:[#allocation13 + $0xdb8] sm:$0xff]
      %v6461 = vld [vmem:[#allocation13 + $0xdc0] sm:$0xff]
      %v6462 = vld [vmem:[#allocation13 + $0xdc8] sm:$0xff]
      %v6463 = vld [vmem:[#allocation13 + $0xdd0] sm:$0xff]
      %v6464 = vld [vmem:[#allocation13 + $0xdd8] sm:$0xff]
      %v6465 = vld [vmem:[#allocation13 + $0xde0] sm:$0xff]
      %v6466 = vld [vmem:[#allocation13 + $0xde8] sm:$0xff]
      %v6467 = vld [vmem:[#allocation13 + $0xdf0] sm:$0xff]
      %v6468 = vld [vmem:[#allocation13 + $0xdf8] sm:$0xff]
      %v6469 = vld [vmem:[#allocation13 + $0xe00] sm:$0xff]
      %v6470 = vld [vmem:[#allocation13 + $0xe08] sm:$0xff]
      %v6471 = vld [vmem:[#allocation13 + $0xe10] sm:$0xff]
      %v6472 = vld [vmem:[#allocation13 + $0xe18] sm:$0xff]
      %v6473 = vld [vmem:[#allocation13 + $0xe20] sm:$0xff]
      %v6474 = vld [vmem:[#allocation13 + $0xe28] sm:$0xff]
      %v6475 = vld [vmem:[#allocation13 + $0xe30] sm:$0xff]
      %v6476 = vld [vmem:[#allocation13 + $0xe38] sm:$0xff]
      %v6477 = vld [vmem:[#allocation13 + $0xe40] sm:$0xff]
      %v6478 = vld [vmem:[#allocation13 + $0xe48] sm:$0xff]
      %v6479 = vld [vmem:[#allocation13 + $0xe50] sm:$0xff]
      %v6480 = vld [vmem:[#allocation13 + $0xe58] sm:$0xff]
      %v6481 = vld [vmem:[#allocation13 + $0xe60] sm:$0xff]
      %v6482 = vld [vmem:[#allocation13 + $0xe68] sm:$0xff]
      %v6483 = vld [vmem:[#allocation13 + $0xe70] sm:$0xff]
      %v6484 = vld [vmem:[#allocation13 + $0xe78] sm:$0xff]
      %v6485 = vld [vmem:[#allocation13 + $0xe80] sm:$0xff]
      %v6486 = vld [vmem:[#allocation13 + $0xe88] sm:$0xff]
      %v6487 = vld [vmem:[#allocation13 + $0xe90] sm:$0xff]
      %v6488 = vld [vmem:[#allocation13 + $0xe98] sm:$0xff]
      %v6489 = vld [vmem:[#allocation13 + $0xea0] sm:$0xff]
      %v6490 = vld [vmem:[#allocation13 + $0xea8] sm:$0xff]
      %v6491 = vld [vmem:[#allocation13 + $0xeb0] sm:$0xff]
      %v6492 = vld [vmem:[#allocation13 + $0xeb8] sm:$0xff]
      %v6493 = vld [vmem:[#allocation13 + $0xec0] sm:$0xff]
      %v6494 = vld [vmem:[#allocation13 + $0xec8] sm:$0xff]
      %v6495 = vld [vmem:[#allocation13 + $0xed0] sm:$0xff]
      %v6496 = vld [vmem:[#allocation13 + $0xed8] sm:$0xff]
      %v6497 = vld [vmem:[#allocation13 + $0xee0] sm:$0xff]
      %v6498 = vld [vmem:[#allocation13 + $0xee8] sm:$0xff]
      %v6499 = vld [vmem:[#allocation13 + $0xef0] sm:$0xff]
      %v6500 = vld [vmem:[#allocation13 + $0xef8] sm:$0xff]
      %v6501 = vld [vmem:[#allocation13 + $0xf00] sm:$0xff]
      %v6502 = vld [vmem:[#allocation13 + $0xf08] sm:$0xff]
      %v6503 = vld [vmem:[#allocation13 + $0xf10] sm:$0xff]
      %v6504 = vld [vmem:[#allocation13 + $0xf18] sm:$0xff]
      %v6505 = vld [vmem:[#allocation13 + $0xf20] sm:$0xff]
      %v6506 = vld [vmem:[#allocation13 + $0xf28] sm:$0xff]
      %v6507 = vld [vmem:[#allocation13 + $0xf30] sm:$0xff]
      %v6508 = vld [vmem:[#allocation13 + $0xf38] sm:$0xff]
      %v6509 = vld [vmem:[#allocation13 + $0xf40] sm:$0xff]
      %v6510 = vld [vmem:[#allocation13 + $0xf48] sm:$0xff]
      %v6511 = vld [vmem:[#allocation13 + $0xf50] sm:$0xff]
      %v6512 = vld [vmem:[#allocation13 + $0xf58] sm:$0xff]
      %v6513 = vld [vmem:[#allocation13 + $0xf60] sm:$0xff]
      %v6514 = vld [vmem:[#allocation13 + $0xf68] sm:$0xff]
      %v6515 = vld [vmem:[#allocation13 + $0xf70] sm:$0xff]
      %v6516 = vld [vmem:[#allocation13 + $0xf78] sm:$0xff]
      %v6517 = vld [vmem:[#allocation13 + $0xf80] sm:$0xff]
      %v6518 = vld [vmem:[#allocation13 + $0xf88] sm:$0xff]
      %v6519 = vld [vmem:[#allocation13 + $0xf90] sm:$0xff]
      %v6520 = vld [vmem:[#allocation13 + $0xf98] sm:$0xff]
      %v6521 = vld [vmem:[#allocation13 + $0xfa0] sm:$0xff]
      %v6522 = vld [vmem:[#allocation13 + $0xfa8] sm:$0xff]
      %v6523 = vld [vmem:[#allocation13 + $0xfb0] sm:$0xff]
      %v6524 = vld [vmem:[#allocation13 + $0xfb8] sm:$0xff]
      %v6525 = vld [vmem:[#allocation13 + $0xfc0] sm:$0xff]
      %v6526 = vld [vmem:[#allocation13 + $0xfc8] sm:$0xff]
      %v6527 = vld [vmem:[#allocation13 + $0xfd0] sm:$0xff]
      %v6528 = vld [vmem:[#allocation13 + $0xfd8] sm:$0xff]
      %v6529 = vld [vmem:[#allocation13 + $0xfe0] sm:$0xff]
      %v6530 = vld [vmem:[#allocation13 + $0xfe8] sm:$0xff]
      %v6531 = vld [vmem:[#allocation13 + $0xff0] sm:$0xff]
      %v6532 = vld [vmem:[#allocation13 + $0xff8] sm:$0xff]
      %v6533 = vld [vmem:[#allocation13 + $0x1000] sm:$0xff]
      %v6534 = vld [vmem:[#allocation13 + $0x1008] sm:$0xff]
      %v6535 = vld [vmem:[#allocation13 + $0x1010] sm:$0xff]
      %v6536 = vld [vmem:[#allocation13 + $0x1018] sm:$0xff]
      %v6537 = vld [vmem:[#allocation13 + $0x1020] sm:$0xff]
      %v6538 = vld [vmem:[#allocation13 + $0x1028] sm:$0xff]
      %v6539 = vld [vmem:[#allocation13 + $0x1030] sm:$0xff]
      %v6540 = vld [vmem:[#allocation13 + $0x1038] sm:$0xff]
      %v6541 = vld [vmem:[#allocation13 + $0x1040] sm:$0xff]
      %v6542 = vld [vmem:[#allocation13 + $0x1048] sm:$0xff]
      %v6543 = vld [vmem:[#allocation13 + $0x1050] sm:$0xff]
      %v6544 = vld [vmem:[#allocation13 + $0x1058] sm:$0xff]
      %v6545 = vld [vmem:[#allocation13 + $0x1060] sm:$0xff]
      %v6546 = vld [vmem:[#allocation13 + $0x1068] sm:$0xff]
      %v6547 = vld [vmem:[#allocation13 + $0x1070] sm:$0xff]
      %v6548 = vld [vmem:[#allocation13 + $0x1078] sm:$0xff]
      %v6549 = vld [vmem:[#allocation13 + $0x1080] sm:$0xff]
      %v6550 = vld [vmem:[#allocation13 + $0x1088] sm:$0xff]
      %v6551 = vld [vmem:[#allocation13 + $0x1090] sm:$0xff]
      %v6552 = vld [vmem:[#allocation13 + $0x1098] sm:$0xff]
      %v6553 = vld [vmem:[#allocation13 + $0x10a0] sm:$0xff]
      %v6554 = vld [vmem:[#allocation13 + $0x10a8] sm:$0xff]
      %v6555 = vld [vmem:[#allocation13 + $0x10b0] sm:$0xff]
      %v6556 = vld [vmem:[#allocation13 + $0x10b8] sm:$0xff]
      %v6557 = vld [vmem:[#allocation13 + $0x10c0] sm:$0xff]
      %v6558 = vld [vmem:[#allocation13 + $0x10c8] sm:$0xff]
      %v6559 = vld [vmem:[#allocation13 + $0x10d0] sm:$0xff]
      %v6560 = vld [vmem:[#allocation13 + $0x10d8] sm:$0xff]
      %v6561 = vld [vmem:[#allocation13 + $0x10e0] sm:$0xff]
      %v6562 = vld [vmem:[#allocation13 + $0x10e8] sm:$0xff]
      %v6563 = vld [vmem:[#allocation13 + $0x10f0] sm:$0xff]
      %v6564 = vld [vmem:[#allocation13 + $0x10f8] sm:$0xff]
      %v6565 = vld [vmem:[#allocation13 + $0x1100] sm:$0xff]
      %v6566 = vld [vmem:[#allocation13 + $0x1108] sm:$0xff]
      %v6567 = vld [vmem:[#allocation13 + $0x1110] sm:$0xff]
      %v6568 = vld [vmem:[#allocation13 + $0x1118] sm:$0xff]
      %v6569 = vld [vmem:[#allocation13 + $0x1120] sm:$0xff]
      %v6570 = vld [vmem:[#allocation13 + $0x1128] sm:$0xff]
      %v6571 = vld [vmem:[#allocation13 + $0x1130] sm:$0xff]
      %v6572 = vld [vmem:[#allocation13 + $0x1138] sm:$0xff]
      %v6573 = vld [vmem:[#allocation13 + $0x1140] sm:$0xff]
      %v6574 = vld [vmem:[#allocation13 + $0x1148] sm:$0xff]
      %v6575 = vld [vmem:[#allocation13 + $0x1150] sm:$0xff]
      %v6576 = vld [vmem:[#allocation13 + $0x1158] sm:$0xff]
      %v6577 = vld [vmem:[#allocation13 + $0x1160] sm:$0xff]
      %v6578 = vld [vmem:[#allocation13 + $0x1168] sm:$0xff]
      %v6579 = vld [vmem:[#allocation13 + $0x1170] sm:$0xff]
      %v6580 = vld [vmem:[#allocation13 + $0x1178] sm:$0xff]
      %v6581 = vld [vmem:[#allocation13 + $0x1180] sm:$0xff]
      %v6582 = vld [vmem:[#allocation13 + $0x1188] sm:$0xff]
      %v6583 = vld [vmem:[#allocation13 + $0x1190] sm:$0xff]
      %v6584 = vld [vmem:[#allocation13 + $0x1198] sm:$0xff]
      %v6585 = vld [vmem:[#allocation13 + $0x11a0] sm:$0xff]
      %v6586 = vld [vmem:[#allocation13 + $0x11a8] sm:$0xff]
      %v6587 = vld [vmem:[#allocation13 + $0x11b0] sm:$0xff]
      %v6588 = vld [vmem:[#allocation13 + $0x11b8] sm:$0xff]
      %v6589 = vld [vmem:[#allocation13 + $0x11c0] sm:$0xff]
      %v6590 = vld [vmem:[#allocation13 + $0x11c8] sm:$0xff]
      %v6591 = vld [vmem:[#allocation13 + $0x11d0] sm:$0xff]
      %v6592 = vld [vmem:[#allocation13 + $0x11d8] sm:$0xff]
      %v6593 = vld [vmem:[#allocation13 + $0x11e0] sm:$0xff]
      %v6594 = vld [vmem:[#allocation13 + $0x11e8] sm:$0xff]
      %v6595 = vld [vmem:[#allocation13 + $0x11f0] sm:$0xff]
      %v6596 = vld [vmem:[#allocation13 + $0x11f8] sm:$0xff]
      %v6789 = vunpack.c.l.b16 %v6405
      %v6790 = vunpack.c.h.b16 %v6405
      %v6791 = vunpack.c.l.b16 %v6406
      %v6792 = vunpack.c.h.b16 %v6406
      %v6793 = vunpack.c.l.b16 %v6407
      %v6794 = vunpack.c.h.b16 %v6407
      %v6795 = vunpack.c.l.b16 %v6408
      %v6796 = vunpack.c.h.b16 %v6408
      %v6797 = vunpack.c.l.b16 %v6409
      %v6798 = vunpack.c.h.b16 %v6409
      %v6799 = vunpack.c.l.b16 %v6410
      %v6800 = vunpack.c.h.b16 %v6410
      %v6801 = vunpack.c.l.b16 %v6411
      %v6802 = vunpack.c.h.b16 %v6411
      %v6803 = vunpack.c.l.b16 %v6412
      %v6804 = vunpack.c.h.b16 %v6412
      %v6805 = vunpack.c.l.b16 %v6413
      %v6806 = vunpack.c.h.b16 %v6413
      %v6807 = vunpack.c.l.b16 %v6414
      %v6808 = vunpack.c.h.b16 %v6414
      %v6809 = vunpack.c.l.b16 %v6415
      %v6810 = vunpack.c.h.b16 %v6415
      %v6811 = vunpack.c.l.b16 %v6416
      %v6812 = vunpack.c.h.b16 %v6416
      %v6813 = vunpack.c.l.b16 %v6417
      %v6814 = vunpack.c.h.b16 %v6417
      %v6815 = vunpack.c.l.b16 %v6418
      %v6816 = vunpack.c.h.b16 %v6418
      %v6817 = vunpack.c.l.b16 %v6419
      %v6818 = vunpack.c.h.b16 %v6419
      %v6819 = vunpack.c.l.b16 %v6420
      %v6820 = vunpack.c.h.b16 %v6420
      %v6821 = vunpack.c.l.b16 %v6421
      %v6822 = vunpack.c.h.b16 %v6421
      %v6823 = vunpack.c.l.b16 %v6422
      %v6824 = vunpack.c.h.b16 %v6422
      %v6825 = vunpack.c.l.b16 %v6423
      %v6826 = vunpack.c.h.b16 %v6423
      %v6827 = vunpack.c.l.b16 %v6424
      %v6828 = vunpack.c.h.b16 %v6424
      %v6829 = vunpack.c.l.b16 %v6425
      %v6830 = vunpack.c.h.b16 %v6425
      %v6831 = vunpack.c.l.b16 %v6426
      %v6832 = vunpack.c.h.b16 %v6426
      %v6833 = vunpack.c.l.b16 %v6427
      %v6834 = vunpack.c.h.b16 %v6427
      %v6835 = vunpack.c.l.b16 %v6428
      %v6836 = vunpack.c.h.b16 %v6428
      %v6837 = vunpack.c.l.b16 %v6429
      %v6838 = vunpack.c.h.b16 %v6429
      %v6839 = vunpack.c.l.b16 %v6430
      %v6840 = vunpack.c.h.b16 %v6430
      %v6841 = vunpack.c.l.b16 %v6431
      %v6842 = vunpack.c.h.b16 %v6431
      %v6843 = vunpack.c.l.b16 %v6432
      %v6844 = vunpack.c.h.b16 %v6432
      %v6845 = vunpack.c.l.b16 %v6433
      %v6846 = vunpack.c.h.b16 %v6433
      %v6847 = vunpack.c.l.b16 %v6434
      %v6848 = vunpack.c.h.b16 %v6434
      %v6849 = vunpack.c.l.b16 %v6435
      %v6850 = vunpack.c.h.b16 %v6435
      %v6851 = vunpack.c.l.b16 %v6436
      %v6852 = vunpack.c.h.b16 %v6436
      %v6853 = vunpack.c.l.b16 %v6437
      %v6854 = vunpack.c.h.b16 %v6437
      %v6855 = vunpack.c.l.b16 %v6438
      %v6856 = vunpack.c.h.b16 %v6438
      %v6857 = vunpack.c.l.b16 %v6439
      %v6858 = vunpack.c.h.b16 %v6439
      %v6859 = vunpack.c.l.b16 %v6440
      %v6860 = vunpack.c.h.b16 %v6440
      %v6861 = vunpack.c.l.b16 %v6441
      %v6862 = vunpack.c.h.b16 %v6441
      %v6863 = vunpack.c.l.b16 %v6442
      %v6864 = vunpack.c.h.b16 %v6442
      %v6865 = vunpack.c.l.b16 %v6443
      %v6866 = vunpack.c.h.b16 %v6443
      %v6867 = vunpack.c.l.b16 %v6444
      %v6868 = vunpack.c.h.b16 %v6444
      %v6869 = vunpack.c.l.b16 %v6445
      %v6870 = vunpack.c.h.b16 %v6445
      %v6871 = vunpack.c.l.b16 %v6446
      %v6872 = vunpack.c.h.b16 %v6446
      %v6873 = vunpack.c.l.b16 %v6447
      %v6874 = vunpack.c.h.b16 %v6447
      %v6875 = vunpack.c.l.b16 %v6448
      %v6876 = vunpack.c.h.b16 %v6448
      %v6877 = vunpack.c.l.b16 %v6449
      %v6878 = vunpack.c.h.b16 %v6449
      %v6879 = vunpack.c.l.b16 %v6450
      %v6880 = vunpack.c.h.b16 %v6450
      %v6881 = vunpack.c.l.b16 %v6451
      %v6882 = vunpack.c.h.b16 %v6451
      %v6883 = vunpack.c.l.b16 %v6452
      %v6884 = vunpack.c.h.b16 %v6452
      %v6885 = vunpack.c.l.b16 %v6453
      %v6886 = vunpack.c.h.b16 %v6453
      %v6887 = vunpack.c.l.b16 %v6454
      %v6888 = vunpack.c.h.b16 %v6454
      %v6889 = vunpack.c.l.b16 %v6455
      %v6890 = vunpack.c.h.b16 %v6455
      %v6891 = vunpack.c.l.b16 %v6456
      %v6892 = vunpack.c.h.b16 %v6456
      %v6893 = vunpack.c.l.b16 %v6457
      %v6894 = vunpack.c.h.b16 %v6457
      %v6895 = vunpack.c.l.b16 %v6458
      %v6896 = vunpack.c.h.b16 %v6458
      %v6897 = vunpack.c.l.b16 %v6459
      %v6898 = vunpack.c.h.b16 %v6459
      %v6899 = vunpack.c.l.b16 %v6460
      %v6900 = vunpack.c.h.b16 %v6460
      %v6901 = vunpack.c.l.b16 %v6461
      %v6902 = vunpack.c.h.b16 %v6461
      %v6903 = vunpack.c.l.b16 %v6462
      %v6904 = vunpack.c.h.b16 %v6462
      %v6905 = vunpack.c.l.b16 %v6463
      %v6906 = vunpack.c.h.b16 %v6463
      %v6907 = vunpack.c.l.b16 %v6464
      %v6908 = vunpack.c.h.b16 %v6464
      %v6909 = vunpack.c.l.b16 %v6465
      %v6910 = vunpack.c.h.b16 %v6465
      %v6911 = vunpack.c.l.b16 %v6466
      %v6912 = vunpack.c.h.b16 %v6466
      %v6913 = vunpack.c.l.b16 %v6467
      %v6914 = vunpack.c.h.b16 %v6467
      %v6915 = vunpack.c.l.b16 %v6468
      %v6916 = vunpack.c.h.b16 %v6468
      %v6917 = vunpack.c.l.b16 %v6469
      %v6918 = vunpack.c.h.b16 %v6469
      %v6919 = vunpack.c.l.b16 %v6470
      %v6920 = vunpack.c.h.b16 %v6470
      %v6921 = vunpack.c.l.b16 %v6471
      %v6922 = vunpack.c.h.b16 %v6471
      %v6923 = vunpack.c.l.b16 %v6472
      %v6924 = vunpack.c.h.b16 %v6472
      %v6925 = vunpack.c.l.b16 %v6473
      %v6926 = vunpack.c.h.b16 %v6473
      %v6927 = vunpack.c.l.b16 %v6474
      %v6928 = vunpack.c.h.b16 %v6474
      %v6929 = vunpack.c.l.b16 %v6475
      %v6930 = vunpack.c.h.b16 %v6475
      %v6931 = vunpack.c.l.b16 %v6476
      %v6932 = vunpack.c.h.b16 %v6476
      %v6933 = vunpack.c.l.b16 %v6477
      %v6934 = vunpack.c.h.b16 %v6477
      %v6935 = vunpack.c.l.b16 %v6478
      %v6936 = vunpack.c.h.b16 %v6478
      %v6937 = vunpack.c.l.b16 %v6479
      %v6938 = vunpack.c.h.b16 %v6479
      %v6939 = vunpack.c.l.b16 %v6480
      %v6940 = vunpack.c.h.b16 %v6480
      %v6941 = vunpack.c.l.b16 %v6481
      %v6942 = vunpack.c.h.b16 %v6481
      %v6943 = vunpack.c.l.b16 %v6482
      %v6944 = vunpack.c.h.b16 %v6482
      %v6945 = vunpack.c.l.b16 %v6483
      %v6946 = vunpack.c.h.b16 %v6483
      %v6947 = vunpack.c.l.b16 %v6484
      %v6948 = vunpack.c.h.b16 %v6484
      %v6949 = vunpack.c.l.b16 %v6485
      %v6950 = vunpack.c.h.b16 %v6485
      %v6951 = vunpack.c.l.b16 %v6486
      %v6952 = vunpack.c.h.b16 %v6486
      %v6953 = vunpack.c.l.b16 %v6487
      %v6954 = vunpack.c.h.b16 %v6487
      %v6955 = vunpack.c.l.b16 %v6488
      %v6956 = vunpack.c.h.b16 %v6488
      %v6957 = vunpack.c.l.b16 %v6489
      %v6958 = vunpack.c.h.b16 %v6489
      %v6959 = vunpack.c.l.b16 %v6490
      %v6960 = vunpack.c.h.b16 %v6490
      %v6961 = vunpack.c.l.b16 %v6491
      %v6962 = vunpack.c.h.b16 %v6491
      %v6963 = vunpack.c.l.b16 %v6492
      %v6964 = vunpack.c.h.b16 %v6492
      %v6965 = vunpack.c.l.b16 %v6493
      %v6966 = vunpack.c.h.b16 %v6493
      %v6967 = vunpack.c.l.b16 %v6494
      %v6968 = vunpack.c.h.b16 %v6494
      %v6969 = vunpack.c.l.b16 %v6495
      %v6970 = vunpack.c.h.b16 %v6495
      %v6971 = vunpack.c.l.b16 %v6496
      %v6972 = vunpack.c.h.b16 %v6496
      %v6973 = vunpack.c.l.b16 %v6497
      %v6974 = vunpack.c.h.b16 %v6497
      %v6975 = vunpack.c.l.b16 %v6498
      %v6976 = vunpack.c.h.b16 %v6498
      %v6977 = vunpack.c.l.b16 %v6499
      %v6978 = vunpack.c.h.b16 %v6499
      %v6979 = vunpack.c.l.b16 %v6500
      %v6980 = vunpack.c.h.b16 %v6500
      %v6981 = vunpack.c.l.b16 %v6501
      %v6982 = vunpack.c.h.b16 %v6501
      %v6983 = vunpack.c.l.b16 %v6502
      %v6984 = vunpack.c.h.b16 %v6502
      %v6985 = vunpack.c.l.b16 %v6503
      %v6986 = vunpack.c.h.b16 %v6503
      %v6987 = vunpack.c.l.b16 %v6504
      %v6988 = vunpack.c.h.b16 %v6504
      %v6989 = vunpack.c.l.b16 %v6505
      %v6990 = vunpack.c.h.b16 %v6505
      %v6991 = vunpack.c.l.b16 %v6506
      %v6992 = vunpack.c.h.b16 %v6506
      %v6993 = vunpack.c.l.b16 %v6507
      %v6994 = vunpack.c.h.b16 %v6507
      %v6995 = vunpack.c.l.b16 %v6508
      %v6996 = vunpack.c.h.b16 %v6508
      %v6997 = vunpack.c.l.b16 %v6509
      %v6998 = vunpack.c.h.b16 %v6509
      %v6999 = vunpack.c.l.b16 %v6510
      %v7000 = vunpack.c.h.b16 %v6510
      %v7001 = vunpack.c.l.b16 %v6511
      %v7002 = vunpack.c.h.b16 %v6511
      %v7003 = vunpack.c.l.b16 %v6512
      %v7004 = vunpack.c.h.b16 %v6512
      %v7005 = vunpack.c.l.b16 %v6513
      %v7006 = vunpack.c.h.b16 %v6513
      %v7007 = vunpack.c.l.b16 %v6514
      %v7008 = vunpack.c.h.b16 %v6514
      %v7009 = vunpack.c.l.b16 %v6515
      %v7010 = vunpack.c.h.b16 %v6515
      %v7011 = vunpack.c.l.b16 %v6516
      %v7012 = vunpack.c.h.b16 %v6516
      %v7013 = vunpack.c.l.b16 %v6517
      %v7014 = vunpack.c.h.b16 %v6517
      %v7015 = vunpack.c.l.b16 %v6518
      %v7016 = vunpack.c.h.b16 %v6518
      %v7017 = vunpack.c.l.b16 %v6519
      %v7018 = vunpack.c.h.b16 %v6519
      %v7019 = vunpack.c.l.b16 %v6520
      %v7020 = vunpack.c.h.b16 %v6520
      %v7021 = vunpack.c.l.b16 %v6521
      %v7022 = vunpack.c.h.b16 %v6521
      %v7023 = vunpack.c.l.b16 %v6522
      %v7024 = vunpack.c.h.b16 %v6522
      %v7025 = vunpack.c.l.b16 %v6523
      %v7026 = vunpack.c.h.b16 %v6523
      %v7027 = vunpack.c.l.b16 %v6524
      %v7028 = vunpack.c.h.b16 %v6524
      %v7029 = vunpack.c.l.b16 %v6525
      %v7030 = vunpack.c.h.b16 %v6525
      %v7031 = vunpack.c.l.b16 %v6526
      %v7032 = vunpack.c.h.b16 %v6526
      %v7033 = vunpack.c.l.b16 %v6527
      %v7034 = vunpack.c.h.b16 %v6527
      %v7035 = vunpack.c.l.b16 %v6528
      %v7036 = vunpack.c.h.b16 %v6528
      %v7037 = vunpack.c.l.b16 %v6529
      %v7038 = vunpack.c.h.b16 %v6529
      %v7039 = vunpack.c.l.b16 %v6530
      %v7040 = vunpack.c.h.b16 %v6530
      %v7041 = vunpack.c.l.b16 %v6531
      %v7042 = vunpack.c.h.b16 %v6531
      %v7043 = vunpack.c.l.b16 %v6532
      %v7044 = vunpack.c.h.b16 %v6532
      %v7045 = vunpack.c.l.b16 %v6533
      %v7046 = vunpack.c.h.b16 %v6533
      %v7047 = vunpack.c.l.b16 %v6534
      %v7048 = vunpack.c.h.b16 %v6534
      %v7049 = vunpack.c.l.b16 %v6535
      %v7050 = vunpack.c.h.b16 %v6535
      %v7051 = vunpack.c.l.b16 %v6536
      %v7052 = vunpack.c.h.b16 %v6536
      %v7053 = vunpack.c.l.b16 %v6537
      %v7054 = vunpack.c.h.b16 %v6537
      %v7055 = vunpack.c.l.b16 %v6538
      %v7056 = vunpack.c.h.b16 %v6538
      %v7057 = vunpack.c.l.b16 %v6539
      %v7058 = vunpack.c.h.b16 %v6539
      %v7059 = vunpack.c.l.b16 %v6540
      %v7060 = vunpack.c.h.b16 %v6540
      %v7061 = vunpack.c.l.b16 %v6541
      %v7062 = vunpack.c.h.b16 %v6541
      %v7063 = vunpack.c.l.b16 %v6542
      %v7064 = vunpack.c.h.b16 %v6542
      %v7065 = vunpack.c.l.b16 %v6543
      %v7066 = vunpack.c.h.b16 %v6543
      %v7067 = vunpack.c.l.b16 %v6544
      %v7068 = vunpack.c.h.b16 %v6544
      %v7069 = vunpack.c.l.b16 %v6545
      %v7070 = vunpack.c.h.b16 %v6545
      %v7071 = vunpack.c.l.b16 %v6546
      %v7072 = vunpack.c.h.b16 %v6546
      %v7073 = vunpack.c.l.b16 %v6547
      %v7074 = vunpack.c.h.b16 %v6547
      %v7075 = vunpack.c.l.b16 %v6548
      %v7076 = vunpack.c.h.b16 %v6548
      %v7077 = vunpack.c.l.b16 %v6549
      %v7078 = vunpack.c.h.b16 %v6549
      %v7079 = vunpack.c.l.b16 %v6550
      %v7080 = vunpack.c.h.b16 %v6550
      %v7081 = vunpack.c.l.b16 %v6551
      %v7082 = vunpack.c.h.b16 %v6551
      %v7083 = vunpack.c.l.b16 %v6552
      %v7084 = vunpack.c.h.b16 %v6552
      %v7085 = vunpack.c.l.b16 %v6553
      %v7086 = vunpack.c.h.b16 %v6553
      %v7087 = vunpack.c.l.b16 %v6554
      %v7088 = vunpack.c.h.b16 %v6554
      %v7089 = vunpack.c.l.b16 %v6555
      %v7090 = vunpack.c.h.b16 %v6555
      %v7091 = vunpack.c.l.b16 %v6556
      %v7092 = vunpack.c.h.b16 %v6556
      %v7093 = vunpack.c.l.b16 %v6557
      %v7094 = vunpack.c.h.b16 %v6557
      %v7095 = vunpack.c.l.b16 %v6558
      %v7096 = vunpack.c.h.b16 %v6558
      %v7097 = vunpack.c.l.b16 %v6559
      %v7098 = vunpack.c.h.b16 %v6559
      %v7099 = vunpack.c.l.b16 %v6560
      %v7100 = vunpack.c.h.b16 %v6560
      %v7101 = vunpack.c.l.b16 %v6561
      %v7102 = vunpack.c.h.b16 %v6561
      %v7103 = vunpack.c.l.b16 %v6562
      %v7104 = vunpack.c.h.b16 %v6562
      %v7105 = vunpack.c.l.b16 %v6563
      %v7106 = vunpack.c.h.b16 %v6563
      %v7107 = vunpack.c.l.b16 %v6564
      %v7108 = vunpack.c.h.b16 %v6564
      %v7109 = vunpack.c.l.b16 %v6565
      %v7110 = vunpack.c.h.b16 %v6565
      %v7111 = vunpack.c.l.b16 %v6566
      %v7112 = vunpack.c.h.b16 %v6566
      %v7113 = vunpack.c.l.b16 %v6567
      %v7114 = vunpack.c.h.b16 %v6567
      %v7115 = vunpack.c.l.b16 %v6568
      %v7116 = vunpack.c.h.b16 %v6568
      %v7117 = vunpack.c.l.b16 %v6569
      %v7118 = vunpack.c.h.b16 %v6569
      %v7119 = vunpack.c.l.b16 %v6570
      %v7120 = vunpack.c.h.b16 %v6570
      %v7121 = vunpack.c.l.b16 %v6571
      %v7122 = vunpack.c.h.b16 %v6571
      %v7123 = vunpack.c.l.b16 %v6572
      %v7124 = vunpack.c.h.b16 %v6572
      %v7125 = vunpack.c.l.b16 %v6573
      %v7126 = vunpack.c.h.b16 %v6573
      %v7127 = vunpack.c.l.b16 %v6574
      %v7128 = vunpack.c.h.b16 %v6574
      %v7129 = vunpack.c.l.b16 %v6575
      %v7130 = vunpack.c.h.b16 %v6575
      %v7131 = vunpack.c.l.b16 %v6576
      %v7132 = vunpack.c.h.b16 %v6576
      %v7133 = vunpack.c.l.b16 %v6577
      %v7134 = vunpack.c.h.b16 %v6577
      %v7135 = vunpack.c.l.b16 %v6578
      %v7136 = vunpack.c.h.b16 %v6578
      %v7137 = vunpack.c.l.b16 %v6579
      %v7138 = vunpack.c.h.b16 %v6579
      %v7139 = vunpack.c.l.b16 %v6580
      %v7140 = vunpack.c.h.b16 %v6580
      %v7141 = vunpack.c.l.b16 %v6581
      %v7142 = vunpack.c.h.b16 %v6581
      %v7143 = vunpack.c.l.b16 %v6582
      %v7144 = vunpack.c.h.b16 %v6582
      %v7145 = vunpack.c.l.b16 %v6583
      %v7146 = vunpack.c.h.b16 %v6583
      %v7147 = vunpack.c.l.b16 %v6584
      %v7148 = vunpack.c.h.b16 %v6584
      %v7149 = vunpack.c.l.b16 %v6585
      %v7150 = vunpack.c.h.b16 %v6585
      %v7151 = vunpack.c.l.b16 %v6586
      %v7152 = vunpack.c.h.b16 %v6586
      %v7153 = vunpack.c.l.b16 %v6587
      %v7154 = vunpack.c.h.b16 %v6587
      %v7155 = vunpack.c.l.b16 %v6588
      %v7156 = vunpack.c.h.b16 %v6588
      %v7157 = vunpack.c.l.b16 %v6589
      %v7158 = vunpack.c.h.b16 %v6589
      %v7159 = vunpack.c.l.b16 %v6590
      %v7160 = vunpack.c.h.b16 %v6590
      %v7161 = vunpack.c.l.b16 %v6591
      %v7162 = vunpack.c.h.b16 %v6591
      %v7163 = vunpack.c.l.b16 %v6592
      %v7164 = vunpack.c.h.b16 %v6592
      %v7165 = vunpack.c.l.b16 %v6593
      %v7166 = vunpack.c.h.b16 %v6593
      %v7167 = vunpack.c.l.b16 %v6594
      %v7168 = vunpack.c.h.b16 %v6594
      %v7169 = vunpack.c.l.b16 %v6595
      %v7170 = vunpack.c.h.b16 %v6595
      %v7171 = vunpack.c.l.b16 %v6596
      %v7172 = vunpack.c.h.b16 %v6596
      %v7173 = vpack.c.b16 %v6793, %v6789
      %v7174 = vpack.c.b16 %v6794, %v6790
      %v7175 = vpack.c.b16 %v6795, %v6791
      %v7176 = vpack.c.b16 %v6796, %v6792
      %v7177 = vpack.c.b16 %v6801, %v6797
      %v7178 = vpack.c.b16 %v6802, %v6798
      %v7179 = vpack.c.b16 %v6803, %v6799
      %v7180 = vpack.c.b16 %v6804, %v6800
      %v7181 = vpack.c.b16 %v6809, %v6805
      %v7182 = vpack.c.b16 %v6810, %v6806
      %v7183 = vpack.c.b16 %v6811, %v6807
      %v7184 = vpack.c.b16 %v6812, %v6808
      %v7185 = vpack.c.b16 %v6817, %v6813
      %v7186 = vpack.c.b16 %v6818, %v6814
      %v7187 = vpack.c.b16 %v6819, %v6815
      %v7188 = vpack.c.b16 %v6820, %v6816
      %v7189 = vpack.c.b16 %v6825, %v6821
      %v7190 = vpack.c.b16 %v6826, %v6822
      %v7191 = vpack.c.b16 %v6827, %v6823
      %v7192 = vpack.c.b16 %v6828, %v6824
      %v7193 = vpack.c.b16 %v6833, %v6829
      %v7194 = vpack.c.b16 %v6834, %v6830
      %v7195 = vpack.c.b16 %v6835, %v6831
      %v7196 = vpack.c.b16 %v6836, %v6832
      %v7197 = vpack.c.b16 %v6841, %v6837
      %v7198 = vpack.c.b16 %v6842, %v6838
      %v7199 = vpack.c.b16 %v6843, %v6839
      %v7200 = vpack.c.b16 %v6844, %v6840
      %v7201 = vpack.c.b16 %v6849, %v6845
      %v7202 = vpack.c.b16 %v6850, %v6846
      %v7203 = vpack.c.b16 %v6851, %v6847
      %v7204 = vpack.c.b16 %v6852, %v6848
      %v7205 = vpack.c.b16 %v6857, %v6853
      %v7206 = vpack.c.b16 %v6858, %v6854
      %v7207 = vpack.c.b16 %v6859, %v6855
      %v7208 = vpack.c.b16 %v6860, %v6856
      %v7209 = vpack.c.b16 %v6865, %v6861
      %v7210 = vpack.c.b16 %v6866, %v6862
      %v7211 = vpack.c.b16 %v6867, %v6863
      %v7212 = vpack.c.b16 %v6868, %v6864
      %v7213 = vpack.c.b16 %v6873, %v6869
      %v7214 = vpack.c.b16 %v6874, %v6870
      %v7215 = vpack.c.b16 %v6875, %v6871
      %v7216 = vpack.c.b16 %v6876, %v6872
      %v7217 = vpack.c.b16 %v6881, %v6877
      %v7218 = vpack.c.b16 %v6882, %v6878
      %v7219 = vpack.c.b16 %v6883, %v6879
      %v7220 = vpack.c.b16 %v6884, %v6880
      %v7221 = vpack.c.b16 %v6889, %v6885
      %v7222 = vpack.c.b16 %v6890, %v6886
      %v7223 = vpack.c.b16 %v6891, %v6887
      %v7224 = vpack.c.b16 %v6892, %v6888
      %v7225 = vpack.c.b16 %v6897, %v6893
      %v7226 = vpack.c.b16 %v6898, %v6894
      %v7227 = vpack.c.b16 %v6899, %v6895
      %v7228 = vpack.c.b16 %v6900, %v6896
      %v7229 = vpack.c.b16 %v6905, %v6901
      %v7230 = vpack.c.b16 %v6906, %v6902
      %v7231 = vpack.c.b16 %v6907, %v6903
      %v7232 = vpack.c.b16 %v6908, %v6904
      %v7233 = vpack.c.b16 %v6913, %v6909
      %v7234 = vpack.c.b16 %v6914, %v6910
      %v7235 = vpack.c.b16 %v6915, %v6911
      %v7236 = vpack.c.b16 %v6916, %v6912
      %v7237 = vpack.c.b16 %v6921, %v6917
      %v7238 = vpack.c.b16 %v6922, %v6918
      %v7239 = vpack.c.b16 %v6923, %v6919
      %v7240 = vpack.c.b16 %v6924, %v6920
      %v7241 = vpack.c.b16 %v6929, %v6925
      %v7242 = vpack.c.b16 %v6930, %v6926
      %v7243 = vpack.c.b16 %v6931, %v6927
      %v7244 = vpack.c.b16 %v6932, %v6928
      %v7245 = vpack.c.b16 %v6937, %v6933
      %v7246 = vpack.c.b16 %v6938, %v6934
      %v7247 = vpack.c.b16 %v6939, %v6935
      %v7248 = vpack.c.b16 %v6940, %v6936
      %v7249 = vpack.c.b16 %v6945, %v6941
      %v7250 = vpack.c.b16 %v6946, %v6942
      %v7251 = vpack.c.b16 %v6947, %v6943
      %v7252 = vpack.c.b16 %v6948, %v6944
      %v7253 = vpack.c.b16 %v6953, %v6949
      %v7254 = vpack.c.b16 %v6954, %v6950
      %v7255 = vpack.c.b16 %v6955, %v6951
      %v7256 = vpack.c.b16 %v6956, %v6952
      %v7257 = vpack.c.b16 %v6961, %v6957
      %v7258 = vpack.c.b16 %v6962, %v6958
      %v7259 = vpack.c.b16 %v6963, %v6959
      %v7260 = vpack.c.b16 %v6964, %v6960
      %v7261 = vpack.c.b16 %v6969, %v6965
      %v7262 = vpack.c.b16 %v6970, %v6966
      %v7263 = vpack.c.b16 %v6971, %v6967
      %v7264 = vpack.c.b16 %v6972, %v6968
      %v7265 = vpack.c.b16 %v6977, %v6973
      %v7266 = vpack.c.b16 %v6978, %v6974
      %v7267 = vpack.c.b16 %v6979, %v6975
      %v7268 = vpack.c.b16 %v6980, %v6976
      %v7269 = vpack.c.b16 %v6985, %v6981
      %v7270 = vpack.c.b16 %v6986, %v6982
      %v7271 = vpack.c.b16 %v6987, %v6983
      %v7272 = vpack.c.b16 %v6988, %v6984
      %v7273 = vpack.c.b16 %v6993, %v6989
      %v7274 = vpack.c.b16 %v6994, %v6990
      %v7275 = vpack.c.b16 %v6995, %v6991
      %v7276 = vpack.c.b16 %v6996, %v6992
      %v7277 = vpack.c.b16 %v7001, %v6997
      %v7278 = vpack.c.b16 %v7002, %v6998
      %v7279 = vpack.c.b16 %v7003, %v6999
      %v7280 = vpack.c.b16 %v7004, %v7000
      %v7281 = vpack.c.b16 %v7009, %v7005
      %v7282 = vpack.c.b16 %v7010, %v7006
      %v7283 = vpack.c.b16 %v7011, %v7007
      %v7284 = vpack.c.b16 %v7012, %v7008
      %v7285 = vpack.c.b16 %v7017, %v7013
      %v7286 = vpack.c.b16 %v7018, %v7014
      %v7287 = vpack.c.b16 %v7019, %v7015
      %v7288 = vpack.c.b16 %v7020, %v7016
      %v7289 = vpack.c.b16 %v7025, %v7021
      %v7290 = vpack.c.b16 %v7026, %v7022
      %v7291 = vpack.c.b16 %v7027, %v7023
      %v7292 = vpack.c.b16 %v7028, %v7024
      %v7293 = vpack.c.b16 %v7033, %v7029
      %v7294 = vpack.c.b16 %v7034, %v7030
      %v7295 = vpack.c.b16 %v7035, %v7031
      %v7296 = vpack.c.b16 %v7036, %v7032
      %v7297 = vpack.c.b16 %v7041, %v7037
      %v7298 = vpack.c.b16 %v7042, %v7038
      %v7299 = vpack.c.b16 %v7043, %v7039
      %v7300 = vpack.c.b16 %v7044, %v7040
      %v7301 = vpack.c.b16 %v7049, %v7045
      %v7302 = vpack.c.b16 %v7050, %v7046
      %v7303 = vpack.c.b16 %v7051, %v7047
      %v7304 = vpack.c.b16 %v7052, %v7048
      %v7305 = vpack.c.b16 %v7057, %v7053
      %v7306 = vpack.c.b16 %v7058, %v7054
      %v7307 = vpack.c.b16 %v7059, %v7055
      %v7308 = vpack.c.b16 %v7060, %v7056
      %v7309 = vpack.c.b16 %v7065, %v7061
      %v7310 = vpack.c.b16 %v7066, %v7062
      %v7311 = vpack.c.b16 %v7067, %v7063
      %v7312 = vpack.c.b16 %v7068, %v7064
      %v7313 = vpack.c.b16 %v7073, %v7069
      %v7314 = vpack.c.b16 %v7074, %v7070
      %v7315 = vpack.c.b16 %v7075, %v7071
      %v7316 = vpack.c.b16 %v7076, %v7072
      %v7317 = vpack.c.b16 %v7081, %v7077
      %v7318 = vpack.c.b16 %v7082, %v7078
      %v7319 = vpack.c.b16 %v7083, %v7079
      %v7320 = vpack.c.b16 %v7084, %v7080
      %v7321 = vpack.c.b16 %v7089, %v7085
      %v7322 = vpack.c.b16 %v7090, %v7086
      %v7323 = vpack.c.b16 %v7091, %v7087
      %v7324 = vpack.c.b16 %v7092, %v7088
      %v7325 = vpack.c.b16 %v7097, %v7093
      %v7326 = vpack.c.b16 %v7098, %v7094
      %v7327 = vpack.c.b16 %v7099, %v7095
      %v7328 = vpack.c.b16 %v7100, %v7096
      %v7329 = vpack.c.b16 %v7105, %v7101
      %v7330 = vpack.c.b16 %v7106, %v7102
      %v7331 = vpack.c.b16 %v7107, %v7103
      %v7332 = vpack.c.b16 %v7108, %v7104
      %v7333 = vpack.c.b16 %v7113, %v7109
      %v7334 = vpack.c.b16 %v7114, %v7110
      %v7335 = vpack.c.b16 %v7115, %v7111
      %v7336 = vpack.c.b16 %v7116, %v7112
      %v7337 = vpack.c.b16 %v7121, %v7117
      %v7338 = vpack.c.b16 %v7122, %v7118
      %v7339 = vpack.c.b16 %v7123, %v7119
      %v7340 = vpack.c.b16 %v7124, %v7120
      %v7341 = vpack.c.b16 %v7129, %v7125
      %v7342 = vpack.c.b16 %v7130, %v7126
      %v7343 = vpack.c.b16 %v7131, %v7127
      %v7344 = vpack.c.b16 %v7132, %v7128
      %v7345 = vpack.c.b16 %v7137, %v7133
      %v7346 = vpack.c.b16 %v7138, %v7134
      %v7347 = vpack.c.b16 %v7139, %v7135
      %v7348 = vpack.c.b16 %v7140, %v7136
      %v7349 = vpack.c.b16 %v7145, %v7141
      %v7350 = vpack.c.b16 %v7146, %v7142
      %v7351 = vpack.c.b16 %v7147, %v7143
      %v7352 = vpack.c.b16 %v7148, %v7144
      %v7353 = vpack.c.b16 %v7153, %v7149
      %v7354 = vpack.c.b16 %v7154, %v7150
      %v7355 = vpack.c.b16 %v7155, %v7151
      %v7356 = vpack.c.b16 %v7156, %v7152
      %v7357 = vpack.c.b16 %v7161, %v7157
      %v7358 = vpack.c.b16 %v7162, %v7158
      %v7359 = vpack.c.b16 %v7163, %v7159
      %v7360 = vpack.c.b16 %v7164, %v7160
      %v7361 = vpack.c.b16 %v7169, %v7165
      %v7362 = vpack.c.b16 %v7170, %v7166
      %v7363 = vpack.c.b16 %v7171, %v7167
      %v7364 = vpack.c.b16 %v7172, %v7168
      %7557 = vmatprep.subr.bf16.mxu0 %v7202
      %7558 = vmatpush1.bf16.msra.mxu0 %v7201
      %7559 = vmatprep.subr.bf16.mxu0 %v7198
      %7560 = vmatpush1.bf16.msra.mxu0 %v7197
      %7561 = vmatprep.subr.bf16.mxu0 %v7194
      %7562 = vmatpush1.bf16.msra.mxu0 %v7193
      %7563 = vmatprep.subr.bf16.mxu0 %v7190
      %7564 = vmatpush1.bf16.msra.mxu0 %v7189
      %7565 = vmatprep.subr.bf16.mxu0 %v7186
      %7566 = vmatpush1.bf16.msra.mxu0 %v7185
      %7567 = vmatprep.subr.bf16.mxu0 %v7182
      %7568 = vmatpush1.bf16.msra.mxu0 %v7181
      %7569 = vmatprep.subr.bf16.mxu0 %v7178
      %7570 = vmatpush1.bf16.msra.mxu0 %v7177
      %7571 = vmatprep.subr.bf16.mxu0 %v7174
      %7572 = vmatpush1.bf16.msra.mxu0 %v7173
      %7573 = vmatprep.subr.bf16.mxu0 %v7234
      %7574 = vmatpush2.bf16.msra.mxu0 %v7233
      %7575 = vmatprep.subr.bf16.mxu0 %v7230
      %7576 = vmatpush2.bf16.msra.mxu0 %v7229
      %7577 = vmatprep.subr.bf16.mxu0 %v7226
      %7578 = vmatpush2.bf16.msra.mxu0 %v7225
      %7579 = vmatprep.subr.bf16.mxu0 %v7222
      %7580 = vmatpush2.bf16.msra.mxu0 %v7221
      %7581 = vmatprep.subr.bf16.mxu0 %v7218
      %7582 = vmatpush2.bf16.msra.mxu0 %v7217
      %7583 = vmatprep.subr.bf16.mxu0 %v7214
      %7584 = vmatpush2.bf16.msra.mxu0 %v7213
      %7585 = vmatprep.subr.bf16.mxu0 %v7210
      %7586 = vmatpush2.bf16.msra.mxu0 %v7209
      %7587 = vmatprep.subr.bf16.mxu0 %v7206
      %7588 = vmatpush2.bf16.msra.mxu0 %v7205
      %7589 = vmatprep.mubr.bf16.mxu0 %v6400
      %7590 = vmatmul.mubr.bf16.gmra.mxu0 %v6399
      %v7591 = vpop.f32.mrf.mxu0
      %v7592 = vadd.f32 0.0, %v7591
      %v7593 = vpop.f32.mrf.mxu0
      %v7594 = vadd.f32 0.0, %v7593
      %v7595 = vpop.f32.mrf.mxu0
      %v7596 = vpop.f32.mrf.mxu0
      %7597 = vdwg.mxu0
      %7598 = vmatprep.subr.bf16.mxu0 %v7266
      %7599 = vmatpush1.bf16.msra.mxu0 %v7265
      %7600 = vmatprep.subr.bf16.mxu0 %v7262
      %7601 = vmatpush1.bf16.msra.mxu0 %v7261
      %7602 = vmatprep.subr.bf16.mxu0 %v7258
      %7603 = vmatpush1.bf16.msra.mxu0 %v7257
      %7604 = vmatprep.subr.bf16.mxu0 %v7254
      %7605 = vmatpush1.bf16.msra.mxu0 %v7253
      %7606 = vmatprep.subr.bf16.mxu0 %v7250
      %7607 = vmatpush1.bf16.msra.mxu0 %v7249
      %7608 = vmatprep.subr.bf16.mxu0 %v7246
      %7609 = vmatpush1.bf16.msra.mxu0 %v7245
      %7610 = vmatprep.subr.bf16.mxu0 %v7242
      %7611 = vmatpush1.bf16.msra.mxu0 %v7241
      %7612 = vmatprep.subr.bf16.mxu0 %v7238
      %7613 = vmatpush1.bf16.msra.mxu0 %v7237
      %7614 = vmatprep.subr.bf16.mxu0 %v7298
      %7615 = vmatpush2.bf16.msra.mxu0 %v7297
      %7616 = vmatprep.subr.bf16.mxu0 %v7294
      %7617 = vmatpush2.bf16.msra.mxu0 %v7293
      %7618 = vmatprep.subr.bf16.mxu0 %v7290
      %7619 = vmatpush2.bf16.msra.mxu0 %v7289
      %7620 = vmatprep.subr.bf16.mxu0 %v7286
      %7621 = vmatpush2.bf16.msra.mxu0 %v7285
      %7622 = vmatprep.subr.bf16.mxu0 %v7282
      %7623 = vmatpush2.bf16.msra.mxu0 %v7281
      %7624 = vmatprep.subr.bf16.mxu0 %v7278
      %7625 = vmatpush2.bf16.msra.mxu0 %v7277
      %7626 = vmatprep.subr.bf16.mxu0 %v7274
      %7627 = vmatpush2.bf16.msra.mxu0 %v7273
      %7628 = vmatprep.subr.bf16.mxu0 %v7270
      %7629 = vmatpush2.bf16.msra.mxu0 %v7269
      %7630 = vmatprep.mubr.bf16.mxu0 %v6402
      %7631 = vmatmul.mubr.bf16.gmra.mxu0 %v6401
      %v7632 = vpop.f32.mrf.mxu0
      %v7633 = vadd.f32 %v7592, %v7632
      %v7634 = vpop.f32.mrf.mxu0
      %v7635 = vadd.f32 %v7594, %v7634
      %v7636 = vpop.f32.mrf.mxu0
      %v7637 = vpop.f32.mrf.mxu0
      %7638 = vdwg.mxu0
      %7639 = vmatprep.subr.bf16.mxu0 %v7330
      %7640 = vmatpush1.bf16.msra.mxu0 %v7329
      %7641 = vmatprep.subr.bf16.mxu0 %v7326
      %7642 = vmatpush1.bf16.msra.mxu0 %v7325
      %7643 = vmatprep.subr.bf16.mxu0 %v7322
      %7644 = vmatpush1.bf16.msra.mxu0 %v7321
      %7645 = vmatprep.subr.bf16.mxu0 %v7318
      %7646 = vmatpush1.bf16.msra.mxu0 %v7317
      %7647 = vmatprep.subr.bf16.mxu0 %v7314
      %7648 = vmatpush1.bf16.msra.mxu0 %v7313
      %7649 = vmatprep.subr.bf16.mxu0 %v7310
      %7650 = vmatpush1.bf16.msra.mxu0 %v7309
      %7651 = vmatprep.subr.bf16.mxu0 %v7306
      %7652 = vmatpush1.bf16.msra.mxu0 %v7305
      %7653 = vmatprep.subr.bf16.mxu0 %v7302
      %7654 = vmatpush1.bf16.msra.mxu0 %v7301
      %7655 = vmatprep.subr.bf16.mxu0 %v7362
      %7656 = vmatpush2.bf16.msra.mxu0 %v7361
      %7657 = vmatprep.subr.bf16.mxu0 %v7358
      %7658 = vmatpush2.bf16.msra.mxu0 %v7357
      %7659 = vmatprep.subr.bf16.mxu0 %v7354
      %7660 = vmatpush2.bf16.msra.mxu0 %v7353
      %7661 = vmatprep.subr.bf16.mxu0 %v7350
      %7662 = vmatpush2.bf16.msra.mxu0 %v7349
      %7663 = vmatprep.subr.bf16.mxu0 %v7346
      %7664 = vmatpush2.bf16.msra.mxu0 %v7345
      %7665 = vmatprep.subr.bf16.mxu0 %v7342
      %7666 = vmatpush2.bf16.msra.mxu0 %v7341
      %7667 = vmatprep.subr.bf16.mxu0 %v7338
      %7668 = vmatpush2.bf16.msra.mxu0 %v7337
      %7669 = vmatprep.subr.bf16.mxu0 %v7334
      %7670 = vmatpush2.bf16.msra.mxu0 %v7333
      %7671 = vmatprep.mubr.bf16.mxu0 %v6404
      %7672 = vmatmul.mubr.bf16.gmra.mxu0 %v6403
      %v7673 = vpop.f32.mrf.mxu0
      %v7674 = vadd.f32 %v7633, %v7673
      %v7675 = vpop.f32.mrf.mxu0
      %v7676 = vadd.f32 %v7635, %v7675
      %v7677 = vpop.f32.mrf.mxu0
      %v7678 = vpop.f32.mrf.mxu0
      %7679 = vdwg.mxu0
      %7680 = vmatprep.subr.bf16.mxu0 %v7204
      %7681 = vmatpush1.bf16.msra.mxu0 %v7203
      %7682 = vmatprep.subr.bf16.mxu0 %v7200
      %7683 = vmatpush1.bf16.msra.mxu0 %v7199
      %7684 = vmatprep.subr.bf16.mxu0 %v7196
      %7685 = vmatpush1.bf16.msra.mxu0 %v7195
      %7686 = vmatprep.subr.bf16.mxu0 %v7192
      %7687 = vmatpush1.bf16.msra.mxu0 %v7191
      %7688 = vmatprep.subr.bf16.mxu0 %v7188
      %7689 = vmatpush1.bf16.msra.mxu0 %v7187
      %7690 = vmatprep.subr.bf16.mxu0 %v7184
      %7691 = vmatpush1.bf16.msra.mxu0 %v7183
      %7692 = vmatprep.subr.bf16.mxu0 %v7180
      %7693 = vmatpush1.bf16.msra.mxu0 %v7179
      %7694 = vmatprep.subr.bf16.mxu0 %v7176
      %7695 = vmatpush1.bf16.msra.mxu0 %v7175
      %7696 = vmatprep.subr.bf16.mxu0 %v7236
      %7697 = vmatpush2.bf16.msra.mxu0 %v7235
      %7698 = vmatprep.subr.bf16.mxu0 %v7232
      %7699 = vmatpush2.bf16.msra.mxu0 %v7231
      %7700 = vmatprep.subr.bf16.mxu0 %v7228
      %7701 = vmatpush2.bf16.msra.mxu0 %v7227
      %7702 = vmatprep.subr.bf16.mxu0 %v7224
      %7703 = vmatpush2.bf16.msra.mxu0 %v7223
      %7704 = vmatprep.subr.bf16.mxu0 %v7220
      %7705 = vmatpush2.bf16.msra.mxu0 %v7219
      %7706 = vmatprep.subr.bf16.mxu0 %v7216
      %7707 = vmatpush2.bf16.msra.mxu0 %v7215
      %7708 = vmatprep.subr.bf16.mxu0 %v7212
      %7709 = vmatpush2.bf16.msra.mxu0 %v7211
      %7710 = vmatprep.subr.bf16.mxu0 %v7208
      %7711 = vmatpush2.bf16.msra.mxu0 %v7207
      %7712 = vmatprep.mubr.bf16.mxu0 %v6400
      %7713 = vmatmul.mubr.bf16.gmra.mxu0 %v6399
      %v7714 = vpop.f32.mrf.mxu0
      %v7715 = vadd.f32 0.0, %v7714
      %v7716 = vpop.f32.mrf.mxu0
      %v7717 = vadd.f32 0.0, %v7716
      %v7718 = vpop.f32.mrf.mxu0
      %v7719 = vpop.f32.mrf.mxu0
      %7720 = vdwg.mxu0
      %7721 = vmatprep.subr.bf16.mxu0 %v7268
      %7722 = vmatpush1.bf16.msra.mxu0 %v7267
      %7723 = vmatprep.subr.bf16.mxu0 %v7264
      %7724 = vmatpush1.bf16.msra.mxu0 %v7263
      %7725 = vmatprep.subr.bf16.mxu0 %v7260
      %7726 = vmatpush1.bf16.msra.mxu0 %v7259
      %7727 = vmatprep.subr.bf16.mxu0 %v7256
      %7728 = vmatpush1.bf16.msra.mxu0 %v7255
      %7729 = vmatprep.subr.bf16.mxu0 %v7252
      %7730 = vmatpush1.bf16.msra.mxu0 %v7251
      %7731 = vmatprep.subr.bf16.mxu0 %v7248
      %7732 = vmatpush1.bf16.msra.mxu0 %v7247
      %7733 = vmatprep.subr.bf16.mxu0 %v7244
      %7734 = vmatpush1.bf16.msra.mxu0 %v7243
      %7735 = vmatprep.subr.bf16.mxu0 %v7240
      %7736 = vmatpush1.bf16.msra.mxu0 %v7239
      %7737 = vmatprep.subr.bf16.mxu0 %v7300
      %7738 = vmatpush2.bf16.msra.mxu0 %v7299
      %7739 = vmatprep.subr.bf16.mxu0 %v7296
      %7740 = vmatpush2.bf16.msra.mxu0 %v7295
      %7741 = vmatprep.subr.bf16.mxu0 %v7292
      %7742 = vmatpush2.bf16.msra.mxu0 %v7291
      %7743 = vmatprep.subr.bf16.mxu0 %v7288
      %7744 = vmatpush2.bf16.msra.mxu0 %v7287
      %7745 = vmatprep.subr.bf16.mxu0 %v7284
      %7746 = vmatpush2.bf16.msra.mxu0 %v7283
      %7747 = vmatprep.subr.bf16.mxu0 %v7280
      %7748 = vmatpush2.bf16.msra.mxu0 %v7279
      %7749 = vmatprep.subr.bf16.mxu0 %v7276
      %7750 = vmatpush2.bf16.msra.mxu0 %v7275
      %7751 = vmatprep.subr.bf16.mxu0 %v7272
      %7752 = vmatpush2.bf16.msra.mxu0 %v7271
      %7753 = vmatprep.mubr.bf16.mxu0 %v6402
      %7754 = vmatmul.mubr.bf16.gmra.mxu0 %v6401
      %v7755 = vpop.f32.mrf.mxu0
      %v7756 = vadd.f32 %v7715, %v7755
      %v7757 = vpop.f32.mrf.mxu0
      %v7758 = vadd.f32 %v7717, %v7757
      %v7759 = vpop.f32.mrf.mxu0
      %v7760 = vpop.f32.mrf.mxu0
      %7761 = vdwg.mxu0
      %7762 = vmatprep.subr.bf16.mxu0 %v7332
      %7763 = vmatpush1.bf16.msra.mxu0 %v7331
      %7764 = vmatprep.subr.bf16.mxu0 %v7328
      %7765 = vmatpush1.bf16.msra.mxu0 %v7327
      %7766 = vmatprep.subr.bf16.mxu0 %v7324
      %7767 = vmatpush1.bf16.msra.mxu0 %v7323
      %7768 = vmatprep.subr.bf16.mxu0 %v7320
      %7769 = vmatpush1.bf16.msra.mxu0 %v7319
      %7770 = vmatprep.subr.bf16.mxu0 %v7316
      %7771 = vmatpush1.bf16.msra.mxu0 %v7315
      %7772 = vmatprep.subr.bf16.mxu0 %v7312
      %7773 = vmatpush1.bf16.msra.mxu0 %v7311
      %7774 = vmatprep.subr.bf16.mxu0 %v7308
      %7775 = vmatpush1.bf16.msra.mxu0 %v7307
      %7776 = vmatprep.subr.bf16.mxu0 %v7304
      %7777 = vmatpush1.bf16.msra.mxu0 %v7303
      %7778 = vmatprep.subr.bf16.mxu0 %v7364
      %7779 = vmatpush2.bf16.msra.mxu0 %v7363
      %7780 = vmatprep.subr.bf16.mxu0 %v7360
      %7781 = vmatpush2.bf16.msra.mxu0 %v7359
      %7782 = vmatprep.subr.bf16.mxu0 %v7356
      %7783 = vmatpush2.bf16.msra.mxu0 %v7355
      %7784 = vmatprep.subr.bf16.mxu0 %v7352
      %7785 = vmatpush2.bf16.msra.mxu0 %v7351
      %7786 = vmatprep.subr.bf16.mxu0 %v7348
      %7787 = vmatpush2.bf16.msra.mxu0 %v7347
      %7788 = vmatprep.subr.bf16.mxu0 %v7344
      %7789 = vmatpush2.bf16.msra.mxu0 %v7343
      %7790 = vmatprep.subr.bf16.mxu0 %v7340
      %7791 = vmatpush2.bf16.msra.mxu0 %v7339
      %7792 = vmatprep.subr.bf16.mxu0 %v7336
      %7793 = vmatpush2.bf16.msra.mxu0 %v7335
      %7794 = vmatprep.mubr.bf16.mxu0 %v6404
      %7795 = vmatmul.mubr.bf16.gmra.mxu0 %v6403
      %v7796 = vpop.f32.mrf.mxu0
      %v7797 = vadd.f32 %v7756, %v7796
      %v7798 = vpop.f32.mrf.mxu0
      %v7799 = vadd.f32 %v7758, %v7798
      %v7800 = vpop.f32.mrf.mxu0
      %v7801 = vpop.f32.mrf.mxu0
      %7802 = vdwg.mxu0
      %v7803 = vadd.f32 %v6270, %v7674
      %v7804 = vadd.f32 %v6272, %v7676
      %v7805 = vadd.f32 %v6393, %v7797
      %v7806 = vadd.f32 %v6395, %v7799
      %v7807 = vld [vmem:[#allocation14] sm:$0xf]
      %v7809 = vlaneseq
      %v7810 = vshrl.u32 %v7809, 7
      %v7811 = vsub.s32 0, %v7810
      %v7812 = vrot.slane %v7807, %v7811
      %v7813 = vlaneseq
      %v7814 = vshrl.u32 %v7813, 7
      %v7815 = vsub.s32 1, %v7814
      %v7816 = vrot.slane %v7807, %v7815
      %v7817 = vlaneseq
      %v7818 = vshrl.u32 %v7817, 7
      %v7819 = vsub.s32 2, %v7818
      %v7820 = vrot.slane %v7807, %v7819
      %v7821 = vlaneseq
      %v7822 = vshrl.u32 %v7821, 7
      %v7823 = vsub.s32 3, %v7822
      %v7824 = vrot.slane %v7807, %v7823
      %v7829 = vadd.f32 %v7803, %v7812
      %v7830 = vadd.f32 %v7804, %v7816
      %v7831 = vadd.f32 %v7805, %v7820
      %v7832 = vadd.f32 %v7806, %v7824
      %v7833 = vmax.f32 %v7829, 0.0
      %v7834 = vmax.f32 %v7830, 0.0
      %v7835 = vmax.f32 %v7831, 0.0
      %v7836 = vmax.f32 %v7832, 0.0
      %v7837 = vpack.c.bf16 %v7833, %v7833
      %v7838 = vpack.c.bf16 %v7834, %v7834
      %v7839 = vpack.c.bf16 %v7835, %v7835
      %v7840 = vpack.c.bf16 %v7836, %v7836
      %v7841 = vld [vmem:[#allocation16] sm:$0xff]
      %v7842 = vld [vmem:[#allocation16 + $0x8] sm:$0xff]
      %v7843 = vld [vmem:[#allocation16 + $0x10] sm:$0xff]
      %v7844 = vld [vmem:[#allocation16 + $0x18] sm:$0xff]
      %v7845 = vld [vmem:[#allocation16 + $0x20] sm:$0xff]
      %v7846 = vld [vmem:[#allocation16 + $0x28] sm:$0xff]
      %v7847 = vld [vmem:[#allocation16 + $0x30] sm:$0xff]
      %v7848 = vld [vmem:[#allocation16 + $0x38] sm:$0xff]
      %v7849 = vld [vmem:[#allocation16 + $0x40] sm:$0xff]
      %v7850 = vld [vmem:[#allocation16 + $0x48] sm:$0xff]
      %v7851 = vld [vmem:[#allocation16 + $0x50] sm:$0xff]
      %v7852 = vld [vmem:[#allocation16 + $0x58] sm:$0xff]
      %v7853 = vld [vmem:[#allocation16 + $0x60] sm:$0xff]
      %v7854 = vld [vmem:[#allocation16 + $0x68] sm:$0xff]
      %v7855 = vld [vmem:[#allocation16 + $0x70] sm:$0xff]
      %v7856 = vld [vmem:[#allocation16 + $0x78] sm:$0xff]
      %v7857 = vld [vmem:[#allocation16 + $0x80] sm:$0xff]
      %v7858 = vld [vmem:[#allocation16 + $0x88] sm:$0xff]
      %v7859 = vld [vmem:[#allocation16 + $0x90] sm:$0xff]
      %v7860 = vld [vmem:[#allocation16 + $0x98] sm:$0xff]
      %v7861 = vld [vmem:[#allocation16 + $0xa0] sm:$0xff]
      %v7862 = vld [vmem:[#allocation16 + $0xa8] sm:$0xff]
      %v7863 = vld [vmem:[#allocation16 + $0xb0] sm:$0xff]
      %v7864 = vld [vmem:[#allocation16 + $0xb8] sm:$0xff]
      %v7865 = vld [vmem:[#allocation16 + $0xc0] sm:$0xff]
      %v7866 = vld [vmem:[#allocation16 + $0xc8] sm:$0xff]
      %v7867 = vld [vmem:[#allocation16 + $0xd0] sm:$0xff]
      %v7868 = vld [vmem:[#allocation16 + $0xd8] sm:$0xff]
      %v7869 = vld [vmem:[#allocation16 + $0xe0] sm:$0xff]
      %v7870 = vld [vmem:[#allocation16 + $0xe8] sm:$0xff]
      %v7871 = vld [vmem:[#allocation16 + $0xf0] sm:$0xff]
      %v7872 = vld [vmem:[#allocation16 + $0xf8] sm:$0xff]
      %v7873 = vld [vmem:[#allocation16 + $0x100] sm:$0xff]
      %v7874 = vld [vmem:[#allocation16 + $0x108] sm:$0xff]
      %v7875 = vld [vmem:[#allocation16 + $0x110] sm:$0xff]
      %v7876 = vld [vmem:[#allocation16 + $0x118] sm:$0xff]
      %v7877 = vld [vmem:[#allocation16 + $0x120] sm:$0xff]
      %v7878 = vld [vmem:[#allocation16 + $0x128] sm:$0xff]
      %v7879 = vld [vmem:[#allocation16 + $0x130] sm:$0xff]
      %v7880 = vld [vmem:[#allocation16 + $0x138] sm:$0xff]
      %v7881 = vld [vmem:[#allocation16 + $0x140] sm:$0xff]
      %v7882 = vld [vmem:[#allocation16 + $0x148] sm:$0xff]
      %v7883 = vld [vmem:[#allocation16 + $0x150] sm:$0xff]
      %v7884 = vld [vmem:[#allocation16 + $0x158] sm:$0xff]
      %v7885 = vld [vmem:[#allocation16 + $0x160] sm:$0xff]
      %v7886 = vld [vmem:[#allocation16 + $0x168] sm:$0xff]
      %v7887 = vld [vmem:[#allocation16 + $0x170] sm:$0xff]
      %v7888 = vld [vmem:[#allocation16 + $0x178] sm:$0xff]
      %v7889 = vld [vmem:[#allocation16 + $0x180] sm:$0xff]
      %v7890 = vld [vmem:[#allocation16 + $0x188] sm:$0xff]
      %v7891 = vld [vmem:[#allocation16 + $0x190] sm:$0xff]
      %v7892 = vld [vmem:[#allocation16 + $0x198] sm:$0xff]
      %v7893 = vld [vmem:[#allocation16 + $0x1a0] sm:$0xff]
      %v7894 = vld [vmem:[#allocation16 + $0x1a8] sm:$0xff]
      %v7895 = vld [vmem:[#allocation16 + $0x1b0] sm:$0xff]
      %v7896 = vld [vmem:[#allocation16 + $0x1b8] sm:$0xff]
      %v7897 = vld [vmem:[#allocation16 + $0x1c0] sm:$0xff]
      %v7898 = vld [vmem:[#allocation16 + $0x1c8] sm:$0xff]
      %v7899 = vld [vmem:[#allocation16 + $0x1d0] sm:$0xff]
      %v7900 = vld [vmem:[#allocation16 + $0x1d8] sm:$0xff]
      %v7901 = vld [vmem:[#allocation16 + $0x1e0] sm:$0xff]
      %v7902 = vld [vmem:[#allocation16 + $0x1e8] sm:$0xff]
      %v7903 = vld [vmem:[#allocation16 + $0x1f0] sm:$0xff]
      %v7904 = vld [vmem:[#allocation16 + $0x1f8] sm:$0xff]
      %v7905 = vld [vmem:[#allocation17] sm:$0x3]
      %v7907 = vlaneseq
      %v7908 = vshrl.u32 %v7907, 7
      %v7909 = vsub.s32 0, %v7908
      %v7910 = vrot.slane %v7905, %v7909
      %v7911 = vlaneseq
      %v7912 = vshrl.u32 %v7911, 7
      %v7913 = vsub.s32 1, %v7912
      %v7914 = vrot.slane %v7905, %v7913
      %v7981 = vunpack.c.l.b16 %v7841
      %v7982 = vunpack.c.h.b16 %v7841
      %v7983 = vunpack.c.l.b16 %v7842
      %v7984 = vunpack.c.h.b16 %v7842
      %v7985 = vunpack.c.l.b16 %v7843
      %v7986 = vunpack.c.h.b16 %v7843
      %v7987 = vunpack.c.l.b16 %v7844
      %v7988 = vunpack.c.h.b16 %v7844
      %v7989 = vunpack.c.l.b16 %v7845
      %v7990 = vunpack.c.h.b16 %v7845
      %v7991 = vunpack.c.l.b16 %v7846
      %v7992 = vunpack.c.h.b16 %v7846
      %v7993 = vunpack.c.l.b16 %v7847
      %v7994 = vunpack.c.h.b16 %v7847
      %v7995 = vunpack.c.l.b16 %v7848
      %v7996 = vunpack.c.h.b16 %v7848
      %v7997 = vunpack.c.l.b16 %v7849
      %v7998 = vunpack.c.h.b16 %v7849
      %v7999 = vunpack.c.l.b16 %v7850
      %v8000 = vunpack.c.h.b16 %v7850
      %v8001 = vunpack.c.l.b16 %v7851
      %v8002 = vunpack.c.h.b16 %v7851
      %v8003 = vunpack.c.l.b16 %v7852
      %v8004 = vunpack.c.h.b16 %v7852
      %v8005 = vunpack.c.l.b16 %v7853
      %v8006 = vunpack.c.h.b16 %v7853
      %v8007 = vunpack.c.l.b16 %v7854
      %v8008 = vunpack.c.h.b16 %v7854
      %v8009 = vunpack.c.l.b16 %v7855
      %v8010 = vunpack.c.h.b16 %v7855
      %v8011 = vunpack.c.l.b16 %v7856
      %v8012 = vunpack.c.h.b16 %v7856
      %v8013 = vunpack.c.l.b16 %v7857
      %v8014 = vunpack.c.h.b16 %v7857
      %v8015 = vunpack.c.l.b16 %v7858
      %v8016 = vunpack.c.h.b16 %v7858
      %v8017 = vunpack.c.l.b16 %v7859
      %v8018 = vunpack.c.h.b16 %v7859
      %v8019 = vunpack.c.l.b16 %v7860
      %v8020 = vunpack.c.h.b16 %v7860
      %v8021 = vunpack.c.l.b16 %v7861
      %v8022 = vunpack.c.h.b16 %v7861
      %v8023 = vunpack.c.l.b16 %v7862
      %v8024 = vunpack.c.h.b16 %v7862
      %v8025 = vunpack.c.l.b16 %v7863
      %v8026 = vunpack.c.h.b16 %v7863
      %v8027 = vunpack.c.l.b16 %v7864
      %v8028 = vunpack.c.h.b16 %v7864
      %v8029 = vunpack.c.l.b16 %v7865
      %v8030 = vunpack.c.h.b16 %v7865
      %v8031 = vunpack.c.l.b16 %v7866
      %v8032 = vunpack.c.h.b16 %v7866
      %v8033 = vunpack.c.l.b16 %v7867
      %v8034 = vunpack.c.h.b16 %v7867
      %v8035 = vunpack.c.l.b16 %v7868
      %v8036 = vunpack.c.h.b16 %v7868
      %v8037 = vunpack.c.l.b16 %v7869
      %v8038 = vunpack.c.h.b16 %v7869
      %v8039 = vunpack.c.l.b16 %v7870
      %v8040 = vunpack.c.h.b16 %v7870
      %v8041 = vunpack.c.l.b16 %v7871
      %v8042 = vunpack.c.h.b16 %v7871
      %v8043 = vunpack.c.l.b16 %v7872
      %v8044 = vunpack.c.h.b16 %v7872
      %v8045 = vunpack.c.l.b16 %v7873
      %v8046 = vunpack.c.h.b16 %v7873
      %v8047 = vunpack.c.l.b16 %v7874
      %v8048 = vunpack.c.h.b16 %v7874
      %v8049 = vunpack.c.l.b16 %v7875
      %v8050 = vunpack.c.h.b16 %v7875
      %v8051 = vunpack.c.l.b16 %v7876
      %v8052 = vunpack.c.h.b16 %v7876
      %v8053 = vunpack.c.l.b16 %v7877
      %v8054 = vunpack.c.h.b16 %v7877
      %v8055 = vunpack.c.l.b16 %v7878
      %v8056 = vunpack.c.h.b16 %v7878
      %v8057 = vunpack.c.l.b16 %v7879
      %v8058 = vunpack.c.h.b16 %v7879
      %v8059 = vunpack.c.l.b16 %v7880
      %v8060 = vunpack.c.h.b16 %v7880
      %v8061 = vunpack.c.l.b16 %v7881
      %v8062 = vunpack.c.h.b16 %v7881
      %v8063 = vunpack.c.l.b16 %v7882
      %v8064 = vunpack.c.h.b16 %v7882
      %v8065 = vunpack.c.l.b16 %v7883
      %v8066 = vunpack.c.h.b16 %v7883
      %v8067 = vunpack.c.l.b16 %v7884
      %v8068 = vunpack.c.h.b16 %v7884
      %v8069 = vunpack.c.l.b16 %v7885
      %v8070 = vunpack.c.h.b16 %v7885
      %v8071 = vunpack.c.l.b16 %v7886
      %v8072 = vunpack.c.h.b16 %v7886
      %v8073 = vunpack.c.l.b16 %v7887
      %v8074 = vunpack.c.h.b16 %v7887
      %v8075 = vunpack.c.l.b16 %v7888
      %v8076 = vunpack.c.h.b16 %v7888
      %v8077 = vunpack.c.l.b16 %v7889
      %v8078 = vunpack.c.h.b16 %v7889
      %v8079 = vunpack.c.l.b16 %v7890
      %v8080 = vunpack.c.h.b16 %v7890
      %v8081 = vunpack.c.l.b16 %v7891
      %v8082 = vunpack.c.h.b16 %v7891
      %v8083 = vunpack.c.l.b16 %v7892
      %v8084 = vunpack.c.h.b16 %v7892
      %v8085 = vunpack.c.l.b16 %v7893
      %v8086 = vunpack.c.h.b16 %v7893
      %v8087 = vunpack.c.l.b16 %v7894
      %v8088 = vunpack.c.h.b16 %v7894
      %v8089 = vunpack.c.l.b16 %v7895
      %v8090 = vunpack.c.h.b16 %v7895
      %v8091 = vunpack.c.l.b16 %v7896
      %v8092 = vunpack.c.h.b16 %v7896
      %v8093 = vunpack.c.l.b16 %v7897
      %v8094 = vunpack.c.h.b16 %v7897
      %v8095 = vunpack.c.l.b16 %v7898
      %v8096 = vunpack.c.h.b16 %v7898
      %v8097 = vunpack.c.l.b16 %v7899
      %v8098 = vunpack.c.h.b16 %v7899
      %v8099 = vunpack.c.l.b16 %v7900
      %v8100 = vunpack.c.h.b16 %v7900
      %v8101 = vunpack.c.l.b16 %v7901
      %v8102 = vunpack.c.h.b16 %v7901
      %v8103 = vunpack.c.l.b16 %v7902
      %v8104 = vunpack.c.h.b16 %v7902
      %v8105 = vunpack.c.l.b16 %v7903
      %v8106 = vunpack.c.h.b16 %v7903
      %v8107 = vunpack.c.l.b16 %v7904
      %v8108 = vunpack.c.h.b16 %v7904
      %v8109 = vpack.c.b16 %v7983, %v7981
      %v8110 = vpack.c.b16 %v7984, %v7982
      %v8111 = vpack.c.b16 %v7987, %v7985
      %v8112 = vpack.c.b16 %v7988, %v7986
      %v8113 = vpack.c.b16 %v7991, %v7989
      %v8114 = vpack.c.b16 %v7992, %v7990
      %v8115 = vpack.c.b16 %v7995, %v7993
      %v8116 = vpack.c.b16 %v7996, %v7994
      %v8117 = vpack.c.b16 %v7999, %v7997
      %v8118 = vpack.c.b16 %v8000, %v7998
      %v8119 = vpack.c.b16 %v8003, %v8001
      %v8120 = vpack.c.b16 %v8004, %v8002
      %v8121 = vpack.c.b16 %v8007, %v8005
      %v8122 = vpack.c.b16 %v8008, %v8006
      %v8123 = vpack.c.b16 %v8011, %v8009
      %v8124 = vpack.c.b16 %v8012, %v8010
      %v8125 = vpack.c.b16 %v8015, %v8013
      %v8126 = vpack.c.b16 %v8016, %v8014
      %v8127 = vpack.c.b16 %v8019, %v8017
      %v8128 = vpack.c.b16 %v8020, %v8018
      %v8129 = vpack.c.b16 %v8023, %v8021
      %v8130 = vpack.c.b16 %v8024, %v8022
      %v8131 = vpack.c.b16 %v8027, %v8025
      %v8132 = vpack.c.b16 %v8028, %v8026
      %v8133 = vpack.c.b16 %v8031, %v8029
      %v8134 = vpack.c.b16 %v8032, %v8030
      %v8135 = vpack.c.b16 %v8035, %v8033
      %v8136 = vpack.c.b16 %v8036, %v8034
      %v8137 = vpack.c.b16 %v8039, %v8037
      %v8138 = vpack.c.b16 %v8040, %v8038
      %v8139 = vpack.c.b16 %v8043, %v8041
      %v8140 = vpack.c.b16 %v8044, %v8042
      %v8141 = vpack.c.b16 %v8047, %v8045
      %v8142 = vpack.c.b16 %v8048, %v8046
      %v8143 = vpack.c.b16 %v8051, %v8049
      %v8144 = vpack.c.b16 %v8052, %v8050
      %v8145 = vpack.c.b16 %v8055, %v8053
      %v8146 = vpack.c.b16 %v8056, %v8054
      %v8147 = vpack.c.b16 %v8059, %v8057
      %v8148 = vpack.c.b16 %v8060, %v8058
      %v8149 = vpack.c.b16 %v8063, %v8061
      %v8150 = vpack.c.b16 %v8064, %v8062
      %v8151 = vpack.c.b16 %v8067, %v8065
      %v8152 = vpack.c.b16 %v8068, %v8066
      %v8153 = vpack.c.b16 %v8071, %v8069
      %v8154 = vpack.c.b16 %v8072, %v8070
      %v8155 = vpack.c.b16 %v8075, %v8073
      %v8156 = vpack.c.b16 %v8076, %v8074
      %v8157 = vpack.c.b16 %v8079, %v8077
      %v8158 = vpack.c.b16 %v8080, %v8078
      %v8159 = vpack.c.b16 %v8083, %v8081
      %v8160 = vpack.c.b16 %v8084, %v8082
      %v8161 = vpack.c.b16 %v8087, %v8085
      %v8162 = vpack.c.b16 %v8088, %v8086
      %v8163 = vpack.c.b16 %v8091, %v8089
      %v8164 = vpack.c.b16 %v8092, %v8090
      %v8165 = vpack.c.b16 %v8095, %v8093
      %v8166 = vpack.c.b16 %v8096, %v8094
      %v8167 = vpack.c.b16 %v8099, %v8097
      %v8168 = vpack.c.b16 %v8100, %v8098
      %v8169 = vpack.c.b16 %v8103, %v8101
      %v8170 = vpack.c.b16 %v8104, %v8102
      %v8171 = vpack.c.b16 %v8107, %v8105
      %v8172 = vpack.c.b16 %v8108, %v8106
      %8237 = vmatprep.subr.bf16.mxu0 %v8124
      %8238 = vmatpush1.bf16.msra.mxu0 %v8123
      %8239 = vmatprep.subr.bf16.mxu0 %v8122
      %8240 = vmatpush1.bf16.msra.mxu0 %v8121
      %8241 = vmatprep.subr.bf16.mxu0 %v8120
      %8242 = vmatpush1.bf16.msra.mxu0 %v8119
      %8243 = vmatprep.subr.bf16.mxu0 %v8118
      %8244 = vmatpush1.bf16.msra.mxu0 %v8117
      %8245 = vmatprep.subr.bf16.mxu0 %v8116
      %8246 = vmatpush1.bf16.msra.mxu0 %v8115
      %8247 = vmatprep.subr.bf16.mxu0 %v8114
      %8248 = vmatpush1.bf16.msra.mxu0 %v8113
      %8249 = vmatprep.subr.bf16.mxu0 %v8112
      %8250 = vmatpush1.bf16.msra.mxu0 %v8111
      %8251 = vmatprep.subr.bf16.mxu0 %v8110
      %8252 = vmatpush1.bf16.msra.mxu0 %v8109
      %8253 = vmatprep.subr.bf16.mxu0 %v8140
      %8254 = vmatpush2.bf16.msra.mxu0 %v8139
      %8255 = vmatprep.subr.bf16.mxu0 %v8138
      %8256 = vmatpush2.bf16.msra.mxu0 %v8137
      %8257 = vmatprep.subr.bf16.mxu0 %v8136
      %8258 = vmatpush2.bf16.msra.mxu0 %v8135
      %8259 = vmatprep.subr.bf16.mxu0 %v8134
      %8260 = vmatpush2.bf16.msra.mxu0 %v8133
      %8261 = vmatprep.subr.bf16.mxu0 %v8132
      %8262 = vmatpush2.bf16.msra.mxu0 %v8131
      %8263 = vmatprep.subr.bf16.mxu0 %v8130
      %8264 = vmatpush2.bf16.msra.mxu0 %v8129
      %8265 = vmatprep.subr.bf16.mxu0 %v8128
      %8266 = vmatpush2.bf16.msra.mxu0 %v8127
      %8267 = vmatprep.subr.bf16.mxu0 %v8126
      %8268 = vmatpush2.bf16.msra.mxu0 %v8125
      %8269 = vmatprep.mubr.bf16.mxu0 %v7838
      %8270 = vmatmul.mubr.bf16.gmra.mxu0 %v7837
      %v8271 = vpop.f32.mrf.mxu0
      %v8272 = vadd.f32 %v7910, %v8271
      %v8273 = vpop.f32.mrf.mxu0
      %v8274 = vadd.f32 %v7914, %v8273
      %v8275 = vpop.f32.mrf.mxu0
      %v8276 = vpop.f32.mrf.mxu0
      %8277 = vdwg.mxu0
      %8278 = vmatprep.subr.bf16.mxu0 %v8156
      %8279 = vmatpush1.bf16.msra.mxu0 %v8155
      %8280 = vmatprep.subr.bf16.mxu0 %v8154
      %8281 = vmatpush1.bf16.msra.mxu0 %v8153
      %8282 = vmatprep.subr.bf16.mxu0 %v8152
      %8283 = vmatpush1.bf16.msra.mxu0 %v8151
      %8284 = vmatprep.subr.bf16.mxu0 %v8150
      %8285 = vmatpush1.bf16.msra.mxu0 %v8149
      %8286 = vmatprep.subr.bf16.mxu0 %v8148
      %8287 = vmatpush1.bf16.msra.mxu0 %v8147
      %8288 = vmatprep.subr.bf16.mxu0 %v8146
      %8289 = vmatpush1.bf16.msra.mxu0 %v8145
      %8290 = vmatprep.subr.bf16.mxu0 %v8144
      %8291 = vmatpush1.bf16.msra.mxu0 %v8143
      %8292 = vmatprep.subr.bf16.mxu0 %v8142
      %8293 = vmatpush1.bf16.msra.mxu0 %v8141
      %8294 = vmatprep.subr.bf16.mxu0 %v8172
      %8295 = vmatpush2.bf16.msra.mxu0 %v8171
      %8296 = vmatprep.subr.bf16.mxu0 %v8170
      %8297 = vmatpush2.bf16.msra.mxu0 %v8169
      %8298 = vmatprep.subr.bf16.mxu0 %v8168
      %8299 = vmatpush2.bf16.msra.mxu0 %v8167
      %8300 = vmatprep.subr.bf16.mxu0 %v8166
      %8301 = vmatpush2.bf16.msra.mxu0 %v8165
      %8302 = vmatprep.subr.bf16.mxu0 %v8164
      %8303 = vmatpush2.bf16.msra.mxu0 %v8163
      %8304 = vmatprep.subr.bf16.mxu0 %v8162
      %8305 = vmatpush2.bf16.msra.mxu0 %v8161
      %8306 = vmatprep.subr.bf16.mxu0 %v8160
      %8307 = vmatpush2.bf16.msra.mxu0 %v8159
      %8308 = vmatprep.subr.bf16.mxu0 %v8158
      %8309 = vmatpush2.bf16.msra.mxu0 %v8157
      %8310 = vmatprep.mubr.bf16.mxu0 %v7840
      %8311 = vmatmul.mubr.bf16.gmra.mxu0 %v7839
      %v8312 = vpop.f32.mrf.mxu0
      %v8313 = vadd.f32 %v8272, %v8312
      %v8314 = vpop.f32.mrf.mxu0
      %v8315 = vadd.f32 %v8274, %v8314
      %v8316 = vpop.f32.mrf.mxu0
      %v8317 = vpop.f32.mrf.mxu0
      %8318 = vdwg.mxu0
      %v8319 = vmax.f32 %v8313, 0.0
      %v8320 = vmax.f32 %v8315, 0.0
      %v8321 = vld [vmem:[#allocation19] sm:$0x3]
      %v8323 = vlaneseq
      %v8324 = vshrl.u32 %v8323, 7
      %v8325 = vsub.s32 0, %v8324
      %v8326 = vrot.slane %v8321, %v8325
      %v8327 = vlaneseq
      %v8328 = vshrl.u32 %v8327, 7
      %v8329 = vsub.s32 1, %v8328
      %v8330 = vrot.slane %v8321, %v8329
      %v8333 = vmul.f32 %v8319, %v8326
      %v8334 = vmul.f32 %v8320, %v8330
      %v8335 = vadd.f32 %v8333, %v8334
      %8336 = vadd.xlane.f32.xlu0 %v8335
      %v8337 = vpop.xlane.xlu0 %8336
      %v8338 = vld [vmem:[#allocation4] sm:$0x1]
      %v8340 = vlaneseq
      %v8341 = vshrl.u32 %v8340, 7
      %v8342 = vsub.s32 0, %v8341
      %v8343 = vrot.slane %v8338, %v8342
      %v8345 = vadd.f32 %v8337, %v8343
      %v8346 = vmul.f32 %v8345, 0.5
      %v8347 = vtanh.pop %v8346
      %v8348 = vadd.f32 %v8347, 1.0
      %v8349 = vmul.f32 %v8348, 0.5
      %8351 = vset.pattern.permute.xlu0 0
      %8352 = vperm.xlu0 %8351, %v8349
      %v8353 = vpop.permute.xlu0 %8352
      %8355 = vst [vmem:[#allocation20] sm:$0xff] %v8353
    $region85: #{tpu_custom_call.1} parent=1 // pred_fallthru
      _
    // Predicated region
    $region86: #{tpu_custom_call.1} parent=1 // pred_check
      _
    $region87: #{tpu_custom_call.1} parent=1 // pred_check_branch
      %8357 = sbr.rel (0) target = $region89
    $region88: #{tpu_custom_call.1} parent=1 // pred_region
      %s8359 = ssub.s32 128, 128
      %8360 = vsyncadd [#allocation7], %s8359
      %s8362 = sshll.u32 [#allocation20], 4
      %s8363 = int_to_ptr.vmem [resolvable:$true] %s8362
      %8365 = dma.vmem_to_hbm [thread:$0]  %s8363, 128, %s10, [#allocation7]
    $region89: #{tpu_custom_call.1} parent=1 // pred_fallthru
      _
    // Predicated region
    $region90: #{tpu_custom_call.1} parent=1 // pred_check
      _
    $region91: #{tpu_custom_call.1} parent=1 // pred_check_branch
      %8367 = sbr.rel (0) target = $region93
    $region92: #{tpu_custom_call.1} parent=1 // pred_region
      %8368 = dma.done [#allocation7], 128
    $region93: #{tpu_custom_call.1} parent=1 // pred_fallthru
      _
    %8369 = vsyncpa [#allocation6], 1
    %8370 = vsyncpa [#allocation9], 1
    %8371 = vsyncpa [#allocation12], 1
    %8372 = vsyncpa [#allocation15], 1
    %8373 = vsyncpa [#allocation18], 1
    %8374 = vsyncpa [#allocation7], 1

</llo_original>
